<compile_context>
chip_gen: v7x
topology: tpu7x:2x2x1
jax: 0.10.0
libtpu: 0.0.40
codegen_flags: <defaults>
</compile_context>

<pallas_src>
import functools
import math

import jax
import jax.numpy as jnp
from jax.experimental import pallas as pl
from jax.experimental.pallas import tpu as pltpu


# ---------------------------------------------------------------------------
# In-kernel math helpers (operate on jnp values inside the Pallas kernel).
# ---------------------------------------------------------------------------

_MXU_DTYPE = jnp.bfloat16  # cast matmul operands at the MXU boundary, f32 accumulate


def _dot(a, b):
    return jnp.dot(a.astype(_MXU_DTYPE), b.astype(_MXU_DTYPE),
                   preferred_element_type=jnp.float32)


def _dot_t(a, b):
    # a @ b.T without materializing the transpose.
    return jax.lax.dot_general(a.astype(_MXU_DTYPE), b.astype(_MXU_DTYPE),
                               (((1,), (1,)), ((), ())),
                               preferred_element_type=jnp.float32)


def _layer_norm(x, g, b, eps=1e-5):
    mu = jnp.mean(x, axis=-1, keepdims=True)
    xc = x - mu
    var = jnp.mean(xc * xc, axis=-1, keepdims=True)
    return xc * jax.lax.rsqrt(var + eps) * g + b


def _softmax(x):
    m = jnp.max(x, axis=-1, keepdims=True)
    e = jnp.exp(x - m)
    return e / jnp.sum(e, axis=-1, keepdims=True)


def _erf(x):
    # Abramowitz & Stegun 7.1.26 polynomial erf (|err| <= 1.5e-7): keeps the
    # exact-erf GELU semantics of torch.nn.GELU() while only using ops that are
    # guaranteed to lower in Mosaic (abs / exp / where).
    # TODO(synk): switch to jax.lax.erf once its Mosaic lowering is guaranteed.
    ax = jnp.abs(x)
    t = 1.0 / (1.0 + 0.3275911 * ax)
    poly = ((((1.061405429 * t - 1.453152027) * t + 1.421413741) * t
             - 0.284496736) * t + 0.254829592) * t
    y = 1.0 - poly * jnp.exp(-(ax * ax))
    return jnp.where(x >= 0.0, y, -y)


def _gelu(x):
    return 0.5 * x * (1.0 + _erf(x * (1.0 / math.sqrt(2.0))))


# ---------------------------------------------------------------------------
# Fused forward kernel (one grid step == one batch element).
# ---------------------------------------------------------------------------

_BLOCK_KEYS = (
    "ln1_g", "ln1_b", "ln2_g", "ln2_b", "ln3_g", "ln3_b", "ln4_g", "ln4_b",
    "dw_taps", "dw_b", "pw_w", "pw_b",
    "ln_kv_g", "ln_kv_b", "ln_q_g", "ln_q_b", "ln_k_g", "ln_k_b", "ln_v_g", "ln_v_b",
    "wq", "wkv", "wo",
    "m1_lin1_wE", "m1_lin1_bE", "m1_conv_taps", "m1_conv_b", "m1_lin2_w", "m1_lin2_b",
    "m2_lin1_wE", "m2_lin1_bE", "m2_conv_taps", "m2_conv_b", "m2_lin2_w", "m2_lin2_b",
    "ffn_w1", "ffn_b1", "ffn_w2", "ffn_b2",
)


def _depthwise_reduce(tok, dsel, dw_taps, dw_b, pw_w, pw_b):
    # DSconv reducer: depthwise conv (k=7, stride=4, pad=3) + pointwise 1x1 conv.
    lt, c = tok.shape
    z = jnp.zeros((3, c), jnp.float32)
    tpad = jnp.concatenate([z, tok, z], axis=0)             # (lt + 6, c)
    full = tpad[0:lt] * dw_taps[0:1]                        # stride-1 depthwise conv
    for k in range(1, 7):
        full = full + tpad[k:k + lt] * dw_taps[k:k + 1]
    # stride-4 subsample as an exact 0/1 selection matmul (avoids strided slices)
    red = jnp.dot(dsel, full, preferred_element_type=jnp.float32) + dw_b
    return _dot(red, pw_w) + pw_b                           # pointwise conv (with bias)


def _mixffn(xn, lin1_wE, lin1_bE, conv_taps, conv_b, lin2_w, lin2_b):
    # xn: (L, C) layer-normed input; the cls row passes through unchanged.
    lt = xn.shape[0] - 1
    x1 = xn[0:1]
    x2 = xn[1:]
    # linear1 (1x1 conv) with the groups=C channel expansion folded into the
    # weight -> one lane-dense (Lt, 4C) intermediate that never leaves VMEM.
    h = _dot(x2, lin1_wE) + lin1_bE                         # (Lt, 4C)
    z = jnp.zeros((1, h.shape[1]), jnp.float32)
    hp = jnp.concatenate([z, h, z], axis=0)                 # 'same' padding (k=3)
    acc = hp[0:lt] * conv_taps[0:1]
    for k in range(1, 3):
        acc = acc + hp[k:k + lt] * conv_taps[k:k + 1]
    g = _gelu(acc + conv_b)                                 # exact-erf GELU
    y = _dot(g, lin2_w) + lin2_b                            # (Lt, C)
    return jnp.concatenate([x1, y], axis=0)


def _mhsa(h, p, dsel, heads):
    l, c = h.shape
    d = c // heads
    scale = 1.0 / math.sqrt(d)
    # reducer on the non-cls tokens, then ln_kv; cls token joins kv un-normalized
    red = _depthwise_reduce(h[1:], dsel, p["dw_taps"], p["dw_b"], p["pw_w"], p["pw_b"])
    red = _layer_norm(red, p["ln_kv_g"], p["ln_kv_b"])
    kv = jnp.concatenate([h[0:1], red], axis=0)             # (Lkv, C)
    q = _layer_norm(_dot(h, p["wq"]), p["ln_q_g"], p["ln_q_b"])
    kvp = _dot(kv, p["wkv"])                                # fused K|V projection (Lkv, 2C)
    k = _layer_norm(kvp[:, :c], p["ln_k_g"], p["ln_k_b"])
    v = _layer_norm(kvp[:, c:], p["ln_v_g"], p["ln_v_b"])
    heads_out = []
    for hh in range(heads):                                 # all heads in one invocation
        sl = slice(hh * d, (hh + 1) * d)
        s = _dot_t(q[:, sl], k[:, sl]) * scale
        a = _softmax(s)                                     # exact softmax (eval, dropout=0)
        heads_out.append(_dot(a, v[:, sl]))
    o = jnp.concatenate(heads_out, axis=1)                  # (L, C)
    return _dot(o, p["wo"])


def _encoder_block(x, p, dsel, heads):
    h = _layer_norm(x, p["ln1_g"], p["ln1_b"])
    xa = _mhsa(h, p, dsel, heads) + x
    m1 = _mixffn(_layer_norm(xa, p["ln2_g"], p["ln2_b"]),
                 p["m1_lin1_wE"], p["m1_lin1_bE"], p["m1_conv_taps"],
                 p["m1_conv_b"], p["m1_lin2_w"], p["m1_lin2_b"]) + xa
    m2 = _mixffn(_layer_norm(m1, p["ln3_g"], p["ln3_b"]),
                 p["m2_lin1_wE"], p["m2_lin1_bE"], p["m2_conv_taps"],
                 p["m2_conv_b"], p["m2_lin2_w"], p["m2_lin2_b"]) + m1
    # NOTE: matches PyTorch exactly — ln4 is applied to mixffn_output (m1),
    # not mixffn_output2 (m2); the residual is m2.
    f = _layer_norm(m1, p["ln4_g"], p["ln4_b"])
    f = _gelu(_dot(f, p["ffn_w1"]) + p["ffn_b1"])
    f = _dot(f, p["ffn_w2"]) + p["ffn_b2"]
    return f + m2


def _fused_forward_kernel(*refs, num_blocks, heads):
    assert len(refs) == 9 + len(_BLOCK_KEYS) + 1
    (patches_ref, convw_ref, cls_ref, pos_ref, dsel_ref,
     mlp_g_ref, mlp_b_ref, mlp_w_ref, mlp_bias_ref) = refs[:9]
    blk_refs = dict(zip(_BLOCK_KEYS, refs[9:9 + len(_BLOCK_KEYS)]))
    out_ref = refs[-1]

    dsel = dsel_ref[...]
    # input layer: Conv2d (as im2col matmul) + cls token + positional encoding
    emb = _dot(patches_ref[0], convw_ref[...])                       # (HW, C)
    x = jnp.concatenate([cls_ref[...], emb], axis=0) + pos_ref[...]  # (L, C)

    for i in range(num_blocks):                     # unrolled; weights indexed statically
        p = {k: blk_refs[k][i] for k in _BLOCK_KEYS}
        x = _encoder_block(x, p, dsel, heads)

    # classifier head on the cls token: LayerNorm -> Linear -> Softmax (exact)
    z = _layer_norm(x[0:1], mlp_g_ref[...], mlp_b_ref[...])
    logits = _dot(z, mlp_w_ref[...]) + mlp_bias_ref[...]
    out_ref[...] = _softmax(logits)[None].astype(out_ref.dtype)


# ---------------------------------------------------------------------------
# Parameter initialization (identical layouts / semantics to the reference).
# ---------------------------------------------------------------------------

def _w(key, shape, scale=0.05):
    return scale * jax.random.normal(key, shape, dtype=jnp.float32)


def init_ln(c):
    return {"g": jnp.ones((c,), jnp.float32), "b": jnp.zeros((c,), jnp.float32)}


def positional_encoding(max_len, emb_dim):
    pos = jnp.arange(max_len, dtype=jnp.float32)[:, None]
    div = jnp.exp(jnp.arange(0, emb_dim, 2, dtype=jnp.float32)
                  * (-math.log(10000.0) / emb_dim))
    enc = jnp.zeros((max_len, emb_dim), jnp.float32)
    enc = enc.at[:, 0::2].set(jnp.sin(pos * div))
    enc = enc.at[:, 1::2].set(jnp.cos(pos * div))
    return enc


def init_mhsa(key, c):
    ks = jax.random.split(key, 8)
    return {
        "dw_taps": _w(ks[0], (7, c)), "dw_b": _w(ks[1], (c,)),
        "pw_w": _w(ks[2], (c, c)), "pw_b": _w(ks[3], (c,)),
        "ln_kv": init_ln(c), "ln_q": init_ln(c), "ln_k": init_ln(c), "ln_v": init_ln(c),
        "wq": _w(ks[4], (c, c)), "wk": _w(ks[5], (c, c)),
        "wv": _w(ks[6], (c, c)), "wo": _w(ks[7], (c, c)),
    }


def init_mixffn(key, c, exp=4):
    ks = jax.random.split(key, 6)
    return {
        "lin1_w": _w(ks[0], (c, c)), "lin1_b": _w(ks[1], (c,)),
        "conv_taps": _w(ks[2], (3, exp * c)), "conv_b": _w(ks[3], (exp * c,)),
        "lin2_w": _w(ks[4], (exp * c, c)), "lin2_b": _w(ks[5], (c,)),
    }


def init_block(key, c):
    ks = jax.random.split(key, 7)
    return {
        "ln1": init_ln(c), "ln2": init_ln(c), "ln3": init_ln(c), "ln4": init_ln(c),
        "mhsa": init_mhsa(ks[0], c),
        "mixffn1": init_mixffn(ks[1], c),
        "mixffn2": init_mixffn(ks[2], c),
        "ffn_w1": _w(ks[3], (c, c)), "ffn_b1": _w(ks[4], (c,)),
        "ffn_w2": _w(ks[5], (c, c)), "ffn_b2": _w(ks[6], (c,)),
    }


def init_params(key, in_ch, emb_dim, ksize, class_num, num_blocks, max_len=128):
    ks = jax.random.split(key, num_blocks + 4)
    return {
        "conv_w": _w(ks[0], (emb_dim, in_ch, ksize)),   # torch layout (out, in, kW)
        "cls_token": _w(ks[1], (1, 1, emb_dim)),
        "pos_enc": positional_encoding(max_len, emb_dim),
        "blocks": [init_block(ks[2 + i], emb_dim) for i in range(num_blocks)],
        "mlp_ln": init_ln(emb_dim),
        "mlp_w": _w(ks[2 + num_blocks], (emb_dim, class_num)),
        "mlp_b": _w(ks[3 + num_blocks], (class_num,)),
    }


# ---------------------------------------------------------------------------
# Wrapper: param re-packing + one pallas_call for the whole forward.
# ---------------------------------------------------------------------------

def _prepare_block_params(blocks, c):
    stacked = {k: [] for k in _BLOCK_KEYS}
    for bp in blocks:
        m = bp["mhsa"]
        vals = {}
        for j in (1, 2, 3, 4):
            vals[f"ln{j}_g"] = bp[f"ln{j}"]["g"].reshape(1, c)
            vals[f"ln{j}_b"] = bp[f"ln{j}"]["b"].reshape(1, c)
        vals["dw_taps"] = m["dw_taps"]
        vals["dw_b"] = m["dw_b"].reshape(1, c)
        vals["pw_w"] = m["pw_w"]
        vals["pw_b"] = m["pw_b"].reshape(1, c)
        for nm in ("kv", "q", "k", "v"):
            vals[f"ln_{nm}_g"] = m[f"ln_{nm}"]["g"].reshape(1, c)
            vals[f"ln_{nm}_b"] = m[f"ln_{nm}"]["b"].reshape(1, c)
        vals["wq"] = m["wq"]
        vals["wkv"] = jnp.concatenate([m["wk"], m["wv"]], axis=1)   # fused K|V weight
        vals["wo"] = m["wo"]
        for tag, mp in (("m1", bp["mixffn1"]), ("m2", bp["mixffn2"])):
            # Fold the groups=C channel expansion (out ch 4g+e reads in ch g)
            # into linear1: exact column/element duplication.
            vals[f"{tag}_lin1_wE"] = jnp.repeat(mp["lin1_w"], 4, axis=1)
            vals[f"{tag}_lin1_bE"] = jnp.repeat(mp["lin1_b"], 4).reshape(1, 4 * c)
            vals[f"{tag}_conv_taps"] = mp["conv_taps"]
            vals[f"{tag}_conv_b"] = mp["conv_b"].reshape(1, 4 * c)
            vals[f"{tag}_lin2_w"] = mp["lin2_w"]
            vals[f"{tag}_lin2_b"] = mp["lin2_b"].reshape(1, c)
        vals["ffn_w1"] = bp["ffn_w1"]
        vals["ffn_b1"] = bp["ffn_b1"].reshape(1, c)
        vals["ffn_w2"] = bp["ffn_w2"]
        vals["ffn_b2"] = bp["ffn_b2"].reshape(1, c)
        for k in _BLOCK_KEYS:
            stacked[k].append(vals[k])
    return {k: jnp.stack(v, axis=0) for k, v in stacked.items()}


def model_forward(x, params, *, ksize, stride, heads):
    b, cin, h, w = x.shape
    emb = params["conv_w"].shape[0]

    # im2col for the (1, ksize)/(1, stride) Conv2d (cheap one-time glue on raw input)
    pad = ksize // 2 - 1
    xp = jnp.pad(x, ((0, 0), (0, 0), (0, 0), (pad, pad)))
    wout = (w + 2 * pad - ksize) // stride + 1
    idx = jnp.arange(wout)[:, None] * stride + jnp.arange(ksize)[None, :]
    patches = xp[:, :, :, idx]                                    # (B, Cin, H, Wout, K)
    hw = h * wout
    patches = jnp.transpose(patches, (0, 2, 3, 1, 4)).reshape(b, hw, cin * ksize)
    conv_w = params["conv_w"].reshape(emb, cin * ksize).T         # (Cin*K, EMB)

    l = hw + 1
    lt = hw
    lr = (lt + 2 * 3 - 7) // 4 + 1                                # DSconv reduced length
    dsel = (jnp.arange(lt)[None, :] == 4 * jnp.arange(lr)[:, None]).astype(jnp.float32)

    cls = params["cls_token"].reshape(1, emb)
    pos = params["pos_enc"][:l]
    blk = _prepare_block_params(params["blocks"], emb)

    mlp_g = params["mlp_ln"]["g"].reshape(1, emb)
    mlp_b = params["mlp_ln"]["b"].reshape(1, emb)
    mlp_w = params["mlp_w"]
    class_num = mlp_w.shape[1]
    mlp_bias = params["mlp_b"].reshape(1, class_num)

    inputs = [patches, conv_w, cls, pos, dsel, mlp_g, mlp_b, mlp_w, mlp_bias]
    inputs += [blk[k] for k in _BLOCK_KEYS]

    def _const_spec(arr):
        zeros = (0,) * arr.ndim
        return pl.BlockSpec(arr.shape, lambda i: zeros)

    in_specs = [pl.BlockSpec((1, hw, cin * ksize), lambda i: (i, 0, 0))]
    in_specs += [_const_spec(a) for a in inputs[1:]]

    num_blocks = len(params["blocks"])
    out = pl.pallas_call(
        functools.partial(_fused_forward_kernel, num_blocks=num_blocks, heads=heads),
        grid=(b,),
        in_specs=in_specs,
        out_specs=pl.BlockSpec((1, 1, class_num), lambda i: (i, 0, 0)),
        out_shape=jax.ShapeDtypeStruct((b, 1, class_num), jnp.float32),
        compiler_params=pltpu.CompilerParams(dimension_semantics=("parallel",)),
    )(*inputs)
    return out.reshape(b, class_num)


# ---------------------------------------------------------------------------
# main
# ---------------------------------------------------------------------------

if __name__ == "__main__":
    # small shapes consistent with the module (in_channels=3, h, w, emb_dim, heads)
    B, CIN, H, W = 2, 3, 2, 64
    EMB, KSIZE, STRIDE = 32, 6, 4
    CLASS_NUM, NUM_BLOCKS, HEADS = 3, 2, 4

    key = jax.random.PRNGKey(0)
    kx, kp = jax.random.split(key)
    x = jax.random.normal(kx, (B, CIN, H, W), dtype=jnp.float32)
    params = init_params(kp, CIN, EMB, KSIZE, CLASS_NUM, NUM_BLOCKS)

    fwd = jax.jit(functools.partial(model_forward, ksize=KSIZE, stride=STRIDE, heads=HEADS))
    pred = fwd(x, params)
    jax.block_until_ready(pred)
    assert pred.shape == (B, CLASS_NUM)
    assert bool(jnp.all(jnp.abs(jnp.sum(pred, axis=-1) - 1.0) < 1e-4))
    print("KERNEL_OK")
</pallas_src>

<mosaic_0001>
module attributes {stable_mosaic.version = 11 : i64} {
  func.func @_fused_forward_kernel(%arg0: i32, %arg1: memref<1x32x18xf32, #tpu.memory_space<vmem>>, %arg2: memref<18x32xf32, #tpu.memory_space<vmem>>, %arg3: memref<1x32xf32, #tpu.memory_space<vmem>>, %arg4: memref<33x32xf32, #tpu.memory_space<vmem>>, %arg5: memref<8x32xf32, #tpu.memory_space<vmem>>, %arg6: memref<1x32xf32, #tpu.memory_space<vmem>>, %arg7: memref<1x32xf32, #tpu.memory_space<vmem>>, %arg8: memref<32x3xf32, #tpu.memory_space<vmem>>, %arg9: memref<1x3xf32, #tpu.memory_space<vmem>>, %arg10: memref<2x1x32xf32, #tpu.memory_space<vmem>>, %arg11: memref<2x1x32xf32, #tpu.memory_space<vmem>>, %arg12: memref<2x1x32xf32, #tpu.memory_space<vmem>>, %arg13: memref<2x1x32xf32, #tpu.memory_space<vmem>>, %arg14: memref<2x1x32xf32, #tpu.memory_space<vmem>>, %arg15: memref<2x1x32xf32, #tpu.memory_space<vmem>>, %arg16: memref<2x1x32xf32, #tpu.memory_space<vmem>>, %arg17: memref<2x1x32xf32, #tpu.memory_space<vmem>>, %arg18: memref<2x7x32xf32, #tpu.memory_space<vmem>>, %arg19: memref<2x1x32xf32, #tpu.memory_space<vmem>>, %arg20: memref<2x32x32xf32, #tpu.memory_space<vmem>>, %arg21: memref<2x1x32xf32, #tpu.memory_space<vmem>>, %arg22: memref<2x1x32xf32, #tpu.memory_space<vmem>>, %arg23: memref<2x1x32xf32, #tpu.memory_space<vmem>>, %arg24: memref<2x1x32xf32, #tpu.memory_space<vmem>>, %arg25: memref<2x1x32xf32, #tpu.memory_space<vmem>>, %arg26: memref<2x1x32xf32, #tpu.memory_space<vmem>>, %arg27: memref<2x1x32xf32, #tpu.memory_space<vmem>>, %arg28: memref<2x1x32xf32, #tpu.memory_space<vmem>>, %arg29: memref<2x1x32xf32, #tpu.memory_space<vmem>>, %arg30: memref<2x32x32xf32, #tpu.memory_space<vmem>>, %arg31: memref<2x32x64xf32, #tpu.memory_space<vmem>>, %arg32: memref<2x32x32xf32, #tpu.memory_space<vmem>>, %arg33: memref<2x32x128xf32, #tpu.memory_space<vmem>>, %arg34: memref<2x1x128xf32, #tpu.memory_space<vmem>>, %arg35: memref<2x3x128xf32, #tpu.memory_space<vmem>>, %arg36: memref<2x1x128xf32, #tpu.memory_space<vmem>>, %arg37: memref<2x128x32xf32, #tpu.memory_space<vmem>>, %arg38: memref<2x1x32xf32, #tpu.memory_space<vmem>>, %arg39: memref<2x32x128xf32, #tpu.memory_space<vmem>>, %arg40: memref<2x1x128xf32, #tpu.memory_space<vmem>>, %arg41: memref<2x3x128xf32, #tpu.memory_space<vmem>>, %arg42: memref<2x1x128xf32, #tpu.memory_space<vmem>>, %arg43: memref<2x128x32xf32, #tpu.memory_space<vmem>>, %arg44: memref<2x1x32xf32, #tpu.memory_space<vmem>>, %arg45: memref<2x32x32xf32, #tpu.memory_space<vmem>>, %arg46: memref<2x1x32xf32, #tpu.memory_space<vmem>>, %arg47: memref<2x32x32xf32, #tpu.memory_space<vmem>>, %arg48: memref<2x1x32xf32, #tpu.memory_space<vmem>>, %arg49: memref<1x1x3xf32, #tpu.memory_space<vmem>>) attributes {dimension_semantics = [#tpu.dimension_semantics<parallel>], iteration_bounds = array<i64: 2>, scalar_prefetch = 0 : i64, scratch_operands = 0 : i64, tpu.core_type = #tpu.core_type<tc>, window_params = [{transform_indices = @transform_0, window_bounds = array<i64: 1, 32, 18>}, {pipeline_mode = #tpu.pipeline_mode<synchronous>, transform_indices = @transform_1, window_bounds = array<i64: 18, 32>}, {pipeline_mode = #tpu.pipeline_mode<synchronous>, transform_indices = @transform_2, window_bounds = array<i64: 1, 32>}, {pipeline_mode = #tpu.pipeline_mode<synchronous>, transform_indices = @transform_3, window_bounds = array<i64: 33, 32>}, {pipeline_mode = #tpu.pipeline_mode<synchronous>, transform_indices = @transform_4, window_bounds = array<i64: 8, 32>}, {pipeline_mode = #tpu.pipeline_mode<synchronous>, transform_indices = @transform_5, window_bounds = array<i64: 1, 32>}, {pipeline_mode = #tpu.pipeline_mode<synchronous>, transform_indices = @transform_6, window_bounds = array<i64: 1, 32>}, {pipeline_mode = #tpu.pipeline_mode<synchronous>, transform_indices = @transform_7, window_bounds = array<i64: 32, 3>}, {pipeline_mode = #tpu.pipeline_mode<synchronous>, transform_indices = @transform_8, window_bounds = array<i64: 1, 3>}, {pipeline_mode = #tpu.pipeline_mode<synchronous>, transform_indices = @transform_9, window_bounds = array<i64: 2, 1, 32>}, {pipeline_mode = #tpu.pipeline_mode<synchronous>, transform_indices = @transform_10, window_bounds = array<i64: 2, 1, 32>}, {pipeline_mode = #tpu.pipeline_mode<synchronous>, transform_indices = @transform_11, window_bounds = array<i64: 2, 1, 32>}, {pipeline_mode = #tpu.pipeline_mode<synchronous>, transform_indices = @transform_12, window_bounds = array<i64: 2, 1, 32>}, {pipeline_mode = #tpu.pipeline_mode<synchronous>, transform_indices = @transform_13, window_bounds = array<i64: 2, 1, 32>}, {pipeline_mode = #tpu.pipeline_mode<synchronous>, transform_indices = @transform_14, window_bounds = array<i64: 2, 1, 32>}, {pipeline_mode = #tpu.pipeline_mode<synchronous>, transform_indices = @transform_15, window_bounds = array<i64: 2, 1, 32>}, {pipeline_mode = #tpu.pipeline_mode<synchronous>, transform_indices = @transform_16, window_bounds = array<i64: 2, 1, 32>}, {pipeline_mode = #tpu.pipeline_mode<synchronous>, transform_indices = @transform_17, window_bounds = array<i64: 2, 7, 32>}, {pipeline_mode = #tpu.pipeline_mode<synchronous>, transform_indices = @transform_18, window_bounds = array<i64: 2, 1, 32>}, {pipeline_mode = #tpu.pipeline_mode<synchronous>, transform_indices = @transform_19, window_bounds = array<i64: 2, 32, 32>}, {pipeline_mode = #tpu.pipeline_mode<synchronous>, transform_indices = @transform_20, window_bounds = array<i64: 2, 1, 32>}, {pipeline_mode = #tpu.pipeline_mode<synchronous>, transform_indices = @transform_21, window_bounds = array<i64: 2, 1, 32>}, {pipeline_mode = #tpu.pipeline_mode<synchronous>, transform_indices = @transform_22, window_bounds = array<i64: 2, 1, 32>}, {pipeline_mode = #tpu.pipeline_mode<synchronous>, transform_indices = @transform_23, window_bounds = array<i64: 2, 1, 32>}, {pipeline_mode = #tpu.pipeline_mode<synchronous>, transform_indices = @transform_24, window_bounds = array<i64: 2, 1, 32>}, {pipeline_mode = #tpu.pipeline_mode<synchronous>, transform_indices = @transform_25, window_bounds = array<i64: 2, 1, 32>}, {pipeline_mode = #tpu.pipeline_mode<synchronous>, transform_indices = @transform_26, window_bounds = array<i64: 2, 1, 32>}, {pipeline_mode = #tpu.pipeline_mode<synchronous>, transform_indices = @transform_27, window_bounds = array<i64: 2, 1, 32>}, {pipeline_mode = #tpu.pipeline_mode<synchronous>, transform_indices = @transform_28, window_bounds = array<i64: 2, 1, 32>}, {pipeline_mode = #tpu.pipeline_mode<synchronous>, transform_indices = @transform_29, window_bounds = array<i64: 2, 32, 32>}, {pipeline_mode = #tpu.pipeline_mode<synchronous>, transform_indices = @transform_30, window_bounds = array<i64: 2, 32, 64>}, {pipeline_mode = #tpu.pipeline_mode<synchronous>, transform_indices = @transform_31, window_bounds = array<i64: 2, 32, 32>}, {pipeline_mode = #tpu.pipeline_mode<synchronous>, transform_indices = @transform_32, window_bounds = array<i64: 2, 32, 128>}, {pipeline_mode = #tpu.pipeline_mode<synchronous>, transform_indices = @transform_33, window_bounds = array<i64: 2, 1, 128>}, {pipeline_mode = #tpu.pipeline_mode<synchronous>, transform_indices = @transform_34, window_bounds = array<i64: 2, 3, 128>}, {pipeline_mode = #tpu.pipeline_mode<synchronous>, transform_indices = @transform_35, window_bounds = array<i64: 2, 1, 128>}, {pipeline_mode = #tpu.pipeline_mode<synchronous>, transform_indices = @transform_36, window_bounds = array<i64: 2, 128, 32>}, {pipeline_mode = #tpu.pipeline_mode<synchronous>, transform_indices = @transform_37, window_bounds = array<i64: 2, 1, 32>}, {pipeline_mode = #tpu.pipeline_mode<synchronous>, transform_indices = @transform_38, window_bounds = array<i64: 2, 32, 128>}, {pipeline_mode = #tpu.pipeline_mode<synchronous>, transform_indices = @transform_39, window_bounds = array<i64: 2, 1, 128>}, {pipeline_mode = #tpu.pipeline_mode<synchronous>, transform_indices = @transform_40, window_bounds = array<i64: 2, 3, 128>}, {pipeline_mode = #tpu.pipeline_mode<synchronous>, transform_indices = @transform_41, window_bounds = array<i64: 2, 1, 128>}, {pipeline_mode = #tpu.pipeline_mode<synchronous>, transform_indices = @transform_42, window_bounds = array<i64: 2, 128, 32>}, {pipeline_mode = #tpu.pipeline_mode<synchronous>, transform_indices = @transform_43, window_bounds = array<i64: 2, 1, 32>}, {pipeline_mode = #tpu.pipeline_mode<synchronous>, transform_indices = @transform_44, window_bounds = array<i64: 2, 32, 32>}, {pipeline_mode = #tpu.pipeline_mode<synchronous>, transform_indices = @transform_45, window_bounds = array<i64: 2, 1, 32>}, {pipeline_mode = #tpu.pipeline_mode<synchronous>, transform_indices = @transform_46, window_bounds = array<i64: 2, 32, 32>}, {pipeline_mode = #tpu.pipeline_mode<synchronous>, transform_indices = @transform_47, window_bounds = array<i64: 2, 1, 32>}, {transform_indices = @transform_48, window_bounds = array<i64: 1, 1, 3>}]} {
    %c0 = arith.constant 0 : index
    %c0_0 = arith.constant 0 : index
    %0 = vector.load %arg5[%c0, %c0_0] : memref<8x32xf32, #tpu.memory_space<vmem>>, vector<8x32xf32>
    %c0_1 = arith.constant 0 : index
    %c0_2 = arith.constant 0 : index
    %c0_3 = arith.constant 0 : index
    %1 = vector.load %arg1[%c0_1, %c0_2, %c0_3] : memref<1x32x18xf32, #tpu.memory_space<vmem>>, vector<1x32x18xf32>
    %2 = vector.shape_cast %1 : vector<1x32x18xf32> to vector<32x18xf32>
    %c0_4 = arith.constant 0 : index
    %c0_5 = arith.constant 0 : index
    %3 = vector.load %arg2[%c0_4, %c0_5] : memref<18x32xf32, #tpu.memory_space<vmem>>, vector<18x32xf32>
    %4 = arith.truncf %2 : vector<32x18xf32> to vector<32x18xbf16>
    %5 = arith.truncf %3 : vector<18x32xf32> to vector<18x32xbf16>
    %cst = arith.constant dense<0.000000e+00> : vector<32x32xf32>
    %6 = tpu.matmul %4, %5, %cst {dimension_numbers = #tpu.dot_dimension_numbers<[1], [0], [0], [1], [0, 0, 1, 1], [], []>} : vector<32x18xbf16>, vector<18x32xbf16>, vector<32x32xf32> -> vector<32x32xf32>
    %c0_6 = arith.constant 0 : index
    %c0_7 = arith.constant 0 : index
    %7 = vector.load %arg3[%c0_6, %c0_7] : memref<1x32xf32, #tpu.memory_space<vmem>>, vector<1x32xf32>
    %8 = tpu.concatenate %7, %6 in 0 : vector<1x32xf32>, vector<32x32xf32> -> vector<33x32xf32>
    %c0_8 = arith.constant 0 : index
    %c0_9 = arith.constant 0 : index
    %9 = vector.load %arg4[%c0_8, %c0_9] : memref<33x32xf32, #tpu.memory_space<vmem>>, vector<33x32xf32>
    %10 = arith.addf %8, %9 : vector<33x32xf32>
    %c0_10 = arith.constant 0 : index
    %c0_11 = arith.constant 0 : index
    %c0_12 = arith.constant 0 : index
    %11 = vector.load %arg10[%c0_10, %c0_11, %c0_12] : memref<2x1x32xf32, #tpu.memory_space<vmem>>, vector<1x1x32xf32>
    %12 = vector.shape_cast %11 : vector<1x1x32xf32> to vector<1x32xf32>
    %c0_13 = arith.constant 0 : index
    %c0_14 = arith.constant 0 : index
    %c0_15 = arith.constant 0 : index
    %13 = vector.load %arg11[%c0_13, %c0_14, %c0_15] : memref<2x1x32xf32, #tpu.memory_space<vmem>>, vector<1x1x32xf32>
    %14 = vector.shape_cast %13 : vector<1x1x32xf32> to vector<1x32xf32>
    %c0_16 = arith.constant 0 : index
    %c0_17 = arith.constant 0 : index
    %c0_18 = arith.constant 0 : index
    %15 = vector.load %arg12[%c0_16, %c0_17, %c0_18] : memref<2x1x32xf32, #tpu.memory_space<vmem>>, vector<1x1x32xf32>
    %16 = vector.shape_cast %15 : vector<1x1x32xf32> to vector<1x32xf32>
    %c0_19 = arith.constant 0 : index
    %c0_20 = arith.constant 0 : index
    %c0_21 = arith.constant 0 : index
    %17 = vector.load %arg13[%c0_19, %c0_20, %c0_21] : memref<2x1x32xf32, #tpu.memory_space<vmem>>, vector<1x1x32xf32>
    %18 = vector.shape_cast %17 : vector<1x1x32xf32> to vector<1x32xf32>
    %c0_22 = arith.constant 0 : index
    %c0_23 = arith.constant 0 : index
    %c0_24 = arith.constant 0 : index
    %19 = vector.load %arg14[%c0_22, %c0_23, %c0_24] : memref<2x1x32xf32, #tpu.memory_space<vmem>>, vector<1x1x32xf32>
    %20 = vector.shape_cast %19 : vector<1x1x32xf32> to vector<1x32xf32>
    %c0_25 = arith.constant 0 : index
    %c0_26 = arith.constant 0 : index
    %c0_27 = arith.constant 0 : index
    %21 = vector.load %arg15[%c0_25, %c0_26, %c0_27] : memref<2x1x32xf32, #tpu.memory_space<vmem>>, vector<1x1x32xf32>
    %22 = vector.shape_cast %21 : vector<1x1x32xf32> to vector<1x32xf32>
    %c0_28 = arith.constant 0 : index
    %c0_29 = arith.constant 0 : index
    %c0_30 = arith.constant 0 : index
    %23 = vector.load %arg16[%c0_28, %c0_29, %c0_30] : memref<2x1x32xf32, #tpu.memory_space<vmem>>, vector<1x1x32xf32>
    %24 = vector.shape_cast %23 : vector<1x1x32xf32> to vector<1x32xf32>
    %c0_31 = arith.constant 0 : index
    %c0_32 = arith.constant 0 : index
    %c0_33 = arith.constant 0 : index
    %25 = vector.load %arg17[%c0_31, %c0_32, %c0_33] : memref<2x1x32xf32, #tpu.memory_space<vmem>>, vector<1x1x32xf32>
    %26 = vector.shape_cast %25 : vector<1x1x32xf32> to vector<1x32xf32>
    %c0_34 = arith.constant 0 : index
    %c0_35 = arith.constant 0 : index
    %c0_36 = arith.constant 0 : index
    %27 = vector.load %arg18[%c0_34, %c0_35, %c0_36] : memref<2x7x32xf32, #tpu.memory_space<vmem>>, vector<1x7x32xf32>
    %28 = vector.shape_cast %27 : vector<1x7x32xf32> to vector<7x32xf32>
    %c0_37 = arith.constant 0 : index
    %c0_38 = arith.constant 0 : index
    %c0_39 = arith.constant 0 : index
    %29 = vector.load %arg19[%c0_37, %c0_38, %c0_39] : memref<2x1x32xf32, #tpu.memory_space<vmem>>, vector<1x1x32xf32>
    %30 = vector.shape_cast %29 : vector<1x1x32xf32> to vector<1x32xf32>
    %c0_40 = arith.constant 0 : index
    %c0_41 = arith.constant 0 : index
    %c0_42 = arith.constant 0 : index
    %31 = vector.load %arg20[%c0_40, %c0_41, %c0_42] : memref<2x32x32xf32, #tpu.memory_space<vmem>>, vector<1x32x32xf32>
    %32 = vector.shape_cast %31 : vector<1x32x32xf32> to vector<32x32xf32>
    %c0_43 = arith.constant 0 : index
    %c0_44 = arith.constant 0 : index
    %c0_45 = arith.constant 0 : index
    %33 = vector.load %arg21[%c0_43, %c0_44, %c0_45] : memref<2x1x32xf32, #tpu.memory_space<vmem>>, vector<1x1x32xf32>
    %34 = vector.shape_cast %33 : vector<1x1x32xf32> to vector<1x32xf32>
    %c0_46 = arith.constant 0 : index
    %c0_47 = arith.constant 0 : index
    %c0_48 = arith.constant 0 : index
    %35 = vector.load %arg22[%c0_46, %c0_47, %c0_48] : memref<2x1x32xf32, #tpu.memory_space<vmem>>, vector<1x1x32xf32>
    %36 = vector.shape_cast %35 : vector<1x1x32xf32> to vector<1x32xf32>
    %c0_49 = arith.constant 0 : index
    %c0_50 = arith.constant 0 : index
    %c0_51 = arith.constant 0 : index
    %37 = vector.load %arg23[%c0_49, %c0_50, %c0_51] : memref<2x1x32xf32, #tpu.memory_space<vmem>>, vector<1x1x32xf32>
    %38 = vector.shape_cast %37 : vector<1x1x32xf32> to vector<1x32xf32>
    %c0_52 = arith.constant 0 : index
    %c0_53 = arith.constant 0 : index
    %c0_54 = arith.constant 0 : index
    %39 = vector.load %arg24[%c0_52, %c0_53, %c0_54] : memref<2x1x32xf32, #tpu.memory_space<vmem>>, vector<1x1x32xf32>
    %40 = vector.shape_cast %39 : vector<1x1x32xf32> to vector<1x32xf32>
    %c0_55 = arith.constant 0 : index
    %c0_56 = arith.constant 0 : index
    %c0_57 = arith.constant 0 : index
    %41 = vector.load %arg25[%c0_55, %c0_56, %c0_57] : memref<2x1x32xf32, #tpu.memory_space<vmem>>, vector<1x1x32xf32>
    %42 = vector.shape_cast %41 : vector<1x1x32xf32> to vector<1x32xf32>
    %c0_58 = arith.constant 0 : index
    %c0_59 = arith.constant 0 : index
    %c0_60 = arith.constant 0 : index
    %43 = vector.load %arg26[%c0_58, %c0_59, %c0_60] : memref<2x1x32xf32, #tpu.memory_space<vmem>>, vector<1x1x32xf32>
    %44 = vector.shape_cast %43 : vector<1x1x32xf32> to vector<1x32xf32>
    %c0_61 = arith.constant 0 : index
    %c0_62 = arith.constant 0 : index
    %c0_63 = arith.constant 0 : index
    %45 = vector.load %arg27[%c0_61, %c0_62, %c0_63] : memref<2x1x32xf32, #tpu.memory_space<vmem>>, vector<1x1x32xf32>
    %46 = vector.shape_cast %45 : vector<1x1x32xf32> to vector<1x32xf32>
    %c0_64 = arith.constant 0 : index
    %c0_65 = arith.constant 0 : index
    %c0_66 = arith.constant 0 : index
    %47 = vector.load %arg28[%c0_64, %c0_65, %c0_66] : memref<2x1x32xf32, #tpu.memory_space<vmem>>, vector<1x1x32xf32>
    %48 = vector.shape_cast %47 : vector<1x1x32xf32> to vector<1x32xf32>
    %c0_67 = arith.constant 0 : index
    %c0_68 = arith.constant 0 : index
    %c0_69 = arith.constant 0 : index
    %49 = vector.load %arg29[%c0_67, %c0_68, %c0_69] : memref<2x1x32xf32, #tpu.memory_space<vmem>>, vector<1x1x32xf32>
    %50 = vector.shape_cast %49 : vector<1x1x32xf32> to vector<1x32xf32>
    %c0_70 = arith.constant 0 : index
    %c0_71 = arith.constant 0 : index
    %c0_72 = arith.constant 0 : index
    %51 = vector.load %arg30[%c0_70, %c0_71, %c0_72] : memref<2x32x32xf32, #tpu.memory_space<vmem>>, vector<1x32x32xf32>
    %52 = vector.shape_cast %51 : vector<1x32x32xf32> to vector<32x32xf32>
    %c0_73 = arith.constant 0 : index
    %c0_74 = arith.constant 0 : index
    %c0_75 = arith.constant 0 : index
    %53 = vector.load %arg31[%c0_73, %c0_74, %c0_75] : memref<2x32x64xf32, #tpu.memory_space<vmem>>, vector<1x32x64xf32>
    %54 = vector.shape_cast %53 : vector<1x32x64xf32> to vector<32x64xf32>
    %c0_76 = arith.constant 0 : index
    %c0_77 = arith.constant 0 : index
    %c0_78 = arith.constant 0 : index
    %55 = vector.load %arg32[%c0_76, %c0_77, %c0_78] : memref<2x32x32xf32, #tpu.memory_space<vmem>>, vector<1x32x32xf32>
    %56 = vector.shape_cast %55 : vector<1x32x32xf32> to vector<32x32xf32>
    %c0_79 = arith.constant 0 : index
    %c0_80 = arith.constant 0 : index
    %c0_81 = arith.constant 0 : index
    %57 = vector.load %arg33[%c0_79, %c0_80, %c0_81] : memref<2x32x128xf32, #tpu.memory_space<vmem>>, vector<1x32x128xf32>
    %58 = vector.shape_cast %57 : vector<1x32x128xf32> to vector<32x128xf32>
    %c0_82 = arith.constant 0 : index
    %c0_83 = arith.constant 0 : index
    %c0_84 = arith.constant 0 : index
    %59 = vector.load %arg34[%c0_82, %c0_83, %c0_84] : memref<2x1x128xf32, #tpu.memory_space<vmem>>, vector<1x1x128xf32>
    %60 = vector.shape_cast %59 : vector<1x1x128xf32> to vector<1x128xf32>
    %c0_85 = arith.constant 0 : index
    %c0_86 = arith.constant 0 : index
    %c0_87 = arith.constant 0 : index
    %61 = vector.load %arg35[%c0_85, %c0_86, %c0_87] : memref<2x3x128xf32, #tpu.memory_space<vmem>>, vector<1x3x128xf32>
    %62 = vector.shape_cast %61 : vector<1x3x128xf32> to vector<3x128xf32>
    %c0_88 = arith.constant 0 : index
    %c0_89 = arith.constant 0 : index
    %c0_90 = arith.constant 0 : index
    %63 = vector.load %arg36[%c0_88, %c0_89, %c0_90] : memref<2x1x128xf32, #tpu.memory_space<vmem>>, vector<1x1x128xf32>
    %64 = vector.shape_cast %63 : vector<1x1x128xf32> to vector<1x128xf32>
    %c0_91 = arith.constant 0 : index
    %c0_92 = arith.constant 0 : index
    %c0_93 = arith.constant 0 : index
    %65 = vector.load %arg37[%c0_91, %c0_92, %c0_93] : memref<2x128x32xf32, #tpu.memory_space<vmem>>, vector<1x128x32xf32>
    %66 = vector.shape_cast %65 : vector<1x128x32xf32> to vector<128x32xf32>
    %c0_94 = arith.constant 0 : index
    %c0_95 = arith.constant 0 : index
    %c0_96 = arith.constant 0 : index
    %67 = vector.load %arg38[%c0_94, %c0_95, %c0_96] : memref<2x1x32xf32, #tpu.memory_space<vmem>>, vector<1x1x32xf32>
    %68 = vector.shape_cast %67 : vector<1x1x32xf32> to vector<1x32xf32>
    %c0_97 = arith.constant 0 : index
    %c0_98 = arith.constant 0 : index
    %c0_99 = arith.constant 0 : index
    %69 = vector.load %arg39[%c0_97, %c0_98, %c0_99] : memref<2x32x128xf32, #tpu.memory_space<vmem>>, vector<1x32x128xf32>
    %70 = vector.shape_cast %69 : vector<1x32x128xf32> to vector<32x128xf32>
    %c0_100 = arith.constant 0 : index
    %c0_101 = arith.constant 0 : index
    %c0_102 = arith.constant 0 : index
    %71 = vector.load %arg40[%c0_100, %c0_101, %c0_102] : memref<2x1x128xf32, #tpu.memory_space<vmem>>, vector<1x1x128xf32>
    %72 = vector.shape_cast %71 : vector<1x1x128xf32> to vector<1x128xf32>
    %c0_103 = arith.constant 0 : index
    %c0_104 = arith.constant 0 : index
    %c0_105 = arith.constant 0 : index
    %73 = vector.load %arg41[%c0_103, %c0_104, %c0_105] : memref<2x3x128xf32, #tpu.memory_space<vmem>>, vector<1x3x128xf32>
    %74 = vector.shape_cast %73 : vector<1x3x128xf32> to vector<3x128xf32>
    %c0_106 = arith.constant 0 : index
    %c0_107 = arith.constant 0 : index
    %c0_108 = arith.constant 0 : index
    %75 = vector.load %arg42[%c0_106, %c0_107, %c0_108] : memref<2x1x128xf32, #tpu.memory_space<vmem>>, vector<1x1x128xf32>
    %76 = vector.shape_cast %75 : vector<1x1x128xf32> to vector<1x128xf32>
    %c0_109 = arith.constant 0 : index
    %c0_110 = arith.constant 0 : index
    %c0_111 = arith.constant 0 : index
    %77 = vector.load %arg43[%c0_109, %c0_110, %c0_111] : memref<2x128x32xf32, #tpu.memory_space<vmem>>, vector<1x128x32xf32>
    %78 = vector.shape_cast %77 : vector<1x128x32xf32> to vector<128x32xf32>
    %c0_112 = arith.constant 0 : index
    %c0_113 = arith.constant 0 : index
    %c0_114 = arith.constant 0 : index
    %79 = vector.load %arg44[%c0_112, %c0_113, %c0_114] : memref<2x1x32xf32, #tpu.memory_space<vmem>>, vector<1x1x32xf32>
    %80 = vector.shape_cast %79 : vector<1x1x32xf32> to vector<1x32xf32>
    %c0_115 = arith.constant 0 : index
    %c0_116 = arith.constant 0 : index
    %c0_117 = arith.constant 0 : index
    %81 = vector.load %arg45[%c0_115, %c0_116, %c0_117] : memref<2x32x32xf32, #tpu.memory_space<vmem>>, vector<1x32x32xf32>
    %82 = vector.shape_cast %81 : vector<1x32x32xf32> to vector<32x32xf32>
    %c0_118 = arith.constant 0 : index
    %c0_119 = arith.constant 0 : index
    %c0_120 = arith.constant 0 : index
    %83 = vector.load %arg46[%c0_118, %c0_119, %c0_120] : memref<2x1x32xf32, #tpu.memory_space<vmem>>, vector<1x1x32xf32>
    %84 = vector.shape_cast %83 : vector<1x1x32xf32> to vector<1x32xf32>
    %c0_121 = arith.constant 0 : index
    %c0_122 = arith.constant 0 : index
    %c0_123 = arith.constant 0 : index
    %85 = vector.load %arg47[%c0_121, %c0_122, %c0_123] : memref<2x32x32xf32, #tpu.memory_space<vmem>>, vector<1x32x32xf32>
    %86 = vector.shape_cast %85 : vector<1x32x32xf32> to vector<32x32xf32>
    %c0_124 = arith.constant 0 : index
    %c0_125 = arith.constant 0 : index
    %c0_126 = arith.constant 0 : index
    %87 = vector.load %arg48[%c0_124, %c0_125, %c0_126] : memref<2x1x32xf32, #tpu.memory_space<vmem>>, vector<1x1x32xf32>
    %88 = vector.shape_cast %87 : vector<1x1x32xf32> to vector<1x32xf32>
    %cst_127 = arith.constant dense<0.000000e+00> : vector<33xf32>
    %89 = vector.multi_reduction <add>, %10, %cst_127 [1] : vector<33x32xf32> to vector<33xf32>
    %90 = vector.shape_cast %89 : vector<33xf32> to vector<33x1xf32>
    %cst_128 = arith.constant 3.200000e+01 : f32
    %91 = vector.broadcast %cst_128 : f32 to vector<33x1xf32>
    %92 = arith.divf %90, %91 : vector<33x1xf32>
    %93 = vector.broadcast %92 : vector<33x1xf32> to vector<33x32xf32>
    %94 = arith.subf %10, %93 : vector<33x32xf32>
    %95 = arith.mulf %94, %94 : vector<33x32xf32>
    %cst_129 = arith.constant dense<0.000000e+00> : vector<33xf32>
    %96 = vector.multi_reduction <add>, %95, %cst_129 [1] : vector<33x32xf32> to vector<33xf32>
    %97 = vector.shape_cast %96 : vector<33xf32> to vector<33x1xf32>
    %cst_130 = arith.constant 3.200000e+01 : f32
    %98 = vector.broadcast %cst_130 : f32 to vector<33x1xf32>
    %99 = arith.divf %97, %98 : vector<33x1xf32>
    %cst_131 = arith.constant 9.99999974E-6 : f32
    %100 = vector.broadcast %cst_131 : f32 to vector<33x1xf32>
    %101 = arith.addf %99, %100 : vector<33x1xf32>
    %102 = math.rsqrt %101 : vector<33x1xf32>
    %103 = vector.broadcast %102 : vector<33x1xf32> to vector<33x32xf32>
    %104 = arith.mulf %94, %103 : vector<33x32xf32>
    %105 = vector.broadcast %12 : vector<1x32xf32> to vector<33x32xf32>
    %106 = arith.mulf %104, %105 : vector<33x32xf32>
    %107 = vector.broadcast %14 : vector<1x32xf32> to vector<33x32xf32>
    %108 = arith.addf %106, %107 : vector<33x32xf32>
    %109 = vector.extract_strided_slice %108 {offsets = [1, 0], sizes = [32, 32], strides = [1, 1]} : vector<33x32xf32> to vector<32x32xf32>
    %cst_132 = arith.constant 0.000000e+00 : f32
    %110 = vector.broadcast %cst_132 : f32 to vector<3x32xf32>
    %111 = tpu.concatenate %110, %109, %110 in 0 : vector<3x32xf32>, vector<32x32xf32>, vector<3x32xf32> -> vector<38x32xf32>
    %112 = vector.extract_strided_slice %111 {offsets = [0, 0], sizes = [32, 32], strides = [1, 1]} : vector<38x32xf32> to vector<32x32xf32>
    %113 = vector.extract_strided_slice %28 {offsets = [0, 0], sizes = [1, 32], strides = [1, 1]} : vector<7x32xf32> to vector<1x32xf32>
    %114 = vector.broadcast %113 : vector<1x32xf32> to vector<32x32xf32>
    %115 = arith.mulf %112, %114 : vector<32x32xf32>
    %116 = vector.extract_strided_slice %111 {offsets = [1, 0], sizes = [32, 32], strides = [1, 1]} : vector<38x32xf32> to vector<32x32xf32>
    %117 = vector.extract_strided_slice %28 {offsets = [1, 0], sizes = [1, 32], strides = [1, 1]} : vector<7x32xf32> to vector<1x32xf32>
    %118 = vector.broadcast %117 : vector<1x32xf32> to vector<32x32xf32>
    %119 = arith.mulf %116, %118 : vector<32x32xf32>
    %120 = arith.addf %115, %119 : vector<32x32xf32>
    %121 = vector.extract_strided_slice %111 {offsets = [2, 0], sizes = [32, 32], strides = [1, 1]} : vector<38x32xf32> to vector<32x32xf32>
    %122 = vector.extract_strided_slice %28 {offsets = [2, 0], sizes = [1, 32], strides = [1, 1]} : vector<7x32xf32> to vector<1x32xf32>
    %123 = vector.broadcast %122 : vector<1x32xf32> to vector<32x32xf32>
    %124 = arith.mulf %121, %123 : vector<32x32xf32>
    %125 = arith.addf %120, %124 : vector<32x32xf32>
    %126 = vector.extract_strided_slice %111 {offsets = [3, 0], sizes = [32, 32], strides = [1, 1]} : vector<38x32xf32> to vector<32x32xf32>
    %127 = vector.extract_strided_slice %28 {offsets = [3, 0], sizes = [1, 32], strides = [1, 1]} : vector<7x32xf32> to vector<1x32xf32>
    %128 = vector.broadcast %127 : vector<1x32xf32> to vector<32x32xf32>
    %129 = arith.mulf %126, %128 : vector<32x32xf32>
    %130 = arith.addf %125, %129 : vector<32x32xf32>
    %131 = vector.extract_strided_slice %111 {offsets = [4, 0], sizes = [32, 32], strides = [1, 1]} : vector<38x32xf32> to vector<32x32xf32>
    %132 = vector.extract_strided_slice %28 {offsets = [4, 0], sizes = [1, 32], strides = [1, 1]} : vector<7x32xf32> to vector<1x32xf32>
    %133 = vector.broadcast %132 : vector<1x32xf32> to vector<32x32xf32>
    %134 = arith.mulf %131, %133 : vector<32x32xf32>
    %135 = arith.addf %130, %134 : vector<32x32xf32>
    %136 = vector.extract_strided_slice %111 {offsets = [5, 0], sizes = [32, 32], strides = [1, 1]} : vector<38x32xf32> to vector<32x32xf32>
    %137 = vector.extract_strided_slice %28 {offsets = [5, 0], sizes = [1, 32], strides = [1, 1]} : vector<7x32xf32> to vector<1x32xf32>
    %138 = vector.broadcast %137 : vector<1x32xf32> to vector<32x32xf32>
    %139 = arith.mulf %136, %138 : vector<32x32xf32>
    %140 = arith.addf %135, %139 : vector<32x32xf32>
    %141 = vector.extract_strided_slice %111 {offsets = [6, 0], sizes = [32, 32], strides = [1, 1]} : vector<38x32xf32> to vector<32x32xf32>
    %142 = vector.extract_strided_slice %28 {offsets = [6, 0], sizes = [1, 32], strides = [1, 1]} : vector<7x32xf32> to vector<1x32xf32>
    %143 = vector.broadcast %142 : vector<1x32xf32> to vector<32x32xf32>
    %144 = arith.mulf %141, %143 : vector<32x32xf32>
    %145 = arith.addf %140, %144 : vector<32x32xf32>
    %cst_133 = arith.constant dense<0.000000e+00> : vector<8x32xf32>
    %146 = tpu.matmul %0, %145, %cst_133 {dimension_numbers = #tpu.dot_dimension_numbers<[1], [0], [0], [1], [0, 0, 1, 1], [], []>} : vector<8x32xf32>, vector<32x32xf32>, vector<8x32xf32> -> vector<8x32xf32>
    %147 = vector.broadcast %30 : vector<1x32xf32> to vector<8x32xf32>
    %148 = arith.addf %146, %147 : vector<8x32xf32>
    %149 = arith.truncf %148 : vector<8x32xf32> to vector<8x32xbf16>
    %150 = arith.truncf %32 : vector<32x32xf32> to vector<32x32xbf16>
    %cst_134 = arith.constant dense<0.000000e+00> : vector<8x32xf32>
    %151 = tpu.matmul %149, %150, %cst_134 {dimension_numbers = #tpu.dot_dimension_numbers<[1], [0], [0], [1], [0, 0, 1, 1], [], []>} : vector<8x32xbf16>, vector<32x32xbf16>, vector<8x32xf32> -> vector<8x32xf32>
    %152 = vector.broadcast %34 : vector<1x32xf32> to vector<8x32xf32>
    %153 = arith.addf %151, %152 : vector<8x32xf32>
    %cst_135 = arith.constant dense<0.000000e+00> : vector<8xf32>
    %154 = vector.multi_reduction <add>, %153, %cst_135 [1] : vector<8x32xf32> to vector<8xf32>
    %155 = vector.shape_cast %154 : vector<8xf32> to vector<8x1xf32>
    %cst_136 = arith.constant 3.200000e+01 : f32
    %156 = vector.broadcast %cst_136 : f32 to vector<8x1xf32>
    %157 = arith.divf %155, %156 : vector<8x1xf32>
    %158 = vector.broadcast %157 : vector<8x1xf32> to vector<8x32xf32>
    %159 = arith.subf %153, %158 : vector<8x32xf32>
    %160 = arith.mulf %159, %159 : vector<8x32xf32>
    %cst_137 = arith.constant dense<0.000000e+00> : vector<8xf32>
    %161 = vector.multi_reduction <add>, %160, %cst_137 [1] : vector<8x32xf32> to vector<8xf32>
    %162 = vector.shape_cast %161 : vector<8xf32> to vector<8x1xf32>
    %cst_138 = arith.constant 3.200000e+01 : f32
    %163 = vector.broadcast %cst_138 : f32 to vector<8x1xf32>
    %164 = arith.divf %162, %163 : vector<8x1xf32>
    %cst_139 = arith.constant 9.99999974E-6 : f32
    %165 = vector.broadcast %cst_139 : f32 to vector<8x1xf32>
    %166 = arith.addf %164, %165 : vector<8x1xf32>
    %167 = math.rsqrt %166 : vector<8x1xf32>
    %168 = vector.broadcast %167 : vector<8x1xf32> to vector<8x32xf32>
    %169 = arith.mulf %159, %168 : vector<8x32xf32>
    %170 = vector.broadcast %36 : vector<1x32xf32> to vector<8x32xf32>
    %171 = arith.mulf %169, %170 : vector<8x32xf32>
    %172 = vector.broadcast %38 : vector<1x32xf32> to vector<8x32xf32>
    %173 = arith.addf %171, %172 : vector<8x32xf32>
    %174 = vector.extract_strided_slice %108 {offsets = [0, 0], sizes = [1, 32], strides = [1, 1]} : vector<33x32xf32> to vector<1x32xf32>
    %175 = tpu.concatenate %174, %173 in 0 : vector<1x32xf32>, vector<8x32xf32> -> vector<9x32xf32>
    %176 = arith.truncf %108 : vector<33x32xf32> to vector<33x32xbf16>
    %177 = arith.truncf %52 : vector<32x32xf32> to vector<32x32xbf16>
    %cst_140 = arith.constant dense<0.000000e+00> : vector<33x32xf32>
    %178 = tpu.matmul %176, %177, %cst_140 {dimension_numbers = #tpu.dot_dimension_numbers<[1], [0], [0], [1], [0, 0, 1, 1], [], []>} : vector<33x32xbf16>, vector<32x32xbf16>, vector<33x32xf32> -> vector<33x32xf32>
    %cst_141 = arith.constant dense<0.000000e+00> : vector<33xf32>
    %179 = vector.multi_reduction <add>, %178, %cst_141 [1] : vector<33x32xf32> to vector<33xf32>
    %180 = vector.shape_cast %179 : vector<33xf32> to vector<33x1xf32>
    %cst_142 = arith.constant 3.200000e+01 : f32
    %181 = vector.broadcast %cst_142 : f32 to vector<33x1xf32>
    %182 = arith.divf %180, %181 : vector<33x1xf32>
    %183 = vector.broadcast %182 : vector<33x1xf32> to vector<33x32xf32>
    %184 = arith.subf %178, %183 : vector<33x32xf32>
    %185 = arith.mulf %184, %184 : vector<33x32xf32>
    %cst_143 = arith.constant dense<0.000000e+00> : vector<33xf32>
    %186 = vector.multi_reduction <add>, %185, %cst_143 [1] : vector<33x32xf32> to vector<33xf32>
    %187 = vector.shape_cast %186 : vector<33xf32> to vector<33x1xf32>
    %cst_144 = arith.constant 3.200000e+01 : f32
    %188 = vector.broadcast %cst_144 : f32 to vector<33x1xf32>
    %189 = arith.divf %187, %188 : vector<33x1xf32>
    %cst_145 = arith.constant 9.99999974E-6 : f32
    %190 = vector.broadcast %cst_145 : f32 to vector<33x1xf32>
    %191 = arith.addf %189, %190 : vector<33x1xf32>
    %192 = math.rsqrt %191 : vector<33x1xf32>
    %193 = vector.broadcast %192 : vector<33x1xf32> to vector<33x32xf32>
    %194 = arith.mulf %184, %193 : vector<33x32xf32>
    %195 = vector.broadcast %40 : vector<1x32xf32> to vector<33x32xf32>
    %196 = arith.mulf %194, %195 : vector<33x32xf32>
    %197 = vector.broadcast %42 : vector<1x32xf32> to vector<33x32xf32>
    %198 = arith.addf %196, %197 : vector<33x32xf32>
    %199 = arith.truncf %175 : vector<9x32xf32> to vector<9x32xbf16>
    %200 = arith.truncf %54 : vector<32x64xf32> to vector<32x64xbf16>
    %cst_146 = arith.constant dense<0.000000e+00> : vector<9x64xf32>
    %201 = tpu.matmul %199, %200, %cst_146 {dimension_numbers = #tpu.dot_dimension_numbers<[1], [0], [0], [1], [0, 0, 1, 1], [], []>} : vector<9x32xbf16>, vector<32x64xbf16>, vector<9x64xf32> -> vector<9x64xf32>
    %202 = vector.extract_strided_slice %201 {offsets = [0, 0], sizes = [9, 32], strides = [1, 1]} : vector<9x64xf32> to vector<9x32xf32>
    %cst_147 = arith.constant dense<0.000000e+00> : vector<9xf32>
    %203 = vector.multi_reduction <add>, %202, %cst_147 [1] : vector<9x32xf32> to vector<9xf32>
    %204 = vector.shape_cast %203 : vector<9xf32> to vector<9x1xf32>
    %cst_148 = arith.constant 3.200000e+01 : f32
    %205 = vector.broadcast %cst_148 : f32 to vector<9x1xf32>
    %206 = arith.divf %204, %205 : vector<9x1xf32>
    %207 = vector.broadcast %206 : vector<9x1xf32> to vector<9x32xf32>
    %208 = arith.subf %202, %207 : vector<9x32xf32>
    %209 = arith.mulf %208, %208 : vector<9x32xf32>
    %cst_149 = arith.constant dense<0.000000e+00> : vector<9xf32>
    %210 = vector.multi_reduction <add>, %209, %cst_149 [1] : vector<9x32xf32> to vector<9xf32>
    %211 = vector.shape_cast %210 : vector<9xf32> to vector<9x1xf32>
    %cst_150 = arith.constant 3.200000e+01 : f32
    %212 = vector.broadcast %cst_150 : f32 to vector<9x1xf32>
    %213 = arith.divf %211, %212 : vector<9x1xf32>
    %cst_151 = arith.constant 9.99999974E-6 : f32
    %214 = vector.broadcast %cst_151 : f32 to vector<9x1xf32>
    %215 = arith.addf %213, %214 : vector<9x1xf32>
    %216 = math.rsqrt %215 : vector<9x1xf32>
    %217 = vector.broadcast %216 : vector<9x1xf32> to vector<9x32xf32>
    %218 = arith.mulf %208, %217 : vector<9x32xf32>
    %219 = vector.broadcast %44 : vector<1x32xf32> to vector<9x32xf32>
    %220 = arith.mulf %218, %219 : vector<9x32xf32>
    %221 = vector.broadcast %46 : vector<1x32xf32> to vector<9x32xf32>
    %222 = arith.addf %220, %221 : vector<9x32xf32>
    %223 = vector.extract_strided_slice %201 {offsets = [0, 32], sizes = [9, 32], strides = [1, 1]} : vector<9x64xf32> to vector<9x32xf32>
    %cst_152 = arith.constant dense<0.000000e+00> : vector<9xf32>
    %224 = vector.multi_reduction <add>, %223, %cst_152 [1] : vector<9x32xf32> to vector<9xf32>
    %225 = vector.shape_cast %224 : vector<9xf32> to vector<9x1xf32>
    %cst_153 = arith.constant 3.200000e+01 : f32
    %226 = vector.broadcast %cst_153 : f32 to vector<9x1xf32>
    %227 = arith.divf %225, %226 : vector<9x1xf32>
    %228 = vector.broadcast %227 : vector<9x1xf32> to vector<9x32xf32>
    %229 = arith.subf %223, %228 : vector<9x32xf32>
    %230 = arith.mulf %229, %229 : vector<9x32xf32>
    %cst_154 = arith.constant dense<0.000000e+00> : vector<9xf32>
    %231 = vector.multi_reduction <add>, %230, %cst_154 [1] : vector<9x32xf32> to vector<9xf32>
    %232 = vector.shape_cast %231 : vector<9xf32> to vector<9x1xf32>
    %cst_155 = arith.constant 3.200000e+01 : f32
    %233 = vector.broadcast %cst_155 : f32 to vector<9x1xf32>
    %234 = arith.divf %232, %233 : vector<9x1xf32>
    %cst_156 = arith.constant 9.99999974E-6 : f32
    %235 = vector.broadcast %cst_156 : f32 to vector<9x1xf32>
    %236 = arith.addf %234, %235 : vector<9x1xf32>
    %237 = math.rsqrt %236 : vector<9x1xf32>
    %238 = vector.broadcast %237 : vector<9x1xf32> to vector<9x32xf32>
    %239 = arith.mulf %229, %238 : vector<9x32xf32>
    %240 = vector.broadcast %48 : vector<1x32xf32> to vector<9x32xf32>
    %241 = arith.mulf %239, %240 : vector<9x32xf32>
    %242 = vector.broadcast %50 : vector<1x32xf32> to vector<9x32xf32>
    %243 = arith.addf %241, %242 : vector<9x32xf32>
    %244 = vector.extract_strided_slice %198 {offsets = [0, 0], sizes = [33, 8], strides = [1, 1]} : vector<33x32xf32> to vector<33x8xf32>
    %245 = vector.extract_strided_slice %222 {offsets = [0, 0], sizes = [9, 8], strides = [1, 1]} : vector<9x32xf32> to vector<9x8xf32>
    %246 = arith.truncf %244 : vector<33x8xf32> to vector<33x8xbf16>
    %247 = arith.truncf %245 : vector<9x8xf32> to vector<9x8xbf16>
    %cst_157 = arith.constant dense<0.000000e+00> : vector<33x9xf32>
    %248 = tpu.matmul %246, %247, %cst_157 {dimension_numbers = #tpu.dot_dimension_numbers<[1], [1], [0], [0], [0, 0, 1, 0], [], []>} : vector<33x8xbf16>, vector<9x8xbf16>, vector<33x9xf32> -> vector<33x9xf32>
    %cst_158 = arith.constant 0.353553385 : f32
    %249 = vector.broadcast %cst_158 : f32 to vector<33x9xf32>
    %250 = arith.mulf %248, %249 : vector<33x9xf32>
    %cst_159 = arith.constant dense<0xFF800000> : vector<33xf32>
    %251 = vector.multi_reduction <maximumf>, %250, %cst_159 [1] : vector<33x9xf32> to vector<33xf32>
    %252 = vector.shape_cast %251 : vector<33xf32> to vector<33x1xf32>
    %253 = vector.broadcast %252 : vector<33x1xf32> to vector<33x9xf32>
    %254 = arith.subf %250, %253 : vector<33x9xf32>
    %255 = math.exp %254 : vector<33x9xf32>
    %cst_160 = arith.constant dense<0.000000e+00> : vector<33xf32>
    %256 = vector.multi_reduction <add>, %255, %cst_160 [1] : vector<33x9xf32> to vector<33xf32>
    %257 = vector.shape_cast %256 : vector<33xf32> to vector<33x1xf32>
    %258 = vector.broadcast %257 : vector<33x1xf32> to vector<33x9xf32>
    %259 = arith.divf %255, %258 : vector<33x9xf32>
    %260 = vector.extract_strided_slice %243 {offsets = [0, 0], sizes = [9, 8], strides = [1, 1]} : vector<9x32xf32> to vector<9x8xf32>
    %261 = arith.truncf %259 : vector<33x9xf32> to vector<33x9xbf16>
    %262 = arith.truncf %260 : vector<9x8xf32> to vector<9x8xbf16>
    %cst_161 = arith.constant dense<0.000000e+00> : vector<33x8xf32>
    %263 = tpu.matmul %261, %262, %cst_161 {dimension_numbers = #tpu.dot_dimension_numbers<[1], [0], [0], [1], [0, 0, 1, 1], [], []>} : vector<33x9xbf16>, vector<9x8xbf16>, vector<33x8xf32> -> vector<33x8xf32>
    %264 = vector.extract_strided_slice %198 {offsets = [0, 8], sizes = [33, 8], strides = [1, 1]} : vector<33x32xf32> to vector<33x8xf32>
    %265 = vector.extract_strided_slice %222 {offsets = [0, 8], sizes = [9, 8], strides = [1, 1]} : vector<9x32xf32> to vector<9x8xf32>
    %266 = arith.truncf %264 : vector<33x8xf32> to vector<33x8xbf16>
    %267 = arith.truncf %265 : vector<9x8xf32> to vector<9x8xbf16>
    %cst_162 = arith.constant dense<0.000000e+00> : vector<33x9xf32>
    %268 = tpu.matmul %266, %267, %cst_162 {dimension_numbers = #tpu.dot_dimension_numbers<[1], [1], [0], [0], [0, 0, 1, 0], [], []>} : vector<33x8xbf16>, vector<9x8xbf16>, vector<33x9xf32> -> vector<33x9xf32>
    %cst_163 = arith.constant 0.353553385 : f32
    %269 = vector.broadcast %cst_163 : f32 to vector<33x9xf32>
    %270 = arith.mulf %268, %269 : vector<33x9xf32>
    %cst_164 = arith.constant dense<0xFF800000> : vector<33xf32>
    %271 = vector.multi_reduction <maximumf>, %270, %cst_164 [1] : vector<33x9xf32> to vector<33xf32>
    %272 = vector.shape_cast %271 : vector<33xf32> to vector<33x1xf32>
    %273 = vector.broadcast %272 : vector<33x1xf32> to vector<33x9xf32>
    %274 = arith.subf %270, %273 : vector<33x9xf32>
    %275 = math.exp %274 : vector<33x9xf32>
    %cst_165 = arith.constant dense<0.000000e+00> : vector<33xf32>
    %276 = vector.multi_reduction <add>, %275, %cst_165 [1] : vector<33x9xf32> to vector<33xf32>
    %277 = vector.shape_cast %276 : vector<33xf32> to vector<33x1xf32>
    %278 = vector.broadcast %277 : vector<33x1xf32> to vector<33x9xf32>
    %279 = arith.divf %275, %278 : vector<33x9xf32>
    %280 = vector.extract_strided_slice %243 {offsets = [0, 8], sizes = [9, 8], strides = [1, 1]} : vector<9x32xf32> to vector<9x8xf32>
    %281 = arith.truncf %279 : vector<33x9xf32> to vector<33x9xbf16>
    %282 = arith.truncf %280 : vector<9x8xf32> to vector<9x8xbf16>
    %cst_166 = arith.constant dense<0.000000e+00> : vector<33x8xf32>
    %283 = tpu.matmul %281, %282, %cst_166 {dimension_numbers = #tpu.dot_dimension_numbers<[1], [0], [0], [1], [0, 0, 1, 1], [], []>} : vector<33x9xbf16>, vector<9x8xbf16>, vector<33x8xf32> -> vector<33x8xf32>
    %284 = vector.extract_strided_slice %198 {offsets = [0, 16], sizes = [33, 8], strides = [1, 1]} : vector<33x32xf32> to vector<33x8xf32>
    %285 = vector.extract_strided_slice %222 {offsets = [0, 16], sizes = [9, 8], strides = [1, 1]} : vector<9x32xf32> to vector<9x8xf32>
    %286 = arith.truncf %284 : vector<33x8xf32> to vector<33x8xbf16>
    %287 = arith.truncf %285 : vector<9x8xf32> to vector<9x8xbf16>
    %cst_167 = arith.constant dense<0.000000e+00> : vector<33x9xf32>
    %288 = tpu.matmul %286, %287, %cst_167 {dimension_numbers = #tpu.dot_dimension_numbers<[1], [1], [0], [0], [0, 0, 1, 0], [], []>} : vector<33x8xbf16>, vector<9x8xbf16>, vector<33x9xf32> -> vector<33x9xf32>
    %cst_168 = arith.constant 0.353553385 : f32
    %289 = vector.broadcast %cst_168 : f32 to vector<33x9xf32>
    %290 = arith.mulf %288, %289 : vector<33x9xf32>
    %cst_169 = arith.constant dense<0xFF800000> : vector<33xf32>
    %291 = vector.multi_reduction <maximumf>, %290, %cst_169 [1] : vector<33x9xf32> to vector<33xf32>
    %292 = vector.shape_cast %291 : vector<33xf32> to vector<33x1xf32>
    %293 = vector.broadcast %292 : vector<33x1xf32> to vector<33x9xf32>
    %294 = arith.subf %290, %293 : vector<33x9xf32>
    %295 = math.exp %294 : vector<33x9xf32>
    %cst_170 = arith.constant dense<0.000000e+00> : vector<33xf32>
    %296 = vector.multi_reduction <add>, %295, %cst_170 [1] : vector<33x9xf32> to vector<33xf32>
    %297 = vector.shape_cast %296 : vector<33xf32> to vector<33x1xf32>
    %298 = vector.broadcast %297 : vector<33x1xf32> to vector<33x9xf32>
    %299 = arith.divf %295, %298 : vector<33x9xf32>
    %300 = vector.extract_strided_slice %243 {offsets = [0, 16], sizes = [9, 8], strides = [1, 1]} : vector<9x32xf32> to vector<9x8xf32>
    %301 = arith.truncf %299 : vector<33x9xf32> to vector<33x9xbf16>
    %302 = arith.truncf %300 : vector<9x8xf32> to vector<9x8xbf16>
    %cst_171 = arith.constant dense<0.000000e+00> : vector<33x8xf32>
    %303 = tpu.matmul %301, %302, %cst_171 {dimension_numbers = #tpu.dot_dimension_numbers<[1], [0], [0], [1], [0, 0, 1, 1], [], []>} : vector<33x9xbf16>, vector<9x8xbf16>, vector<33x8xf32> -> vector<33x8xf32>
    %304 = vector.extract_strided_slice %198 {offsets = [0, 24], sizes = [33, 8], strides = [1, 1]} : vector<33x32xf32> to vector<33x8xf32>
    %305 = vector.extract_strided_slice %222 {offsets = [0, 24], sizes = [9, 8], strides = [1, 1]} : vector<9x32xf32> to vector<9x8xf32>
    %306 = arith.truncf %304 : vector<33x8xf32> to vector<33x8xbf16>
    %307 = arith.truncf %305 : vector<9x8xf32> to vector<9x8xbf16>
    %cst_172 = arith.constant dense<0.000000e+00> : vector<33x9xf32>
    %308 = tpu.matmul %306, %307, %cst_172 {dimension_numbers = #tpu.dot_dimension_numbers<[1], [1], [0], [0], [0, 0, 1, 0], [], []>} : vector<33x8xbf16>, vector<9x8xbf16>, vector<33x9xf32> -> vector<33x9xf32>
    %cst_173 = arith.constant 0.353553385 : f32
    %309 = vector.broadcast %cst_173 : f32 to vector<33x9xf32>
    %310 = arith.mulf %308, %309 : vector<33x9xf32>
    %cst_174 = arith.constant dense<0xFF800000> : vector<33xf32>
    %311 = vector.multi_reduction <maximumf>, %310, %cst_174 [1] : vector<33x9xf32> to vector<33xf32>
    %312 = vector.shape_cast %311 : vector<33xf32> to vector<33x1xf32>
    %313 = vector.broadcast %312 : vector<33x1xf32> to vector<33x9xf32>
    %314 = arith.subf %310, %313 : vector<33x9xf32>
    %315 = math.exp %314 : vector<33x9xf32>
    %cst_175 = arith.constant dense<0.000000e+00> : vector<33xf32>
    %316 = vector.multi_reduction <add>, %315, %cst_175 [1] : vector<33x9xf32> to vector<33xf32>
    %317 = vector.shape_cast %316 : vector<33xf32> to vector<33x1xf32>
    %318 = vector.broadcast %317 : vector<33x1xf32> to vector<33x9xf32>
    %319 = arith.divf %315, %318 : vector<33x9xf32>
    %320 = vector.extract_strided_slice %243 {offsets = [0, 24], sizes = [9, 8], strides = [1, 1]} : vector<9x32xf32> to vector<9x8xf32>
    %321 = arith.truncf %319 : vector<33x9xf32> to vector<33x9xbf16>
    %322 = arith.truncf %320 : vector<9x8xf32> to vector<9x8xbf16>
    %cst_176 = arith.constant dense<0.000000e+00> : vector<33x8xf32>
    %323 = tpu.matmul %321, %322, %cst_176 {dimension_numbers = #tpu.dot_dimension_numbers<[1], [0], [0], [1], [0, 0, 1, 1], [], []>} : vector<33x9xbf16>, vector<9x8xbf16>, vector<33x8xf32> -> vector<33x8xf32>
    %324 = tpu.concatenate %263, %283, %303, %323 in 1 : vector<33x8xf32>, vector<33x8xf32>, vector<33x8xf32>, vector<33x8xf32> -> vector<33x32xf32>
    %325 = arith.truncf %324 : vector<33x32xf32> to vector<33x32xbf16>
    %326 = arith.truncf %56 : vector<32x32xf32> to vector<32x32xbf16>
    %cst_177 = arith.constant dense<0.000000e+00> : vector<33x32xf32>
    %327 = tpu.matmul %325, %326, %cst_177 {dimension_numbers = #tpu.dot_dimension_numbers<[1], [0], [0], [1], [0, 0, 1, 1], [], []>} : vector<33x32xbf16>, vector<32x32xbf16>, vector<33x32xf32> -> vector<33x32xf32>
    %328 = arith.addf %327, %10 : vector<33x32xf32>
    %cst_178 = arith.constant dense<0.000000e+00> : vector<33xf32>
    %329 = vector.multi_reduction <add>, %328, %cst_178 [1] : vector<33x32xf32> to vector<33xf32>
    %330 = vector.shape_cast %329 : vector<33xf32> to vector<33x1xf32>
    %cst_179 = arith.constant 3.200000e+01 : f32
    %331 = vector.broadcast %cst_179 : f32 to vector<33x1xf32>
    %332 = arith.divf %330, %331 : vector<33x1xf32>
    %333 = vector.broadcast %332 : vector<33x1xf32> to vector<33x32xf32>
    %334 = arith.subf %328, %333 : vector<33x32xf32>
    %335 = arith.mulf %334, %334 : vector<33x32xf32>
    %cst_180 = arith.constant dense<0.000000e+00> : vector<33xf32>
    %336 = vector.multi_reduction <add>, %335, %cst_180 [1] : vector<33x32xf32> to vector<33xf32>
    %337 = vector.shape_cast %336 : vector<33xf32> to vector<33x1xf32>
    %cst_181 = arith.constant 3.200000e+01 : f32
    %338 = vector.broadcast %cst_181 : f32 to vector<33x1xf32>
    %339 = arith.divf %337, %338 : vector<33x1xf32>
    %cst_182 = arith.constant 9.99999974E-6 : f32
    %340 = vector.broadcast %cst_182 : f32 to vector<33x1xf32>
    %341 = arith.addf %339, %340 : vector<33x1xf32>
    %342 = math.rsqrt %341 : vector<33x1xf32>
    %343 = vector.broadcast %342 : vector<33x1xf32> to vector<33x32xf32>
    %344 = arith.mulf %334, %343 : vector<33x32xf32>
    %345 = vector.broadcast %16 : vector<1x32xf32> to vector<33x32xf32>
    %346 = arith.mulf %344, %345 : vector<33x32xf32>
    %347 = vector.broadcast %18 : vector<1x32xf32> to vector<33x32xf32>
    %348 = arith.addf %346, %347 : vector<33x32xf32>
    %349 = vector.extract_strided_slice %348 {offsets = [0, 0], sizes = [1, 32], strides = [1, 1]} : vector<33x32xf32> to vector<1x32xf32>
    %350 = vector.extract_strided_slice %348 {offsets = [1, 0], sizes = [32, 32], strides = [1, 1]} : vector<33x32xf32> to vector<32x32xf32>
    %351 = arith.truncf %350 : vector<32x32xf32> to vector<32x32xbf16>
    %352 = arith.truncf %58 : vector<32x128xf32> to vector<32x128xbf16>
    %cst_183 = arith.constant dense<0.000000e+00> : vector<32x128xf32>
    %353 = tpu.matmul %351, %352, %cst_183 {dimension_numbers = #tpu.dot_dimension_numbers<[1], [0], [0], [1], [0, 0, 1, 1], [], []>} : vector<32x32xbf16>, vector<32x128xbf16>, vector<32x128xf32> -> vector<32x128xf32>
    %354 = vector.broadcast %60 : vector<1x128xf32> to vector<32x128xf32>
    %355 = arith.addf %353, %354 : vector<32x128xf32>
    %cst_184 = arith.constant 0.000000e+00 : f32
    %356 = vector.broadcast %cst_184 : f32 to vector<1x128xf32>
    %357 = tpu.concatenate %356, %355, %356 in 0 : vector<1x128xf32>, vector<32x128xf32>, vector<1x128xf32> -> vector<34x128xf32>
    %358 = vector.extract_strided_slice %357 {offsets = [0, 0], sizes = [32, 128], strides = [1, 1]} : vector<34x128xf32> to vector<32x128xf32>
    %359 = vector.extract_strided_slice %62 {offsets = [0, 0], sizes = [1, 128], strides = [1, 1]} : vector<3x128xf32> to vector<1x128xf32>
    %360 = vector.broadcast %359 : vector<1x128xf32> to vector<32x128xf32>
    %361 = arith.mulf %358, %360 : vector<32x128xf32>
    %362 = vector.extract_strided_slice %357 {offsets = [1, 0], sizes = [32, 128], strides = [1, 1]} : vector<34x128xf32> to vector<32x128xf32>
    %363 = vector.extract_strided_slice %62 {offsets = [1, 0], sizes = [1, 128], strides = [1, 1]} : vector<3x128xf32> to vector<1x128xf32>
    %364 = vector.broadcast %363 : vector<1x128xf32> to vector<32x128xf32>
    %365 = arith.mulf %362, %364 : vector<32x128xf32>
    %366 = arith.addf %361, %365 : vector<32x128xf32>
    %367 = vector.extract_strided_slice %357 {offsets = [2, 0], sizes = [32, 128], strides = [1, 1]} : vector<34x128xf32> to vector<32x128xf32>
    %368 = vector.extract_strided_slice %62 {offsets = [2, 0], sizes = [1, 128], strides = [1, 1]} : vector<3x128xf32> to vector<1x128xf32>
    %369 = vector.broadcast %368 : vector<1x128xf32> to vector<32x128xf32>
    %370 = arith.mulf %367, %369 : vector<32x128xf32>
    %371 = arith.addf %366, %370 : vector<32x128xf32>
    %372 = vector.broadcast %64 : vector<1x128xf32> to vector<32x128xf32>
    %373 = arith.addf %371, %372 : vector<32x128xf32>
    %cst_185 = arith.constant 5.000000e-01 : f32
    %374 = vector.broadcast %cst_185 : f32 to vector<32x128xf32>
    %375 = arith.mulf %374, %373 : vector<32x128xf32>
    %cst_186 = arith.constant 0.707106769 : f32
    %376 = vector.broadcast %cst_186 : f32 to vector<32x128xf32>
    %377 = arith.mulf %373, %376 : vector<32x128xf32>
    %378 = math.absf %377 : vector<32x128xf32>
    %cst_187 = arith.constant 0.327591091 : f32
    %379 = vector.broadcast %cst_187 : f32 to vector<32x128xf32>
    %380 = arith.mulf %379, %378 : vector<32x128xf32>
    %cst_188 = arith.constant 1.000000e+00 : f32
    %381 = vector.broadcast %cst_188 : f32 to vector<32x128xf32>
    %382 = arith.addf %381, %380 : vector<32x128xf32>
    %cst_189 = arith.constant 1.000000e+00 : f32
    %383 = vector.broadcast %cst_189 : f32 to vector<32x128xf32>
    %384 = arith.divf %383, %382 : vector<32x128xf32>
    %cst_190 = arith.constant 1.06140542 : f32
    %385 = vector.broadcast %cst_190 : f32 to vector<32x128xf32>
    %386 = arith.mulf %385, %384 : vector<32x128xf32>
    %cst_191 = arith.constant 1.45315206 : f32
    %387 = vector.broadcast %cst_191 : f32 to vector<32x128xf32>
    %388 = arith.subf %386, %387 : vector<32x128xf32>
    %389 = arith.mulf %388, %384 : vector<32x128xf32>
    %cst_192 = arith.constant 1.42141378 : f32
    %390 = vector.broadcast %cst_192 : f32 to vector<32x128xf32>
    %391 = arith.addf %389, %390 : vector<32x128xf32>
    %392 = arith.mulf %391, %384 : vector<32x128xf32>
    %cst_193 = arith.constant 0.284496725 : f32
    %393 = vector.broadcast %cst_193 : f32 to vector<32x128xf32>
    %394 = arith.subf %392, %393 : vector<32x128xf32>
    %395 = arith.mulf %394, %384 : vector<32x128xf32>
    %cst_194 = arith.constant 0.254829586 : f32
    %396 = vector.broadcast %cst_194 : f32 to vector<32x128xf32>
    %397 = arith.addf %395, %396 : vector<32x128xf32>
    %398 = arith.mulf %397, %384 : vector<32x128xf32>
    %399 = arith.mulf %378, %378 : vector<32x128xf32>
    %cst_195 = arith.constant 0.000000e+00 : f32
    %400 = vector.broadcast %cst_195 : f32 to vector<32x128xf32>
    %401 = arith.subf %400, %399 : vector<32x128xf32>
    %402 = math.exp %401 : vector<32x128xf32>
    %403 = arith.mulf %398, %402 : vector<32x128xf32>
    %cst_196 = arith.constant 1.000000e+00 : f32
    %404 = vector.broadcast %cst_196 : f32 to vector<32x128xf32>
    %405 = arith.subf %404, %403 : vector<32x128xf32>
    %cst_197 = arith.constant 0.000000e+00 : f32
    %406 = vector.broadcast %cst_197 : f32 to vector<32x128xf32>
    %407 = arith.cmpf oge, %377, %406 : vector<32x128xf32>
    %cst_198 = arith.constant 0.000000e+00 : f32
    %408 = vector.broadcast %cst_198 : f32 to vector<32x128xf32>
    %409 = arith.subf %408, %405 : vector<32x128xf32>
    %410 = arith.select %407, %405, %409 : vector<32x128xi1>, vector<32x128xf32>
    %cst_199 = arith.constant 1.000000e+00 : f32
    %411 = vector.broadcast %cst_199 : f32 to vector<32x128xf32>
    %412 = arith.addf %411, %410 : vector<32x128xf32>
    %413 = arith.mulf %375, %412 : vector<32x128xf32>
    %414 = arith.truncf %413 : vector<32x128xf32> to vector<32x128xbf16>
    %415 = arith.truncf %66 : vector<128x32xf32> to vector<128x32xbf16>
    %cst_200 = arith.constant dense<0.000000e+00> : vector<32x32xf32>
    %416 = tpu.matmul %414, %415, %cst_200 {dimension_numbers = #tpu.dot_dimension_numbers<[1], [0], [0], [1], [0, 0, 1, 1], [], []>} : vector<32x128xbf16>, vector<128x32xbf16>, vector<32x32xf32> -> vector<32x32xf32>
    %417 = vector.broadcast %68 : vector<1x32xf32> to vector<32x32xf32>
    %418 = arith.addf %416, %417 : vector<32x32xf32>
    %419 = tpu.concatenate %349, %418 in 0 : vector<1x32xf32>, vector<32x32xf32> -> vector<33x32xf32>
    %420 = arith.addf %419, %328 : vector<33x32xf32>
    %cst_201 = arith.constant dense<0.000000e+00> : vector<33xf32>
    %421 = vector.multi_reduction <add>, %420, %cst_201 [1] : vector<33x32xf32> to vector<33xf32>
    %422 = vector.shape_cast %421 : vector<33xf32> to vector<33x1xf32>
    %cst_202 = arith.constant 3.200000e+01 : f32
    %423 = vector.broadcast %cst_202 : f32 to vector<33x1xf32>
    %424 = arith.divf %422, %423 : vector<33x1xf32>
    %425 = vector.broadcast %424 : vector<33x1xf32> to vector<33x32xf32>
    %426 = arith.subf %420, %425 : vector<33x32xf32>
    %427 = arith.mulf %426, %426 : vector<33x32xf32>
    %cst_203 = arith.constant dense<0.000000e+00> : vector<33xf32>
    %428 = vector.multi_reduction <add>, %427, %cst_203 [1] : vector<33x32xf32> to vector<33xf32>
    %429 = vector.shape_cast %428 : vector<33xf32> to vector<33x1xf32>
    %cst_204 = arith.constant 3.200000e+01 : f32
    %430 = vector.broadcast %cst_204 : f32 to vector<33x1xf32>
    %431 = arith.divf %429, %430 : vector<33x1xf32>
    %cst_205 = arith.constant 9.99999974E-6 : f32
    %432 = vector.broadcast %cst_205 : f32 to vector<33x1xf32>
    %433 = arith.addf %431, %432 : vector<33x1xf32>
    %434 = math.rsqrt %433 : vector<33x1xf32>
    %435 = vector.broadcast %434 : vector<33x1xf32> to vector<33x32xf32>
    %436 = arith.mulf %426, %435 : vector<33x32xf32>
    %437 = vector.broadcast %20 : vector<1x32xf32> to vector<33x32xf32>
    %438 = arith.mulf %436, %437 : vector<33x32xf32>
    %439 = vector.broadcast %22 : vector<1x32xf32> to vector<33x32xf32>
    %440 = arith.addf %438, %439 : vector<33x32xf32>
    %441 = vector.extract_strided_slice %440 {offsets = [0, 0], sizes = [1, 32], strides = [1, 1]} : vector<33x32xf32> to vector<1x32xf32>
    %442 = vector.extract_strided_slice %440 {offsets = [1, 0], sizes = [32, 32], strides = [1, 1]} : vector<33x32xf32> to vector<32x32xf32>
    %443 = arith.truncf %442 : vector<32x32xf32> to vector<32x32xbf16>
    %444 = arith.truncf %70 : vector<32x128xf32> to vector<32x128xbf16>
    %cst_206 = arith.constant dense<0.000000e+00> : vector<32x128xf32>
    %445 = tpu.matmul %443, %444, %cst_206 {dimension_numbers = #tpu.dot_dimension_numbers<[1], [0], [0], [1], [0, 0, 1, 1], [], []>} : vector<32x32xbf16>, vector<32x128xbf16>, vector<32x128xf32> -> vector<32x128xf32>
    %446 = vector.broadcast %72 : vector<1x128xf32> to vector<32x128xf32>
    %447 = arith.addf %445, %446 : vector<32x128xf32>
    %cst_207 = arith.constant 0.000000e+00 : f32
    %448 = vector.broadcast %cst_207 : f32 to vector<1x128xf32>
    %449 = tpu.concatenate %448, %447, %448 in 0 : vector<1x128xf32>, vector<32x128xf32>, vector<1x128xf32> -> vector<34x128xf32>
    %450 = vector.extract_strided_slice %449 {offsets = [0, 0], sizes = [32, 128], strides = [1, 1]} : vector<34x128xf32> to vector<32x128xf32>
    %451 = vector.extract_strided_slice %74 {offsets = [0, 0], sizes = [1, 128], strides = [1, 1]} : vector<3x128xf32> to vector<1x128xf32>
    %452 = vector.broadcast %451 : vector<1x128xf32> to vector<32x128xf32>
    %453 = arith.mulf %450, %452 : vector<32x128xf32>
    %454 = vector.extract_strided_slice %449 {offsets = [1, 0], sizes = [32, 128], strides = [1, 1]} : vector<34x128xf32> to vector<32x128xf32>
    %455 = vector.extract_strided_slice %74 {offsets = [1, 0], sizes = [1, 128], strides = [1, 1]} : vector<3x128xf32> to vector<1x128xf32>
    %456 = vector.broadcast %455 : vector<1x128xf32> to vector<32x128xf32>
    %457 = arith.mulf %454, %456 : vector<32x128xf32>
    %458 = arith.addf %453, %457 : vector<32x128xf32>
    %459 = vector.extract_strided_slice %449 {offsets = [2, 0], sizes = [32, 128], strides = [1, 1]} : vector<34x128xf32> to vector<32x128xf32>
    %460 = vector.extract_strided_slice %74 {offsets = [2, 0], sizes = [1, 128], strides = [1, 1]} : vector<3x128xf32> to vector<1x128xf32>
    %461 = vector.broadcast %460 : vector<1x128xf32> to vector<32x128xf32>
    %462 = arith.mulf %459, %461 : vector<32x128xf32>
    %463 = arith.addf %458, %462 : vector<32x128xf32>
    %464 = vector.broadcast %76 : vector<1x128xf32> to vector<32x128xf32>
    %465 = arith.addf %463, %464 : vector<32x128xf32>
    %cst_208 = arith.constant 5.000000e-01 : f32
    %466 = vector.broadcast %cst_208 : f32 to vector<32x128xf32>
    %467 = arith.mulf %466, %465 : vector<32x128xf32>
    %cst_209 = arith.constant 0.707106769 : f32
    %468 = vector.broadcast %cst_209 : f32 to vector<32x128xf32>
    %469 = arith.mulf %465, %468 : vector<32x128xf32>
    %470 = math.absf %469 : vector<32x128xf32>
    %cst_210 = arith.constant 0.327591091 : f32
    %471 = vector.broadcast %cst_210 : f32 to vector<32x128xf32>
    %472 = arith.mulf %471, %470 : vector<32x128xf32>
    %cst_211 = arith.constant 1.000000e+00 : f32
    %473 = vector.broadcast %cst_211 : f32 to vector<32x128xf32>
    %474 = arith.addf %473, %472 : vector<32x128xf32>
    %cst_212 = arith.constant 1.000000e+00 : f32
    %475 = vector.broadcast %cst_212 : f32 to vector<32x128xf32>
    %476 = arith.divf %475, %474 : vector<32x128xf32>
    %cst_213 = arith.constant 1.06140542 : f32
    %477 = vector.broadcast %cst_213 : f32 to vector<32x128xf32>
    %478 = arith.mulf %477, %476 : vector<32x128xf32>
    %cst_214 = arith.constant 1.45315206 : f32
    %479 = vector.broadcast %cst_214 : f32 to vector<32x128xf32>
    %480 = arith.subf %478, %479 : vector<32x128xf32>
    %481 = arith.mulf %480, %476 : vector<32x128xf32>
    %cst_215 = arith.constant 1.42141378 : f32
    %482 = vector.broadcast %cst_215 : f32 to vector<32x128xf32>
    %483 = arith.addf %481, %482 : vector<32x128xf32>
    %484 = arith.mulf %483, %476 : vector<32x128xf32>
    %cst_216 = arith.constant 0.284496725 : f32
    %485 = vector.broadcast %cst_216 : f32 to vector<32x128xf32>
    %486 = arith.subf %484, %485 : vector<32x128xf32>
    %487 = arith.mulf %486, %476 : vector<32x128xf32>
    %cst_217 = arith.constant 0.254829586 : f32
    %488 = vector.broadcast %cst_217 : f32 to vector<32x128xf32>
    %489 = arith.addf %487, %488 : vector<32x128xf32>
    %490 = arith.mulf %489, %476 : vector<32x128xf32>
    %491 = arith.mulf %470, %470 : vector<32x128xf32>
    %cst_218 = arith.constant 0.000000e+00 : f32
    %492 = vector.broadcast %cst_218 : f32 to vector<32x128xf32>
    %493 = arith.subf %492, %491 : vector<32x128xf32>
    %494 = math.exp %493 : vector<32x128xf32>
    %495 = arith.mulf %490, %494 : vector<32x128xf32>
    %cst_219 = arith.constant 1.000000e+00 : f32
    %496 = vector.broadcast %cst_219 : f32 to vector<32x128xf32>
    %497 = arith.subf %496, %495 : vector<32x128xf32>
    %cst_220 = arith.constant 0.000000e+00 : f32
    %498 = vector.broadcast %cst_220 : f32 to vector<32x128xf32>
    %499 = arith.cmpf oge, %469, %498 : vector<32x128xf32>
    %cst_221 = arith.constant 0.000000e+00 : f32
    %500 = vector.broadcast %cst_221 : f32 to vector<32x128xf32>
    %501 = arith.subf %500, %497 : vector<32x128xf32>
    %502 = arith.select %499, %497, %501 : vector<32x128xi1>, vector<32x128xf32>
    %cst_222 = arith.constant 1.000000e+00 : f32
    %503 = vector.broadcast %cst_222 : f32 to vector<32x128xf32>
    %504 = arith.addf %503, %502 : vector<32x128xf32>
    %505 = arith.mulf %467, %504 : vector<32x128xf32>
    %506 = arith.truncf %505 : vector<32x128xf32> to vector<32x128xbf16>
    %507 = arith.truncf %78 : vector<128x32xf32> to vector<128x32xbf16>
    %cst_223 = arith.constant dense<0.000000e+00> : vector<32x32xf32>
    %508 = tpu.matmul %506, %507, %cst_223 {dimension_numbers = #tpu.dot_dimension_numbers<[1], [0], [0], [1], [0, 0, 1, 1], [], []>} : vector<32x128xbf16>, vector<128x32xbf16>, vector<32x32xf32> -> vector<32x32xf32>
    %509 = vector.broadcast %80 : vector<1x32xf32> to vector<32x32xf32>
    %510 = arith.addf %508, %509 : vector<32x32xf32>
    %511 = tpu.concatenate %441, %510 in 0 : vector<1x32xf32>, vector<32x32xf32> -> vector<33x32xf32>
    %512 = arith.addf %511, %420 : vector<33x32xf32>
    %cst_224 = arith.constant dense<0.000000e+00> : vector<33xf32>
    %513 = vector.multi_reduction <add>, %420, %cst_224 [1] : vector<33x32xf32> to vector<33xf32>
    %514 = vector.shape_cast %513 : vector<33xf32> to vector<33x1xf32>
    %cst_225 = arith.constant 3.200000e+01 : f32
    %515 = vector.broadcast %cst_225 : f32 to vector<33x1xf32>
    %516 = arith.divf %514, %515 : vector<33x1xf32>
    %517 = vector.broadcast %516 : vector<33x1xf32> to vector<33x32xf32>
    %518 = arith.subf %420, %517 : vector<33x32xf32>
    %519 = arith.mulf %518, %518 : vector<33x32xf32>
    %cst_226 = arith.constant dense<0.000000e+00> : vector<33xf32>
    %520 = vector.multi_reduction <add>, %519, %cst_226 [1] : vector<33x32xf32> to vector<33xf32>
    %521 = vector.shape_cast %520 : vector<33xf32> to vector<33x1xf32>
    %cst_227 = arith.constant 3.200000e+01 : f32
    %522 = vector.broadcast %cst_227 : f32 to vector<33x1xf32>
    %523 = arith.divf %521, %522 : vector<33x1xf32>
    %cst_228 = arith.constant 9.99999974E-6 : f32
    %524 = vector.broadcast %cst_228 : f32 to vector<33x1xf32>
    %525 = arith.addf %523, %524 : vector<33x1xf32>
    %526 = math.rsqrt %525 : vector<33x1xf32>
    %527 = vector.broadcast %526 : vector<33x1xf32> to vector<33x32xf32>
    %528 = arith.mulf %518, %527 : vector<33x32xf32>
    %529 = vector.broadcast %24 : vector<1x32xf32> to vector<33x32xf32>
    %530 = arith.mulf %528, %529 : vector<33x32xf32>
    %531 = vector.broadcast %26 : vector<1x32xf32> to vector<33x32xf32>
    %532 = arith.addf %530, %531 : vector<33x32xf32>
    %533 = arith.truncf %532 : vector<33x32xf32> to vector<33x32xbf16>
    %534 = arith.truncf %82 : vector<32x32xf32> to vector<32x32xbf16>
    %cst_229 = arith.constant dense<0.000000e+00> : vector<33x32xf32>
    %535 = tpu.matmul %533, %534, %cst_229 {dimension_numbers = #tpu.dot_dimension_numbers<[1], [0], [0], [1], [0, 0, 1, 1], [], []>} : vector<33x32xbf16>, vector<32x32xbf16>, vector<33x32xf32> -> vector<33x32xf32>
    %536 = vector.broadcast %84 : vector<1x32xf32> to vector<33x32xf32>
    %537 = arith.addf %535, %536 : vector<33x32xf32>
    %cst_230 = arith.constant 5.000000e-01 : f32
    %538 = vector.broadcast %cst_230 : f32 to vector<33x32xf32>
    %539 = arith.mulf %538, %537 : vector<33x32xf32>
    %cst_231 = arith.constant 0.707106769 : f32
    %540 = vector.broadcast %cst_231 : f32 to vector<33x32xf32>
    %541 = arith.mulf %537, %540 : vector<33x32xf32>
    %542 = math.absf %541 : vector<33x32xf32>
    %cst_232 = arith.constant 0.327591091 : f32
    %543 = vector.broadcast %cst_232 : f32 to vector<33x32xf32>
    %544 = arith.mulf %543, %542 : vector<33x32xf32>
    %cst_233 = arith.constant 1.000000e+00 : f32
    %545 = vector.broadcast %cst_233 : f32 to vector<33x32xf32>
    %546 = arith.addf %545, %544 : vector<33x32xf32>
    %cst_234 = arith.constant 1.000000e+00 : f32
    %547 = vector.broadcast %cst_234 : f32 to vector<33x32xf32>
    %548 = arith.divf %547, %546 : vector<33x32xf32>
    %cst_235 = arith.constant 1.06140542 : f32
    %549 = vector.broadcast %cst_235 : f32 to vector<33x32xf32>
    %550 = arith.mulf %549, %548 : vector<33x32xf32>
    %cst_236 = arith.constant 1.45315206 : f32
    %551 = vector.broadcast %cst_236 : f32 to vector<33x32xf32>
    %552 = arith.subf %550, %551 : vector<33x32xf32>
    %553 = arith.mulf %552, %548 : vector<33x32xf32>
    %cst_237 = arith.constant 1.42141378 : f32
    %554 = vector.broadcast %cst_237 : f32 to vector<33x32xf32>
    %555 = arith.addf %553, %554 : vector<33x32xf32>
    %556 = arith.mulf %555, %548 : vector<33x32xf32>
    %cst_238 = arith.constant 0.284496725 : f32
    %557 = vector.broadcast %cst_238 : f32 to vector<33x32xf32>
    %558 = arith.subf %556, %557 : vector<33x32xf32>
    %559 = arith.mulf %558, %548 : vector<33x32xf32>
    %cst_239 = arith.constant 0.254829586 : f32
    %560 = vector.broadcast %cst_239 : f32 to vector<33x32xf32>
    %561 = arith.addf %559, %560 : vector<33x32xf32>
    %562 = arith.mulf %561, %548 : vector<33x32xf32>
    %563 = arith.mulf %542, %542 : vector<33x32xf32>
    %cst_240 = arith.constant 0.000000e+00 : f32
    %564 = vector.broadcast %cst_240 : f32 to vector<33x32xf32>
    %565 = arith.subf %564, %563 : vector<33x32xf32>
    %566 = math.exp %565 : vector<33x32xf32>
    %567 = arith.mulf %562, %566 : vector<33x32xf32>
    %cst_241 = arith.constant 1.000000e+00 : f32
    %568 = vector.broadcast %cst_241 : f32 to vector<33x32xf32>
    %569 = arith.subf %568, %567 : vector<33x32xf32>
    %cst_242 = arith.constant 0.000000e+00 : f32
    %570 = vector.broadcast %cst_242 : f32 to vector<33x32xf32>
    %571 = arith.cmpf oge, %541, %570 : vector<33x32xf32>
    %cst_243 = arith.constant 0.000000e+00 : f32
    %572 = vector.broadcast %cst_243 : f32 to vector<33x32xf32>
    %573 = arith.subf %572, %569 : vector<33x32xf32>
    %574 = arith.select %571, %569, %573 : vector<33x32xi1>, vector<33x32xf32>
    %cst_244 = arith.constant 1.000000e+00 : f32
    %575 = vector.broadcast %cst_244 : f32 to vector<33x32xf32>
    %576 = arith.addf %575, %574 : vector<33x32xf32>
    %577 = arith.mulf %539, %576 : vector<33x32xf32>
    %578 = arith.truncf %577 : vector<33x32xf32> to vector<33x32xbf16>
    %579 = arith.truncf %86 : vector<32x32xf32> to vector<32x32xbf16>
    %cst_245 = arith.constant dense<0.000000e+00> : vector<33x32xf32>
    %580 = tpu.matmul %578, %579, %cst_245 {dimension_numbers = #tpu.dot_dimension_numbers<[1], [0], [0], [1], [0, 0, 1, 1], [], []>} : vector<33x32xbf16>, vector<32x32xbf16>, vector<33x32xf32> -> vector<33x32xf32>
    %581 = vector.broadcast %88 : vector<1x32xf32> to vector<33x32xf32>
    %582 = arith.addf %580, %581 : vector<33x32xf32>
    %583 = arith.addf %582, %512 : vector<33x32xf32>
    %c1 = arith.constant 1 : index
    %c0_246 = arith.constant 0 : index
    %c0_247 = arith.constant 0 : index
    %584 = vector.load %arg10[%c1, %c0_246, %c0_247] : memref<2x1x32xf32, #tpu.memory_space<vmem>>, vector<1x1x32xf32>
    %585 = vector.shape_cast %584 : vector<1x1x32xf32> to vector<1x32xf32>
    %c1_248 = arith.constant 1 : index
    %c0_249 = arith.constant 0 : index
    %c0_250 = arith.constant 0 : index
    %586 = vector.load %arg11[%c1_248, %c0_249, %c0_250] : memref<2x1x32xf32, #tpu.memory_space<vmem>>, vector<1x1x32xf32>
    %587 = vector.shape_cast %586 : vector<1x1x32xf32> to vector<1x32xf32>
    %c1_251 = arith.constant 1 : index
    %c0_252 = arith.constant 0 : index
    %c0_253 = arith.constant 0 : index
    %588 = vector.load %arg12[%c1_251, %c0_252, %c0_253] : memref<2x1x32xf32, #tpu.memory_space<vmem>>, vector<1x1x32xf32>
    %589 = vector.shape_cast %588 : vector<1x1x32xf32> to vector<1x32xf32>
    %c1_254 = arith.constant 1 : index
    %c0_255 = arith.constant 0 : index
    %c0_256 = arith.constant 0 : index
    %590 = vector.load %arg13[%c1_254, %c0_255, %c0_256] : memref<2x1x32xf32, #tpu.memory_space<vmem>>, vector<1x1x32xf32>
    %591 = vector.shape_cast %590 : vector<1x1x32xf32> to vector<1x32xf32>
    %c1_257 = arith.constant 1 : index
    %c0_258 = arith.constant 0 : index
    %c0_259 = arith.constant 0 : index
    %592 = vector.load %arg14[%c1_257, %c0_258, %c0_259] : memref<2x1x32xf32, #tpu.memory_space<vmem>>, vector<1x1x32xf32>
    %593 = vector.shape_cast %592 : vector<1x1x32xf32> to vector<1x32xf32>
    %c1_260 = arith.constant 1 : index
    %c0_261 = arith.constant 0 : index
    %c0_262 = arith.constant 0 : index
    %594 = vector.load %arg15[%c1_260, %c0_261, %c0_262] : memref<2x1x32xf32, #tpu.memory_space<vmem>>, vector<1x1x32xf32>
    %595 = vector.shape_cast %594 : vector<1x1x32xf32> to vector<1x32xf32>
    %c1_263 = arith.constant 1 : index
    %c0_264 = arith.constant 0 : index
    %c0_265 = arith.constant 0 : index
    %596 = vector.load %arg16[%c1_263, %c0_264, %c0_265] : memref<2x1x32xf32, #tpu.memory_space<vmem>>, vector<1x1x32xf32>
    %597 = vector.shape_cast %596 : vector<1x1x32xf32> to vector<1x32xf32>
    %c1_266 = arith.constant 1 : index
    %c0_267 = arith.constant 0 : index
    %c0_268 = arith.constant 0 : index
    %598 = vector.load %arg17[%c1_266, %c0_267, %c0_268] : memref<2x1x32xf32, #tpu.memory_space<vmem>>, vector<1x1x32xf32>
    %599 = vector.shape_cast %598 : vector<1x1x32xf32> to vector<1x32xf32>
    %c1_269 = arith.constant 1 : index
    %c0_270 = arith.constant 0 : index
    %c0_271 = arith.constant 0 : index
    %600 = vector.load %arg18[%c1_269, %c0_270, %c0_271] : memref<2x7x32xf32, #tpu.memory_space<vmem>>, vector<1x7x32xf32>
    %601 = vector.shape_cast %600 : vector<1x7x32xf32> to vector<7x32xf32>
    %c1_272 = arith.constant 1 : index
    %c0_273 = arith.constant 0 : index
    %c0_274 = arith.constant 0 : index
    %602 = vector.load %arg19[%c1_272, %c0_273, %c0_274] : memref<2x1x32xf32, #tpu.memory_space<vmem>>, vector<1x1x32xf32>
    %603 = vector.shape_cast %602 : vector<1x1x32xf32> to vector<1x32xf32>
    %c1_275 = arith.constant 1 : index
    %c0_276 = arith.constant 0 : index
    %c0_277 = arith.constant 0 : index
    %604 = vector.load %arg20[%c1_275, %c0_276, %c0_277] : memref<2x32x32xf32, #tpu.memory_space<vmem>>, vector<1x32x32xf32>
    %605 = vector.shape_cast %604 : vector<1x32x32xf32> to vector<32x32xf32>
    %c1_278 = arith.constant 1 : index
    %c0_279 = arith.constant 0 : index
    %c0_280 = arith.constant 0 : index
    %606 = vector.load %arg21[%c1_278, %c0_279, %c0_280] : memref<2x1x32xf32, #tpu.memory_space<vmem>>, vector<1x1x32xf32>
    %607 = vector.shape_cast %606 : vector<1x1x32xf32> to vector<1x32xf32>
    %c1_281 = arith.constant 1 : index
    %c0_282 = arith.constant 0 : index
    %c0_283 = arith.constant 0 : index
    %608 = vector.load %arg22[%c1_281, %c0_282, %c0_283] : memref<2x1x32xf32, #tpu.memory_space<vmem>>, vector<1x1x32xf32>
    %609 = vector.shape_cast %608 : vector<1x1x32xf32> to vector<1x32xf32>
    %c1_284 = arith.constant 1 : index
    %c0_285 = arith.constant 0 : index
    %c0_286 = arith.constant 0 : index
    %610 = vector.load %arg23[%c1_284, %c0_285, %c0_286] : memref<2x1x32xf32, #tpu.memory_space<vmem>>, vector<1x1x32xf32>
    %611 = vector.shape_cast %610 : vector<1x1x32xf32> to vector<1x32xf32>
    %c1_287 = arith.constant 1 : index
    %c0_288 = arith.constant 0 : index
    %c0_289 = arith.constant 0 : index
    %612 = vector.load %arg24[%c1_287, %c0_288, %c0_289] : memref<2x1x32xf32, #tpu.memory_space<vmem>>, vector<1x1x32xf32>
    %613 = vector.shape_cast %612 : vector<1x1x32xf32> to vector<1x32xf32>
    %c1_290 = arith.constant 1 : index
    %c0_291 = arith.constant 0 : index
    %c0_292 = arith.constant 0 : index
    %614 = vector.load %arg25[%c1_290, %c0_291, %c0_292] : memref<2x1x32xf32, #tpu.memory_space<vmem>>, vector<1x1x32xf32>
    %615 = vector.shape_cast %614 : vector<1x1x32xf32> to vector<1x32xf32>
    %c1_293 = arith.constant 1 : index
    %c0_294 = arith.constant 0 : index
    %c0_295 = arith.constant 0 : index
    %616 = vector.load %arg26[%c1_293, %c0_294, %c0_295] : memref<2x1x32xf32, #tpu.memory_space<vmem>>, vector<1x1x32xf32>
    %617 = vector.shape_cast %616 : vector<1x1x32xf32> to vector<1x32xf32>
    %c1_296 = arith.constant 1 : index
    %c0_297 = arith.constant 0 : index
    %c0_298 = arith.constant 0 : index
    %618 = vector.load %arg27[%c1_296, %c0_297, %c0_298] : memref<2x1x32xf32, #tpu.memory_space<vmem>>, vector<1x1x32xf32>
    %619 = vector.shape_cast %618 : vector<1x1x32xf32> to vector<1x32xf32>
    %c1_299 = arith.constant 1 : index
    %c0_300 = arith.constant 0 : index
    %c0_301 = arith.constant 0 : index
    %620 = vector.load %arg28[%c1_299, %c0_300, %c0_301] : memref<2x1x32xf32, #tpu.memory_space<vmem>>, vector<1x1x32xf32>
    %621 = vector.shape_cast %620 : vector<1x1x32xf32> to vector<1x32xf32>
    %c1_302 = arith.constant 1 : index
    %c0_303 = arith.constant 0 : index
    %c0_304 = arith.constant 0 : index
    %622 = vector.load %arg29[%c1_302, %c0_303, %c0_304] : memref<2x1x32xf32, #tpu.memory_space<vmem>>, vector<1x1x32xf32>
    %623 = vector.shape_cast %622 : vector<1x1x32xf32> to vector<1x32xf32>
    %c1_305 = arith.constant 1 : index
    %c0_306 = arith.constant 0 : index
    %c0_307 = arith.constant 0 : index
    %624 = vector.load %arg30[%c1_305, %c0_306, %c0_307] : memref<2x32x32xf32, #tpu.memory_space<vmem>>, vector<1x32x32xf32>
    %625 = vector.shape_cast %624 : vector<1x32x32xf32> to vector<32x32xf32>
    %c1_308 = arith.constant 1 : index
    %c0_309 = arith.constant 0 : index
    %c0_310 = arith.constant 0 : index
    %626 = vector.load %arg31[%c1_308, %c0_309, %c0_310] : memref<2x32x64xf32, #tpu.memory_space<vmem>>, vector<1x32x64xf32>
    %627 = vector.shape_cast %626 : vector<1x32x64xf32> to vector<32x64xf32>
    %c1_311 = arith.constant 1 : index
    %c0_312 = arith.constant 0 : index
    %c0_313 = arith.constant 0 : index
    %628 = vector.load %arg32[%c1_311, %c0_312, %c0_313] : memref<2x32x32xf32, #tpu.memory_space<vmem>>, vector<1x32x32xf32>
    %629 = vector.shape_cast %628 : vector<1x32x32xf32> to vector<32x32xf32>
    %c1_314 = arith.constant 1 : index
    %c0_315 = arith.constant 0 : index
    %c0_316 = arith.constant 0 : index
    %630 = vector.load %arg33[%c1_314, %c0_315, %c0_316] : memref<2x32x128xf32, #tpu.memory_space<vmem>>, vector<1x32x128xf32>
    %631 = vector.shape_cast %630 : vector<1x32x128xf32> to vector<32x128xf32>
    %c1_317 = arith.constant 1 : index
    %c0_318 = arith.constant 0 : index
    %c0_319 = arith.constant 0 : index
    %632 = vector.load %arg34[%c1_317, %c0_318, %c0_319] : memref<2x1x128xf32, #tpu.memory_space<vmem>>, vector<1x1x128xf32>
    %633 = vector.shape_cast %632 : vector<1x1x128xf32> to vector<1x128xf32>
    %c1_320 = arith.constant 1 : index
    %c0_321 = arith.constant 0 : index
    %c0_322 = arith.constant 0 : index
    %634 = vector.load %arg35[%c1_320, %c0_321, %c0_322] : memref<2x3x128xf32, #tpu.memory_space<vmem>>, vector<1x3x128xf32>
    %635 = vector.shape_cast %634 : vector<1x3x128xf32> to vector<3x128xf32>
    %c1_323 = arith.constant 1 : index
    %c0_324 = arith.constant 0 : index
    %c0_325 = arith.constant 0 : index
    %636 = vector.load %arg36[%c1_323, %c0_324, %c0_325] : memref<2x1x128xf32, #tpu.memory_space<vmem>>, vector<1x1x128xf32>
    %637 = vector.shape_cast %636 : vector<1x1x128xf32> to vector<1x128xf32>
    %c1_326 = arith.constant 1 : index
    %c0_327 = arith.constant 0 : index
    %c0_328 = arith.constant 0 : index
    %638 = vector.load %arg37[%c1_326, %c0_327, %c0_328] : memref<2x128x32xf32, #tpu.memory_space<vmem>>, vector<1x128x32xf32>
    %639 = vector.shape_cast %638 : vector<1x128x32xf32> to vector<128x32xf32>
    %c1_329 = arith.constant 1 : index
    %c0_330 = arith.constant 0 : index
    %c0_331 = arith.constant 0 : index
    %640 = vector.load %arg38[%c1_329, %c0_330, %c0_331] : memref<2x1x32xf32, #tpu.memory_space<vmem>>, vector<1x1x32xf32>
    %641 = vector.shape_cast %640 : vector<1x1x32xf32> to vector<1x32xf32>
    %c1_332 = arith.constant 1 : index
    %c0_333 = arith.constant 0 : index
    %c0_334 = arith.constant 0 : index
    %642 = vector.load %arg39[%c1_332, %c0_333, %c0_334] : memref<2x32x128xf32, #tpu.memory_space<vmem>>, vector<1x32x128xf32>
    %643 = vector.shape_cast %642 : vector<1x32x128xf32> to vector<32x128xf32>
    %c1_335 = arith.constant 1 : index
    %c0_336 = arith.constant 0 : index
    %c0_337 = arith.constant 0 : index
    %644 = vector.load %arg40[%c1_335, %c0_336, %c0_337] : memref<2x1x128xf32, #tpu.memory_space<vmem>>, vector<1x1x128xf32>
    %645 = vector.shape_cast %644 : vector<1x1x128xf32> to vector<1x128xf32>
    %c1_338 = arith.constant 1 : index
    %c0_339 = arith.constant 0 : index
    %c0_340 = arith.constant 0 : index
    %646 = vector.load %arg41[%c1_338, %c0_339, %c0_340] : memref<2x3x128xf32, #tpu.memory_space<vmem>>, vector<1x3x128xf32>
    %647 = vector.shape_cast %646 : vector<1x3x128xf32> to vector<3x128xf32>
    %c1_341 = arith.constant 1 : index
    %c0_342 = arith.constant 0 : index
    %c0_343 = arith.constant 0 : index
    %648 = vector.load %arg42[%c1_341, %c0_342, %c0_343] : memref<2x1x128xf32, #tpu.memory_space<vmem>>, vector<1x1x128xf32>
    %649 = vector.shape_cast %648 : vector<1x1x128xf32> to vector<1x128xf32>
    %c1_344 = arith.constant 1 : index
    %c0_345 = arith.constant 0 : index
    %c0_346 = arith.constant 0 : index
    %650 = vector.load %arg43[%c1_344, %c0_345, %c0_346] : memref<2x128x32xf32, #tpu.memory_space<vmem>>, vector<1x128x32xf32>
    %651 = vector.shape_cast %650 : vector<1x128x32xf32> to vector<128x32xf32>
    %c1_347 = arith.constant 1 : index
    %c0_348 = arith.constant 0 : index
    %c0_349 = arith.constant 0 : index
    %652 = vector.load %arg44[%c1_347, %c0_348, %c0_349] : memref<2x1x32xf32, #tpu.memory_space<vmem>>, vector<1x1x32xf32>
    %653 = vector.shape_cast %652 : vector<1x1x32xf32> to vector<1x32xf32>
    %c1_350 = arith.constant 1 : index
    %c0_351 = arith.constant 0 : index
    %c0_352 = arith.constant 0 : index
    %654 = vector.load %arg45[%c1_350, %c0_351, %c0_352] : memref<2x32x32xf32, #tpu.memory_space<vmem>>, vector<1x32x32xf32>
    %655 = vector.shape_cast %654 : vector<1x32x32xf32> to vector<32x32xf32>
    %c1_353 = arith.constant 1 : index
    %c0_354 = arith.constant 0 : index
    %c0_355 = arith.constant 0 : index
    %656 = vector.load %arg46[%c1_353, %c0_354, %c0_355] : memref<2x1x32xf32, #tpu.memory_space<vmem>>, vector<1x1x32xf32>
    %657 = vector.shape_cast %656 : vector<1x1x32xf32> to vector<1x32xf32>
    %c1_356 = arith.constant 1 : index
    %c0_357 = arith.constant 0 : index
    %c0_358 = arith.constant 0 : index
    %658 = vector.load %arg47[%c1_356, %c0_357, %c0_358] : memref<2x32x32xf32, #tpu.memory_space<vmem>>, vector<1x32x32xf32>
    %659 = vector.shape_cast %658 : vector<1x32x32xf32> to vector<32x32xf32>
    %c1_359 = arith.constant 1 : index
    %c0_360 = arith.constant 0 : index
    %c0_361 = arith.constant 0 : index
    %660 = vector.load %arg48[%c1_359, %c0_360, %c0_361] : memref<2x1x32xf32, #tpu.memory_space<vmem>>, vector<1x1x32xf32>
    %661 = vector.shape_cast %660 : vector<1x1x32xf32> to vector<1x32xf32>
    %cst_362 = arith.constant dense<0.000000e+00> : vector<33xf32>
    %662 = vector.multi_reduction <add>, %583, %cst_362 [1] : vector<33x32xf32> to vector<33xf32>
    %663 = vector.shape_cast %662 : vector<33xf32> to vector<33x1xf32>
    %cst_363 = arith.constant 3.200000e+01 : f32
    %664 = vector.broadcast %cst_363 : f32 to vector<33x1xf32>
    %665 = arith.divf %663, %664 : vector<33x1xf32>
    %666 = vector.broadcast %665 : vector<33x1xf32> to vector<33x32xf32>
    %667 = arith.subf %583, %666 : vector<33x32xf32>
    %668 = arith.mulf %667, %667 : vector<33x32xf32>
    %cst_364 = arith.constant dense<0.000000e+00> : vector<33xf32>
    %669 = vector.multi_reduction <add>, %668, %cst_364 [1] : vector<33x32xf32> to vector<33xf32>
    %670 = vector.shape_cast %669 : vector<33xf32> to vector<33x1xf32>
    %cst_365 = arith.constant 3.200000e+01 : f32
    %671 = vector.broadcast %cst_365 : f32 to vector<33x1xf32>
    %672 = arith.divf %670, %671 : vector<33x1xf32>
    %cst_366 = arith.constant 9.99999974E-6 : f32
    %673 = vector.broadcast %cst_366 : f32 to vector<33x1xf32>
    %674 = arith.addf %672, %673 : vector<33x1xf32>
    %675 = math.rsqrt %674 : vector<33x1xf32>
    %676 = vector.broadcast %675 : vector<33x1xf32> to vector<33x32xf32>
    %677 = arith.mulf %667, %676 : vector<33x32xf32>
    %678 = vector.broadcast %585 : vector<1x32xf32> to vector<33x32xf32>
    %679 = arith.mulf %677, %678 : vector<33x32xf32>
    %680 = vector.broadcast %587 : vector<1x32xf32> to vector<33x32xf32>
    %681 = arith.addf %679, %680 : vector<33x32xf32>
    %682 = vector.extract_strided_slice %681 {offsets = [1, 0], sizes = [32, 32], strides = [1, 1]} : vector<33x32xf32> to vector<32x32xf32>
    %cst_367 = arith.constant 0.000000e+00 : f32
    %683 = vector.broadcast %cst_367 : f32 to vector<3x32xf32>
    %684 = tpu.concatenate %683, %682, %683 in 0 : vector<3x32xf32>, vector<32x32xf32>, vector<3x32xf32> -> vector<38x32xf32>
    %685 = vector.extract_strided_slice %684 {offsets = [0, 0], sizes = [32, 32], strides = [1, 1]} : vector<38x32xf32> to vector<32x32xf32>
    %686 = vector.extract_strided_slice %601 {offsets = [0, 0], sizes = [1, 32], strides = [1, 1]} : vector<7x32xf32> to vector<1x32xf32>
    %687 = vector.broadcast %686 : vector<1x32xf32> to vector<32x32xf32>
    %688 = arith.mulf %685, %687 : vector<32x32xf32>
    %689 = vector.extract_strided_slice %684 {offsets = [1, 0], sizes = [32, 32], strides = [1, 1]} : vector<38x32xf32> to vector<32x32xf32>
    %690 = vector.extract_strided_slice %601 {offsets = [1, 0], sizes = [1, 32], strides = [1, 1]} : vector<7x32xf32> to vector<1x32xf32>
    %691 = vector.broadcast %690 : vector<1x32xf32> to vector<32x32xf32>
    %692 = arith.mulf %689, %691 : vector<32x32xf32>
    %693 = arith.addf %688, %692 : vector<32x32xf32>
    %694 = vector.extract_strided_slice %684 {offsets = [2, 0], sizes = [32, 32], strides = [1, 1]} : vector<38x32xf32> to vector<32x32xf32>
    %695 = vector.extract_strided_slice %601 {offsets = [2, 0], sizes = [1, 32], strides = [1, 1]} : vector<7x32xf32> to vector<1x32xf32>
    %696 = vector.broadcast %695 : vector<1x32xf32> to vector<32x32xf32>
    %697 = arith.mulf %694, %696 : vector<32x32xf32>
    %698 = arith.addf %693, %697 : vector<32x32xf32>
    %699 = vector.extract_strided_slice %684 {offsets = [3, 0], sizes = [32, 32], strides = [1, 1]} : vector<38x32xf32> to vector<32x32xf32>
    %700 = vector.extract_strided_slice %601 {offsets = [3, 0], sizes = [1, 32], strides = [1, 1]} : vector<7x32xf32> to vector<1x32xf32>
    %701 = vector.broadcast %700 : vector<1x32xf32> to vector<32x32xf32>
    %702 = arith.mulf %699, %701 : vector<32x32xf32>
    %703 = arith.addf %698, %702 : vector<32x32xf32>
    %704 = vector.extract_strided_slice %684 {offsets = [4, 0], sizes = [32, 32], strides = [1, 1]} : vector<38x32xf32> to vector<32x32xf32>
    %705 = vector.extract_strided_slice %601 {offsets = [4, 0], sizes = [1, 32], strides = [1, 1]} : vector<7x32xf32> to vector<1x32xf32>
    %706 = vector.broadcast %705 : vector<1x32xf32> to vector<32x32xf32>
    %707 = arith.mulf %704, %706 : vector<32x32xf32>
    %708 = arith.addf %703, %707 : vector<32x32xf32>
    %709 = vector.extract_strided_slice %684 {offsets = [5, 0], sizes = [32, 32], strides = [1, 1]} : vector<38x32xf32> to vector<32x32xf32>
    %710 = vector.extract_strided_slice %601 {offsets = [5, 0], sizes = [1, 32], strides = [1, 1]} : vector<7x32xf32> to vector<1x32xf32>
    %711 = vector.broadcast %710 : vector<1x32xf32> to vector<32x32xf32>
    %712 = arith.mulf %709, %711 : vector<32x32xf32>
    %713 = arith.addf %708, %712 : vector<32x32xf32>
    %714 = vector.extract_strided_slice %684 {offsets = [6, 0], sizes = [32, 32], strides = [1, 1]} : vector<38x32xf32> to vector<32x32xf32>
    %715 = vector.extract_strided_slice %601 {offsets = [6, 0], sizes = [1, 32], strides = [1, 1]} : vector<7x32xf32> to vector<1x32xf32>
    %716 = vector.broadcast %715 : vector<1x32xf32> to vector<32x32xf32>
    %717 = arith.mulf %714, %716 : vector<32x32xf32>
    %718 = arith.addf %713, %717 : vector<32x32xf32>
    %cst_368 = arith.constant dense<0.000000e+00> : vector<8x32xf32>
    %719 = tpu.matmul %0, %718, %cst_368 {dimension_numbers = #tpu.dot_dimension_numbers<[1], [0], [0], [1], [0, 0, 1, 1], [], []>} : vector<8x32xf32>, vector<32x32xf32>, vector<8x32xf32> -> vector<8x32xf32>
    %720 = vector.broadcast %603 : vector<1x32xf32> to vector<8x32xf32>
    %721 = arith.addf %719, %720 : vector<8x32xf32>
    %722 = arith.truncf %721 : vector<8x32xf32> to vector<8x32xbf16>
    %723 = arith.truncf %605 : vector<32x32xf32> to vector<32x32xbf16>
    %cst_369 = arith.constant dense<0.000000e+00> : vector<8x32xf32>
    %724 = tpu.matmul %722, %723, %cst_369 {dimension_numbers = #tpu.dot_dimension_numbers<[1], [0], [0], [1], [0, 0, 1, 1], [], []>} : vector<8x32xbf16>, vector<32x32xbf16>, vector<8x32xf32> -> vector<8x32xf32>
    %725 = vector.broadcast %607 : vector<1x32xf32> to vector<8x32xf32>
    %726 = arith.addf %724, %725 : vector<8x32xf32>
    %cst_370 = arith.constant dense<0.000000e+00> : vector<8xf32>
    %727 = vector.multi_reduction <add>, %726, %cst_370 [1] : vector<8x32xf32> to vector<8xf32>
    %728 = vector.shape_cast %727 : vector<8xf32> to vector<8x1xf32>
    %cst_371 = arith.constant 3.200000e+01 : f32
    %729 = vector.broadcast %cst_371 : f32 to vector<8x1xf32>
    %730 = arith.divf %728, %729 : vector<8x1xf32>
    %731 = vector.broadcast %730 : vector<8x1xf32> to vector<8x32xf32>
    %732 = arith.subf %726, %731 : vector<8x32xf32>
    %733 = arith.mulf %732, %732 : vector<8x32xf32>
    %cst_372 = arith.constant dense<0.000000e+00> : vector<8xf32>
    %734 = vector.multi_reduction <add>, %733, %cst_372 [1] : vector<8x32xf32> to vector<8xf32>
    %735 = vector.shape_cast %734 : vector<8xf32> to vector<8x1xf32>
    %cst_373 = arith.constant 3.200000e+01 : f32
    %736 = vector.broadcast %cst_373 : f32 to vector<8x1xf32>
    %737 = arith.divf %735, %736 : vector<8x1xf32>
    %cst_374 = arith.constant 9.99999974E-6 : f32
    %738 = vector.broadcast %cst_374 : f32 to vector<8x1xf32>
    %739 = arith.addf %737, %738 : vector<8x1xf32>
    %740 = math.rsqrt %739 : vector<8x1xf32>
    %741 = vector.broadcast %740 : vector<8x1xf32> to vector<8x32xf32>
    %742 = arith.mulf %732, %741 : vector<8x32xf32>
    %743 = vector.broadcast %609 : vector<1x32xf32> to vector<8x32xf32>
    %744 = arith.mulf %742, %743 : vector<8x32xf32>
    %745 = vector.broadcast %611 : vector<1x32xf32> to vector<8x32xf32>
    %746 = arith.addf %744, %745 : vector<8x32xf32>
    %747 = vector.extract_strided_slice %681 {offsets = [0, 0], sizes = [1, 32], strides = [1, 1]} : vector<33x32xf32> to vector<1x32xf32>
    %748 = tpu.concatenate %747, %746 in 0 : vector<1x32xf32>, vector<8x32xf32> -> vector<9x32xf32>
    %749 = arith.truncf %681 : vector<33x32xf32> to vector<33x32xbf16>
    %750 = arith.truncf %625 : vector<32x32xf32> to vector<32x32xbf16>
    %cst_375 = arith.constant dense<0.000000e+00> : vector<33x32xf32>
    %751 = tpu.matmul %749, %750, %cst_375 {dimension_numbers = #tpu.dot_dimension_numbers<[1], [0], [0], [1], [0, 0, 1, 1], [], []>} : vector<33x32xbf16>, vector<32x32xbf16>, vector<33x32xf32> -> vector<33x32xf32>
    %cst_376 = arith.constant dense<0.000000e+00> : vector<33xf32>
    %752 = vector.multi_reduction <add>, %751, %cst_376 [1] : vector<33x32xf32> to vector<33xf32>
    %753 = vector.shape_cast %752 : vector<33xf32> to vector<33x1xf32>
    %cst_377 = arith.constant 3.200000e+01 : f32
    %754 = vector.broadcast %cst_377 : f32 to vector<33x1xf32>
    %755 = arith.divf %753, %754 : vector<33x1xf32>
    %756 = vector.broadcast %755 : vector<33x1xf32> to vector<33x32xf32>
    %757 = arith.subf %751, %756 : vector<33x32xf32>
    %758 = arith.mulf %757, %757 : vector<33x32xf32>
    %cst_378 = arith.constant dense<0.000000e+00> : vector<33xf32>
    %759 = vector.multi_reduction <add>, %758, %cst_378 [1] : vector<33x32xf32> to vector<33xf32>
    %760 = vector.shape_cast %759 : vector<33xf32> to vector<33x1xf32>
    %cst_379 = arith.constant 3.200000e+01 : f32
    %761 = vector.broadcast %cst_379 : f32 to vector<33x1xf32>
    %762 = arith.divf %760, %761 : vector<33x1xf32>
    %cst_380 = arith.constant 9.99999974E-6 : f32
    %763 = vector.broadcast %cst_380 : f32 to vector<33x1xf32>
    %764 = arith.addf %762, %763 : vector<33x1xf32>
    %765 = math.rsqrt %764 : vector<33x1xf32>
    %766 = vector.broadcast %765 : vector<33x1xf32> to vector<33x32xf32>
    %767 = arith.mulf %757, %766 : vector<33x32xf32>
    %768 = vector.broadcast %613 : vector<1x32xf32> to vector<33x32xf32>
    %769 = arith.mulf %767, %768 : vector<33x32xf32>
    %770 = vector.broadcast %615 : vector<1x32xf32> to vector<33x32xf32>
    %771 = arith.addf %769, %770 : vector<33x32xf32>
    %772 = arith.truncf %748 : vector<9x32xf32> to vector<9x32xbf16>
    %773 = arith.truncf %627 : vector<32x64xf32> to vector<32x64xbf16>
    %cst_381 = arith.constant dense<0.000000e+00> : vector<9x64xf32>
    %774 = tpu.matmul %772, %773, %cst_381 {dimension_numbers = #tpu.dot_dimension_numbers<[1], [0], [0], [1], [0, 0, 1, 1], [], []>} : vector<9x32xbf16>, vector<32x64xbf16>, vector<9x64xf32> -> vector<9x64xf32>
    %775 = vector.extract_strided_slice %774 {offsets = [0, 0], sizes = [9, 32], strides = [1, 1]} : vector<9x64xf32> to vector<9x32xf32>
    %cst_382 = arith.constant dense<0.000000e+00> : vector<9xf32>
    %776 = vector.multi_reduction <add>, %775, %cst_382 [1] : vector<9x32xf32> to vector<9xf32>
    %777 = vector.shape_cast %776 : vector<9xf32> to vector<9x1xf32>
    %cst_383 = arith.constant 3.200000e+01 : f32
    %778 = vector.broadcast %cst_383 : f32 to vector<9x1xf32>
    %779 = arith.divf %777, %778 : vector<9x1xf32>
    %780 = vector.broadcast %779 : vector<9x1xf32> to vector<9x32xf32>
    %781 = arith.subf %775, %780 : vector<9x32xf32>
    %782 = arith.mulf %781, %781 : vector<9x32xf32>
    %cst_384 = arith.constant dense<0.000000e+00> : vector<9xf32>
    %783 = vector.multi_reduction <add>, %782, %cst_384 [1] : vector<9x32xf32> to vector<9xf32>
    %784 = vector.shape_cast %783 : vector<9xf32> to vector<9x1xf32>
    %cst_385 = arith.constant 3.200000e+01 : f32
    %785 = vector.broadcast %cst_385 : f32 to vector<9x1xf32>
    %786 = arith.divf %784, %785 : vector<9x1xf32>
    %cst_386 = arith.constant 9.99999974E-6 : f32
    %787 = vector.broadcast %cst_386 : f32 to vector<9x1xf32>
    %788 = arith.addf %786, %787 : vector<9x1xf32>
    %789 = math.rsqrt %788 : vector<9x1xf32>
    %790 = vector.broadcast %789 : vector<9x1xf32> to vector<9x32xf32>
    %791 = arith.mulf %781, %790 : vector<9x32xf32>
    %792 = vector.broadcast %617 : vector<1x32xf32> to vector<9x32xf32>
    %793 = arith.mulf %791, %792 : vector<9x32xf32>
    %794 = vector.broadcast %619 : vector<1x32xf32> to vector<9x32xf32>
    %795 = arith.addf %793, %794 : vector<9x32xf32>
    %796 = vector.extract_strided_slice %774 {offsets = [0, 32], sizes = [9, 32], strides = [1, 1]} : vector<9x64xf32> to vector<9x32xf32>
    %cst_387 = arith.constant dense<0.000000e+00> : vector<9xf32>
    %797 = vector.multi_reduction <add>, %796, %cst_387 [1] : vector<9x32xf32> to vector<9xf32>
    %798 = vector.shape_cast %797 : vector<9xf32> to vector<9x1xf32>
    %cst_388 = arith.constant 3.200000e+01 : f32
    %799 = vector.broadcast %cst_388 : f32 to vector<9x1xf32>
    %800 = arith.divf %798, %799 : vector<9x1xf32>
    %801 = vector.broadcast %800 : vector<9x1xf32> to vector<9x32xf32>
    %802 = arith.subf %796, %801 : vector<9x32xf32>
    %803 = arith.mulf %802, %802 : vector<9x32xf32>
    %cst_389 = arith.constant dense<0.000000e+00> : vector<9xf32>
    %804 = vector.multi_reduction <add>, %803, %cst_389 [1] : vector<9x32xf32> to vector<9xf32>
    %805 = vector.shape_cast %804 : vector<9xf32> to vector<9x1xf32>
    %cst_390 = arith.constant 3.200000e+01 : f32
    %806 = vector.broadcast %cst_390 : f32 to vector<9x1xf32>
    %807 = arith.divf %805, %806 : vector<9x1xf32>
    %cst_391 = arith.constant 9.99999974E-6 : f32
    %808 = vector.broadcast %cst_391 : f32 to vector<9x1xf32>
    %809 = arith.addf %807, %808 : vector<9x1xf32>
    %810 = math.rsqrt %809 : vector<9x1xf32>
    %811 = vector.broadcast %810 : vector<9x1xf32> to vector<9x32xf32>
    %812 = arith.mulf %802, %811 : vector<9x32xf32>
    %813 = vector.broadcast %621 : vector<1x32xf32> to vector<9x32xf32>
    %814 = arith.mulf %812, %813 : vector<9x32xf32>
    %815 = vector.broadcast %623 : vector<1x32xf32> to vector<9x32xf32>
    %816 = arith.addf %814, %815 : vector<9x32xf32>
    %817 = vector.extract_strided_slice %771 {offsets = [0, 0], sizes = [33, 8], strides = [1, 1]} : vector<33x32xf32> to vector<33x8xf32>
    %818 = vector.extract_strided_slice %795 {offsets = [0, 0], sizes = [9, 8], strides = [1, 1]} : vector<9x32xf32> to vector<9x8xf32>
    %819 = arith.truncf %817 : vector<33x8xf32> to vector<33x8xbf16>
    %820 = arith.truncf %818 : vector<9x8xf32> to vector<9x8xbf16>
    %cst_392 = arith.constant dense<0.000000e+00> : vector<33x9xf32>
    %821 = tpu.matmul %819, %820, %cst_392 {dimension_numbers = #tpu.dot_dimension_numbers<[1], [1], [0], [0], [0, 0, 1, 0], [], []>} : vector<33x8xbf16>, vector<9x8xbf16>, vector<33x9xf32> -> vector<33x9xf32>
    %cst_393 = arith.constant 0.353553385 : f32
    %822 = vector.broadcast %cst_393 : f32 to vector<33x9xf32>
    %823 = arith.mulf %821, %822 : vector<33x9xf32>
    %cst_394 = arith.constant dense<0xFF800000> : vector<33xf32>
    %824 = vector.multi_reduction <maximumf>, %823, %cst_394 [1] : vector<33x9xf32> to vector<33xf32>
    %825 = vector.shape_cast %824 : vector<33xf32> to vector<33x1xf32>
    %826 = vector.broadcast %825 : vector<33x1xf32> to vector<33x9xf32>
    %827 = arith.subf %823, %826 : vector<33x9xf32>
    %828 = math.exp %827 : vector<33x9xf32>
    %cst_395 = arith.constant dense<0.000000e+00> : vector<33xf32>
    %829 = vector.multi_reduction <add>, %828, %cst_395 [1] : vector<33x9xf32> to vector<33xf32>
    %830 = vector.shape_cast %829 : vector<33xf32> to vector<33x1xf32>
    %831 = vector.broadcast %830 : vector<33x1xf32> to vector<33x9xf32>
    %832 = arith.divf %828, %831 : vector<33x9xf32>
    %833 = vector.extract_strided_slice %816 {offsets = [0, 0], sizes = [9, 8], strides = [1, 1]} : vector<9x32xf32> to vector<9x8xf32>
    %834 = arith.truncf %832 : vector<33x9xf32> to vector<33x9xbf16>
    %835 = arith.truncf %833 : vector<9x8xf32> to vector<9x8xbf16>
    %cst_396 = arith.constant dense<0.000000e+00> : vector<33x8xf32>
    %836 = tpu.matmul %834, %835, %cst_396 {dimension_numbers = #tpu.dot_dimension_numbers<[1], [0], [0], [1], [0, 0, 1, 1], [], []>} : vector<33x9xbf16>, vector<9x8xbf16>, vector<33x8xf32> -> vector<33x8xf32>
    %837 = vector.extract_strided_slice %771 {offsets = [0, 8], sizes = [33, 8], strides = [1, 1]} : vector<33x32xf32> to vector<33x8xf32>
    %838 = vector.extract_strided_slice %795 {offsets = [0, 8], sizes = [9, 8], strides = [1, 1]} : vector<9x32xf32> to vector<9x8xf32>
    %839 = arith.truncf %837 : vector<33x8xf32> to vector<33x8xbf16>
    %840 = arith.truncf %838 : vector<9x8xf32> to vector<9x8xbf16>
    %cst_397 = arith.constant dense<0.000000e+00> : vector<33x9xf32>
    %841 = tpu.matmul %839, %840, %cst_397 {dimension_numbers = #tpu.dot_dimension_numbers<[1], [1], [0], [0], [0, 0, 1, 0], [], []>} : vector<33x8xbf16>, vector<9x8xbf16>, vector<33x9xf32> -> vector<33x9xf32>
    %cst_398 = arith.constant 0.353553385 : f32
    %842 = vector.broadcast %cst_398 : f32 to vector<33x9xf32>
    %843 = arith.mulf %841, %842 : vector<33x9xf32>
    %cst_399 = arith.constant dense<0xFF800000> : vector<33xf32>
    %844 = vector.multi_reduction <maximumf>, %843, %cst_399 [1] : vector<33x9xf32> to vector<33xf32>
    %845 = vector.shape_cast %844 : vector<33xf32> to vector<33x1xf32>
    %846 = vector.broadcast %845 : vector<33x1xf32> to vector<33x9xf32>
    %847 = arith.subf %843, %846 : vector<33x9xf32>
    %848 = math.exp %847 : vector<33x9xf32>
    %cst_400 = arith.constant dense<0.000000e+00> : vector<33xf32>
    %849 = vector.multi_reduction <add>, %848, %cst_400 [1] : vector<33x9xf32> to vector<33xf32>
    %850 = vector.shape_cast %849 : vector<33xf32> to vector<33x1xf32>
    %851 = vector.broadcast %850 : vector<33x1xf32> to vector<33x9xf32>
    %852 = arith.divf %848, %851 : vector<33x9xf32>
    %853 = vector.extract_strided_slice %816 {offsets = [0, 8], sizes = [9, 8], strides = [1, 1]} : vector<9x32xf32> to vector<9x8xf32>
    %854 = arith.truncf %852 : vector<33x9xf32> to vector<33x9xbf16>
    %855 = arith.truncf %853 : vector<9x8xf32> to vector<9x8xbf16>
    %cst_401 = arith.constant dense<0.000000e+00> : vector<33x8xf32>
    %856 = tpu.matmul %854, %855, %cst_401 {dimension_numbers = #tpu.dot_dimension_numbers<[1], [0], [0], [1], [0, 0, 1, 1], [], []>} : vector<33x9xbf16>, vector<9x8xbf16>, vector<33x8xf32> -> vector<33x8xf32>
    %857 = vector.extract_strided_slice %771 {offsets = [0, 16], sizes = [33, 8], strides = [1, 1]} : vector<33x32xf32> to vector<33x8xf32>
    %858 = vector.extract_strided_slice %795 {offsets = [0, 16], sizes = [9, 8], strides = [1, 1]} : vector<9x32xf32> to vector<9x8xf32>
    %859 = arith.truncf %857 : vector<33x8xf32> to vector<33x8xbf16>
    %860 = arith.truncf %858 : vector<9x8xf32> to vector<9x8xbf16>
    %cst_402 = arith.constant dense<0.000000e+00> : vector<33x9xf32>
    %861 = tpu.matmul %859, %860, %cst_402 {dimension_numbers = #tpu.dot_dimension_numbers<[1], [1], [0], [0], [0, 0, 1, 0], [], []>} : vector<33x8xbf16>, vector<9x8xbf16>, vector<33x9xf32> -> vector<33x9xf32>
    %cst_403 = arith.constant 0.353553385 : f32
    %862 = vector.broadcast %cst_403 : f32 to vector<33x9xf32>
    %863 = arith.mulf %861, %862 : vector<33x9xf32>
    %cst_404 = arith.constant dense<0xFF800000> : vector<33xf32>
    %864 = vector.multi_reduction <maximumf>, %863, %cst_404 [1] : vector<33x9xf32> to vector<33xf32>
    %865 = vector.shape_cast %864 : vector<33xf32> to vector<33x1xf32>
    %866 = vector.broadcast %865 : vector<33x1xf32> to vector<33x9xf32>
    %867 = arith.subf %863, %866 : vector<33x9xf32>
    %868 = math.exp %867 : vector<33x9xf32>
    %cst_405 = arith.constant dense<0.000000e+00> : vector<33xf32>
    %869 = vector.multi_reduction <add>, %868, %cst_405 [1] : vector<33x9xf32> to vector<33xf32>
    %870 = vector.shape_cast %869 : vector<33xf32> to vector<33x1xf32>
    %871 = vector.broadcast %870 : vector<33x1xf32> to vector<33x9xf32>
    %872 = arith.divf %868, %871 : vector<33x9xf32>
    %873 = vector.extract_strided_slice %816 {offsets = [0, 16], sizes = [9, 8], strides = [1, 1]} : vector<9x32xf32> to vector<9x8xf32>
    %874 = arith.truncf %872 : vector<33x9xf32> to vector<33x9xbf16>
    %875 = arith.truncf %873 : vector<9x8xf32> to vector<9x8xbf16>
    %cst_406 = arith.constant dense<0.000000e+00> : vector<33x8xf32>
    %876 = tpu.matmul %874, %875, %cst_406 {dimension_numbers = #tpu.dot_dimension_numbers<[1], [0], [0], [1], [0, 0, 1, 1], [], []>} : vector<33x9xbf16>, vector<9x8xbf16>, vector<33x8xf32> -> vector<33x8xf32>
    %877 = vector.extract_strided_slice %771 {offsets = [0, 24], sizes = [33, 8], strides = [1, 1]} : vector<33x32xf32> to vector<33x8xf32>
    %878 = vector.extract_strided_slice %795 {offsets = [0, 24], sizes = [9, 8], strides = [1, 1]} : vector<9x32xf32> to vector<9x8xf32>
    %879 = arith.truncf %877 : vector<33x8xf32> to vector<33x8xbf16>
    %880 = arith.truncf %878 : vector<9x8xf32> to vector<9x8xbf16>
    %cst_407 = arith.constant dense<0.000000e+00> : vector<33x9xf32>
    %881 = tpu.matmul %879, %880, %cst_407 {dimension_numbers = #tpu.dot_dimension_numbers<[1], [1], [0], [0], [0, 0, 1, 0], [], []>} : vector<33x8xbf16>, vector<9x8xbf16>, vector<33x9xf32> -> vector<33x9xf32>
    %cst_408 = arith.constant 0.353553385 : f32
    %882 = vector.broadcast %cst_408 : f32 to vector<33x9xf32>
    %883 = arith.mulf %881, %882 : vector<33x9xf32>
    %cst_409 = arith.constant dense<0xFF800000> : vector<33xf32>
    %884 = vector.multi_reduction <maximumf>, %883, %cst_409 [1] : vector<33x9xf32> to vector<33xf32>
    %885 = vector.shape_cast %884 : vector<33xf32> to vector<33x1xf32>
    %886 = vector.broadcast %885 : vector<33x1xf32> to vector<33x9xf32>
    %887 = arith.subf %883, %886 : vector<33x9xf32>
    %888 = math.exp %887 : vector<33x9xf32>
    %cst_410 = arith.constant dense<0.000000e+00> : vector<33xf32>
    %889 = vector.multi_reduction <add>, %888, %cst_410 [1] : vector<33x9xf32> to vector<33xf32>
    %890 = vector.shape_cast %889 : vector<33xf32> to vector<33x1xf32>
    %891 = vector.broadcast %890 : vector<33x1xf32> to vector<33x9xf32>
    %892 = arith.divf %888, %891 : vector<33x9xf32>
    %893 = vector.extract_strided_slice %816 {offsets = [0, 24], sizes = [9, 8], strides = [1, 1]} : vector<9x32xf32> to vector<9x8xf32>
    %894 = arith.truncf %892 : vector<33x9xf32> to vector<33x9xbf16>
    %895 = arith.truncf %893 : vector<9x8xf32> to vector<9x8xbf16>
    %cst_411 = arith.constant dense<0.000000e+00> : vector<33x8xf32>
    %896 = tpu.matmul %894, %895, %cst_411 {dimension_numbers = #tpu.dot_dimension_numbers<[1], [0], [0], [1], [0, 0, 1, 1], [], []>} : vector<33x9xbf16>, vector<9x8xbf16>, vector<33x8xf32> -> vector<33x8xf32>
    %897 = tpu.concatenate %836, %856, %876, %896 in 1 : vector<33x8xf32>, vector<33x8xf32>, vector<33x8xf32>, vector<33x8xf32> -> vector<33x32xf32>
    %898 = arith.truncf %897 : vector<33x32xf32> to vector<33x32xbf16>
    %899 = arith.truncf %629 : vector<32x32xf32> to vector<32x32xbf16>
    %cst_412 = arith.constant dense<0.000000e+00> : vector<33x32xf32>
    %900 = tpu.matmul %898, %899, %cst_412 {dimension_numbers = #tpu.dot_dimension_numbers<[1], [0], [0], [1], [0, 0, 1, 1], [], []>} : vector<33x32xbf16>, vector<32x32xbf16>, vector<33x32xf32> -> vector<33x32xf32>
    %901 = arith.addf %900, %583 : vector<33x32xf32>
    %cst_413 = arith.constant dense<0.000000e+00> : vector<33xf32>
    %902 = vector.multi_reduction <add>, %901, %cst_413 [1] : vector<33x32xf32> to vector<33xf32>
    %903 = vector.shape_cast %902 : vector<33xf32> to vector<33x1xf32>
    %cst_414 = arith.constant 3.200000e+01 : f32
    %904 = vector.broadcast %cst_414 : f32 to vector<33x1xf32>
    %905 = arith.divf %903, %904 : vector<33x1xf32>
    %906 = vector.broadcast %905 : vector<33x1xf32> to vector<33x32xf32>
    %907 = arith.subf %901, %906 : vector<33x32xf32>
    %908 = arith.mulf %907, %907 : vector<33x32xf32>
    %cst_415 = arith.constant dense<0.000000e+00> : vector<33xf32>
    %909 = vector.multi_reduction <add>, %908, %cst_415 [1] : vector<33x32xf32> to vector<33xf32>
    %910 = vector.shape_cast %909 : vector<33xf32> to vector<33x1xf32>
    %cst_416 = arith.constant 3.200000e+01 : f32
    %911 = vector.broadcast %cst_416 : f32 to vector<33x1xf32>
    %912 = arith.divf %910, %911 : vector<33x1xf32>
    %cst_417 = arith.constant 9.99999974E-6 : f32
    %913 = vector.broadcast %cst_417 : f32 to vector<33x1xf32>
    %914 = arith.addf %912, %913 : vector<33x1xf32>
    %915 = math.rsqrt %914 : vector<33x1xf32>
    %916 = vector.broadcast %915 : vector<33x1xf32> to vector<33x32xf32>
    %917 = arith.mulf %907, %916 : vector<33x32xf32>
    %918 = vector.broadcast %589 : vector<1x32xf32> to vector<33x32xf32>
    %919 = arith.mulf %917, %918 : vector<33x32xf32>
    %920 = vector.broadcast %591 : vector<1x32xf32> to vector<33x32xf32>
    %921 = arith.addf %919, %920 : vector<33x32xf32>
    %922 = vector.extract_strided_slice %921 {offsets = [0, 0], sizes = [1, 32], strides = [1, 1]} : vector<33x32xf32> to vector<1x32xf32>
    %923 = vector.extract_strided_slice %921 {offsets = [1, 0], sizes = [32, 32], strides = [1, 1]} : vector<33x32xf32> to vector<32x32xf32>
    %924 = arith.truncf %923 : vector<32x32xf32> to vector<32x32xbf16>
    %925 = arith.truncf %631 : vector<32x128xf32> to vector<32x128xbf16>
    %cst_418 = arith.constant dense<0.000000e+00> : vector<32x128xf32>
    %926 = tpu.matmul %924, %925, %cst_418 {dimension_numbers = #tpu.dot_dimension_numbers<[1], [0], [0], [1], [0, 0, 1, 1], [], []>} : vector<32x32xbf16>, vector<32x128xbf16>, vector<32x128xf32> -> vector<32x128xf32>
    %927 = vector.broadcast %633 : vector<1x128xf32> to vector<32x128xf32>
    %928 = arith.addf %926, %927 : vector<32x128xf32>
    %cst_419 = arith.constant 0.000000e+00 : f32
    %929 = vector.broadcast %cst_419 : f32 to vector<1x128xf32>
    %930 = tpu.concatenate %929, %928, %929 in 0 : vector<1x128xf32>, vector<32x128xf32>, vector<1x128xf32> -> vector<34x128xf32>
    %931 = vector.extract_strided_slice %930 {offsets = [0, 0], sizes = [32, 128], strides = [1, 1]} : vector<34x128xf32> to vector<32x128xf32>
    %932 = vector.extract_strided_slice %635 {offsets = [0, 0], sizes = [1, 128], strides = [1, 1]} : vector<3x128xf32> to vector<1x128xf32>
    %933 = vector.broadcast %932 : vector<1x128xf32> to vector<32x128xf32>
    %934 = arith.mulf %931, %933 : vector<32x128xf32>
    %935 = vector.extract_strided_slice %930 {offsets = [1, 0], sizes = [32, 128], strides = [1, 1]} : vector<34x128xf32> to vector<32x128xf32>
    %936 = vector.extract_strided_slice %635 {offsets = [1, 0], sizes = [1, 128], strides = [1, 1]} : vector<3x128xf32> to vector<1x128xf32>
    %937 = vector.broadcast %936 : vector<1x128xf32> to vector<32x128xf32>
    %938 = arith.mulf %935, %937 : vector<32x128xf32>
    %939 = arith.addf %934, %938 : vector<32x128xf32>
    %940 = vector.extract_strided_slice %930 {offsets = [2, 0], sizes = [32, 128], strides = [1, 1]} : vector<34x128xf32> to vector<32x128xf32>
    %941 = vector.extract_strided_slice %635 {offsets = [2, 0], sizes = [1, 128], strides = [1, 1]} : vector<3x128xf32> to vector<1x128xf32>
    %942 = vector.broadcast %941 : vector<1x128xf32> to vector<32x128xf32>
    %943 = arith.mulf %940, %942 : vector<32x128xf32>
    %944 = arith.addf %939, %943 : vector<32x128xf32>
    %945 = vector.broadcast %637 : vector<1x128xf32> to vector<32x128xf32>
    %946 = arith.addf %944, %945 : vector<32x128xf32>
    %cst_420 = arith.constant 5.000000e-01 : f32
    %947 = vector.broadcast %cst_420 : f32 to vector<32x128xf32>
    %948 = arith.mulf %947, %946 : vector<32x128xf32>
    %cst_421 = arith.constant 0.707106769 : f32
    %949 = vector.broadcast %cst_421 : f32 to vector<32x128xf32>
    %950 = arith.mulf %946, %949 : vector<32x128xf32>
    %951 = math.absf %950 : vector<32x128xf32>
    %cst_422 = arith.constant 0.327591091 : f32
    %952 = vector.broadcast %cst_422 : f32 to vector<32x128xf32>
    %953 = arith.mulf %952, %951 : vector<32x128xf32>
    %cst_423 = arith.constant 1.000000e+00 : f32
    %954 = vector.broadcast %cst_423 : f32 to vector<32x128xf32>
    %955 = arith.addf %954, %953 : vector<32x128xf32>
    %cst_424 = arith.constant 1.000000e+00 : f32
    %956 = vector.broadcast %cst_424 : f32 to vector<32x128xf32>
    %957 = arith.divf %956, %955 : vector<32x128xf32>
    %cst_425 = arith.constant 1.06140542 : f32
    %958 = vector.broadcast %cst_425 : f32 to vector<32x128xf32>
    %959 = arith.mulf %958, %957 : vector<32x128xf32>
    %cst_426 = arith.constant 1.45315206 : f32
    %960 = vector.broadcast %cst_426 : f32 to vector<32x128xf32>
    %961 = arith.subf %959, %960 : vector<32x128xf32>
    %962 = arith.mulf %961, %957 : vector<32x128xf32>
    %cst_427 = arith.constant 1.42141378 : f32
    %963 = vector.broadcast %cst_427 : f32 to vector<32x128xf32>
    %964 = arith.addf %962, %963 : vector<32x128xf32>
    %965 = arith.mulf %964, %957 : vector<32x128xf32>
    %cst_428 = arith.constant 0.284496725 : f32
    %966 = vector.broadcast %cst_428 : f32 to vector<32x128xf32>
    %967 = arith.subf %965, %966 : vector<32x128xf32>
    %968 = arith.mulf %967, %957 : vector<32x128xf32>
    %cst_429 = arith.constant 0.254829586 : f32
    %969 = vector.broadcast %cst_429 : f32 to vector<32x128xf32>
    %970 = arith.addf %968, %969 : vector<32x128xf32>
    %971 = arith.mulf %970, %957 : vector<32x128xf32>
    %972 = arith.mulf %951, %951 : vector<32x128xf32>
    %cst_430 = arith.constant 0.000000e+00 : f32
    %973 = vector.broadcast %cst_430 : f32 to vector<32x128xf32>
    %974 = arith.subf %973, %972 : vector<32x128xf32>
    %975 = math.exp %974 : vector<32x128xf32>
    %976 = arith.mulf %971, %975 : vector<32x128xf32>
    %cst_431 = arith.constant 1.000000e+00 : f32
    %977 = vector.broadcast %cst_431 : f32 to vector<32x128xf32>
    %978 = arith.subf %977, %976 : vector<32x128xf32>
    %cst_432 = arith.constant 0.000000e+00 : f32
    %979 = vector.broadcast %cst_432 : f32 to vector<32x128xf32>
    %980 = arith.cmpf oge, %950, %979 : vector<32x128xf32>
    %cst_433 = arith.constant 0.000000e+00 : f32
    %981 = vector.broadcast %cst_433 : f32 to vector<32x128xf32>
    %982 = arith.subf %981, %978 : vector<32x128xf32>
    %983 = arith.select %980, %978, %982 : vector<32x128xi1>, vector<32x128xf32>
    %cst_434 = arith.constant 1.000000e+00 : f32
    %984 = vector.broadcast %cst_434 : f32 to vector<32x128xf32>
    %985 = arith.addf %984, %983 : vector<32x128xf32>
    %986 = arith.mulf %948, %985 : vector<32x128xf32>
    %987 = arith.truncf %986 : vector<32x128xf32> to vector<32x128xbf16>
    %988 = arith.truncf %639 : vector<128x32xf32> to vector<128x32xbf16>
    %cst_435 = arith.constant dense<0.000000e+00> : vector<32x32xf32>
    %989 = tpu.matmul %987, %988, %cst_435 {dimension_numbers = #tpu.dot_dimension_numbers<[1], [0], [0], [1], [0, 0, 1, 1], [], []>} : vector<32x128xbf16>, vector<128x32xbf16>, vector<32x32xf32> -> vector<32x32xf32>
    %990 = vector.broadcast %641 : vector<1x32xf32> to vector<32x32xf32>
    %991 = arith.addf %989, %990 : vector<32x32xf32>
    %992 = tpu.concatenate %922, %991 in 0 : vector<1x32xf32>, vector<32x32xf32> -> vector<33x32xf32>
    %993 = arith.addf %992, %901 : vector<33x32xf32>
    %cst_436 = arith.constant dense<0.000000e+00> : vector<33xf32>
    %994 = vector.multi_reduction <add>, %993, %cst_436 [1] : vector<33x32xf32> to vector<33xf32>
    %995 = vector.shape_cast %994 : vector<33xf32> to vector<33x1xf32>
    %cst_437 = arith.constant 3.200000e+01 : f32
    %996 = vector.broadcast %cst_437 : f32 to vector<33x1xf32>
    %997 = arith.divf %995, %996 : vector<33x1xf32>
    %998 = vector.broadcast %997 : vector<33x1xf32> to vector<33x32xf32>
    %999 = arith.subf %993, %998 : vector<33x32xf32>
    %1000 = arith.mulf %999, %999 : vector<33x32xf32>
    %cst_438 = arith.constant dense<0.000000e+00> : vector<33xf32>
    %1001 = vector.multi_reduction <add>, %1000, %cst_438 [1] : vector<33x32xf32> to vector<33xf32>
    %1002 = vector.shape_cast %1001 : vector<33xf32> to vector<33x1xf32>
    %cst_439 = arith.constant 3.200000e+01 : f32
    %1003 = vector.broadcast %cst_439 : f32 to vector<33x1xf32>
    %1004 = arith.divf %1002, %1003 : vector<33x1xf32>
    %cst_440 = arith.constant 9.99999974E-6 : f32
    %1005 = vector.broadcast %cst_440 : f32 to vector<33x1xf32>
    %1006 = arith.addf %1004, %1005 : vector<33x1xf32>
    %1007 = math.rsqrt %1006 : vector<33x1xf32>
    %1008 = vector.broadcast %1007 : vector<33x1xf32> to vector<33x32xf32>
    %1009 = arith.mulf %999, %1008 : vector<33x32xf32>
    %1010 = vector.broadcast %593 : vector<1x32xf32> to vector<33x32xf32>
    %1011 = arith.mulf %1009, %1010 : vector<33x32xf32>
    %1012 = vector.broadcast %595 : vector<1x32xf32> to vector<33x32xf32>
    %1013 = arith.addf %1011, %1012 : vector<33x32xf32>
    %1014 = vector.extract_strided_slice %1013 {offsets = [0, 0], sizes = [1, 32], strides = [1, 1]} : vector<33x32xf32> to vector<1x32xf32>
    %1015 = vector.extract_strided_slice %1013 {offsets = [1, 0], sizes = [32, 32], strides = [1, 1]} : vector<33x32xf32> to vector<32x32xf32>
    %1016 = arith.truncf %1015 : vector<32x32xf32> to vector<32x32xbf16>
    %1017 = arith.truncf %643 : vector<32x128xf32> to vector<32x128xbf16>
    %cst_441 = arith.constant dense<0.000000e+00> : vector<32x128xf32>
    %1018 = tpu.matmul %1016, %1017, %cst_441 {dimension_numbers = #tpu.dot_dimension_numbers<[1], [0], [0], [1], [0, 0, 1, 1], [], []>} : vector<32x32xbf16>, vector<32x128xbf16>, vector<32x128xf32> -> vector<32x128xf32>
    %1019 = vector.broadcast %645 : vector<1x128xf32> to vector<32x128xf32>
    %1020 = arith.addf %1018, %1019 : vector<32x128xf32>
    %cst_442 = arith.constant 0.000000e+00 : f32
    %1021 = vector.broadcast %cst_442 : f32 to vector<1x128xf32>
    %1022 = tpu.concatenate %1021, %1020, %1021 in 0 : vector<1x128xf32>, vector<32x128xf32>, vector<1x128xf32> -> vector<34x128xf32>
    %1023 = vector.extract_strided_slice %1022 {offsets = [0, 0], sizes = [32, 128], strides = [1, 1]} : vector<34x128xf32> to vector<32x128xf32>
    %1024 = vector.extract_strided_slice %647 {offsets = [0, 0], sizes = [1, 128], strides = [1, 1]} : vector<3x128xf32> to vector<1x128xf32>
    %1025 = vector.broadcast %1024 : vector<1x128xf32> to vector<32x128xf32>
    %1026 = arith.mulf %1023, %1025 : vector<32x128xf32>
    %1027 = vector.extract_strided_slice %1022 {offsets = [1, 0], sizes = [32, 128], strides = [1, 1]} : vector<34x128xf32> to vector<32x128xf32>
    %1028 = vector.extract_strided_slice %647 {offsets = [1, 0], sizes = [1, 128], strides = [1, 1]} : vector<3x128xf32> to vector<1x128xf32>
    %1029 = vector.broadcast %1028 : vector<1x128xf32> to vector<32x128xf32>
    %1030 = arith.mulf %1027, %1029 : vector<32x128xf32>
    %1031 = arith.addf %1026, %1030 : vector<32x128xf32>
    %1032 = vector.extract_strided_slice %1022 {offsets = [2, 0], sizes = [32, 128], strides = [1, 1]} : vector<34x128xf32> to vector<32x128xf32>
    %1033 = vector.extract_strided_slice %647 {offsets = [2, 0], sizes = [1, 128], strides = [1, 1]} : vector<3x128xf32> to vector<1x128xf32>
    %1034 = vector.broadcast %1033 : vector<1x128xf32> to vector<32x128xf32>
    %1035 = arith.mulf %1032, %1034 : vector<32x128xf32>
    %1036 = arith.addf %1031, %1035 : vector<32x128xf32>
    %1037 = vector.broadcast %649 : vector<1x128xf32> to vector<32x128xf32>
    %1038 = arith.addf %1036, %1037 : vector<32x128xf32>
    %cst_443 = arith.constant 5.000000e-01 : f32
    %1039 = vector.broadcast %cst_443 : f32 to vector<32x128xf32>
    %1040 = arith.mulf %1039, %1038 : vector<32x128xf32>
    %cst_444 = arith.constant 0.707106769 : f32
    %1041 = vector.broadcast %cst_444 : f32 to vector<32x128xf32>
    %1042 = arith.mulf %1038, %1041 : vector<32x128xf32>
    %1043 = math.absf %1042 : vector<32x128xf32>
    %cst_445 = arith.constant 0.327591091 : f32
    %1044 = vector.broadcast %cst_445 : f32 to vector<32x128xf32>
    %1045 = arith.mulf %1044, %1043 : vector<32x128xf32>
    %cst_446 = arith.constant 1.000000e+00 : f32
    %1046 = vector.broadcast %cst_446 : f32 to vector<32x128xf32>
    %1047 = arith.addf %1046, %1045 : vector<32x128xf32>
    %cst_447 = arith.constant 1.000000e+00 : f32
    %1048 = vector.broadcast %cst_447 : f32 to vector<32x128xf32>
    %1049 = arith.divf %1048, %1047 : vector<32x128xf32>
    %cst_448 = arith.constant 1.06140542 : f32
    %1050 = vector.broadcast %cst_448 : f32 to vector<32x128xf32>
    %1051 = arith.mulf %1050, %1049 : vector<32x128xf32>
    %cst_449 = arith.constant 1.45315206 : f32
    %1052 = vector.broadcast %cst_449 : f32 to vector<32x128xf32>
    %1053 = arith.subf %1051, %1052 : vector<32x128xf32>
    %1054 = arith.mulf %1053, %1049 : vector<32x128xf32>
    %cst_450 = arith.constant 1.42141378 : f32
    %1055 = vector.broadcast %cst_450 : f32 to vector<32x128xf32>
    %1056 = arith.addf %1054, %1055 : vector<32x128xf32>
    %1057 = arith.mulf %1056, %1049 : vector<32x128xf32>
    %cst_451 = arith.constant 0.284496725 : f32
    %1058 = vector.broadcast %cst_451 : f32 to vector<32x128xf32>
    %1059 = arith.subf %1057, %1058 : vector<32x128xf32>
    %1060 = arith.mulf %1059, %1049 : vector<32x128xf32>
    %cst_452 = arith.constant 0.254829586 : f32
    %1061 = vector.broadcast %cst_452 : f32 to vector<32x128xf32>
    %1062 = arith.addf %1060, %1061 : vector<32x128xf32>
    %1063 = arith.mulf %1062, %1049 : vector<32x128xf32>
    %1064 = arith.mulf %1043, %1043 : vector<32x128xf32>
    %cst_453 = arith.constant 0.000000e+00 : f32
    %1065 = vector.broadcast %cst_453 : f32 to vector<32x128xf32>
    %1066 = arith.subf %1065, %1064 : vector<32x128xf32>
    %1067 = math.exp %1066 : vector<32x128xf32>
    %1068 = arith.mulf %1063, %1067 : vector<32x128xf32>
    %cst_454 = arith.constant 1.000000e+00 : f32
    %1069 = vector.broadcast %cst_454 : f32 to vector<32x128xf32>
    %1070 = arith.subf %1069, %1068 : vector<32x128xf32>
    %cst_455 = arith.constant 0.000000e+00 : f32
    %1071 = vector.broadcast %cst_455 : f32 to vector<32x128xf32>
    %1072 = arith.cmpf oge, %1042, %1071 : vector<32x128xf32>
    %cst_456 = arith.constant 0.000000e+00 : f32
    %1073 = vector.broadcast %cst_456 : f32 to vector<32x128xf32>
    %1074 = arith.subf %1073, %1070 : vector<32x128xf32>
    %1075 = arith.select %1072, %1070, %1074 : vector<32x128xi1>, vector<32x128xf32>
    %cst_457 = arith.constant 1.000000e+00 : f32
    %1076 = vector.broadcast %cst_457 : f32 to vector<32x128xf32>
    %1077 = arith.addf %1076, %1075 : vector<32x128xf32>
    %1078 = arith.mulf %1040, %1077 : vector<32x128xf32>
    %1079 = arith.truncf %1078 : vector<32x128xf32> to vector<32x128xbf16>
    %1080 = arith.truncf %651 : vector<128x32xf32> to vector<128x32xbf16>
    %cst_458 = arith.constant dense<0.000000e+00> : vector<32x32xf32>
    %1081 = tpu.matmul %1079, %1080, %cst_458 {dimension_numbers = #tpu.dot_dimension_numbers<[1], [0], [0], [1], [0, 0, 1, 1], [], []>} : vector<32x128xbf16>, vector<128x32xbf16>, vector<32x32xf32> -> vector<32x32xf32>
    %1082 = vector.broadcast %653 : vector<1x32xf32> to vector<32x32xf32>
    %1083 = arith.addf %1081, %1082 : vector<32x32xf32>
    %1084 = tpu.concatenate %1014, %1083 in 0 : vector<1x32xf32>, vector<32x32xf32> -> vector<33x32xf32>
    %1085 = arith.addf %1084, %993 : vector<33x32xf32>
    %cst_459 = arith.constant dense<0.000000e+00> : vector<33xf32>
    %1086 = vector.multi_reduction <add>, %993, %cst_459 [1] : vector<33x32xf32> to vector<33xf32>
    %1087 = vector.shape_cast %1086 : vector<33xf32> to vector<33x1xf32>
    %cst_460 = arith.constant 3.200000e+01 : f32
    %1088 = vector.broadcast %cst_460 : f32 to vector<33x1xf32>
    %1089 = arith.divf %1087, %1088 : vector<33x1xf32>
    %1090 = vector.broadcast %1089 : vector<33x1xf32> to vector<33x32xf32>
    %1091 = arith.subf %993, %1090 : vector<33x32xf32>
    %1092 = arith.mulf %1091, %1091 : vector<33x32xf32>
    %cst_461 = arith.constant dense<0.000000e+00> : vector<33xf32>
    %1093 = vector.multi_reduction <add>, %1092, %cst_461 [1] : vector<33x32xf32> to vector<33xf32>
    %1094 = vector.shape_cast %1093 : vector<33xf32> to vector<33x1xf32>
    %cst_462 = arith.constant 3.200000e+01 : f32
    %1095 = vector.broadcast %cst_462 : f32 to vector<33x1xf32>
    %1096 = arith.divf %1094, %1095 : vector<33x1xf32>
    %cst_463 = arith.constant 9.99999974E-6 : f32
    %1097 = vector.broadcast %cst_463 : f32 to vector<33x1xf32>
    %1098 = arith.addf %1096, %1097 : vector<33x1xf32>
    %1099 = math.rsqrt %1098 : vector<33x1xf32>
    %1100 = vector.broadcast %1099 : vector<33x1xf32> to vector<33x32xf32>
    %1101 = arith.mulf %1091, %1100 : vector<33x32xf32>
    %1102 = vector.broadcast %597 : vector<1x32xf32> to vector<33x32xf32>
    %1103 = arith.mulf %1101, %1102 : vector<33x32xf32>
    %1104 = vector.broadcast %599 : vector<1x32xf32> to vector<33x32xf32>
    %1105 = arith.addf %1103, %1104 : vector<33x32xf32>
    %1106 = arith.truncf %1105 : vector<33x32xf32> to vector<33x32xbf16>
    %1107 = arith.truncf %655 : vector<32x32xf32> to vector<32x32xbf16>
    %cst_464 = arith.constant dense<0.000000e+00> : vector<33x32xf32>
    %1108 = tpu.matmul %1106, %1107, %cst_464 {dimension_numbers = #tpu.dot_dimension_numbers<[1], [0], [0], [1], [0, 0, 1, 1], [], []>} : vector<33x32xbf16>, vector<32x32xbf16>, vector<33x32xf32> -> vector<33x32xf32>
    %1109 = vector.broadcast %657 : vector<1x32xf32> to vector<33x32xf32>
    %1110 = arith.addf %1108, %1109 : vector<33x32xf32>
    %cst_465 = arith.constant 5.000000e-01 : f32
    %1111 = vector.broadcast %cst_465 : f32 to vector<33x32xf32>
    %1112 = arith.mulf %1111, %1110 : vector<33x32xf32>
    %cst_466 = arith.constant 0.707106769 : f32
    %1113 = vector.broadcast %cst_466 : f32 to vector<33x32xf32>
    %1114 = arith.mulf %1110, %1113 : vector<33x32xf32>
    %1115 = math.absf %1114 : vector<33x32xf32>
    %cst_467 = arith.constant 0.327591091 : f32
    %1116 = vector.broadcast %cst_467 : f32 to vector<33x32xf32>
    %1117 = arith.mulf %1116, %1115 : vector<33x32xf32>
    %cst_468 = arith.constant 1.000000e+00 : f32
    %1118 = vector.broadcast %cst_468 : f32 to vector<33x32xf32>
    %1119 = arith.addf %1118, %1117 : vector<33x32xf32>
    %cst_469 = arith.constant 1.000000e+00 : f32
    %1120 = vector.broadcast %cst_469 : f32 to vector<33x32xf32>
    %1121 = arith.divf %1120, %1119 : vector<33x32xf32>
    %cst_470 = arith.constant 1.06140542 : f32
    %1122 = vector.broadcast %cst_470 : f32 to vector<33x32xf32>
    %1123 = arith.mulf %1122, %1121 : vector<33x32xf32>
    %cst_471 = arith.constant 1.45315206 : f32
    %1124 = vector.broadcast %cst_471 : f32 to vector<33x32xf32>
    %1125 = arith.subf %1123, %1124 : vector<33x32xf32>
    %1126 = arith.mulf %1125, %1121 : vector<33x32xf32>
    %cst_472 = arith.constant 1.42141378 : f32
    %1127 = vector.broadcast %cst_472 : f32 to vector<33x32xf32>
    %1128 = arith.addf %1126, %1127 : vector<33x32xf32>
    %1129 = arith.mulf %1128, %1121 : vector<33x32xf32>
    %cst_473 = arith.constant 0.284496725 : f32
    %1130 = vector.broadcast %cst_473 : f32 to vector<33x32xf32>
    %1131 = arith.subf %1129, %1130 : vector<33x32xf32>
    %1132 = arith.mulf %1131, %1121 : vector<33x32xf32>
    %cst_474 = arith.constant 0.254829586 : f32
    %1133 = vector.broadcast %cst_474 : f32 to vector<33x32xf32>
    %1134 = arith.addf %1132, %1133 : vector<33x32xf32>
    %1135 = arith.mulf %1134, %1121 : vector<33x32xf32>
    %1136 = arith.mulf %1115, %1115 : vector<33x32xf32>
    %cst_475 = arith.constant 0.000000e+00 : f32
    %1137 = vector.broadcast %cst_475 : f32 to vector<33x32xf32>
    %1138 = arith.subf %1137, %1136 : vector<33x32xf32>
    %1139 = math.exp %1138 : vector<33x32xf32>
    %1140 = arith.mulf %1135, %1139 : vector<33x32xf32>
    %cst_476 = arith.constant 1.000000e+00 : f32
    %1141 = vector.broadcast %cst_476 : f32 to vector<33x32xf32>
    %1142 = arith.subf %1141, %1140 : vector<33x32xf32>
    %cst_477 = arith.constant 0.000000e+00 : f32
    %1143 = vector.broadcast %cst_477 : f32 to vector<33x32xf32>
    %1144 = arith.cmpf oge, %1114, %1143 : vector<33x32xf32>
    %cst_478 = arith.constant 0.000000e+00 : f32
    %1145 = vector.broadcast %cst_478 : f32 to vector<33x32xf32>
    %1146 = arith.subf %1145, %1142 : vector<33x32xf32>
    %1147 = arith.select %1144, %1142, %1146 : vector<33x32xi1>, vector<33x32xf32>
    %cst_479 = arith.constant 1.000000e+00 : f32
    %1148 = vector.broadcast %cst_479 : f32 to vector<33x32xf32>
    %1149 = arith.addf %1148, %1147 : vector<33x32xf32>
    %1150 = arith.mulf %1112, %1149 : vector<33x32xf32>
    %1151 = arith.truncf %1150 : vector<33x32xf32> to vector<33x32xbf16>
    %1152 = arith.truncf %659 : vector<32x32xf32> to vector<32x32xbf16>
    %cst_480 = arith.constant dense<0.000000e+00> : vector<33x32xf32>
    %1153 = tpu.matmul %1151, %1152, %cst_480 {dimension_numbers = #tpu.dot_dimension_numbers<[1], [0], [0], [1], [0, 0, 1, 1], [], []>} : vector<33x32xbf16>, vector<32x32xbf16>, vector<33x32xf32> -> vector<33x32xf32>
    %1154 = vector.broadcast %661 : vector<1x32xf32> to vector<33x32xf32>
    %1155 = arith.addf %1153, %1154 : vector<33x32xf32>
    %1156 = arith.addf %1155, %1085 : vector<33x32xf32>
    %1157 = vector.extract_strided_slice %1156 {offsets = [0, 0], sizes = [1, 32], strides = [1, 1]} : vector<33x32xf32> to vector<1x32xf32>
    %c0_481 = arith.constant 0 : index
    %c0_482 = arith.constant 0 : index
    %1158 = vector.load %arg6[%c0_481, %c0_482] : memref<1x32xf32, #tpu.memory_space<vmem>>, vector<1x32xf32>
    %c0_483 = arith.constant 0 : index
    %c0_484 = arith.constant 0 : index
    %1159 = vector.load %arg7[%c0_483, %c0_484] : memref<1x32xf32, #tpu.memory_space<vmem>>, vector<1x32xf32>
    %cst_485 = arith.constant dense<0.000000e+00> : vector<1xf32>
    %1160 = vector.multi_reduction <add>, %1157, %cst_485 [1] : vector<1x32xf32> to vector<1xf32>
    %1161 = vector.shape_cast %1160 : vector<1xf32> to vector<1x1xf32>
    %cst_486 = arith.constant 3.200000e+01 : f32
    %1162 = vector.broadcast %cst_486 : f32 to vector<1x1xf32>
    %1163 = arith.divf %1161, %1162 : vector<1x1xf32>
    %1164 = vector.broadcast %1163 : vector<1x1xf32> to vector<1x32xf32>
    %1165 = arith.subf %1157, %1164 : vector<1x32xf32>
    %1166 = arith.mulf %1165, %1165 : vector<1x32xf32>
    %cst_487 = arith.constant dense<0.000000e+00> : vector<1xf32>
    %1167 = vector.multi_reduction <add>, %1166, %cst_487 [1] : vector<1x32xf32> to vector<1xf32>
    %1168 = vector.shape_cast %1167 : vector<1xf32> to vector<1x1xf32>
    %cst_488 = arith.constant 3.200000e+01 : f32
    %1169 = vector.broadcast %cst_488 : f32 to vector<1x1xf32>
    %1170 = arith.divf %1168, %1169 : vector<1x1xf32>
    %cst_489 = arith.constant 9.99999974E-6 : f32
    %1171 = vector.broadcast %cst_489 : f32 to vector<1x1xf32>
    %1172 = arith.addf %1170, %1171 : vector<1x1xf32>
    %1173 = math.rsqrt %1172 : vector<1x1xf32>
    %1174 = vector.broadcast %1173 : vector<1x1xf32> to vector<1x32xf32>
    %1175 = arith.mulf %1165, %1174 : vector<1x32xf32>
    %1176 = arith.mulf %1175, %1158 : vector<1x32xf32>
    %1177 = arith.addf %1176, %1159 : vector<1x32xf32>
    %c0_490 = arith.constant 0 : index
    %c0_491 = arith.constant 0 : index
    %1178 = vector.load %arg8[%c0_490, %c0_491] : memref<32x3xf32, #tpu.memory_space<vmem>>, vector<32x3xf32>
    %1179 = arith.truncf %1177 : vector<1x32xf32> to vector<1x32xbf16>
    %1180 = arith.truncf %1178 : vector<32x3xf32> to vector<32x3xbf16>
    %cst_492 = arith.constant dense<0.000000e+00> : vector<1x3xf32>
    %1181 = tpu.matmul %1179, %1180, %cst_492 {dimension_numbers = #tpu.dot_dimension_numbers<[1], [0], [0], [1], [0, 0, 1, 1], [], []>} : vector<1x32xbf16>, vector<32x3xbf16>, vector<1x3xf32> -> vector<1x3xf32>
    %c0_493 = arith.constant 0 : index
    %c0_494 = arith.constant 0 : index
    %1182 = vector.load %arg9[%c0_493, %c0_494] : memref<1x3xf32, #tpu.memory_space<vmem>>, vector<1x3xf32>
    %1183 = arith.addf %1181, %1182 : vector<1x3xf32>
    %cst_495 = arith.constant dense<0xFF800000> : vector<1xf32>
    %1184 = vector.multi_reduction <maximumf>, %1183, %cst_495 [1] : vector<1x3xf32> to vector<1xf32>
    %1185 = vector.shape_cast %1184 : vector<1xf32> to vector<1x1xf32>
    %1186 = vector.broadcast %1185 : vector<1x1xf32> to vector<1x3xf32>
    %1187 = arith.subf %1183, %1186 : vector<1x3xf32>
    %1188 = math.exp %1187 : vector<1x3xf32>
    %cst_496 = arith.constant dense<0.000000e+00> : vector<1xf32>
    %1189 = vector.multi_reduction <add>, %1188, %cst_496 [1] : vector<1x3xf32> to vector<1xf32>
    %1190 = vector.shape_cast %1189 : vector<1xf32> to vector<1x1xf32>
    %1191 = vector.broadcast %1190 : vector<1x1xf32> to vector<1x3xf32>
    %1192 = arith.divf %1188, %1191 : vector<1x3xf32>
    %1193 = vector.shape_cast %1192 : vector<1x3xf32> to vector<1x1x3xf32>
    %c0_497 = arith.constant 0 : index
    %c0_498 = arith.constant 0 : index
    %c0_499 = arith.constant 0 : index
    %1194 = vector.load %arg49[%c0_497, %c0_498, %c0_499] : memref<1x1x3xf32, #tpu.memory_space<vmem>>, vector<1x1x3xf32>
    tpu.vector_store %arg49[%c0_497, %c0_498, %c0_499], %1193 {strides = array<i32>} : memref<1x1x3xf32, #tpu.memory_space<vmem>>, vector<1x1x3xf32>,
    return
  }
  func.func @transform_0(%arg0: i32) -> (i32, i32, i32) {
    %c0_i32 = arith.constant 0 : i32
    %c0_i32_0 = arith.constant 0 : i32
    %c0_i32_1 = arith.constant 0 : i32
    return %arg0, %c0_i32, %c0_i32_0 : i32, i32, i32
  }
  func.func @transform_1(%arg0: i32) -> (i32, i32) {
    %c0_i32 = arith.constant 0 : i32
    %c0_i32_0 = arith.constant 0 : i32
    %c0_i32_1 = arith.constant 0 : i32
    return %c0_i32, %c0_i32_0 : i32, i32
  }
  func.func @transform_2(%arg0: i32) -> (i32, i32) {
    %c0_i32 = arith.constant 0 : i32
    %c0_i32_0 = arith.constant 0 : i32
    %c0_i32_1 = arith.constant 0 : i32
    return %c0_i32, %c0_i32_0 : i32, i32
  }
  func.func @transform_3(%arg0: i32) -> (i32, i32) {
    %c0_i32 = arith.constant 0 : i32
    %c0_i32_0 = arith.constant 0 : i32
    %c0_i32_1 = arith.constant 0 : i32
    return %c0_i32, %c0_i32_0 : i32, i32
  }
  func.func @transform_4(%arg0: i32) -> (i32, i32) {
    %c0_i32 = arith.constant 0 : i32
    %c0_i32_0 = arith.constant 0 : i32
    %c0_i32_1 = arith.constant 0 : i32
    return %c0_i32, %c0_i32_0 : i32, i32
  }
  func.func @transform_5(%arg0: i32) -> (i32, i32) {
    %c0_i32 = arith.constant 0 : i32
    %c0_i32_0 = arith.constant 0 : i32
    %c0_i32_1 = arith.constant 0 : i32
    return %c0_i32, %c0_i32_0 : i32, i32
  }
  func.func @transform_6(%arg0: i32) -> (i32, i32) {
    %c0_i32 = arith.constant 0 : i32
    %c0_i32_0 = arith.constant 0 : i32
    %c0_i32_1 = arith.constant 0 : i32
    return %c0_i32, %c0_i32_0 : i32, i32
  }
  func.func @transform_7(%arg0: i32) -> (i32, i32) {
    %c0_i32 = arith.constant 0 : i32
    %c0_i32_0 = arith.constant 0 : i32
    %c0_i32_1 = arith.constant 0 : i32
    return %c0_i32, %c0_i32_0 : i32, i32
  }
  func.func @transform_8(%arg0: i32) -> (i32, i32) {
    %c0_i32 = arith.constant 0 : i32
    %c0_i32_0 = arith.constant 0 : i32
    %c0_i32_1 = arith.constant 0 : i32
    return %c0_i32, %c0_i32_0 : i32, i32
  }
  func.func @transform_9(%arg0: i32) -> (i32, i32, i32) {
    %c0_i32 = arith.constant 0 : i32
    %c0_i32_0 = arith.constant 0 : i32
    %c0_i32_1 = arith.constant 0 : i32
    %c0_i32_2 = arith.constant 0 : i32
    return %c0_i32, %c0_i32_0, %c0_i32_1 : i32, i32, i32
  }
  func.func @transform_10(%arg0: i32) -> (i32, i32, i32) {
    %c0_i32 = arith.constant 0 : i32
    %c0_i32_0 = arith.constant 0 : i32
    %c0_i32_1 = arith.constant 0 : i32
    %c0_i32_2 = arith.constant 0 : i32
    return %c0_i32, %c0_i32_0, %c0_i32_1 : i32, i32, i32
  }
  func.func @transform_11(%arg0: i32) -> (i32, i32, i32) {
    %c0_i32 = arith.constant 0 : i32
    %c0_i32_0 = arith.constant 0 : i32
    %c0_i32_1 = arith.constant 0 : i32
    %c0_i32_2 = arith.constant 0 : i32
    return %c0_i32, %c0_i32_0, %c0_i32_1 : i32, i32, i32
  }
  func.func @transform_12(%arg0: i32) -> (i32, i32, i32) {
    %c0_i32 = arith.constant 0 : i32
    %c0_i32_0 = arith.constant 0 : i32
    %c0_i32_1 = arith.constant 0 : i32
    %c0_i32_2 = arith.constant 0 : i32
    return %c0_i32, %c0_i32_0, %c0_i32_1 : i32, i32, i32
  }
  func.func @transform_13(%arg0: i32) -> (i32, i32, i32) {
    %c0_i32 = arith.constant 0 : i32
    %c0_i32_0 = arith.constant 0 : i32
    %c0_i32_1 = arith.constant 0 : i32
    %c0_i32_2 = arith.constant 0 : i32
    return %c0_i32, %c0_i32_0, %c0_i32_1 : i32, i32, i32
  }
  func.func @transform_14(%arg0: i32) -> (i32, i32, i32) {
    %c0_i32 = arith.constant 0 : i32
    %c0_i32_0 = arith.constant 0 : i32
    %c0_i32_1 = arith.constant 0 : i32
    %c0_i32_2 = arith.constant 0 : i32
    return %c0_i32, %c0_i32_0, %c0_i32_1 : i32, i32, i32
  }
  func.func @transform_15(%arg0: i32) -> (i32, i32, i32) {
    %c0_i32 = arith.constant 0 : i32
    %c0_i32_0 = arith.constant 0 : i32
    %c0_i32_1 = arith.constant 0 : i32
    %c0_i32_2 = arith.constant 0 : i32
    return %c0_i32, %c0_i32_0, %c0_i32_1 : i32, i32, i32
  }
  func.func @transform_16(%arg0: i32) -> (i32, i32, i32) {
    %c0_i32 = arith.constant 0 : i32
    %c0_i32_0 = arith.constant 0 : i32
    %c0_i32_1 = arith.constant 0 : i32
    %c0_i32_2 = arith.constant 0 : i32
    return %c0_i32, %c0_i32_0, %c0_i32_1 : i32, i32, i32
  }
  func.func @transform_17(%arg0: i32) -> (i32, i32, i32) {
    %c0_i32 = arith.constant 0 : i32
    %c0_i32_0 = arith.constant 0 : i32
    %c0_i32_1 = arith.constant 0 : i32
    %c0_i32_2 = arith.constant 0 : i32
    return %c0_i32, %c0_i32_0, %c0_i32_1 : i32, i32, i32
  }
  func.func @transform_18(%arg0: i32) -> (i32, i32, i32) {
    %c0_i32 = arith.constant 0 : i32
    %c0_i32_0 = arith.constant 0 : i32
    %c0_i32_1 = arith.constant 0 : i32
    %c0_i32_2 = arith.constant 0 : i32
    return %c0_i32, %c0_i32_0, %c0_i32_1 : i32, i32, i32
  }
  func.func @transform_19(%arg0: i32) -> (i32, i32, i32) {
    %c0_i32 = arith.constant 0 : i32
    %c0_i32_0 = arith.constant 0 : i32
    %c0_i32_1 = arith.constant 0 : i32
    %c0_i32_2 = arith.constant 0 : i32
    return %c0_i32, %c0_i32_0, %c0_i32_1 : i32, i32, i32
  }
  func.func @transform_20(%arg0: i32) -> (i32, i32, i32) {
    %c0_i32 = arith.constant 0 : i32
    %c0_i32_0 = arith.constant 0 : i32
    %c0_i32_1 = arith.constant 0 : i32
    %c0_i32_2 = arith.constant 0 : i32
    return %c0_i32, %c0_i32_0, %c0_i32_1 : i32, i32, i32
  }
  func.func @transform_21(%arg0: i32) -> (i32, i32, i32) {
    %c0_i32 = arith.constant 0 : i32
    %c0_i32_0 = arith.constant 0 : i32
    %c0_i32_1 = arith.constant 0 : i32
    %c0_i32_2 = arith.constant 0 : i32
    return %c0_i32, %c0_i32_0, %c0_i32_1 : i32, i32, i32
  }
  func.func @transform_22(%arg0: i32) -> (i32, i32, i32) {
    %c0_i32 = arith.constant 0 : i32
    %c0_i32_0 = arith.constant 0 : i32
    %c0_i32_1 = arith.constant 0 : i32
    %c0_i32_2 = arith.constant 0 : i32
    return %c0_i32, %c0_i32_0, %c0_i32_1 : i32, i32, i32
  }
  func.func @transform_23(%arg0: i32) -> (i32, i32, i32) {
    %c0_i32 = arith.constant 0 : i32
    %c0_i32_0 = arith.constant 0 : i32
    %c0_i32_1 = arith.constant 0 : i32
    %c0_i32_2 = arith.constant 0 : i32
    return %c0_i32, %c0_i32_0, %c0_i32_1 : i32, i32, i32
  }
  func.func @transform_24(%arg0: i32) -> (i32, i32, i32) {
    %c0_i32 = arith.constant 0 : i32
    %c0_i32_0 = arith.constant 0 : i32
    %c0_i32_1 = arith.constant 0 : i32
    %c0_i32_2 = arith.constant 0 : i32
    return %c0_i32, %c0_i32_0, %c0_i32_1 : i32, i32, i32
  }
  func.func @transform_25(%arg0: i32) -> (i32, i32, i32) {
    %c0_i32 = arith.constant 0 : i32
    %c0_i32_0 = arith.constant 0 : i32
    %c0_i32_1 = arith.constant 0 : i32
    %c0_i32_2 = arith.constant 0 : i32
    return %c0_i32, %c0_i32_0, %c0_i32_1 : i32, i32, i32
  }
  func.func @transform_26(%arg0: i32) -> (i32, i32, i32) {
    %c0_i32 = arith.constant 0 : i32
    %c0_i32_0 = arith.constant 0 : i32
    %c0_i32_1 = arith.constant 0 : i32
    %c0_i32_2 = arith.constant 0 : i32
    return %c0_i32, %c0_i32_0, %c0_i32_1 : i32, i32, i32
  }
  func.func @transform_27(%arg0: i32) -> (i32, i32, i32) {
    %c0_i32 = arith.constant 0 : i32
    %c0_i32_0 = arith.constant 0 : i32
    %c0_i32_1 = arith.constant 0 : i32
    %c0_i32_2 = arith.constant 0 : i32
    return %c0_i32, %c0_i32_0, %c0_i32_1 : i32, i32, i32
  }
  func.func @transform_28(%arg0: i32) -> (i32, i32, i32) {
    %c0_i32 = arith.constant 0 : i32
    %c0_i32_0 = arith.constant 0 : i32
    %c0_i32_1 = arith.constant 0 : i32
    %c0_i32_2 = arith.constant 0 : i32
    return %c0_i32, %c0_i32_0, %c0_i32_1 : i32, i32, i32
  }
  func.func @transform_29(%arg0: i32) -> (i32, i32, i32) {
    %c0_i32 = arith.constant 0 : i32
    %c0_i32_0 = arith.constant 0 : i32
    %c0_i32_1 = arith.constant 0 : i32
    %c0_i32_2 = arith.constant 0 : i32
    return %c0_i32, %c0_i32_0, %c0_i32_1 : i32, i32, i32
  }
  func.func @transform_30(%arg0: i32) -> (i32, i32, i32) {
    %c0_i32 = arith.constant 0 : i32
    %c0_i32_0 = arith.constant 0 : i32
    %c0_i32_1 = arith.constant 0 : i32
    %c0_i32_2 = arith.constant 0 : i32
    return %c0_i32, %c0_i32_0, %c0_i32_1 : i32, i32, i32
  }
  func.func @transform_31(%arg0: i32) -> (i32, i32, i32) {
    %c0_i32 = arith.constant 0 : i32
    %c0_i32_0 = arith.constant 0 : i32
    %c0_i32_1 = arith.constant 0 : i32
    %c0_i32_2 = arith.constant 0 : i32
    return %c0_i32, %c0_i32_0, %c0_i32_1 : i32, i32, i32
  }
  func.func @transform_32(%arg0: i32) -> (i32, i32, i32) {
    %c0_i32 = arith.constant 0 : i32
    %c0_i32_0 = arith.constant 0 : i32
    %c0_i32_1 = arith.constant 0 : i32
    %c0_i32_2 = arith.constant 0 : i32
    return %c0_i32, %c0_i32_0, %c0_i32_1 : i32, i32, i32
  }
  func.func @transform_33(%arg0: i32) -> (i32, i32, i32) {
    %c0_i32 = arith.constant 0 : i32
    %c0_i32_0 = arith.constant 0 : i32
    %c0_i32_1 = arith.constant 0 : i32
    %c0_i32_2 = arith.constant 0 : i32
    return %c0_i32, %c0_i32_0, %c0_i32_1 : i32, i32, i32
  }
  func.func @transform_34(%arg0: i32) -> (i32, i32, i32) {
    %c0_i32 = arith.constant 0 : i32
    %c0_i32_0 = arith.constant 0 : i32
    %c0_i32_1 = arith.constant 0 : i32
    %c0_i32_2 = arith.constant 0 : i32
    return %c0_i32, %c0_i32_0, %c0_i32_1 : i32, i32, i32
  }
  func.func @transform_35(%arg0: i32) -> (i32, i32, i32) {
    %c0_i32 = arith.constant 0 : i32
    %c0_i32_0 = arith.constant 0 : i32
    %c0_i32_1 = arith.constant 0 : i32
    %c0_i32_2 = arith.constant 0 : i32
    return %c0_i32, %c0_i32_0, %c0_i32_1 : i32, i32, i32
  }
  func.func @transform_36(%arg0: i32) -> (i32, i32, i32) {
    %c0_i32 = arith.constant 0 : i32
    %c0_i32_0 = arith.constant 0 : i32
    %c0_i32_1 = arith.constant 0 : i32
    %c0_i32_2 = arith.constant 0 : i32
    return %c0_i32, %c0_i32_0, %c0_i32_1 : i32, i32, i32
  }
  func.func @transform_37(%arg0: i32) -> (i32, i32, i32) {
    %c0_i32 = arith.constant 0 : i32
    %c0_i32_0 = arith.constant 0 : i32
    %c0_i32_1 = arith.constant 0 : i32
    %c0_i32_2 = arith.constant 0 : i32
    return %c0_i32, %c0_i32_0, %c0_i32_1 : i32, i32, i32
  }
  func.func @transform_38(%arg0: i32) -> (i32, i32, i32) {
    %c0_i32 = arith.constant 0 : i32
    %c0_i32_0 = arith.constant 0 : i32
    %c0_i32_1 = arith.constant 0 : i32
    %c0_i32_2 = arith.constant 0 : i32
    return %c0_i32, %c0_i32_0, %c0_i32_1 : i32, i32, i32
  }
  func.func @transform_39(%arg0: i32) -> (i32, i32, i32) {
    %c0_i32 = arith.constant 0 : i32
    %c0_i32_0 = arith.constant 0 : i32
    %c0_i32_1 = arith.constant 0 : i32
    %c0_i32_2 = arith.constant 0 : i32
    return %c0_i32, %c0_i32_0, %c0_i32_1 : i32, i32, i32
  }
  func.func @transform_40(%arg0: i32) -> (i32, i32, i32) {
    %c0_i32 = arith.constant 0 : i32
    %c0_i32_0 = arith.constant 0 : i32
    %c0_i32_1 = arith.constant 0 : i32
    %c0_i32_2 = arith.constant 0 : i32
    return %c0_i32, %c0_i32_0, %c0_i32_1 : i32, i32, i32
  }
  func.func @transform_41(%arg0: i32) -> (i32, i32, i32) {
    %c0_i32 = arith.constant 0 : i32
    %c0_i32_0 = arith.constant 0 : i32
    %c0_i32_1 = arith.constant 0 : i32
    %c0_i32_2 = arith.constant 0 : i32
    return %c0_i32, %c0_i32_0, %c0_i32_1 : i32, i32, i32
  }
  func.func @transform_42(%arg0: i32) -> (i32, i32, i32) {
    %c0_i32 = arith.constant 0 : i32
    %c0_i32_0 = arith.constant 0 : i32
    %c0_i32_1 = arith.constant 0 : i32
    %c0_i32_2 = arith.constant 0 : i32
    return %c0_i32, %c0_i32_0, %c0_i32_1 : i32, i32, i32
  }
  func.func @transform_43(%arg0: i32) -> (i32, i32, i32) {
    %c0_i32 = arith.constant 0 : i32
    %c0_i32_0 = arith.constant 0 : i32
    %c0_i32_1 = arith.constant 0 : i32
    %c0_i32_2 = arith.constant 0 : i32
    return %c0_i32, %c0_i32_0, %c0_i32_1 : i32, i32, i32
  }
  func.func @transform_44(%arg0: i32) -> (i32, i32, i32) {
    %c0_i32 = arith.constant 0 : i32
    %c0_i32_0 = arith.constant 0 : i32
    %c0_i32_1 = arith.constant 0 : i32
    %c0_i32_2 = arith.constant 0 : i32
    return %c0_i32, %c0_i32_0, %c0_i32_1 : i32, i32, i32
  }
  func.func @transform_45(%arg0: i32) -> (i32, i32, i32) {
    %c0_i32 = arith.constant 0 : i32
    %c0_i32_0 = arith.constant 0 : i32
    %c0_i32_1 = arith.constant 0 : i32
    %c0_i32_2 = arith.constant 0 : i32
    return %c0_i32, %c0_i32_0, %c0_i32_1 : i32, i32, i32
  }
  func.func @transform_46(%arg0: i32) -> (i32, i32, i32) {
    %c0_i32 = arith.constant 0 : i32
    %c0_i32_0 = arith.constant 0 : i32
    %c0_i32_1 = arith.constant 0 : i32
    %c0_i32_2 = arith.constant 0 : i32
    return %c0_i32, %c0_i32_0, %c0_i32_1 : i32, i32, i32
  }
  func.func @transform_47(%arg0: i32) -> (i32, i32, i32) {
    %c0_i32 = arith.constant 0 : i32
    %c0_i32_0 = arith.constant 0 : i32
    %c0_i32_1 = arith.constant 0 : i32
    %c0_i32_2 = arith.constant 0 : i32
    return %c0_i32, %c0_i32_0, %c0_i32_1 : i32, i32, i32
  }
  func.func @transform_48(%arg0: i32) -> (i32, i32, i32) {
    %c0_i32 = arith.constant 0 : i32
    %c0_i32_0 = arith.constant 0 : i32
    %c0_i32_1 = arith.constant 0 : i32
    return %arg0, %c0_i32, %c0_i32_0 : i32, i32, i32
  }
}

</mosaic_0001>

<llo_original>
// kernel: model_forward.1
$region0: #{model_forward.1}
  #allocation0 [shape = 'u32[]', space=smem, size = 0x4, offset = 0x4, fixed_abs, tag = 'smem constant byte address 0x4 - core index']
  #allocation1 [shape = 'u32[144,128]{1,0:T(1,128)}', space=vmem, size = 0x12000, scoped, tag = 'internal scratch']
  %s0 = inlined_call_operand.smem [shape: u32[49], index: -1, kind: input, shape index: {}]
  %s1 = sld [smem:[%s0]]
  %s2 = scalar_lea.smem %s0, 1
  %s3 = sld [smem:[%s2]]
  %s4 = scalar_lea.smem %s0, 2
  %s5 = sld [smem:[%s4]]
  %s6 = scalar_lea.smem %s0, 3
  %s7 = sld [smem:[%s6]]
  %s8 = scalar_lea.smem %s0, 4
  %s9 = sld [smem:[%s8]]
  %s10 = scalar_lea.smem %s0, 5
  %s11 = sld [smem:[%s10]]
  %s12 = scalar_lea.smem %s0, 6
  %s13 = sld [smem:[%s12]]
  %s14 = scalar_lea.smem %s0, 7
  %s15 = sld [smem:[%s14]]
  %s16 = scalar_lea.smem %s0, 8
  %s17 = sld [smem:[%s16]]
  %s18 = scalar_lea.smem %s0, 9
  %s19 = sld [smem:[%s18]]
  %s20 = scalar_lea.smem %s0, 10
  %s21 = sld [smem:[%s20]]
  %s22 = scalar_lea.smem %s0, 11
  %s23 = sld [smem:[%s22]]
  %s24 = scalar_lea.smem %s0, 12
  %s25 = sld [smem:[%s24]]
  %s26 = scalar_lea.smem %s0, 13
  %s27 = sld [smem:[%s26]]
  %s28 = scalar_lea.smem %s0, 14
  %s29 = sld [smem:[%s28]]
  %s30 = scalar_lea.smem %s0, 15
  %s31 = sld [smem:[%s30]]
  %s32 = scalar_lea.smem %s0, 16
  %s33 = sld [smem:[%s32]]
  %s34 = scalar_lea.smem %s0, 17
  %s35 = sld [smem:[%s34]]
  %s36 = scalar_lea.smem %s0, 18
  %s37 = sld [smem:[%s36]]
  %s38 = scalar_lea.smem %s0, 19
  %s39 = sld [smem:[%s38]]
  %s40 = scalar_lea.smem %s0, 20
  %s41 = sld [smem:[%s40]]
  %s42 = scalar_lea.smem %s0, 21
  %s43 = sld [smem:[%s42]]
  %s44 = scalar_lea.smem %s0, 22
  %s45 = sld [smem:[%s44]]
  %s46 = scalar_lea.smem %s0, 23
  %s47 = sld [smem:[%s46]]
  %s48 = scalar_lea.smem %s0, 24
  %s49 = sld [smem:[%s48]]
  %s50 = scalar_lea.smem %s0, 25
  %s51 = sld [smem:[%s50]]
  %s52 = scalar_lea.smem %s0, 26
  %s53 = sld [smem:[%s52]]
  %s54 = scalar_lea.smem %s0, 27
  %s55 = sld [smem:[%s54]]
  %s56 = scalar_lea.smem %s0, 28
  %s57 = sld [smem:[%s56]]
  %s58 = scalar_lea.smem %s0, 29
  %s59 = sld [smem:[%s58]]
  %s60 = scalar_lea.smem %s0, 30
  %s61 = sld [smem:[%s60]]
  %s62 = scalar_lea.smem %s0, 31
  %s63 = sld [smem:[%s62]]
  %s64 = scalar_lea.smem %s0, 32
  %s65 = sld [smem:[%s64]]
  %s66 = scalar_lea.smem %s0, 33
  %s67 = sld [smem:[%s66]]
  %s68 = scalar_lea.smem %s0, 34
  %s69 = sld [smem:[%s68]]
  %s70 = scalar_lea.smem %s0, 35
  %s71 = sld [smem:[%s70]]
  %s72 = scalar_lea.smem %s0, 36
  %s73 = sld [smem:[%s72]]
  %s74 = scalar_lea.smem %s0, 37
  %s75 = sld [smem:[%s74]]
  %s76 = scalar_lea.smem %s0, 38
  %s77 = sld [smem:[%s76]]
  %s78 = scalar_lea.smem %s0, 39
  %s79 = sld [smem:[%s78]]
  %s80 = scalar_lea.smem %s0, 40
  %s81 = sld [smem:[%s80]]
  %s82 = scalar_lea.smem %s0, 41
  %s83 = sld [smem:[%s82]]
  %s84 = scalar_lea.smem %s0, 42
  %s85 = sld [smem:[%s84]]
  %s86 = scalar_lea.smem %s0, 43
  %s87 = sld [smem:[%s86]]
  %s88 = scalar_lea.smem %s0, 44
  %s89 = sld [smem:[%s88]]
  %s90 = scalar_lea.smem %s0, 45
  %s91 = sld [smem:[%s90]]
  %s92 = scalar_lea.smem %s0, 46
  %s93 = sld [smem:[%s92]]
  %s94 = scalar_lea.smem %s0, 47
  %s95 = sld [smem:[%s94]]
  %s96 = scalar_lea.smem %s0, 48
  %s97 = sld [smem:[%s96]]
  %s98 = sld [smem:[#allocation0]]
  $region225: #{model_forward.1} parent=0
    _
  %s100 = ssub.s32 1, %s98
  %s101 = scalar_select 0, %s100, %s98
  $region1: #{model_forward.1} parent=0
    #allocation2 [shape = 'u8[1024]{0}', space=vmem, size = 0x400, scoped, tag = 'output window, operand 0']
    #allocation3 [shape = 's32[2]{0}', space=sflag, size = 0x8, scoped, tag = 'scoped memory for model_forward.1']
    %102 = vsyncpa [#allocation3], 0
    %s103 = scalar_lea.sflag [#allocation3], 1
    %104 = vsyncpa %s103, 0
    loop: start=0, step=1, limit=4
    $region2: #{model_forward.1} parent=1 // loop_pre_header
      _
    $region3: #{model_forward.1} parent=1 // loop_header
      %s106 = sphi 0, %s110
      %p107 = scmp.ge.s32.totalorder %s106, 4
      %s116 = sphi 0, %s118
      %s119 = sphi 0, %s116
      %s120 = sphi 0, %s119
      %s136 = sphi 0, %s120
      %s140 = sphi 0, %s140
      %s142 = sphi 0, %s140
      %s143 = sphi 0, %s142
      %s157 = sphi 0, %s143
      %s161 = sphi 0, %s161
      %s163 = sphi 0, %s161
      %s164 = sphi 0, %s163
      %s178 = sphi 0, %s164
      %s182 = sphi 0, %s182
      %s184 = sphi 0, %s182
      %s185 = sphi 0, %s184
      %s199 = sphi 0, %s185
      %s203 = sphi 0, %s203
      %s205 = sphi 0, %s203
      %s206 = sphi 0, %s205
      %s220 = sphi 0, %s206
      %s224 = sphi 0, %s224
      %s226 = sphi 0, %s224
      %s227 = sphi 0, %s226
      %s241 = sphi 0, %s227
      %s245 = sphi 0, %s245
      %s247 = sphi 0, %s245
      %s248 = sphi 0, %s247
      %s262 = sphi 0, %s248
      %s266 = sphi 0, %s266
      %s268 = sphi 0, %s266
      %s269 = sphi 0, %s268
      %s283 = sphi 0, %s269
      %s287 = sphi 0, %s287
      %s289 = sphi 0, %s287
      %s290 = sphi 0, %s289
      %s304 = sphi 0, %s290
      %s308 = sphi 0, %s308
      %s310 = sphi 0, %s308
      %s311 = sphi 0, %s310
      %s325 = sphi 0, %s311
      %s329 = sphi 0, %s329
      %s331 = sphi 0, %s329
      %s332 = sphi 0, %s331
      %s346 = sphi 0, %s332
      %s350 = sphi 0, %s350
      %s352 = sphi 0, %s350
      %s353 = sphi 0, %s352
      %s367 = sphi 0, %s353
      %s371 = sphi 0, %s371
      %s373 = sphi 0, %s371
      %s374 = sphi 0, %s373
      %s388 = sphi 0, %s374
      %s392 = sphi 0, %s392
      %s394 = sphi 0, %s392
      %s395 = sphi 0, %s394
      %s409 = sphi 0, %s395
      %s413 = sphi 0, %s413
      %s415 = sphi 0, %s413
      %s416 = sphi 0, %s415
      %s430 = sphi 0, %s416
      %s434 = sphi 0, %s434
      %s436 = sphi 0, %s434
      %s437 = sphi 0, %s436
      %s451 = sphi 0, %s437
      %s455 = sphi 0, %s455
      %s457 = sphi 0, %s455
      %s458 = sphi 0, %s457
      %s472 = sphi 0, %s458
      %s476 = sphi 0, %s476
      %s478 = sphi 0, %s476
      %s479 = sphi 0, %s478
      %s493 = sphi 0, %s479
      %s497 = sphi 0, %s497
      %s499 = sphi 0, %s497
      %s500 = sphi 0, %s499
      %s514 = sphi 0, %s500
      %s518 = sphi 0, %s518
      %s520 = sphi 0, %s518
      %s521 = sphi 0, %s520
      %s535 = sphi 0, %s521
      %s539 = sphi 0, %s539
      %s541 = sphi 0, %s539
      %s542 = sphi 0, %s541
      %s556 = sphi 0, %s542
      %s560 = sphi 0, %s560
      %s562 = sphi 0, %s560
      %s563 = sphi 0, %s562
      %s577 = sphi 0, %s563
      %s581 = sphi 0, %s581
      %s583 = sphi 0, %s581
      %s584 = sphi 0, %s583
      %s598 = sphi 0, %s584
      %s602 = sphi 0, %s602
      %s604 = sphi 0, %s602
      %s605 = sphi 0, %s604
      %s619 = sphi 0, %s605
      %s623 = sphi 0, %s623
      %s625 = sphi 0, %s623
      %s626 = sphi 0, %s625
      %s640 = sphi 0, %s626
      %s644 = sphi 0, %s644
      %s646 = sphi 0, %s644
      %s647 = sphi 0, %s646
      %s661 = sphi 0, %s647
      %s665 = sphi 0, %s665
      %s667 = sphi 0, %s665
      %s668 = sphi 0, %s667
      %s682 = sphi 0, %s668
      %s686 = sphi 0, %s686
      %s688 = sphi 0, %s686
      %s689 = sphi 0, %s688
      %s703 = sphi 0, %s689
      %s707 = sphi 0, %s707
      %s709 = sphi 0, %s707
      %s710 = sphi 0, %s709
      %s724 = sphi 0, %s710
      %s728 = sphi 0, %s728
      %s730 = sphi 0, %s728
      %s731 = sphi 0, %s730
      %s745 = sphi 0, %s731
      %s749 = sphi 0, %s749
      %s751 = sphi 0, %s749
      %s752 = sphi 0, %s751
      %s766 = sphi 0, %s752
      %s770 = sphi 0, %s770
      %s772 = sphi 0, %s770
      %s773 = sphi 0, %s772
      %s787 = sphi 0, %s773
      %s791 = sphi 0, %s791
      %s793 = sphi 0, %s791
      %s794 = sphi 0, %s793
      %s808 = sphi 0, %s794
      %s812 = sphi 0, %s812
      %s814 = sphi 0, %s812
      %s815 = sphi 0, %s814
      %s829 = sphi 0, %s815
      %s833 = sphi 0, %s833
      %s835 = sphi 0, %s833
      %s836 = sphi 0, %s835
      %s850 = sphi 0, %s836
      %s854 = sphi 0, %s854
      %s856 = sphi 0, %s854
      %s857 = sphi 0, %s856
      %s871 = sphi 0, %s857
      %s875 = sphi 0, %s875
      %s877 = sphi 0, %s875
      %s878 = sphi 0, %s877
      %s892 = sphi 0, %s878
      %s896 = sphi 0, %s896
      %s898 = sphi 0, %s896
      %s899 = sphi 0, %s898
      %s913 = sphi 0, %s899
      %s917 = sphi 0, %s917
      %s919 = sphi 0, %s917
      %s920 = sphi 0, %s919
      %s934 = sphi 0, %s920
      %s938 = sphi 0, %s938
      %s940 = sphi 0, %s938
      %s941 = sphi 0, %s940
      %s955 = sphi 0, %s941
      %s959 = sphi 0, %s959
      %s961 = sphi 0, %s959
      %s962 = sphi 0, %s961
      %s976 = sphi 0, %s962
      %s980 = sphi 0, %s980
      %s982 = sphi 0, %s980
      %s983 = sphi 0, %s982
      %s997 = sphi 0, %s983
      %s1001 = sphi 0, %s1001
      %s1003 = sphi 0, %s1001
      %s1004 = sphi 0, %s1003
      %s1018 = sphi 0, %s1004
      %s1022 = sphi 0, %s1022
      %s1024 = sphi 0, %s1022
      %s1025 = sphi 0, %s1024
      %s1039 = sphi 0, %s1025
      %s1043 = sphi 0, %s1043
      %s1045 = sphi 0, %s1043
      %s1046 = sphi 0, %s1045
      %s1060 = sphi 0, %s1046
      %s1064 = sphi 0, %s1064
      %s1066 = sphi 0, %s1064
      %s1067 = sphi 0, %s1066
      %s1081 = sphi 0, %s1067
      %s1085 = sphi 0, %s1085
      %s1087 = sphi 0, %s1085
      %s1088 = sphi 0, %s1087
      %s1102 = sphi 0, %s1088
      %s1106 = sphi 0, %s1106
      %s1108 = sphi 0, %s1106
      %s1109 = sphi 0, %s1108
      %s1123 = sphi 0, %s1109
      %s1129 = sphi 0, %s1131
      %s1132 = sphi 0, %s1129
      %s1133 = sphi 0, %s1132
      %s1149 = sphi 0, %s1133
    $region4: #{model_forward.1} parent=1 // loop_header_branch
      %109 = sbr.rel (%p107) target = $region8
    $region5: #{model_forward.1} parent=1 // loop_body
      %s111 = ssub.s32 %s106, 1
      %s112 = ssub.s32 %s106, 2
      %s113 = sadd.s32 %s106, 1
      %s114 = ssub.s32 %s106, %s113
      %p115 = scmp.eq.s32.totalorder %s114, 0
      %s117 = sadd.s32 %s116, 1
      %s118 = scalar_select %p115, %s116, %s117
      %p121 = pneg %p115
      %p122 = scmp.eq.s32.totalorder %s106, 1
      %p123 = por %p121, %p122
      %p124 = scmp.ne.s32.totalorder %s116, %s119
      %p125 = scmp.eq.s32.totalorder %s106, 0
      %p126 = por %p124, %p125
      %p127 = scmp.ne.s32.totalorder %s116, %s119
      %p128 = scmp.eq.s32.totalorder %s111, 1
      %p129 = por %p127, %p128
      %p130 = scmp.ne.s32.totalorder %s119, %s120
      %p131 = scmp.eq.s32.totalorder %s111, 0
      %p132 = por %p130, %p131
      %p133 = scmp.ne.s32.totalorder %s119, %s120
      %p134 = scmp.eq.s32.totalorder %s112, 1
      %p135 = por %p133, %p134
      %p137 = scmp.ne.s32.totalorder %s120, %s136
      %p138 = scmp.eq.s32.totalorder %s112, 0
      %p139 = por %p137, %p138
      %s141 = sadd.s32 %s140, 1
      %p144 = scmp.eq.s32.totalorder %s106, 1
      %p145 = scmp.ne.s32.totalorder %s140, %s142
      %p146 = scmp.eq.s32.totalorder %s106, 0
      %p147 = por %p145, %p146
      %p148 = scmp.ne.s32.totalorder %s140, %s142
      %p149 = scmp.eq.s32.totalorder %s111, 1
      %p150 = por %p148, %p149
      %p151 = scmp.ne.s32.totalorder %s142, %s143
      %p152 = scmp.eq.s32.totalorder %s111, 0
      %p153 = por %p151, %p152
      %p154 = scmp.ne.s32.totalorder %s142, %s143
      %p155 = scmp.eq.s32.totalorder %s112, 1
      %p156 = por %p154, %p155
      %p158 = scmp.ne.s32.totalorder %s143, %s157
      %p159 = scmp.eq.s32.totalorder %s112, 0
      %p160 = por %p158, %p159
      %s162 = sadd.s32 %s161, 1
      %p165 = scmp.eq.s32.totalorder %s106, 1
      %p166 = scmp.ne.s32.totalorder %s161, %s163
      %p167 = scmp.eq.s32.totalorder %s106, 0
      %p168 = por %p166, %p167
      %p169 = scmp.ne.s32.totalorder %s161, %s163
      %p170 = scmp.eq.s32.totalorder %s111, 1
      %p171 = por %p169, %p170
      %p172 = scmp.ne.s32.totalorder %s163, %s164
      %p173 = scmp.eq.s32.totalorder %s111, 0
      %p174 = por %p172, %p173
      %p175 = scmp.ne.s32.totalorder %s163, %s164
      %p176 = scmp.eq.s32.totalorder %s112, 1
      %p177 = por %p175, %p176
      %p179 = scmp.ne.s32.totalorder %s164, %s178
      %p180 = scmp.eq.s32.totalorder %s112, 0
      %p181 = por %p179, %p180
      %s183 = sadd.s32 %s182, 1
      %p186 = scmp.eq.s32.totalorder %s106, 1
      %p187 = scmp.ne.s32.totalorder %s182, %s184
      %p188 = scmp.eq.s32.totalorder %s106, 0
      %p189 = por %p187, %p188
      %p190 = scmp.ne.s32.totalorder %s182, %s184
      %p191 = scmp.eq.s32.totalorder %s111, 1
      %p192 = por %p190, %p191
      %p193 = scmp.ne.s32.totalorder %s184, %s185
      %p194 = scmp.eq.s32.totalorder %s111, 0
      %p195 = por %p193, %p194
      %p196 = scmp.ne.s32.totalorder %s184, %s185
      %p197 = scmp.eq.s32.totalorder %s112, 1
      %p198 = por %p196, %p197
      %p200 = scmp.ne.s32.totalorder %s185, %s199
      %p201 = scmp.eq.s32.totalorder %s112, 0
      %p202 = por %p200, %p201
      %s204 = sadd.s32 %s203, 1
      %p207 = scmp.eq.s32.totalorder %s106, 1
      %p208 = scmp.ne.s32.totalorder %s203, %s205
      %p209 = scmp.eq.s32.totalorder %s106, 0
      %p210 = por %p208, %p209
      %p211 = scmp.ne.s32.totalorder %s203, %s205
      %p212 = scmp.eq.s32.totalorder %s111, 1
      %p213 = por %p211, %p212
      %p214 = scmp.ne.s32.totalorder %s205, %s206
      %p215 = scmp.eq.s32.totalorder %s111, 0
      %p216 = por %p214, %p215
      %p217 = scmp.ne.s32.totalorder %s205, %s206
      %p218 = scmp.eq.s32.totalorder %s112, 1
      %p219 = por %p217, %p218
      %p221 = scmp.ne.s32.totalorder %s206, %s220
      %p222 = scmp.eq.s32.totalorder %s112, 0
      %p223 = por %p221, %p222
      %s225 = sadd.s32 %s224, 1
      %p228 = scmp.eq.s32.totalorder %s106, 1
      %p229 = scmp.ne.s32.totalorder %s224, %s226
      %p230 = scmp.eq.s32.totalorder %s106, 0
      %p231 = por %p229, %p230
      %p232 = scmp.ne.s32.totalorder %s224, %s226
      %p233 = scmp.eq.s32.totalorder %s111, 1
      %p234 = por %p232, %p233
      %p235 = scmp.ne.s32.totalorder %s226, %s227
      %p236 = scmp.eq.s32.totalorder %s111, 0
      %p237 = por %p235, %p236
      %p238 = scmp.ne.s32.totalorder %s226, %s227
      %p239 = scmp.eq.s32.totalorder %s112, 1
      %p240 = por %p238, %p239
      %p242 = scmp.ne.s32.totalorder %s227, %s241
      %p243 = scmp.eq.s32.totalorder %s112, 0
      %p244 = por %p242, %p243
      %s246 = sadd.s32 %s245, 1
      %p249 = scmp.eq.s32.totalorder %s106, 1
      %p250 = scmp.ne.s32.totalorder %s245, %s247
      %p251 = scmp.eq.s32.totalorder %s106, 0
      %p252 = por %p250, %p251
      %p253 = scmp.ne.s32.totalorder %s245, %s247
      %p254 = scmp.eq.s32.totalorder %s111, 1
      %p255 = por %p253, %p254
      %p256 = scmp.ne.s32.totalorder %s247, %s248
      %p257 = scmp.eq.s32.totalorder %s111, 0
      %p258 = por %p256, %p257
      %p259 = scmp.ne.s32.totalorder %s247, %s248
      %p260 = scmp.eq.s32.totalorder %s112, 1
      %p261 = por %p259, %p260
      %p263 = scmp.ne.s32.totalorder %s248, %s262
      %p264 = scmp.eq.s32.totalorder %s112, 0
      %p265 = por %p263, %p264
      %s267 = sadd.s32 %s266, 1
      %p270 = scmp.eq.s32.totalorder %s106, 1
      %p271 = scmp.ne.s32.totalorder %s266, %s268
      %p272 = scmp.eq.s32.totalorder %s106, 0
      %p273 = por %p271, %p272
      %p274 = scmp.ne.s32.totalorder %s266, %s268
      %p275 = scmp.eq.s32.totalorder %s111, 1
      %p276 = por %p274, %p275
      %p277 = scmp.ne.s32.totalorder %s268, %s269
      %p278 = scmp.eq.s32.totalorder %s111, 0
      %p279 = por %p277, %p278
      %p280 = scmp.ne.s32.totalorder %s268, %s269
      %p281 = scmp.eq.s32.totalorder %s112, 1
      %p282 = por %p280, %p281
      %p284 = scmp.ne.s32.totalorder %s269, %s283
      %p285 = scmp.eq.s32.totalorder %s112, 0
      %p286 = por %p284, %p285
      %s288 = sadd.s32 %s287, 1
      %p291 = scmp.eq.s32.totalorder %s106, 1
      %p292 = scmp.ne.s32.totalorder %s287, %s289
      %p293 = scmp.eq.s32.totalorder %s106, 0
      %p294 = por %p292, %p293
      %p295 = scmp.ne.s32.totalorder %s287, %s289
      %p296 = scmp.eq.s32.totalorder %s111, 1
      %p297 = por %p295, %p296
      %p298 = scmp.ne.s32.totalorder %s289, %s290
      %p299 = scmp.eq.s32.totalorder %s111, 0
      %p300 = por %p298, %p299
      %p301 = scmp.ne.s32.totalorder %s289, %s290
      %p302 = scmp.eq.s32.totalorder %s112, 1
      %p303 = por %p301, %p302
      %p305 = scmp.ne.s32.totalorder %s290, %s304
      %p306 = scmp.eq.s32.totalorder %s112, 0
      %p307 = por %p305, %p306
      %s309 = sadd.s32 %s308, 1
      %p312 = scmp.eq.s32.totalorder %s106, 1
      %p313 = scmp.ne.s32.totalorder %s308, %s310
      %p314 = scmp.eq.s32.totalorder %s106, 0
      %p315 = por %p313, %p314
      %p316 = scmp.ne.s32.totalorder %s308, %s310
      %p317 = scmp.eq.s32.totalorder %s111, 1
      %p318 = por %p316, %p317
      %p319 = scmp.ne.s32.totalorder %s310, %s311
      %p320 = scmp.eq.s32.totalorder %s111, 0
      %p321 = por %p319, %p320
      %p322 = scmp.ne.s32.totalorder %s310, %s311
      %p323 = scmp.eq.s32.totalorder %s112, 1
      %p324 = por %p322, %p323
      %p326 = scmp.ne.s32.totalorder %s311, %s325
      %p327 = scmp.eq.s32.totalorder %s112, 0
      %p328 = por %p326, %p327
      %s330 = sadd.s32 %s329, 1
      %p333 = scmp.eq.s32.totalorder %s106, 1
      %p334 = scmp.ne.s32.totalorder %s329, %s331
      %p335 = scmp.eq.s32.totalorder %s106, 0
      %p336 = por %p334, %p335
      %p337 = scmp.ne.s32.totalorder %s329, %s331
      %p338 = scmp.eq.s32.totalorder %s111, 1
      %p339 = por %p337, %p338
      %p340 = scmp.ne.s32.totalorder %s331, %s332
      %p341 = scmp.eq.s32.totalorder %s111, 0
      %p342 = por %p340, %p341
      %p343 = scmp.ne.s32.totalorder %s331, %s332
      %p344 = scmp.eq.s32.totalorder %s112, 1
      %p345 = por %p343, %p344
      %p347 = scmp.ne.s32.totalorder %s332, %s346
      %p348 = scmp.eq.s32.totalorder %s112, 0
      %p349 = por %p347, %p348
      %s351 = sadd.s32 %s350, 1
      %p354 = scmp.eq.s32.totalorder %s106, 1
      %p355 = scmp.ne.s32.totalorder %s350, %s352
      %p356 = scmp.eq.s32.totalorder %s106, 0
      %p357 = por %p355, %p356
      %p358 = scmp.ne.s32.totalorder %s350, %s352
      %p359 = scmp.eq.s32.totalorder %s111, 1
      %p360 = por %p358, %p359
      %p361 = scmp.ne.s32.totalorder %s352, %s353
      %p362 = scmp.eq.s32.totalorder %s111, 0
      %p363 = por %p361, %p362
      %p364 = scmp.ne.s32.totalorder %s352, %s353
      %p365 = scmp.eq.s32.totalorder %s112, 1
      %p366 = por %p364, %p365
      %p368 = scmp.ne.s32.totalorder %s353, %s367
      %p369 = scmp.eq.s32.totalorder %s112, 0
      %p370 = por %p368, %p369
      %s372 = sadd.s32 %s371, 1
      %p375 = scmp.eq.s32.totalorder %s106, 1
      %p376 = scmp.ne.s32.totalorder %s371, %s373
      %p377 = scmp.eq.s32.totalorder %s106, 0
      %p378 = por %p376, %p377
      %p379 = scmp.ne.s32.totalorder %s371, %s373
      %p380 = scmp.eq.s32.totalorder %s111, 1
      %p381 = por %p379, %p380
      %p382 = scmp.ne.s32.totalorder %s373, %s374
      %p383 = scmp.eq.s32.totalorder %s111, 0
      %p384 = por %p382, %p383
      %p385 = scmp.ne.s32.totalorder %s373, %s374
      %p386 = scmp.eq.s32.totalorder %s112, 1
      %p387 = por %p385, %p386
      %p389 = scmp.ne.s32.totalorder %s374, %s388
      %p390 = scmp.eq.s32.totalorder %s112, 0
      %p391 = por %p389, %p390
      %s393 = sadd.s32 %s392, 1
      %p396 = scmp.eq.s32.totalorder %s106, 1
      %p397 = scmp.ne.s32.totalorder %s392, %s394
      %p398 = scmp.eq.s32.totalorder %s106, 0
      %p399 = por %p397, %p398
      %p400 = scmp.ne.s32.totalorder %s392, %s394
      %p401 = scmp.eq.s32.totalorder %s111, 1
      %p402 = por %p400, %p401
      %p403 = scmp.ne.s32.totalorder %s394, %s395
      %p404 = scmp.eq.s32.totalorder %s111, 0
      %p405 = por %p403, %p404
      %p406 = scmp.ne.s32.totalorder %s394, %s395
      %p407 = scmp.eq.s32.totalorder %s112, 1
      %p408 = por %p406, %p407
      %p410 = scmp.ne.s32.totalorder %s395, %s409
      %p411 = scmp.eq.s32.totalorder %s112, 0
      %p412 = por %p410, %p411
      %s414 = sadd.s32 %s413, 1
      %p417 = scmp.eq.s32.totalorder %s106, 1
      %p418 = scmp.ne.s32.totalorder %s413, %s415
      %p419 = scmp.eq.s32.totalorder %s106, 0
      %p420 = por %p418, %p419
      %p421 = scmp.ne.s32.totalorder %s413, %s415
      %p422 = scmp.eq.s32.totalorder %s111, 1
      %p423 = por %p421, %p422
      %p424 = scmp.ne.s32.totalorder %s415, %s416
      %p425 = scmp.eq.s32.totalorder %s111, 0
      %p426 = por %p424, %p425
      %p427 = scmp.ne.s32.totalorder %s415, %s416
      %p428 = scmp.eq.s32.totalorder %s112, 1
      %p429 = por %p427, %p428
      %p431 = scmp.ne.s32.totalorder %s416, %s430
      %p432 = scmp.eq.s32.totalorder %s112, 0
      %p433 = por %p431, %p432
      %s435 = sadd.s32 %s434, 1
      %p438 = scmp.eq.s32.totalorder %s106, 1
      %p439 = scmp.ne.s32.totalorder %s434, %s436
      %p440 = scmp.eq.s32.totalorder %s106, 0
      %p441 = por %p439, %p440
      %p442 = scmp.ne.s32.totalorder %s434, %s436
      %p443 = scmp.eq.s32.totalorder %s111, 1
      %p444 = por %p442, %p443
      %p445 = scmp.ne.s32.totalorder %s436, %s437
      %p446 = scmp.eq.s32.totalorder %s111, 0
      %p447 = por %p445, %p446
      %p448 = scmp.ne.s32.totalorder %s436, %s437
      %p449 = scmp.eq.s32.totalorder %s112, 1
      %p450 = por %p448, %p449
      %p452 = scmp.ne.s32.totalorder %s437, %s451
      %p453 = scmp.eq.s32.totalorder %s112, 0
      %p454 = por %p452, %p453
      %s456 = sadd.s32 %s455, 1
      %p459 = scmp.eq.s32.totalorder %s106, 1
      %p460 = scmp.ne.s32.totalorder %s455, %s457
      %p461 = scmp.eq.s32.totalorder %s106, 0
      %p462 = por %p460, %p461
      %p463 = scmp.ne.s32.totalorder %s455, %s457
      %p464 = scmp.eq.s32.totalorder %s111, 1
      %p465 = por %p463, %p464
      %p466 = scmp.ne.s32.totalorder %s457, %s458
      %p467 = scmp.eq.s32.totalorder %s111, 0
      %p468 = por %p466, %p467
      %p469 = scmp.ne.s32.totalorder %s457, %s458
      %p470 = scmp.eq.s32.totalorder %s112, 1
      %p471 = por %p469, %p470
      %p473 = scmp.ne.s32.totalorder %s458, %s472
      %p474 = scmp.eq.s32.totalorder %s112, 0
      %p475 = por %p473, %p474
      %s477 = sadd.s32 %s476, 1
      %p480 = scmp.eq.s32.totalorder %s106, 1
      %p481 = scmp.ne.s32.totalorder %s476, %s478
      %p482 = scmp.eq.s32.totalorder %s106, 0
      %p483 = por %p481, %p482
      %p484 = scmp.ne.s32.totalorder %s476, %s478
      %p485 = scmp.eq.s32.totalorder %s111, 1
      %p486 = por %p484, %p485
      %p487 = scmp.ne.s32.totalorder %s478, %s479
      %p488 = scmp.eq.s32.totalorder %s111, 0
      %p489 = por %p487, %p488
      %p490 = scmp.ne.s32.totalorder %s478, %s479
      %p491 = scmp.eq.s32.totalorder %s112, 1
      %p492 = por %p490, %p491
      %p494 = scmp.ne.s32.totalorder %s479, %s493
      %p495 = scmp.eq.s32.totalorder %s112, 0
      %p496 = por %p494, %p495
      %s498 = sadd.s32 %s497, 1
      %p501 = scmp.eq.s32.totalorder %s106, 1
      %p502 = scmp.ne.s32.totalorder %s497, %s499
      %p503 = scmp.eq.s32.totalorder %s106, 0
      %p504 = por %p502, %p503
      %p505 = scmp.ne.s32.totalorder %s497, %s499
      %p506 = scmp.eq.s32.totalorder %s111, 1
      %p507 = por %p505, %p506
      %p508 = scmp.ne.s32.totalorder %s499, %s500
      %p509 = scmp.eq.s32.totalorder %s111, 0
      %p510 = por %p508, %p509
      %p511 = scmp.ne.s32.totalorder %s499, %s500
      %p512 = scmp.eq.s32.totalorder %s112, 1
      %p513 = por %p511, %p512
      %p515 = scmp.ne.s32.totalorder %s500, %s514
      %p516 = scmp.eq.s32.totalorder %s112, 0
      %p517 = por %p515, %p516
      %s519 = sadd.s32 %s518, 1
      %p522 = scmp.eq.s32.totalorder %s106, 1
      %p523 = scmp.ne.s32.totalorder %s518, %s520
      %p524 = scmp.eq.s32.totalorder %s106, 0
      %p525 = por %p523, %p524
      %p526 = scmp.ne.s32.totalorder %s518, %s520
      %p527 = scmp.eq.s32.totalorder %s111, 1
      %p528 = por %p526, %p527
      %p529 = scmp.ne.s32.totalorder %s520, %s521
      %p530 = scmp.eq.s32.totalorder %s111, 0
      %p531 = por %p529, %p530
      %p532 = scmp.ne.s32.totalorder %s520, %s521
      %p533 = scmp.eq.s32.totalorder %s112, 1
      %p534 = por %p532, %p533
      %p536 = scmp.ne.s32.totalorder %s521, %s535
      %p537 = scmp.eq.s32.totalorder %s112, 0
      %p538 = por %p536, %p537
      %s540 = sadd.s32 %s539, 1
      %p543 = scmp.eq.s32.totalorder %s106, 1
      %p544 = scmp.ne.s32.totalorder %s539, %s541
      %p545 = scmp.eq.s32.totalorder %s106, 0
      %p546 = por %p544, %p545
      %p547 = scmp.ne.s32.totalorder %s539, %s541
      %p548 = scmp.eq.s32.totalorder %s111, 1
      %p549 = por %p547, %p548
      %p550 = scmp.ne.s32.totalorder %s541, %s542
      %p551 = scmp.eq.s32.totalorder %s111, 0
      %p552 = por %p550, %p551
      %p553 = scmp.ne.s32.totalorder %s541, %s542
      %p554 = scmp.eq.s32.totalorder %s112, 1
      %p555 = por %p553, %p554
      %p557 = scmp.ne.s32.totalorder %s542, %s556
      %p558 = scmp.eq.s32.totalorder %s112, 0
      %p559 = por %p557, %p558
      %s561 = sadd.s32 %s560, 1
      %p564 = scmp.eq.s32.totalorder %s106, 1
      %p565 = scmp.ne.s32.totalorder %s560, %s562
      %p566 = scmp.eq.s32.totalorder %s106, 0
      %p567 = por %p565, %p566
      %p568 = scmp.ne.s32.totalorder %s560, %s562
      %p569 = scmp.eq.s32.totalorder %s111, 1
      %p570 = por %p568, %p569
      %p571 = scmp.ne.s32.totalorder %s562, %s563
      %p572 = scmp.eq.s32.totalorder %s111, 0
      %p573 = por %p571, %p572
      %p574 = scmp.ne.s32.totalorder %s562, %s563
      %p575 = scmp.eq.s32.totalorder %s112, 1
      %p576 = por %p574, %p575
      %p578 = scmp.ne.s32.totalorder %s563, %s577
      %p579 = scmp.eq.s32.totalorder %s112, 0
      %p580 = por %p578, %p579
      %s582 = sadd.s32 %s581, 1
      %p585 = scmp.eq.s32.totalorder %s106, 1
      %p586 = scmp.ne.s32.totalorder %s581, %s583
      %p587 = scmp.eq.s32.totalorder %s106, 0
      %p588 = por %p586, %p587
      %p589 = scmp.ne.s32.totalorder %s581, %s583
      %p590 = scmp.eq.s32.totalorder %s111, 1
      %p591 = por %p589, %p590
      %p592 = scmp.ne.s32.totalorder %s583, %s584
      %p593 = scmp.eq.s32.totalorder %s111, 0
      %p594 = por %p592, %p593
      %p595 = scmp.ne.s32.totalorder %s583, %s584
      %p596 = scmp.eq.s32.totalorder %s112, 1
      %p597 = por %p595, %p596
      %p599 = scmp.ne.s32.totalorder %s584, %s598
      %p600 = scmp.eq.s32.totalorder %s112, 0
      %p601 = por %p599, %p600
      %s603 = sadd.s32 %s602, 1
      %p606 = scmp.eq.s32.totalorder %s106, 1
      %p607 = scmp.ne.s32.totalorder %s602, %s604
      %p608 = scmp.eq.s32.totalorder %s106, 0
      %p609 = por %p607, %p608
      %p610 = scmp.ne.s32.totalorder %s602, %s604
      %p611 = scmp.eq.s32.totalorder %s111, 1
      %p612 = por %p610, %p611
      %p613 = scmp.ne.s32.totalorder %s604, %s605
      %p614 = scmp.eq.s32.totalorder %s111, 0
      %p615 = por %p613, %p614
      %p616 = scmp.ne.s32.totalorder %s604, %s605
      %p617 = scmp.eq.s32.totalorder %s112, 1
      %p618 = por %p616, %p617
      %p620 = scmp.ne.s32.totalorder %s605, %s619
      %p621 = scmp.eq.s32.totalorder %s112, 0
      %p622 = por %p620, %p621
      %s624 = sadd.s32 %s623, 1
      %p627 = scmp.eq.s32.totalorder %s106, 1
      %p628 = scmp.ne.s32.totalorder %s623, %s625
      %p629 = scmp.eq.s32.totalorder %s106, 0
      %p630 = por %p628, %p629
      %p631 = scmp.ne.s32.totalorder %s623, %s625
      %p632 = scmp.eq.s32.totalorder %s111, 1
      %p633 = por %p631, %p632
      %p634 = scmp.ne.s32.totalorder %s625, %s626
      %p635 = scmp.eq.s32.totalorder %s111, 0
      %p636 = por %p634, %p635
      %p637 = scmp.ne.s32.totalorder %s625, %s626
      %p638 = scmp.eq.s32.totalorder %s112, 1
      %p639 = por %p637, %p638
      %p641 = scmp.ne.s32.totalorder %s626, %s640
      %p642 = scmp.eq.s32.totalorder %s112, 0
      %p643 = por %p641, %p642
      %s645 = sadd.s32 %s644, 1
      %p648 = scmp.eq.s32.totalorder %s106, 1
      %p649 = scmp.ne.s32.totalorder %s644, %s646
      %p650 = scmp.eq.s32.totalorder %s106, 0
      %p651 = por %p649, %p650
      %p652 = scmp.ne.s32.totalorder %s644, %s646
      %p653 = scmp.eq.s32.totalorder %s111, 1
      %p654 = por %p652, %p653
      %p655 = scmp.ne.s32.totalorder %s646, %s647
      %p656 = scmp.eq.s32.totalorder %s111, 0
      %p657 = por %p655, %p656
      %p658 = scmp.ne.s32.totalorder %s646, %s647
      %p659 = scmp.eq.s32.totalorder %s112, 1
      %p660 = por %p658, %p659
      %p662 = scmp.ne.s32.totalorder %s647, %s661
      %p663 = scmp.eq.s32.totalorder %s112, 0
      %p664 = por %p662, %p663
      %s666 = sadd.s32 %s665, 1
      %p669 = scmp.eq.s32.totalorder %s106, 1
      %p670 = scmp.ne.s32.totalorder %s665, %s667
      %p671 = scmp.eq.s32.totalorder %s106, 0
      %p672 = por %p670, %p671
      %p673 = scmp.ne.s32.totalorder %s665, %s667
      %p674 = scmp.eq.s32.totalorder %s111, 1
      %p675 = por %p673, %p674
      %p676 = scmp.ne.s32.totalorder %s667, %s668
      %p677 = scmp.eq.s32.totalorder %s111, 0
      %p678 = por %p676, %p677
      %p679 = scmp.ne.s32.totalorder %s667, %s668
      %p680 = scmp.eq.s32.totalorder %s112, 1
      %p681 = por %p679, %p680
      %p683 = scmp.ne.s32.totalorder %s668, %s682
      %p684 = scmp.eq.s32.totalorder %s112, 0
      %p685 = por %p683, %p684
      %s687 = sadd.s32 %s686, 1
      %p690 = scmp.eq.s32.totalorder %s106, 1
      %p691 = scmp.ne.s32.totalorder %s686, %s688
      %p692 = scmp.eq.s32.totalorder %s106, 0
      %p693 = por %p691, %p692
      %p694 = scmp.ne.s32.totalorder %s686, %s688
      %p695 = scmp.eq.s32.totalorder %s111, 1
      %p696 = por %p694, %p695
      %p697 = scmp.ne.s32.totalorder %s688, %s689
      %p698 = scmp.eq.s32.totalorder %s111, 0
      %p699 = por %p697, %p698
      %p700 = scmp.ne.s32.totalorder %s688, %s689
      %p701 = scmp.eq.s32.totalorder %s112, 1
      %p702 = por %p700, %p701
      %p704 = scmp.ne.s32.totalorder %s689, %s703
      %p705 = scmp.eq.s32.totalorder %s112, 0
      %p706 = por %p704, %p705
      %s708 = sadd.s32 %s707, 1
      %p711 = scmp.eq.s32.totalorder %s106, 1
      %p712 = scmp.ne.s32.totalorder %s707, %s709
      %p713 = scmp.eq.s32.totalorder %s106, 0
      %p714 = por %p712, %p713
      %p715 = scmp.ne.s32.totalorder %s707, %s709
      %p716 = scmp.eq.s32.totalorder %s111, 1
      %p717 = por %p715, %p716
      %p718 = scmp.ne.s32.totalorder %s709, %s710
      %p719 = scmp.eq.s32.totalorder %s111, 0
      %p720 = por %p718, %p719
      %p721 = scmp.ne.s32.totalorder %s709, %s710
      %p722 = scmp.eq.s32.totalorder %s112, 1
      %p723 = por %p721, %p722
      %p725 = scmp.ne.s32.totalorder %s710, %s724
      %p726 = scmp.eq.s32.totalorder %s112, 0
      %p727 = por %p725, %p726
      %s729 = sadd.s32 %s728, 1
      %p732 = scmp.eq.s32.totalorder %s106, 1
      %p733 = scmp.ne.s32.totalorder %s728, %s730
      %p734 = scmp.eq.s32.totalorder %s106, 0
      %p735 = por %p733, %p734
      %p736 = scmp.ne.s32.totalorder %s728, %s730
      %p737 = scmp.eq.s32.totalorder %s111, 1
      %p738 = por %p736, %p737
      %p739 = scmp.ne.s32.totalorder %s730, %s731
      %p740 = scmp.eq.s32.totalorder %s111, 0
      %p741 = por %p739, %p740
      %p742 = scmp.ne.s32.totalorder %s730, %s731
      %p743 = scmp.eq.s32.totalorder %s112, 1
      %p744 = por %p742, %p743
      %p746 = scmp.ne.s32.totalorder %s731, %s745
      %p747 = scmp.eq.s32.totalorder %s112, 0
      %p748 = por %p746, %p747
      %s750 = sadd.s32 %s749, 1
      %p753 = scmp.eq.s32.totalorder %s106, 1
      %p754 = scmp.ne.s32.totalorder %s749, %s751
      %p755 = scmp.eq.s32.totalorder %s106, 0
      %p756 = por %p754, %p755
      %p757 = scmp.ne.s32.totalorder %s749, %s751
      %p758 = scmp.eq.s32.totalorder %s111, 1
      %p759 = por %p757, %p758
      %p760 = scmp.ne.s32.totalorder %s751, %s752
      %p761 = scmp.eq.s32.totalorder %s111, 0
      %p762 = por %p760, %p761
      %p763 = scmp.ne.s32.totalorder %s751, %s752
      %p764 = scmp.eq.s32.totalorder %s112, 1
      %p765 = por %p763, %p764
      %p767 = scmp.ne.s32.totalorder %s752, %s766
      %p768 = scmp.eq.s32.totalorder %s112, 0
      %p769 = por %p767, %p768
      %s771 = sadd.s32 %s770, 1
      %p774 = scmp.eq.s32.totalorder %s106, 1
      %p775 = scmp.ne.s32.totalorder %s770, %s772
      %p776 = scmp.eq.s32.totalorder %s106, 0
      %p777 = por %p775, %p776
      %p778 = scmp.ne.s32.totalorder %s770, %s772
      %p779 = scmp.eq.s32.totalorder %s111, 1
      %p780 = por %p778, %p779
      %p781 = scmp.ne.s32.totalorder %s772, %s773
      %p782 = scmp.eq.s32.totalorder %s111, 0
      %p783 = por %p781, %p782
      %p784 = scmp.ne.s32.totalorder %s772, %s773
      %p785 = scmp.eq.s32.totalorder %s112, 1
      %p786 = por %p784, %p785
      %p788 = scmp.ne.s32.totalorder %s773, %s787
      %p789 = scmp.eq.s32.totalorder %s112, 0
      %p790 = por %p788, %p789
      %s792 = sadd.s32 %s791, 1
      %p795 = scmp.eq.s32.totalorder %s106, 1
      %p796 = scmp.ne.s32.totalorder %s791, %s793
      %p797 = scmp.eq.s32.totalorder %s106, 0
      %p798 = por %p796, %p797
      %p799 = scmp.ne.s32.totalorder %s791, %s793
      %p800 = scmp.eq.s32.totalorder %s111, 1
      %p801 = por %p799, %p800
      %p802 = scmp.ne.s32.totalorder %s793, %s794
      %p803 = scmp.eq.s32.totalorder %s111, 0
      %p804 = por %p802, %p803
      %p805 = scmp.ne.s32.totalorder %s793, %s794
      %p806 = scmp.eq.s32.totalorder %s112, 1
      %p807 = por %p805, %p806
      %p809 = scmp.ne.s32.totalorder %s794, %s808
      %p810 = scmp.eq.s32.totalorder %s112, 0
      %p811 = por %p809, %p810
      %s813 = sadd.s32 %s812, 1
      %p816 = scmp.eq.s32.totalorder %s106, 1
      %p817 = scmp.ne.s32.totalorder %s812, %s814
      %p818 = scmp.eq.s32.totalorder %s106, 0
      %p819 = por %p817, %p818
      %p820 = scmp.ne.s32.totalorder %s812, %s814
      %p821 = scmp.eq.s32.totalorder %s111, 1
      %p822 = por %p820, %p821
      %p823 = scmp.ne.s32.totalorder %s814, %s815
      %p824 = scmp.eq.s32.totalorder %s111, 0
      %p825 = por %p823, %p824
      %p826 = scmp.ne.s32.totalorder %s814, %s815
      %p827 = scmp.eq.s32.totalorder %s112, 1
      %p828 = por %p826, %p827
      %p830 = scmp.ne.s32.totalorder %s815, %s829
      %p831 = scmp.eq.s32.totalorder %s112, 0
      %p832 = por %p830, %p831
      %s834 = sadd.s32 %s833, 1
      %p837 = scmp.eq.s32.totalorder %s106, 1
      %p838 = scmp.ne.s32.totalorder %s833, %s835
      %p839 = scmp.eq.s32.totalorder %s106, 0
      %p840 = por %p838, %p839
      %p841 = scmp.ne.s32.totalorder %s833, %s835
      %p842 = scmp.eq.s32.totalorder %s111, 1
      %p843 = por %p841, %p842
      %p844 = scmp.ne.s32.totalorder %s835, %s836
      %p845 = scmp.eq.s32.totalorder %s111, 0
      %p846 = por %p844, %p845
      %p847 = scmp.ne.s32.totalorder %s835, %s836
      %p848 = scmp.eq.s32.totalorder %s112, 1
      %p849 = por %p847, %p848
      %p851 = scmp.ne.s32.totalorder %s836, %s850
      %p852 = scmp.eq.s32.totalorder %s112, 0
      %p853 = por %p851, %p852
      %s855 = sadd.s32 %s854, 1
      %p858 = scmp.eq.s32.totalorder %s106, 1
      %p859 = scmp.ne.s32.totalorder %s854, %s856
      %p860 = scmp.eq.s32.totalorder %s106, 0
      %p861 = por %p859, %p860
      %p862 = scmp.ne.s32.totalorder %s854, %s856
      %p863 = scmp.eq.s32.totalorder %s111, 1
      %p864 = por %p862, %p863
      %p865 = scmp.ne.s32.totalorder %s856, %s857
      %p866 = scmp.eq.s32.totalorder %s111, 0
      %p867 = por %p865, %p866
      %p868 = scmp.ne.s32.totalorder %s856, %s857
      %p869 = scmp.eq.s32.totalorder %s112, 1
      %p870 = por %p868, %p869
      %p872 = scmp.ne.s32.totalorder %s857, %s871
      %p873 = scmp.eq.s32.totalorder %s112, 0
      %p874 = por %p872, %p873
      %s876 = sadd.s32 %s875, 1
      %p879 = scmp.eq.s32.totalorder %s106, 1
      %p880 = scmp.ne.s32.totalorder %s875, %s877
      %p881 = scmp.eq.s32.totalorder %s106, 0
      %p882 = por %p880, %p881
      %p883 = scmp.ne.s32.totalorder %s875, %s877
      %p884 = scmp.eq.s32.totalorder %s111, 1
      %p885 = por %p883, %p884
      %p886 = scmp.ne.s32.totalorder %s877, %s878
      %p887 = scmp.eq.s32.totalorder %s111, 0
      %p888 = por %p886, %p887
      %p889 = scmp.ne.s32.totalorder %s877, %s878
      %p890 = scmp.eq.s32.totalorder %s112, 1
      %p891 = por %p889, %p890
      %p893 = scmp.ne.s32.totalorder %s878, %s892
      %p894 = scmp.eq.s32.totalorder %s112, 0
      %p895 = por %p893, %p894
      %s897 = sadd.s32 %s896, 1
      %p900 = scmp.eq.s32.totalorder %s106, 1
      %p901 = scmp.ne.s32.totalorder %s896, %s898
      %p902 = scmp.eq.s32.totalorder %s106, 0
      %p903 = por %p901, %p902
      %p904 = scmp.ne.s32.totalorder %s896, %s898
      %p905 = scmp.eq.s32.totalorder %s111, 1
      %p906 = por %p904, %p905
      %p907 = scmp.ne.s32.totalorder %s898, %s899
      %p908 = scmp.eq.s32.totalorder %s111, 0
      %p909 = por %p907, %p908
      %p910 = scmp.ne.s32.totalorder %s898, %s899
      %p911 = scmp.eq.s32.totalorder %s112, 1
      %p912 = por %p910, %p911
      %p914 = scmp.ne.s32.totalorder %s899, %s913
      %p915 = scmp.eq.s32.totalorder %s112, 0
      %p916 = por %p914, %p915
      %s918 = sadd.s32 %s917, 1
      %p921 = scmp.eq.s32.totalorder %s106, 1
      %p922 = scmp.ne.s32.totalorder %s917, %s919
      %p923 = scmp.eq.s32.totalorder %s106, 0
      %p924 = por %p922, %p923
      %p925 = scmp.ne.s32.totalorder %s917, %s919
      %p926 = scmp.eq.s32.totalorder %s111, 1
      %p927 = por %p925, %p926
      %p928 = scmp.ne.s32.totalorder %s919, %s920
      %p929 = scmp.eq.s32.totalorder %s111, 0
      %p930 = por %p928, %p929
      %p931 = scmp.ne.s32.totalorder %s919, %s920
      %p932 = scmp.eq.s32.totalorder %s112, 1
      %p933 = por %p931, %p932
      %p935 = scmp.ne.s32.totalorder %s920, %s934
      %p936 = scmp.eq.s32.totalorder %s112, 0
      %p937 = por %p935, %p936
      %s939 = sadd.s32 %s938, 1
      %p942 = scmp.eq.s32.totalorder %s106, 1
      %p943 = scmp.ne.s32.totalorder %s938, %s940
      %p944 = scmp.eq.s32.totalorder %s106, 0
      %p945 = por %p943, %p944
      %p946 = scmp.ne.s32.totalorder %s938, %s940
      %p947 = scmp.eq.s32.totalorder %s111, 1
      %p948 = por %p946, %p947
      %p949 = scmp.ne.s32.totalorder %s940, %s941
      %p950 = scmp.eq.s32.totalorder %s111, 0
      %p951 = por %p949, %p950
      %p952 = scmp.ne.s32.totalorder %s940, %s941
      %p953 = scmp.eq.s32.totalorder %s112, 1
      %p954 = por %p952, %p953
      %p956 = scmp.ne.s32.totalorder %s941, %s955
      %p957 = scmp.eq.s32.totalorder %s112, 0
      %p958 = por %p956, %p957
      %s960 = sadd.s32 %s959, 1
      %p963 = scmp.eq.s32.totalorder %s106, 1
      %p964 = scmp.ne.s32.totalorder %s959, %s961
      %p965 = scmp.eq.s32.totalorder %s106, 0
      %p966 = por %p964, %p965
      %p967 = scmp.ne.s32.totalorder %s959, %s961
      %p968 = scmp.eq.s32.totalorder %s111, 1
      %p969 = por %p967, %p968
      %p970 = scmp.ne.s32.totalorder %s961, %s962
      %p971 = scmp.eq.s32.totalorder %s111, 0
      %p972 = por %p970, %p971
      %p973 = scmp.ne.s32.totalorder %s961, %s962
      %p974 = scmp.eq.s32.totalorder %s112, 1
      %p975 = por %p973, %p974
      %p977 = scmp.ne.s32.totalorder %s962, %s976
      %p978 = scmp.eq.s32.totalorder %s112, 0
      %p979 = por %p977, %p978
      %s981 = sadd.s32 %s980, 1
      %p984 = scmp.eq.s32.totalorder %s106, 1
      %p985 = scmp.ne.s32.totalorder %s980, %s982
      %p986 = scmp.eq.s32.totalorder %s106, 0
      %p987 = por %p985, %p986
      %p988 = scmp.ne.s32.totalorder %s980, %s982
      %p989 = scmp.eq.s32.totalorder %s111, 1
      %p990 = por %p988, %p989
      %p991 = scmp.ne.s32.totalorder %s982, %s983
      %p992 = scmp.eq.s32.totalorder %s111, 0
      %p993 = por %p991, %p992
      %p994 = scmp.ne.s32.totalorder %s982, %s983
      %p995 = scmp.eq.s32.totalorder %s112, 1
      %p996 = por %p994, %p995
      %p998 = scmp.ne.s32.totalorder %s983, %s997
      %p999 = scmp.eq.s32.totalorder %s112, 0
      %p1000 = por %p998, %p999
      %s1002 = sadd.s32 %s1001, 1
      %p1005 = scmp.eq.s32.totalorder %s106, 1
      %p1006 = scmp.ne.s32.totalorder %s1001, %s1003
      %p1007 = scmp.eq.s32.totalorder %s106, 0
      %p1008 = por %p1006, %p1007
      %p1009 = scmp.ne.s32.totalorder %s1001, %s1003
      %p1010 = scmp.eq.s32.totalorder %s111, 1
      %p1011 = por %p1009, %p1010
      %p1012 = scmp.ne.s32.totalorder %s1003, %s1004
      %p1013 = scmp.eq.s32.totalorder %s111, 0
      %p1014 = por %p1012, %p1013
      %p1015 = scmp.ne.s32.totalorder %s1003, %s1004
      %p1016 = scmp.eq.s32.totalorder %s112, 1
      %p1017 = por %p1015, %p1016
      %p1019 = scmp.ne.s32.totalorder %s1004, %s1018
      %p1020 = scmp.eq.s32.totalorder %s112, 0
      %p1021 = por %p1019, %p1020
      %s1023 = sadd.s32 %s1022, 1
      %p1026 = scmp.eq.s32.totalorder %s106, 1
      %p1027 = scmp.ne.s32.totalorder %s1022, %s1024
      %p1028 = scmp.eq.s32.totalorder %s106, 0
      %p1029 = por %p1027, %p1028
      %p1030 = scmp.ne.s32.totalorder %s1022, %s1024
      %p1031 = scmp.eq.s32.totalorder %s111, 1
      %p1032 = por %p1030, %p1031
      %p1033 = scmp.ne.s32.totalorder %s1024, %s1025
      %p1034 = scmp.eq.s32.totalorder %s111, 0
      %p1035 = por %p1033, %p1034
      %p1036 = scmp.ne.s32.totalorder %s1024, %s1025
      %p1037 = scmp.eq.s32.totalorder %s112, 1
      %p1038 = por %p1036, %p1037
      %p1040 = scmp.ne.s32.totalorder %s1025, %s1039
      %p1041 = scmp.eq.s32.totalorder %s112, 0
      %p1042 = por %p1040, %p1041
      %s1044 = sadd.s32 %s1043, 1
      %p1047 = scmp.eq.s32.totalorder %s106, 1
      %p1048 = scmp.ne.s32.totalorder %s1043, %s1045
      %p1049 = scmp.eq.s32.totalorder %s106, 0
      %p1050 = por %p1048, %p1049
      %p1051 = scmp.ne.s32.totalorder %s1043, %s1045
      %p1052 = scmp.eq.s32.totalorder %s111, 1
      %p1053 = por %p1051, %p1052
      %p1054 = scmp.ne.s32.totalorder %s1045, %s1046
      %p1055 = scmp.eq.s32.totalorder %s111, 0
      %p1056 = por %p1054, %p1055
      %p1057 = scmp.ne.s32.totalorder %s1045, %s1046
      %p1058 = scmp.eq.s32.totalorder %s112, 1
      %p1059 = por %p1057, %p1058
      %p1061 = scmp.ne.s32.totalorder %s1046, %s1060
      %p1062 = scmp.eq.s32.totalorder %s112, 0
      %p1063 = por %p1061, %p1062
      %s1065 = sadd.s32 %s1064, 1
      %p1068 = scmp.eq.s32.totalorder %s106, 1
      %p1069 = scmp.ne.s32.totalorder %s1064, %s1066
      %p1070 = scmp.eq.s32.totalorder %s106, 0
      %p1071 = por %p1069, %p1070
      %p1072 = scmp.ne.s32.totalorder %s1064, %s1066
      %p1073 = scmp.eq.s32.totalorder %s111, 1
      %p1074 = por %p1072, %p1073
      %p1075 = scmp.ne.s32.totalorder %s1066, %s1067
      %p1076 = scmp.eq.s32.totalorder %s111, 0
      %p1077 = por %p1075, %p1076
      %p1078 = scmp.ne.s32.totalorder %s1066, %s1067
      %p1079 = scmp.eq.s32.totalorder %s112, 1
      %p1080 = por %p1078, %p1079
      %p1082 = scmp.ne.s32.totalorder %s1067, %s1081
      %p1083 = scmp.eq.s32.totalorder %s112, 0
      %p1084 = por %p1082, %p1083
      %s1086 = sadd.s32 %s1085, 1
      %p1089 = scmp.eq.s32.totalorder %s106, 1
      %p1090 = scmp.ne.s32.totalorder %s1085, %s1087
      %p1091 = scmp.eq.s32.totalorder %s106, 0
      %p1092 = por %p1090, %p1091
      %p1093 = scmp.ne.s32.totalorder %s1085, %s1087
      %p1094 = scmp.eq.s32.totalorder %s111, 1
      %p1095 = por %p1093, %p1094
      %p1096 = scmp.ne.s32.totalorder %s1087, %s1088
      %p1097 = scmp.eq.s32.totalorder %s111, 0
      %p1098 = por %p1096, %p1097
      %p1099 = scmp.ne.s32.totalorder %s1087, %s1088
      %p1100 = scmp.eq.s32.totalorder %s112, 1
      %p1101 = por %p1099, %p1100
      %p1103 = scmp.ne.s32.totalorder %s1088, %s1102
      %p1104 = scmp.eq.s32.totalorder %s112, 0
      %p1105 = por %p1103, %p1104
      %s1107 = sadd.s32 %s1106, 1
      %p1110 = scmp.eq.s32.totalorder %s106, 1
      %p1111 = scmp.ne.s32.totalorder %s1106, %s1108
      %p1112 = scmp.eq.s32.totalorder %s106, 0
      %p1113 = por %p1111, %p1112
      %p1114 = scmp.ne.s32.totalorder %s1106, %s1108
      %p1115 = scmp.eq.s32.totalorder %s111, 1
      %p1116 = por %p1114, %p1115
      %p1117 = scmp.ne.s32.totalorder %s1108, %s1109
      %p1118 = scmp.eq.s32.totalorder %s111, 0
      %p1119 = por %p1117, %p1118
      %p1120 = scmp.ne.s32.totalorder %s1108, %s1109
      %p1121 = scmp.eq.s32.totalorder %s112, 1
      %p1122 = por %p1120, %p1121
      %p1124 = scmp.ne.s32.totalorder %s1109, %s1123
      %p1125 = scmp.eq.s32.totalorder %s112, 0
      %p1126 = por %p1124, %p1125
      %s1127 = ssub.s32 %s106, %s113
      %p1128 = scmp.eq.s32.totalorder %s1127, 0
      %s1130 = sadd.s32 %s1129, 1
      %s1131 = scalar_select %p1128, %s1129, %s1130
      %p1134 = pneg %p1128
      %p1135 = scmp.eq.s32.totalorder %s106, 1
      %p1136 = por %p1134, %p1135
      %p1137 = scmp.ne.s32.totalorder %s1129, %s1132
      %p1138 = scmp.eq.s32.totalorder %s106, 0
      %p1139 = por %p1137, %p1138
      %p1140 = scmp.ne.s32.totalorder %s1129, %s1132
      %p1141 = scmp.eq.s32.totalorder %s111, 1
      %p1142 = por %p1140, %p1141
      %p1143 = scmp.ne.s32.totalorder %s1132, %s1133
      %p1144 = scmp.eq.s32.totalorder %s111, 0
      %p1145 = por %p1143, %p1144
      %p1146 = scmp.ne.s32.totalorder %s1132, %s1133
      %p1147 = scmp.eq.s32.totalorder %s112, 1
      %p1148 = por %p1146, %p1147
      %p1150 = scmp.ne.s32.totalorder %s1133, %s1149
      %p1151 = scmp.eq.s32.totalorder %s112, 0
      %p1152 = por %p1150, %p1151
      %p1153 = scmp.le.s32.totalorder 1, %s106
      %p1154 = scmp.lt.s32.totalorder %s106, 3
      %p1155 = pnand %p1153, %p1154
      %p1156 = pneg %p1155
      // Predicated region
      $region9: #{model_forward.1} parent=5 // pred_check
        _
      $region10: #{model_forward.1} parent=5 // pred_check_branch
        %1158 = sbr.rel (%p1155) target = $region12
      $region11: #{model_forward.1} parent=5 // pred_region
        %s1159 = ssub.s32 %s106, 1
        // Predicated region
        $region13: #{model_forward.1} parent=11 // pred_check
          %p1160 = pneg %p153
        $region14: #{model_forward.1} parent=11 // pred_check_branch
          %1162 = sbr.rel (%p1160) target = $region16
        $region15: #{model_forward.1} parent=11 // pred_region
          _
        $region16: #{model_forward.1} parent=11 // pred_fallthru
          _
        // Predicated region
        $region17: #{model_forward.1} parent=11 // pred_check
          %p1163 = pneg %p174
        $region18: #{model_forward.1} parent=11 // pred_check_branch
          %1165 = sbr.rel (%p1163) target = $region20
        $region19: #{model_forward.1} parent=11 // pred_region
          _
        $region20: #{model_forward.1} parent=11 // pred_fallthru
          _
        // Predicated region
        $region21: #{model_forward.1} parent=11 // pred_check
          %p1166 = pneg %p195
        $region22: #{model_forward.1} parent=11 // pred_check_branch
          %1168 = sbr.rel (%p1166) target = $region24
        $region23: #{model_forward.1} parent=11 // pred_region
          _
        $region24: #{model_forward.1} parent=11 // pred_fallthru
          _
        // Predicated region
        $region25: #{model_forward.1} parent=11 // pred_check
          %p1169 = pneg %p216
        $region26: #{model_forward.1} parent=11 // pred_check_branch
          %1171 = sbr.rel (%p1169) target = $region28
        $region27: #{model_forward.1} parent=11 // pred_region
          _
        $region28: #{model_forward.1} parent=11 // pred_fallthru
          _
        // Predicated region
        $region29: #{model_forward.1} parent=11 // pred_check
          %p1172 = pneg %p237
        $region30: #{model_forward.1} parent=11 // pred_check_branch
          %1174 = sbr.rel (%p1172) target = $region32
        $region31: #{model_forward.1} parent=11 // pred_region
          _
        $region32: #{model_forward.1} parent=11 // pred_fallthru
          _
        // Predicated region
        $region33: #{model_forward.1} parent=11 // pred_check
          %p1175 = pneg %p258
        $region34: #{model_forward.1} parent=11 // pred_check_branch
          %1177 = sbr.rel (%p1175) target = $region36
        $region35: #{model_forward.1} parent=11 // pred_region
          _
        $region36: #{model_forward.1} parent=11 // pred_fallthru
          _
        // Predicated region
        $region37: #{model_forward.1} parent=11 // pred_check
          %p1178 = pneg %p279
        $region38: #{model_forward.1} parent=11 // pred_check_branch
          %1180 = sbr.rel (%p1178) target = $region40
        $region39: #{model_forward.1} parent=11 // pred_region
          _
        $region40: #{model_forward.1} parent=11 // pred_fallthru
          _
        // Predicated region
        $region41: #{model_forward.1} parent=11 // pred_check
          %p1181 = pneg %p300
        $region42: #{model_forward.1} parent=11 // pred_check_branch
          %1183 = sbr.rel (%p1181) target = $region44
        $region43: #{model_forward.1} parent=11 // pred_region
          _
        $region44: #{model_forward.1} parent=11 // pred_fallthru
          _
        // Predicated region
        $region45: #{model_forward.1} parent=11 // pred_check
          %p1184 = pneg %p321
        $region46: #{model_forward.1} parent=11 // pred_check_branch
          %1186 = sbr.rel (%p1184) target = $region48
        $region47: #{model_forward.1} parent=11 // pred_region
          _
        $region48: #{model_forward.1} parent=11 // pred_fallthru
          _
        // Predicated region
        $region49: #{model_forward.1} parent=11 // pred_check
          %p1187 = pneg %p342
        $region50: #{model_forward.1} parent=11 // pred_check_branch
          %1189 = sbr.rel (%p1187) target = $region52
        $region51: #{model_forward.1} parent=11 // pred_region
          _
        $region52: #{model_forward.1} parent=11 // pred_fallthru
          _
        // Predicated region
        $region53: #{model_forward.1} parent=11 // pred_check
          %p1190 = pneg %p363
        $region54: #{model_forward.1} parent=11 // pred_check_branch
          %1192 = sbr.rel (%p1190) target = $region56
        $region55: #{model_forward.1} parent=11 // pred_region
          _
        $region56: #{model_forward.1} parent=11 // pred_fallthru
          _
        // Predicated region
        $region57: #{model_forward.1} parent=11 // pred_check
          %p1193 = pneg %p384
        $region58: #{model_forward.1} parent=11 // pred_check_branch
          %1195 = sbr.rel (%p1193) target = $region60
        $region59: #{model_forward.1} parent=11 // pred_region
          _
        $region60: #{model_forward.1} parent=11 // pred_fallthru
          _
        // Predicated region
        $region61: #{model_forward.1} parent=11 // pred_check
          %p1196 = pneg %p405
        $region62: #{model_forward.1} parent=11 // pred_check_branch
          %1198 = sbr.rel (%p1196) target = $region64
        $region63: #{model_forward.1} parent=11 // pred_region
          _
        $region64: #{model_forward.1} parent=11 // pred_fallthru
          _
        // Predicated region
        $region65: #{model_forward.1} parent=11 // pred_check
          %p1199 = pneg %p426
        $region66: #{model_forward.1} parent=11 // pred_check_branch
          %1201 = sbr.rel (%p1199) target = $region68
        $region67: #{model_forward.1} parent=11 // pred_region
          _
        $region68: #{model_forward.1} parent=11 // pred_fallthru
          _
        // Predicated region
        $region69: #{model_forward.1} parent=11 // pred_check
          %p1202 = pneg %p447
        $region70: #{model_forward.1} parent=11 // pred_check_branch
          %1204 = sbr.rel (%p1202) target = $region72
        $region71: #{model_forward.1} parent=11 // pred_region
          _
        $region72: #{model_forward.1} parent=11 // pred_fallthru
          _
        // Predicated region
        $region73: #{model_forward.1} parent=11 // pred_check
          %p1205 = pneg %p468
        $region74: #{model_forward.1} parent=11 // pred_check_branch
          %1207 = sbr.rel (%p1205) target = $region76
        $region75: #{model_forward.1} parent=11 // pred_region
          _
        $region76: #{model_forward.1} parent=11 // pred_fallthru
          _
        // Predicated region
        $region77: #{model_forward.1} parent=11 // pred_check
          %p1208 = pneg %p489
        $region78: #{model_forward.1} parent=11 // pred_check_branch
          %1210 = sbr.rel (%p1208) target = $region80
        $region79: #{model_forward.1} parent=11 // pred_region
          _
        $region80: #{model_forward.1} parent=11 // pred_fallthru
          _
        // Predicated region
        $region81: #{model_forward.1} parent=11 // pred_check
          %p1211 = pneg %p510
        $region82: #{model_forward.1} parent=11 // pred_check_branch
          %1213 = sbr.rel (%p1211) target = $region84
        $region83: #{model_forward.1} parent=11 // pred_region
          _
        $region84: #{model_forward.1} parent=11 // pred_fallthru
          _
        // Predicated region
        $region85: #{model_forward.1} parent=11 // pred_check
          %p1214 = pneg %p531
        $region86: #{model_forward.1} parent=11 // pred_check_branch
          %1216 = sbr.rel (%p1214) target = $region88
        $region87: #{model_forward.1} parent=11 // pred_region
          _
        $region88: #{model_forward.1} parent=11 // pred_fallthru
          _
        // Predicated region
        $region89: #{model_forward.1} parent=11 // pred_check
          %p1217 = pneg %p552
        $region90: #{model_forward.1} parent=11 // pred_check_branch
          %1219 = sbr.rel (%p1217) target = $region92
        $region91: #{model_forward.1} parent=11 // pred_region
          _
        $region92: #{model_forward.1} parent=11 // pred_fallthru
          _
        // Predicated region
        $region93: #{model_forward.1} parent=11 // pred_check
          %p1220 = pneg %p573
        $region94: #{model_forward.1} parent=11 // pred_check_branch
          %1222 = sbr.rel (%p1220) target = $region96
        $region95: #{model_forward.1} parent=11 // pred_region
          _
        $region96: #{model_forward.1} parent=11 // pred_fallthru
          _
        // Predicated region
        $region97: #{model_forward.1} parent=11 // pred_check
          %p1223 = pneg %p594
        $region98: #{model_forward.1} parent=11 // pred_check_branch
          %1225 = sbr.rel (%p1223) target = $region100
        $region99: #{model_forward.1} parent=11 // pred_region
          _
        $region100: #{model_forward.1} parent=11 // pred_fallthru
          _
        // Predicated region
        $region101: #{model_forward.1} parent=11 // pred_check
          %p1226 = pneg %p615
        $region102: #{model_forward.1} parent=11 // pred_check_branch
          %1228 = sbr.rel (%p1226) target = $region104
        $region103: #{model_forward.1} parent=11 // pred_region
          _
        $region104: #{model_forward.1} parent=11 // pred_fallthru
          _
        // Predicated region
        $region105: #{model_forward.1} parent=11 // pred_check
          %p1229 = pneg %p636
        $region106: #{model_forward.1} parent=11 // pred_check_branch
          %1231 = sbr.rel (%p1229) target = $region108
        $region107: #{model_forward.1} parent=11 // pred_region
          _
        $region108: #{model_forward.1} parent=11 // pred_fallthru
          _
        // Predicated region
        $region109: #{model_forward.1} parent=11 // pred_check
          %p1232 = pneg %p657
        $region110: #{model_forward.1} parent=11 // pred_check_branch
          %1234 = sbr.rel (%p1232) target = $region112
        $region111: #{model_forward.1} parent=11 // pred_region
          _
        $region112: #{model_forward.1} parent=11 // pred_fallthru
          _
        // Predicated region
        $region113: #{model_forward.1} parent=11 // pred_check
          %p1235 = pneg %p678
        $region114: #{model_forward.1} parent=11 // pred_check_branch
          %1237 = sbr.rel (%p1235) target = $region116
        $region115: #{model_forward.1} parent=11 // pred_region
          _
        $region116: #{model_forward.1} parent=11 // pred_fallthru
          _
        // Predicated region
        $region117: #{model_forward.1} parent=11 // pred_check
          %p1238 = pneg %p699
        $region118: #{model_forward.1} parent=11 // pred_check_branch
          %1240 = sbr.rel (%p1238) target = $region120
        $region119: #{model_forward.1} parent=11 // pred_region
          _
        $region120: #{model_forward.1} parent=11 // pred_fallthru
          _
        // Predicated region
        $region121: #{model_forward.1} parent=11 // pred_check
          %p1241 = pneg %p720
        $region122: #{model_forward.1} parent=11 // pred_check_branch
          %1243 = sbr.rel (%p1241) target = $region124
        $region123: #{model_forward.1} parent=11 // pred_region
          _
        $region124: #{model_forward.1} parent=11 // pred_fallthru
          _
        // Predicated region
        $region125: #{model_forward.1} parent=11 // pred_check
          %p1244 = pneg %p741
        $region126: #{model_forward.1} parent=11 // pred_check_branch
          %1246 = sbr.rel (%p1244) target = $region128
        $region127: #{model_forward.1} parent=11 // pred_region
          _
        $region128: #{model_forward.1} parent=11 // pred_fallthru
          _
        // Predicated region
        $region129: #{model_forward.1} parent=11 // pred_check
          %p1247 = pneg %p762
        $region130: #{model_forward.1} parent=11 // pred_check_branch
          %1249 = sbr.rel (%p1247) target = $region132
        $region131: #{model_forward.1} parent=11 // pred_region
          _
        $region132: #{model_forward.1} parent=11 // pred_fallthru
          _
        // Predicated region
        $region133: #{model_forward.1} parent=11 // pred_check
          %p1250 = pneg %p783
        $region134: #{model_forward.1} parent=11 // pred_check_branch
          %1252 = sbr.rel (%p1250) target = $region136
        $region135: #{model_forward.1} parent=11 // pred_region
          _
        $region136: #{model_forward.1} parent=11 // pred_fallthru
          _
        // Predicated region
        $region137: #{model_forward.1} parent=11 // pred_check
          %p1253 = pneg %p804
        $region138: #{model_forward.1} parent=11 // pred_check_branch
          %1255 = sbr.rel (%p1253) target = $region140
        $region139: #{model_forward.1} parent=11 // pred_region
          _
        $region140: #{model_forward.1} parent=11 // pred_fallthru
          _
        // Predicated region
        $region141: #{model_forward.1} parent=11 // pred_check
          %p1256 = pneg %p825
        $region142: #{model_forward.1} parent=11 // pred_check_branch
          %1258 = sbr.rel (%p1256) target = $region144
        $region143: #{model_forward.1} parent=11 // pred_region
          _
        $region144: #{model_forward.1} parent=11 // pred_fallthru
          _
        // Predicated region
        $region145: #{model_forward.1} parent=11 // pred_check
          %p1259 = pneg %p846
        $region146: #{model_forward.1} parent=11 // pred_check_branch
          %1261 = sbr.rel (%p1259) target = $region148
        $region147: #{model_forward.1} parent=11 // pred_region
          _
        $region148: #{model_forward.1} parent=11 // pred_fallthru
          _
        // Predicated region
        $region149: #{model_forward.1} parent=11 // pred_check
          %p1262 = pneg %p867
        $region150: #{model_forward.1} parent=11 // pred_check_branch
          %1264 = sbr.rel (%p1262) target = $region152
        $region151: #{model_forward.1} parent=11 // pred_region
          _
        $region152: #{model_forward.1} parent=11 // pred_fallthru
          _
        // Predicated region
        $region153: #{model_forward.1} parent=11 // pred_check
          %p1265 = pneg %p888
        $region154: #{model_forward.1} parent=11 // pred_check_branch
          %1267 = sbr.rel (%p1265) target = $region156
        $region155: #{model_forward.1} parent=11 // pred_region
          _
        $region156: #{model_forward.1} parent=11 // pred_fallthru
          _
        // Predicated region
        $region157: #{model_forward.1} parent=11 // pred_check
          %p1268 = pneg %p909
        $region158: #{model_forward.1} parent=11 // pred_check_branch
          %1270 = sbr.rel (%p1268) target = $region160
        $region159: #{model_forward.1} parent=11 // pred_region
          _
        $region160: #{model_forward.1} parent=11 // pred_fallthru
          _
        // Predicated region
        $region161: #{model_forward.1} parent=11 // pred_check
          %p1271 = pneg %p930
        $region162: #{model_forward.1} parent=11 // pred_check_branch
          %1273 = sbr.rel (%p1271) target = $region164
        $region163: #{model_forward.1} parent=11 // pred_region
          _
        $region164: #{model_forward.1} parent=11 // pred_fallthru
          _
        // Predicated region
        $region165: #{model_forward.1} parent=11 // pred_check
          %p1274 = pneg %p951
        $region166: #{model_forward.1} parent=11 // pred_check_branch
          %1276 = sbr.rel (%p1274) target = $region168
        $region167: #{model_forward.1} parent=11 // pred_region
          _
        $region168: #{model_forward.1} parent=11 // pred_fallthru
          _
        // Predicated region
        $region169: #{model_forward.1} parent=11 // pred_check
          %p1277 = pneg %p972
        $region170: #{model_forward.1} parent=11 // pred_check_branch
          %1279 = sbr.rel (%p1277) target = $region172
        $region171: #{model_forward.1} parent=11 // pred_region
          _
        $region172: #{model_forward.1} parent=11 // pred_fallthru
          _
        // Predicated region
        $region173: #{model_forward.1} parent=11 // pred_check
          %p1280 = pneg %p993
        $region174: #{model_forward.1} parent=11 // pred_check_branch
          %1282 = sbr.rel (%p1280) target = $region176
        $region175: #{model_forward.1} parent=11 // pred_region
          _
        $region176: #{model_forward.1} parent=11 // pred_fallthru
          _
        // Predicated region
        $region177: #{model_forward.1} parent=11 // pred_check
          %p1283 = pneg %p1014
        $region178: #{model_forward.1} parent=11 // pred_check_branch
          %1285 = sbr.rel (%p1283) target = $region180
        $region179: #{model_forward.1} parent=11 // pred_region
          _
        $region180: #{model_forward.1} parent=11 // pred_fallthru
          _
        // Predicated region
        $region181: #{model_forward.1} parent=11 // pred_check
          %p1286 = pneg %p1035
        $region182: #{model_forward.1} parent=11 // pred_check_branch
          %1288 = sbr.rel (%p1286) target = $region184
        $region183: #{model_forward.1} parent=11 // pred_region
          _
        $region184: #{model_forward.1} parent=11 // pred_fallthru
          _
        // Predicated region
        $region185: #{model_forward.1} parent=11 // pred_check
          %p1289 = pneg %p1056
        $region186: #{model_forward.1} parent=11 // pred_check_branch
          %1291 = sbr.rel (%p1289) target = $region188
        $region187: #{model_forward.1} parent=11 // pred_region
          _
        $region188: #{model_forward.1} parent=11 // pred_fallthru
          _
        // Predicated region
        $region189: #{model_forward.1} parent=11 // pred_check
          %p1292 = pneg %p1077
        $region190: #{model_forward.1} parent=11 // pred_check_branch
          %1294 = sbr.rel (%p1292) target = $region192
        $region191: #{model_forward.1} parent=11 // pred_region
          _
        $region192: #{model_forward.1} parent=11 // pred_fallthru
          _
        // Predicated region
        $region193: #{model_forward.1} parent=11 // pred_check
          %p1295 = pneg %p1098
        $region194: #{model_forward.1} parent=11 // pred_check_branch
          %1297 = sbr.rel (%p1295) target = $region196
        $region195: #{model_forward.1} parent=11 // pred_region
          _
        $region196: #{model_forward.1} parent=11 // pred_fallthru
          _
        // Predicated region
        $region197: #{model_forward.1} parent=11 // pred_check
          %p1298 = pneg %p1119
        $region198: #{model_forward.1} parent=11 // pred_check_branch
          %1300 = sbr.rel (%p1298) target = $region200
        $region199: #{model_forward.1} parent=11 // pred_region
          _
        $region200: #{model_forward.1} parent=11 // pred_fallthru
          _
      $region12: #{model_forward.1} parent=5 // pred_fallthru
        _
      %p1301 = scmp.lt.s32.totalorder %s106, 2
      // Predicated region
      $region201: #{model_forward.1} parent=5 // pred_check
        %p1302 = pneg %p1301
      $region202: #{model_forward.1} parent=5 // pred_check_branch
        %1304 = sbr.rel (%p1302) target = $region204
      $region203: #{model_forward.1} parent=5 // pred_region
        // Predicated region
        $region205: #{model_forward.1} parent=203 // pred_check
          %p1305 = pneg %p126
        $region206: #{model_forward.1} parent=203 // pred_check_branch
          %1307 = sbr.rel (%p1305) target = $region208
        $region207: #{model_forward.1} parent=203 // pred_region
          %p1308 = scmp.lt.s32.totalorder %s106, 1
          %s1309 = scalar_select %p1308, %s106, 1
          %s1310 = smul.addr %s1309, 4
          %s1311 = smul.addr %s1310, 8
          %s1312 = scalar_lea.vmem %s1, %s1311
        $region208: #{model_forward.1} parent=203 // pred_fallthru
          _
      $region204: #{model_forward.1} parent=5 // pred_fallthru
        _
      %p1313 = scmp.le.s32.totalorder 1, %s106
      %p1314 = scmp.lt.s32.totalorder %s106, 3
      %p1315 = pnand %p1313, %p1314
      %p1316 = pneg %p1315
      // Predicated region
      $region209: #{model_forward.1} parent=5 // pred_check
        _
      $region210: #{model_forward.1} parent=5 // pred_check_branch
        %1318 = sbr.rel (%p1315) target = $region212
      $region211: #{model_forward.1} parent=5 // pred_region
        %s1319 = ssub.s32 %s106, 1
        %p1320 = scmp.lt.s32.totalorder %s111, 1
        %s1321 = scalar_select %p1320, %s111, 1
        %s1322 = smul.addr %s1321, 4
        %s1323 = smul.addr %s1322, 8
        %s1324 = scalar_lea.vmem %s1, %s1323
        %p1325 = pneg %p132
        %p1326 = pneg %p129
        %p1327 = pneg %p153
        %p1328 = pneg %p150
        %p1329 = pneg %p174
        %p1330 = pneg %p171
        %p1331 = pneg %p195
        %p1332 = pneg %p192
        %p1333 = pneg %p216
        %p1334 = pneg %p213
        %p1335 = pneg %p237
        %p1336 = pneg %p234
        %p1337 = pneg %p258
        %p1338 = pneg %p255
        %p1339 = pneg %p279
        %p1340 = pneg %p276
        %p1341 = pneg %p300
        %p1342 = pneg %p297
        %p1343 = pneg %p321
        %p1344 = pneg %p318
        %p1345 = pneg %p342
        %p1346 = pneg %p339
        %p1347 = pneg %p363
        %p1348 = pneg %p360
        %p1349 = pneg %p384
        %p1350 = pneg %p381
        %p1351 = pneg %p405
        %p1352 = pneg %p402
        %p1353 = pneg %p426
        %p1354 = pneg %p423
        %p1355 = pneg %p447
        %p1356 = pneg %p444
        %p1357 = pneg %p468
        %p1358 = pneg %p465
        %p1359 = pneg %p489
        %p1360 = pneg %p486
        %p1361 = pneg %p510
        %p1362 = pneg %p507
        %p1363 = pneg %p531
        %p1364 = pneg %p528
        %p1365 = pneg %p552
        %p1366 = pneg %p549
        %p1367 = pneg %p573
        %p1368 = pneg %p570
        %p1369 = pneg %p594
        %p1370 = pneg %p591
        %p1371 = pneg %p615
        %p1372 = pneg %p612
        %p1373 = pneg %p636
        %p1374 = pneg %p633
        %p1375 = pneg %p657
        %p1376 = pneg %p654
        %p1377 = pneg %p678
        %p1378 = pneg %p675
        %p1379 = pneg %p699
        %p1380 = pneg %p696
        %p1381 = pneg %p720
        %p1382 = pneg %p717
        %p1383 = pneg %p741
        %p1384 = pneg %p738
        %p1385 = pneg %p762
        %p1386 = pneg %p759
        %p1387 = pneg %p783
        %p1388 = pneg %p780
        %p1389 = pneg %p804
        %p1390 = pneg %p801
        %p1391 = pneg %p825
        %p1392 = pneg %p822
        %p1393 = pneg %p846
        %p1394 = pneg %p843
        %p1395 = pneg %p867
        %p1396 = pneg %p864
        %p1397 = pneg %p888
        %p1398 = pneg %p885
        %p1399 = pneg %p909
        %p1400 = pneg %p906
        %p1401 = pneg %p930
        %p1402 = pneg %p927
        %p1403 = pneg %p951
        %p1404 = pneg %p948
        %p1405 = pneg %p972
        %p1406 = pneg %p969
        %p1407 = pneg %p993
        %p1408 = pneg %p990
        %p1409 = pneg %p1014
        %p1410 = pneg %p1011
        %p1411 = pneg %p1035
        %p1412 = pneg %p1032
        %p1413 = pneg %p1056
        %p1414 = pneg %p1053
        %p1415 = pneg %p1077
        %p1416 = pneg %p1074
        %p1417 = pneg %p1098
        %p1418 = pneg %p1095
        %p1419 = pneg %p1119
        %p1420 = pneg %p1116
        %p1421 = pneg %p1145
        %p1422 = pneg %p1142
        %s1423 = sand.u32 %s1132, 1
        %s1424 = scalar_lea.sflag [#allocation3], %s1423
        %s1425 = sand.u32 %s1132, 1
        %s1426 = scalar_lea.vmem [#allocation2], %s1425
        %p1427 = scmp.lt.s32.totalorder %s111, 1
        %s1428 = scalar_select %p1427, %s111, 1
        %s1429 = smul.addr %s1428, 4
        %s1430 = smul.addr %s1429, 8
        %s1431 = scalar_lea.vmem %s1, %s1430
        %v1433 = vld [vmem:[%s9] sm:$0xff]
        %v1434 = vld [vmem:[%s1431] sm:$0xff]
        %v1435 = vld [vmem:[%s1431 + $0x8] sm:$0xff]
        %v1436 = vld [vmem:[%s1431 + $0x10] sm:$0xff]
        %v1437 = vld [vmem:[%s1431 + $0x18] sm:$0xff]
        %v1438 = vld [vmem:[%s3] sm:$0xff]
        %v1439 = vld [vmem:[%s3 + $0x8] sm:$0xff]
        %v1440 = vld [vmem:[%s3 + $0x10] sm:$0x3]
        %v1441 = vpack.c.bf16 %v1435, %v1434
        %v1442 = vpack.c.bf16 %v1437, %v1436
        %v1443 = vpack.c.bf16 %v1439, %v1438
        %v1444 = vpack.c.bf16 %v1440, %v1440
        %vm1445 = vcmask 146432
        %v1447 = vsel %vm1445, %v1441, 0
        %v1450 = vsel %vm1445, %v1442, 0
        %vm1452 = vcmask 1040384
        %v1454 = vsel %vm1452, %v1444, 0
        %1456 = vmatprep.subr.bf16.mxu0 0
        %1457 = vmatpush1.bf16.msra.mxu0 %v1443
        %1458 = vmatprep.subr.bf16.mxu0 0
        %1459 = vmatpush1.bf16.msra.mxu0 %v1454
        %1460 = vmatprep.subr.bf16.mxu0 0
        %1461 = vmatpush1.bf16.msra.mxu0 0
        %1462 = vmatprep.subr.bf16.mxu0 0
        %1463 = vmatpush1.bf16.msra.mxu0 0
        %1464 = vmatprep.subr.bf16.mxu0 0
        %1465 = vmatpush1.bf16.msra.mxu0 0
        %1466 = vmatprep.subr.bf16.mxu0 0
        %1467 = vmatpush1.bf16.msra.mxu0 0
        %1468 = vmatprep.subr.bf16.mxu0 0
        %1469 = vmatpush1.bf16.msra.mxu0 0
        %1470 = vmatprep.subr.bf16.mxu0 0
        %1471 = vmatpush1.bf16.msra.mxu0 0
        %1472 = vmatprep.subr.bf16.mxu0 0
        %1473 = vmatpush1.bf16.msra.mxu0 0
        %1474 = vmatprep.subr.bf16.mxu0 0
        %1475 = vmatpush1.bf16.msra.mxu0 0
        %1476 = vmatprep.subr.bf16.mxu0 0
        %1477 = vmatpush1.bf16.msra.mxu0 0
        %1478 = vmatprep.subr.bf16.mxu0 0
        %1479 = vmatpush1.bf16.msra.mxu0 0
        %1480 = vmatprep.subr.bf16.mxu0 0
        %1481 = vmatpush1.bf16.msra.mxu0 0
        %1482 = vmatprep.subr.bf16.mxu0 0
        %1483 = vmatpush1.bf16.msra.mxu0 0
        %1484 = vmatprep.subr.bf16.mxu0 0
        %1485 = vmatpush1.bf16.msra.mxu0 0
        %1486 = vmatprep.subr.bf16.mxu0 0
        %1487 = vmatpush1.bf16.msra.mxu0 0
        %1488 = vmatprep.mubr.bf16.mxu0 0
        %1489 = vmatmul.mubr.bf16.gmra.mrb[0].mxu0 %v1447
        %v1490 = vpop.f32.mrb[0].mxu0
        %v1491 = vadd.f32 0.0, %v1490
        %v1492 = vpop.f32.mrb[0].mxu0
        %v1493 = vpop.f32.mrb[0].mxu0
        %v1494 = vadd.f32 0.0, %v1493
        %v1495 = vpop.f32.mrb[0].mxu0
        %1496 = vmatprep.mubr.bf16.mxu0 0
        %1497 = vmatmul.mubr.bf16.gmra.mrb[0].mxu0 %v1450
        %v1498 = vpop.f32.mrb[0].mxu0
        %v1499 = vadd.f32 0.0, %v1498
        %v1500 = vpop.f32.mrb[0].mxu0
        %v1501 = vpop.f32.mrb[0].mxu0
        %v1502 = vadd.f32 0.0, %v1501
        %v1503 = vpop.f32.mrb[0].mxu0
        %1504 = vdwg.mxu0
        %v1505 = vld [vmem:[%s5] sm:$0x1]
        %v1510 = vrot.slane %v1491, 7
        %v1511 = vrot.slane %v1494, 7
        %v1512 = vsel %vm1452, %v1510, %v1511
        %v1513 = vrot.slane %v1499, 7
        %v1514 = vsel %vm1452, %v1511, %v1513
        %v1515 = vrot.slane %v1502, 7
        %v1516 = vsel %vm1452, %v1513, %v1515
        %v1522 = vsel %vm1452, %v1505, %v1510
        %v1523 = vld [vmem:[%s7] sm:$0xff]
        %v1524 = vld [vmem:[%s7 + $0x8] sm:$0xff]
        %v1525 = vld [vmem:[%s7 + $0x10] sm:$0xff]
        %v1526 = vld [vmem:[%s7 + $0x18] sm:$0xff]
        %v1527 = vld [vmem:[%s7 + $0x20] sm:$0x1]
        %v1528 = vadd.f32 %v1522, %v1523
        %v1529 = vadd.f32 %v1512, %v1524
        %v1530 = vadd.f32 %v1514, %v1525
        %v1531 = vadd.f32 %v1516, %v1526
        %v1532 = vadd.f32 %v1515, %v1527
        %v1533 = vld [vmem:[%s19] sm:$0x1]
        %v1534 = vld [vmem:[%s21] sm:$0x1]
        %v1535 = vld [vmem:[%s23] sm:$0x1]
        %v1536 = vld [vmem:[%s25] sm:$0x1]
        %v1537 = vld [vmem:[%s27] sm:$0x1]
        %v1538 = vld [vmem:[%s29] sm:$0x1]
        %v1539 = vld [vmem:[%s31] sm:$0x1]
        %v1540 = vld [vmem:[%s33] sm:$0x1]
        %v1541 = vld [vmem:[%s35] sm:$0x7f]
        %v1542 = vld [vmem:[%s37] sm:$0x1]
        %v1543 = vld [vmem:[%s39] sm:$0xff]
        %v1544 = vld [vmem:[%s39 + $0x8] sm:$0xff]
        %v1545 = vld [vmem:[%s39 + $0x10] sm:$0xff]
        %v1546 = vld [vmem:[%s39 + $0x18] sm:$0xff]
        %v1547 = vld [vmem:[%s41] sm:$0x1]
        %v1548 = vld [vmem:[%s43] sm:$0x1]
        %v1549 = vld [vmem:[%s45] sm:$0x1]
        %v1550 = vld [vmem:[%s47] sm:$0x1]
        %v1551 = vld [vmem:[%s49] sm:$0x1]
        %v1552 = vld [vmem:[%s51] sm:$0x1]
        %v1553 = vld [vmem:[%s53] sm:$0x1]
        %v1554 = vld [vmem:[%s55] sm:$0x1]
        %v1555 = vld [vmem:[%s57] sm:$0x1]
        %v1556 = vld [vmem:[%s59] sm:$0xff]
        %v1557 = vld [vmem:[%s59 + $0x8] sm:$0xff]
        %v1558 = vld [vmem:[%s59 + $0x10] sm:$0xff]
        %v1559 = vld [vmem:[%s59 + $0x18] sm:$0xff]
        %v1560 = vld [vmem:[%s61] sm:$0xff]
        %v1561 = vld [vmem:[%s61 + $0x8] sm:$0xff]
        %v1562 = vld [vmem:[%s61 + $0x10] sm:$0xff]
        %v1563 = vld [vmem:[%s61 + $0x18] sm:$0xff]
        %v1564 = vld [vmem:[%s63] sm:$0xff]
        %v1565 = vld [vmem:[%s63 + $0x8] sm:$0xff]
        %v1566 = vld [vmem:[%s63 + $0x10] sm:$0xff]
        %v1567 = vld [vmem:[%s63 + $0x18] sm:$0xff]
        %v1568 = vld [vmem:[%s65] sm:$0xff]
        %v1569 = vld [vmem:[%s65 + $0x8] sm:$0xff]
        %v1570 = vld [vmem:[%s65 + $0x10] sm:$0xff]
        %v1571 = vld [vmem:[%s65 + $0x18] sm:$0xff]
        %v1572 = vld [vmem:[%s67] sm:$0x1]
        %v1573 = vld [vmem:[%s69] sm:$0x7]
        %v1574 = vld [vmem:[%s71] sm:$0x1]
        %v1575 = vld [vmem:[%s73] sm:$0xff]
        %v1576 = vld [vmem:[%s73 + $0x8] sm:$0xff]
        %v1577 = vld [vmem:[%s73 + $0x10] sm:$0xff]
        %v1578 = vld [vmem:[%s73 + $0x18] sm:$0xff]
        %v1579 = vld [vmem:[%s73 + $0x20] sm:$0xff]
        %v1580 = vld [vmem:[%s73 + $0x28] sm:$0xff]
        %v1581 = vld [vmem:[%s73 + $0x30] sm:$0xff]
        %v1582 = vld [vmem:[%s73 + $0x38] sm:$0xff]
        %v1583 = vld [vmem:[%s73 + $0x40] sm:$0xff]
        %v1584 = vld [vmem:[%s73 + $0x48] sm:$0xff]
        %v1585 = vld [vmem:[%s73 + $0x50] sm:$0xff]
        %v1586 = vld [vmem:[%s73 + $0x58] sm:$0xff]
        %v1587 = vld [vmem:[%s73 + $0x60] sm:$0xff]
        %v1588 = vld [vmem:[%s73 + $0x68] sm:$0xff]
        %v1589 = vld [vmem:[%s73 + $0x70] sm:$0xff]
        %v1590 = vld [vmem:[%s73 + $0x78] sm:$0xff]
        %v1591 = vld [vmem:[%s75] sm:$0x1]
        %v1592 = vld [vmem:[%s77] sm:$0xff]
        %v1593 = vld [vmem:[%s77 + $0x8] sm:$0xff]
        %v1594 = vld [vmem:[%s77 + $0x10] sm:$0xff]
        %v1595 = vld [vmem:[%s77 + $0x18] sm:$0xff]
        %v1596 = vld [vmem:[%s79] sm:$0x1]
        %v1597 = vld [vmem:[%s81] sm:$0x7]
        %v1598 = vld [vmem:[%s83] sm:$0x1]
        %v1599 = vld [vmem:[%s85] sm:$0xff]
        %v1600 = vld [vmem:[%s85 + $0x8] sm:$0xff]
        %v1601 = vld [vmem:[%s85 + $0x10] sm:$0xff]
        %v1602 = vld [vmem:[%s85 + $0x18] sm:$0xff]
        %v1603 = vld [vmem:[%s85 + $0x20] sm:$0xff]
        %v1604 = vld [vmem:[%s85 + $0x28] sm:$0xff]
        %v1605 = vld [vmem:[%s85 + $0x30] sm:$0xff]
        %v1606 = vld [vmem:[%s85 + $0x38] sm:$0xff]
        %v1607 = vld [vmem:[%s85 + $0x40] sm:$0xff]
        %v1608 = vld [vmem:[%s85 + $0x48] sm:$0xff]
        %v1609 = vld [vmem:[%s85 + $0x50] sm:$0xff]
        %v1610 = vld [vmem:[%s85 + $0x58] sm:$0xff]
        %v1611 = vld [vmem:[%s85 + $0x60] sm:$0xff]
        %v1612 = vld [vmem:[%s85 + $0x68] sm:$0xff]
        %v1613 = vld [vmem:[%s85 + $0x70] sm:$0xff]
        %v1614 = vld [vmem:[%s85 + $0x78] sm:$0xff]
        %v1615 = vld [vmem:[%s87] sm:$0x1]
        %v1616 = vld [vmem:[%s89] sm:$0xff]
        %v1617 = vld [vmem:[%s89 + $0x8] sm:$0xff]
        %v1618 = vld [vmem:[%s89 + $0x10] sm:$0xff]
        %v1619 = vld [vmem:[%s89 + $0x18] sm:$0xff]
        %v1620 = vld [vmem:[%s91] sm:$0x1]
        %v1621 = vld [vmem:[%s93] sm:$0xff]
        %v1622 = vld [vmem:[%s93 + $0x8] sm:$0xff]
        %v1623 = vld [vmem:[%s93 + $0x10] sm:$0xff]
        %v1624 = vld [vmem:[%s93 + $0x18] sm:$0xff]
        %v1625 = vld [vmem:[%s95] sm:$0x1]
        %vm1626 = vcmask 261120
        %v1627 = vsel %vm1626, %v1528, 0.0
        %1628 = vadd.xlane.f32.xlu0 %v1627
        %v1629 = vpop.xlane.xlu0 %1628
        %v1630 = vsel %vm1626, %v1529, 0.0
        %1631 = vadd.xlane.f32.xlu0 %v1630
        %v1632 = vpop.xlane.xlu0 %1631
        %v1633 = vsel %vm1626, %v1530, 0.0
        %1634 = vadd.xlane.f32.xlu0 %v1633
        %v1635 = vpop.xlane.xlu0 %1634
        %v1636 = vsel %vm1626, %v1531, 0.0
        %1637 = vadd.xlane.f32.xlu0 %v1636
        %v1638 = vpop.xlane.xlu0 %1637
        %vm1639 = vcmask 253952
        %v1640 = vsel %vm1639, %v1532, 0.0
        %1641 = vadd.xlane.f32.xlu0 %v1640
        %v1642 = vpop.xlane.xlu0 %1641
        %v1643 = vrcp.pop 32.0
        %v1644 = vmul.f32 %v1629, %v1643
        %v1645 = vmul.f32 %v1632, %v1643
        %v1646 = vmul.f32 %v1635, %v1643
        %v1647 = vmul.f32 %v1638, %v1643
        %v1648 = vmul.f32 %v1642, %v1643
        %v1649 = vsub.f32 %v1528, %v1644
        %v1650 = vsub.f32 %v1529, %v1645
        %v1651 = vsub.f32 %v1530, %v1646
        %v1652 = vsub.f32 %v1531, %v1647
        %v1653 = vsub.f32 %v1532, %v1648
        %v1654 = vmul.f32 %v1649, %v1649
        %v1655 = vmul.f32 %v1650, %v1650
        %v1656 = vmul.f32 %v1651, %v1651
        %v1657 = vmul.f32 %v1652, %v1652
        %v1658 = vmul.f32 %v1653, %v1653
        %v1659 = vsel %vm1626, %v1654, 0.0
        %1660 = vadd.xlane.f32.xlu0 %v1659
        %v1661 = vpop.xlane.xlu0 %1660
        %v1662 = vsel %vm1626, %v1655, 0.0
        %1663 = vadd.xlane.f32.xlu0 %v1662
        %v1664 = vpop.xlane.xlu0 %1663
        %v1665 = vsel %vm1626, %v1656, 0.0
        %1666 = vadd.xlane.f32.xlu0 %v1665
        %v1667 = vpop.xlane.xlu0 %1666
        %v1668 = vsel %vm1626, %v1657, 0.0
        %1669 = vadd.xlane.f32.xlu0 %v1668
        %v1670 = vpop.xlane.xlu0 %1669
        %v1671 = vsel %vm1639, %v1658, 0.0
        %1672 = vadd.xlane.f32.xlu0 %v1671
        %v1673 = vpop.xlane.xlu0 %1672
        %v1674 = vmul.f32 %v1661, %v1643
        %v1675 = vmul.f32 %v1664, %v1643
        %v1676 = vmul.f32 %v1667, %v1643
        %v1677 = vmul.f32 %v1670, %v1643
        %v1678 = vmul.f32 %v1673, %v1643
        %v1679 = vadd.f32 %v1674, 1e-05
        %v1680 = vadd.f32 %v1675, 1e-05
        %v1681 = vadd.f32 %v1676, 1e-05
        %v1682 = vadd.f32 %v1677, 1e-05
        %v1683 = vadd.f32 %v1678, 1e-05
        %v1684 = vrsqrt.pop %v1679
        %v1685 = vrsqrt.pop %v1680
        %v1686 = vrsqrt.pop %v1681
        %v1687 = vrsqrt.pop %v1682
        %v1688 = vrsqrt.pop %v1683
        %v1689 = vmul.f32 %v1649, %v1684
        %v1690 = vmul.f32 %v1650, %v1685
        %v1691 = vmul.f32 %v1651, %v1686
        %v1692 = vmul.f32 %v1652, %v1687
        %v1693 = vmul.f32 %v1653, %v1688
        %v1695 = vlaneseq
        %v1696 = vshrl.u32 %v1695, 7
        %v1697 = vsub.s32 0, %v1696
        %v1698 = vrot.slane %v1533, %v1697
        %v1700 = vmul.f32 %v1689, %v1698
        %v1701 = vmul.f32 %v1690, %v1698
        %v1702 = vmul.f32 %v1691, %v1698
        %v1703 = vmul.f32 %v1692, %v1698
        %v1704 = vmul.f32 %v1693, %v1698
        %v1706 = vlaneseq
        %v1707 = vshrl.u32 %v1706, 7
        %v1708 = vsub.s32 0, %v1707
        %v1709 = vrot.slane %v1534, %v1708
        %v1711 = vadd.f32 %v1700, %v1709
        %v1712 = vadd.f32 %v1701, %v1709
        %v1713 = vadd.f32 %v1702, %v1709
        %v1714 = vadd.f32 %v1703, %v1709
        %v1715 = vadd.f32 %v1704, %v1709
        %vm1721 = vcmask 1041408
        %v1722 = vrot.slane %v1711, 6
        %v1723 = vrot.slane %v1712, 6
        %v1724 = vsel %vm1721, %v1722, %v1723
        %v1725 = vrot.slane %v1713, 6
        %v1726 = vsel %vm1721, %v1723, %v1725
        %v1727 = vrot.slane %v1714, 6
        %v1728 = vsel %vm1721, %v1725, %v1727
        %v1729 = vrot.slane %v1715, 6
        %v1730 = vsel %vm1721, %v1727, %v1729
        %vm1736 = vcmask 1042432
        %v1737 = vsel %vm1736, 0.0, %v1722
        %v1738 = vsel %vm1736, %v1730, 0.0
        %v1739 = vlaneseq
        %v1740 = vshrl.u32 %v1739, 7
        %v1741 = vsub.s32 0, %v1740
        %v1742 = vrot.slane %v1541, %v1741
        %v1743 = vmul.f32 %v1737, %v1742
        %v1744 = vmul.f32 %v1724, %v1742
        %v1745 = vmul.f32 %v1726, %v1742
        %v1746 = vmul.f32 %v1728, %v1742
        %v1747 = vlaneseq
        %v1748 = vshrl.u32 %v1747, 7
        %v1749 = vsub.s32 1, %v1748
        %v1750 = vrot.slane %v1541, %v1749
        %v1751 = vmul.f32 %v1737, %v1750
        %v1752 = vmul.f32 %v1724, %v1750
        %v1753 = vmul.f32 %v1726, %v1750
        %v1754 = vmul.f32 %v1728, %v1750
        %v1755 = vmul.f32 %v1738, %v1750
        %vm1761 = vcmask 1046528
        %v1762 = vrot.slane %v1751, 1
        %v1763 = vrot.slane %v1752, 1
        %v1764 = vsel %vm1761, %v1762, %v1763
        %v1765 = vrot.slane %v1753, 1
        %v1766 = vsel %vm1761, %v1763, %v1765
        %v1767 = vrot.slane %v1754, 1
        %v1768 = vsel %vm1761, %v1765, %v1767
        %v1769 = vrot.slane %v1755, 1
        %v1770 = vsel %vm1761, %v1767, %v1769
        %v1775 = vadd.f32 %v1743, %v1764
        %v1776 = vadd.f32 %v1744, %v1766
        %v1777 = vadd.f32 %v1745, %v1768
        %v1778 = vadd.f32 %v1746, %v1770
        %v1779 = vlaneseq
        %v1780 = vshrl.u32 %v1779, 7
        %v1781 = vsub.s32 2, %v1780
        %v1782 = vrot.slane %v1541, %v1781
        %v1783 = vmul.f32 %v1737, %v1782
        %v1784 = vmul.f32 %v1724, %v1782
        %v1785 = vmul.f32 %v1726, %v1782
        %v1786 = vmul.f32 %v1728, %v1782
        %v1787 = vmul.f32 %v1738, %v1782
        %vm1793 = vcmask 1045504
        %v1794 = vrot.slane %v1783, 2
        %v1795 = vrot.slane %v1784, 2
        %v1796 = vsel %vm1793, %v1794, %v1795
        %v1797 = vrot.slane %v1785, 2
        %v1798 = vsel %vm1793, %v1795, %v1797
        %v1799 = vrot.slane %v1786, 2
        %v1800 = vsel %vm1793, %v1797, %v1799
        %v1801 = vrot.slane %v1787, 2
        %v1802 = vsel %vm1793, %v1799, %v1801
        %v1807 = vadd.f32 %v1775, %v1796
        %v1808 = vadd.f32 %v1776, %v1798
        %v1809 = vadd.f32 %v1777, %v1800
        %v1810 = vadd.f32 %v1778, %v1802
        %v1811 = vlaneseq
        %v1812 = vshrl.u32 %v1811, 7
        %v1813 = vsub.s32 3, %v1812
        %v1814 = vrot.slane %v1541, %v1813
        %v1815 = vmul.f32 %v1737, %v1814
        %v1816 = vmul.f32 %v1724, %v1814
        %v1817 = vmul.f32 %v1726, %v1814
        %v1818 = vmul.f32 %v1728, %v1814
        %v1819 = vmul.f32 %v1738, %v1814
        %vm1825 = vcmask 1044480
        %v1826 = vrot.slane %v1815, 3
        %v1827 = vrot.slane %v1816, 3
        %v1828 = vsel %vm1825, %v1826, %v1827
        %v1829 = vrot.slane %v1817, 3
        %v1830 = vsel %vm1825, %v1827, %v1829
        %v1831 = vrot.slane %v1818, 3
        %v1832 = vsel %vm1825, %v1829, %v1831
        %v1833 = vrot.slane %v1819, 3
        %v1834 = vsel %vm1825, %v1831, %v1833
        %v1839 = vadd.f32 %v1807, %v1828
        %v1840 = vadd.f32 %v1808, %v1830
        %v1841 = vadd.f32 %v1809, %v1832
        %v1842 = vadd.f32 %v1810, %v1834
        %v1843 = vlaneseq
        %v1844 = vshrl.u32 %v1843, 7
        %v1845 = vsub.s32 4, %v1844
        %v1846 = vrot.slane %v1541, %v1845
        %v1847 = vmul.f32 %v1737, %v1846
        %v1848 = vmul.f32 %v1724, %v1846
        %v1849 = vmul.f32 %v1726, %v1846
        %v1850 = vmul.f32 %v1728, %v1846
        %v1851 = vmul.f32 %v1738, %v1846
        %vm1857 = vcmask 1043456
        %v1858 = vrot.slane %v1847, 4
        %v1859 = vrot.slane %v1848, 4
        %v1860 = vsel %vm1857, %v1858, %v1859
        %v1861 = vrot.slane %v1849, 4
        %v1862 = vsel %vm1857, %v1859, %v1861
        %v1863 = vrot.slane %v1850, 4
        %v1864 = vsel %vm1857, %v1861, %v1863
        %v1865 = vrot.slane %v1851, 4
        %v1866 = vsel %vm1857, %v1863, %v1865
        %v1871 = vadd.f32 %v1839, %v1860
        %v1872 = vadd.f32 %v1840, %v1862
        %v1873 = vadd.f32 %v1841, %v1864
        %v1874 = vadd.f32 %v1842, %v1866
        %v1875 = vlaneseq
        %v1876 = vshrl.u32 %v1875, 7
        %v1877 = vsub.s32 5, %v1876
        %v1878 = vrot.slane %v1541, %v1877
        %v1879 = vmul.f32 %v1737, %v1878
        %v1880 = vmul.f32 %v1724, %v1878
        %v1881 = vmul.f32 %v1726, %v1878
        %v1882 = vmul.f32 %v1728, %v1878
        %v1883 = vmul.f32 %v1738, %v1878
        %v1889 = vrot.slane %v1879, 5
        %v1890 = vrot.slane %v1880, 5
        %v1891 = vsel %vm1736, %v1889, %v1890
        %v1892 = vrot.slane %v1881, 5
        %v1893 = vsel %vm1736, %v1890, %v1892
        %v1894 = vrot.slane %v1882, 5
        %v1895 = vsel %vm1736, %v1892, %v1894
        %v1896 = vrot.slane %v1883, 5
        %v1897 = vsel %vm1736, %v1894, %v1896
        %v1902 = vadd.f32 %v1871, %v1891
        %v1903 = vadd.f32 %v1872, %v1893
        %v1904 = vadd.f32 %v1873, %v1895
        %v1905 = vadd.f32 %v1874, %v1897
        %v1906 = vlaneseq
        %v1907 = vshrl.u32 %v1906, 7
        %v1908 = vsub.s32 6, %v1907
        %v1909 = vrot.slane %v1541, %v1908
        %v1910 = vmul.f32 %v1737, %v1909
        %v1911 = vmul.f32 %v1724, %v1909
        %v1912 = vmul.f32 %v1726, %v1909
        %v1913 = vmul.f32 %v1728, %v1909
        %v1914 = vmul.f32 %v1738, %v1909
        %v1920 = vrot.slane %v1910, 6
        %v1921 = vrot.slane %v1911, 6
        %v1922 = vsel %vm1721, %v1920, %v1921
        %v1923 = vrot.slane %v1912, 6
        %v1924 = vsel %vm1721, %v1921, %v1923
        %v1925 = vrot.slane %v1913, 6
        %v1926 = vsel %vm1721, %v1923, %v1925
        %v1927 = vrot.slane %v1914, 6
        %v1928 = vsel %vm1721, %v1925, %v1927
        %v1933 = vadd.f32 %v1902, %v1922
        %v1934 = vadd.f32 %v1903, %v1924
        %v1935 = vadd.f32 %v1904, %v1926
        %v1936 = vadd.f32 %v1905, %v1928
        %v1938 = vlaneseq
        %v1939 = vshrl.u32 %v1938, 7
        %v1940 = vsub.s32 0, %v1939
        %v1941 = vrot.slane %v1542, %v1940
        %v1944 = vsel %vm1626, %v1433, 0
        %1946 = vmatprep.subr.mxu0 0.0
        %1947 = vmatpush1.msra.mxu0 %v1933
        %1948 = vmatprep.subr.mxu0 0.0
        %1949 = vmatpush1.msra.mxu0 %v1934
        %1950 = vmatprep.subr.mxu0 0.0
        %1951 = vmatpush1.msra.mxu0 %v1935
        %1952 = vmatprep.subr.mxu0 0.0
        %1953 = vmatpush1.msra.mxu0 %v1936
        %1954 = vmatprep.subr.mxu0 0.0
        %1955 = vmatpush1.msra.mxu0 0.0
        %1956 = vmatprep.subr.mxu0 0.0
        %1957 = vmatpush1.msra.mxu0 0.0
        %1958 = vmatprep.subr.mxu0 0.0
        %1959 = vmatpush1.msra.mxu0 0.0
        %1960 = vmatprep.subr.mxu0 0.0
        %1961 = vmatpush1.msra.mxu0 0.0
        %1962 = vmatprep.subr.mxu0 0.0
        %1963 = vmatpush1.msra.mxu0 0.0
        %1964 = vmatprep.subr.mxu0 0.0
        %1965 = vmatpush1.msra.mxu0 0.0
        %1966 = vmatprep.subr.mxu0 0.0
        %1967 = vmatpush1.msra.mxu0 0.0
        %1968 = vmatprep.subr.mxu0 0.0
        %1969 = vmatpush1.msra.mxu0 0.0
        %1970 = vmatprep.subr.mxu0 0.0
        %1971 = vmatpush1.msra.mxu0 0.0
        %1972 = vmatprep.subr.mxu0 0.0
        %1973 = vmatpush1.msra.mxu0 0.0
        %1974 = vmatprep.subr.mxu0 0.0
        %1975 = vmatpush1.msra.mxu0 0.0
        %1976 = vmatprep.subr.mxu0 0.0
        %1977 = vmatpush1.msra.mxu0 0.0
        %1978 = vmatprep.subr.mxu0 0.0
        %1979 = vmatpush1.msra.mxu0 0.0
        %1980 = vmatprep.subr.mxu0 0.0
        %1981 = vmatpush1.msra.mxu0 0.0
        %1982 = vmatprep.subr.mxu0 0.0
        %1983 = vmatpush1.msra.mxu0 0.0
        %1984 = vmatprep.subr.mxu0 0.0
        %1985 = vmatpush1.msra.mxu0 0.0
        %1986 = vmatprep.subr.mxu0 0.0
        %1987 = vmatpush1.msra.mxu0 0.0
        %1988 = vmatprep.subr.mxu0 0.0
        %1989 = vmatpush1.msra.mxu0 0.0
        %1990 = vmatprep.subr.mxu0 0.0
        %1991 = vmatpush1.msra.mxu0 0.0
        %1992 = vmatprep.subr.mxu0 0.0
        %1993 = vmatpush1.msra.mxu0 0.0
        %1994 = vmatprep.subr.mxu0 0.0
        %1995 = vmatpush1.msra.mxu0 0.0
        %1996 = vmatprep.subr.mxu0 0.0
        %1997 = vmatpush1.msra.mxu0 0.0
        %1998 = vmatprep.subr.mxu0 0.0
        %1999 = vmatpush1.msra.mxu0 0.0
        %2000 = vmatprep.subr.mxu0 0.0
        %2001 = vmatpush1.msra.mxu0 0.0
        %2002 = vmatprep.subr.mxu0 0.0
        %2003 = vmatpush1.msra.mxu0 0.0
        %2004 = vmatprep.subr.mxu0 0.0
        %2005 = vmatpush1.msra.mxu0 0.0
        %2006 = vmatprep.subr.mxu0 0.0
        %2007 = vmatpush1.msra.mxu0 0.0
        %2008 = vmatprep.subr.mxu0 0.0
        %2009 = vmatpush1.msra.mxu0 0.0
        %2010 = vmatprep.mubr.f32.mxu0 0.0
        %2011 = vmatmul.mubr.f32.gmra.mrb[0].mxu0 %v1944
        %v2012 = vpop.f32.mrb[0].mxu0
        %v2013 = vadd.f32 %v1941, %v2012
        %v2014 = vpop.f32.mrb[0].mxu0
        %2015 = vdwg.mxu0
        %v2016 = vpack.c.bf16 %v2013, %v2013
        %v2017 = vpack.c.bf16 %v1544, %v1543
        %v2018 = vpack.c.bf16 %v1546, %v1545
        %v2020 = vlaneseq
        %v2021 = vshrl.u32 %v2020, 7
        %v2022 = vsub.s32 0, %v2021
        %v2023 = vrot.slane %v1547, %v2022
        %v2026 = vsel %vm1626, %v2016, 0
        %2028 = vmatprep.subr.bf16.mxu0 0
        %2029 = vmatpush1.bf16.msra.mxu0 %v2017
        %2030 = vmatprep.subr.bf16.mxu0 0
        %2031 = vmatpush1.bf16.msra.mxu0 %v2018
        %2032 = vmatprep.subr.bf16.mxu0 0
        %2033 = vmatpush1.bf16.msra.mxu0 0
        %2034 = vmatprep.subr.bf16.mxu0 0
        %2035 = vmatpush1.bf16.msra.mxu0 0
        %2036 = vmatprep.subr.bf16.mxu0 0
        %2037 = vmatpush1.bf16.msra.mxu0 0
        %2038 = vmatprep.subr.bf16.mxu0 0
        %2039 = vmatpush1.bf16.msra.mxu0 0
        %2040 = vmatprep.subr.bf16.mxu0 0
        %2041 = vmatpush1.bf16.msra.mxu0 0
        %2042 = vmatprep.subr.bf16.mxu0 0
        %2043 = vmatpush1.bf16.msra.mxu0 0
        %2044 = vmatprep.subr.bf16.mxu0 0
        %2045 = vmatpush1.bf16.msra.mxu0 0
        %2046 = vmatprep.subr.bf16.mxu0 0
        %2047 = vmatpush1.bf16.msra.mxu0 0
        %2048 = vmatprep.subr.bf16.mxu0 0
        %2049 = vmatpush1.bf16.msra.mxu0 0
        %2050 = vmatprep.subr.bf16.mxu0 0
        %2051 = vmatpush1.bf16.msra.mxu0 0
        %2052 = vmatprep.subr.bf16.mxu0 0
        %2053 = vmatpush1.bf16.msra.mxu0 0
        %2054 = vmatprep.subr.bf16.mxu0 0
        %2055 = vmatpush1.bf16.msra.mxu0 0
        %2056 = vmatprep.subr.bf16.mxu0 0
        %2057 = vmatpush1.bf16.msra.mxu0 0
        %2058 = vmatprep.subr.bf16.mxu0 0
        %2059 = vmatpush1.bf16.msra.mxu0 0
        %2060 = vmatprep.mubr.bf16.mxu0 0
        %2061 = vmatmul.mubr.bf16.gmra.mrb[0].mxu0 %v2026
        %v2062 = vpop.f32.mrb[0].mxu0
        %v2063 = vadd.f32 %v2023, %v2062
        %v2064 = vpop.f32.mrb[0].mxu0
        %v2065 = vpop.f32.mrb[0].mxu0
        %v2066 = vpop.f32.mrb[0].mxu0
        %2067 = vdwg.mxu0
        %v2068 = vsel %vm1626, %v2063, 0.0
        %2069 = vadd.xlane.f32.xlu0 %v2068
        %v2070 = vpop.xlane.xlu0 %2069
        %v2071 = vmul.f32 %v2070, %v1643
        %v2072 = vsub.f32 %v2063, %v2071
        %v2073 = vmul.f32 %v2072, %v2072
        %v2074 = vsel %vm1626, %v2073, 0.0
        %2075 = vadd.xlane.f32.xlu0 %v2074
        %v2076 = vpop.xlane.xlu0 %2075
        %v2077 = vmul.f32 %v2076, %v1643
        %v2078 = vadd.f32 %v2077, 1e-05
        %v2079 = vrsqrt.pop %v2078
        %v2080 = vmul.f32 %v2072, %v2079
        %v2082 = vlaneseq
        %v2083 = vshrl.u32 %v2082, 7
        %v2084 = vsub.s32 0, %v2083
        %v2085 = vrot.slane %v1548, %v2084
        %v2087 = vmul.f32 %v2080, %v2085
        %v2089 = vlaneseq
        %v2090 = vshrl.u32 %v2089, 7
        %v2091 = vsub.s32 0, %v2090
        %v2092 = vrot.slane %v1549, %v2091
        %v2094 = vadd.f32 %v2087, %v2092
        %v2096 = vrot.slane %v2094, 7
        %v2098 = vsel %vm1452, %v1711, %v2096
        %v2099 = vpack.c.bf16 %v1712, %v1711
        %v2100 = vpack.c.bf16 %v1714, %v1713
        %v2101 = vpack.c.bf16 %v1715, %v1715
        %v2102 = vpack.c.bf16 %v1557, %v1556
        %v2103 = vpack.c.bf16 %v1559, %v1558
        %v2105 = vsel %vm1626, %v2099, 0
        %v2108 = vsel %vm1626, %v2100, 0
        %v2111 = vsel %vm1626, %v2101, 0
        %2113 = vmatprep.subr.bf16.mxu0 0
        %2114 = vmatpush1.bf16.msra.mxu0 %v2102
        %2115 = vmatprep.subr.bf16.mxu0 0
        %2116 = vmatpush1.bf16.msra.mxu0 %v2103
        %2117 = vmatprep.subr.bf16.mxu0 0
        %2118 = vmatpush1.bf16.msra.mxu0 0
        %2119 = vmatprep.subr.bf16.mxu0 0
        %2120 = vmatpush1.bf16.msra.mxu0 0
        %2121 = vmatprep.subr.bf16.mxu0 0
        %2122 = vmatpush1.bf16.msra.mxu0 0
        %2123 = vmatprep.subr.bf16.mxu0 0
        %2124 = vmatpush1.bf16.msra.mxu0 0
        %2125 = vmatprep.subr.bf16.mxu0 0
        %2126 = vmatpush1.bf16.msra.mxu0 0
        %2127 = vmatprep.subr.bf16.mxu0 0
        %2128 = vmatpush1.bf16.msra.mxu0 0
        %2129 = vmatprep.subr.bf16.mxu0 0
        %2130 = vmatpush1.bf16.msra.mxu0 0
        %2131 = vmatprep.subr.bf16.mxu0 0
        %2132 = vmatpush1.bf16.msra.mxu0 0
        %2133 = vmatprep.subr.bf16.mxu0 0
        %2134 = vmatpush1.bf16.msra.mxu0 0
        %2135 = vmatprep.subr.bf16.mxu0 0
        %2136 = vmatpush1.bf16.msra.mxu0 0
        %2137 = vmatprep.subr.bf16.mxu0 0
        %2138 = vmatpush1.bf16.msra.mxu0 0
        %2139 = vmatprep.subr.bf16.mxu0 0
        %2140 = vmatpush1.bf16.msra.mxu0 0
        %2141 = vmatprep.subr.bf16.mxu0 0
        %2142 = vmatpush1.bf16.msra.mxu0 0
        %2143 = vmatprep.subr.bf16.mxu0 0
        %2144 = vmatpush1.bf16.msra.mxu0 0
        %2145 = vmatprep.mubr.bf16.mxu0 0
        %2146 = vmatmul.mubr.bf16.gmra.mrb[0].mxu0 %v2105
        %v2147 = vpop.f32.mrb[0].mxu0
        %v2148 = vadd.f32 0.0, %v2147
        %v2149 = vpop.f32.mrb[0].mxu0
        %v2150 = vpop.f32.mrb[0].mxu0
        %v2151 = vadd.f32 0.0, %v2150
        %v2152 = vpop.f32.mrb[0].mxu0
        %2153 = vmatprep.mubr.bf16.mxu0 0
        %2154 = vmatmul.mubr.bf16.gmra.mrb[0].mxu0 %v2108
        %v2155 = vpop.f32.mrb[0].mxu0
        %v2156 = vadd.f32 0.0, %v2155
        %v2157 = vpop.f32.mrb[0].mxu0
        %v2158 = vpop.f32.mrb[0].mxu0
        %v2159 = vadd.f32 0.0, %v2158
        %v2160 = vpop.f32.mrb[0].mxu0
        %2161 = vmatprep.mubr.bf16.mxu0 0
        %2162 = vmatmul.mubr.bf16.gmra.mrb[0].mxu0 %v2111
        %v2163 = vpop.f32.mrb[0].mxu0
        %v2164 = vadd.f32 0.0, %v2163
        %v2165 = vpop.f32.mrb[0].mxu0
        %v2166 = vpop.f32.mrb[0].mxu0
        %v2167 = vpop.f32.mrb[0].mxu0
        %2168 = vdwg.mxu0
        %v2169 = vsel %vm1626, %v2148, 0.0
        %2170 = vadd.xlane.f32.xlu0 %v2169
        %v2171 = vpop.xlane.xlu0 %2170
        %v2172 = vsel %vm1626, %v2151, 0.0
        %2173 = vadd.xlane.f32.xlu0 %v2172
        %v2174 = vpop.xlane.xlu0 %2173
        %v2175 = vsel %vm1626, %v2156, 0.0
        %2176 = vadd.xlane.f32.xlu0 %v2175
        %v2177 = vpop.xlane.xlu0 %2176
        %v2178 = vsel %vm1626, %v2159, 0.0
        %2179 = vadd.xlane.f32.xlu0 %v2178
        %v2180 = vpop.xlane.xlu0 %2179
        %v2181 = vsel %vm1639, %v2164, 0.0
        %2182 = vadd.xlane.f32.xlu0 %v2181
        %v2183 = vpop.xlane.xlu0 %2182
        %v2184 = vmul.f32 %v2171, %v1643
        %v2185 = vmul.f32 %v2174, %v1643
        %v2186 = vmul.f32 %v2177, %v1643
        %v2187 = vmul.f32 %v2180, %v1643
        %v2188 = vmul.f32 %v2183, %v1643
        %v2189 = vsub.f32 %v2148, %v2184
        %v2190 = vsub.f32 %v2151, %v2185
        %v2191 = vsub.f32 %v2156, %v2186
        %v2192 = vsub.f32 %v2159, %v2187
        %v2193 = vsub.f32 %v2164, %v2188
        %v2194 = vmul.f32 %v2189, %v2189
        %v2195 = vmul.f32 %v2190, %v2190
        %v2196 = vmul.f32 %v2191, %v2191
        %v2197 = vmul.f32 %v2192, %v2192
        %v2198 = vmul.f32 %v2193, %v2193
        %v2199 = vsel %vm1626, %v2194, 0.0
        %2200 = vadd.xlane.f32.xlu0 %v2199
        %v2201 = vpop.xlane.xlu0 %2200
        %v2202 = vsel %vm1626, %v2195, 0.0
        %2203 = vadd.xlane.f32.xlu0 %v2202
        %v2204 = vpop.xlane.xlu0 %2203
        %v2205 = vsel %vm1626, %v2196, 0.0
        %2206 = vadd.xlane.f32.xlu0 %v2205
        %v2207 = vpop.xlane.xlu0 %2206
        %v2208 = vsel %vm1626, %v2197, 0.0
        %2209 = vadd.xlane.f32.xlu0 %v2208
        %v2210 = vpop.xlane.xlu0 %2209
        %v2211 = vsel %vm1639, %v2198, 0.0
        %2212 = vadd.xlane.f32.xlu0 %v2211
        %v2213 = vpop.xlane.xlu0 %2212
        %v2214 = vmul.f32 %v2201, %v1643
        %v2215 = vmul.f32 %v2204, %v1643
        %v2216 = vmul.f32 %v2207, %v1643
        %v2217 = vmul.f32 %v2210, %v1643
        %v2218 = vmul.f32 %v2213, %v1643
        %v2219 = vadd.f32 %v2214, 1e-05
        %v2220 = vadd.f32 %v2215, 1e-05
        %v2221 = vadd.f32 %v2216, 1e-05
        %v2222 = vadd.f32 %v2217, 1e-05
        %v2223 = vadd.f32 %v2218, 1e-05
        %v2224 = vrsqrt.pop %v2219
        %v2225 = vrsqrt.pop %v2220
        %v2226 = vrsqrt.pop %v2221
        %v2227 = vrsqrt.pop %v2222
        %v2228 = vrsqrt.pop %v2223
        %v2229 = vmul.f32 %v2189, %v2224
        %v2230 = vmul.f32 %v2190, %v2225
        %v2231 = vmul.f32 %v2191, %v2226
        %v2232 = vmul.f32 %v2192, %v2227
        %v2233 = vmul.f32 %v2193, %v2228
        %v2235 = vlaneseq
        %v2236 = vshrl.u32 %v2235, 7
        %v2237 = vsub.s32 0, %v2236
        %v2238 = vrot.slane %v1550, %v2237
        %v2240 = vmul.f32 %v2229, %v2238
        %v2241 = vmul.f32 %v2230, %v2238
        %v2242 = vmul.f32 %v2231, %v2238
        %v2243 = vmul.f32 %v2232, %v2238
        %v2244 = vmul.f32 %v2233, %v2238
        %v2246 = vlaneseq
        %v2247 = vshrl.u32 %v2246, 7
        %v2248 = vsub.s32 0, %v2247
        %v2249 = vrot.slane %v1551, %v2248
        %v2251 = vadd.f32 %v2240, %v2249
        %v2252 = vadd.f32 %v2241, %v2249
        %v2253 = vadd.f32 %v2242, %v2249
        %v2254 = vadd.f32 %v2243, %v2249
        %v2255 = vadd.f32 %v2244, %v2249
        %v2256 = vpack.c.bf16 %v2096, %v2098
        %v2257 = vpack.c.bf16 %v1561, %v1560
        %v2258 = vpack.c.bf16 %v1563, %v1562
        %v2260 = vsel %vm1626, %v2256, 0
        %2262 = vmatprep.subr.bf16.mxu0 0
        %2263 = vmatpush1.bf16.msra.mxu0 %v2257
        %2264 = vmatprep.subr.bf16.mxu0 0
        %2265 = vmatpush1.bf16.msra.mxu0 %v2258
        %2266 = vmatprep.subr.bf16.mxu0 0
        %2267 = vmatpush1.bf16.msra.mxu0 0
        %2268 = vmatprep.subr.bf16.mxu0 0
        %2269 = vmatpush1.bf16.msra.mxu0 0
        %2270 = vmatprep.subr.bf16.mxu0 0
        %2271 = vmatpush1.bf16.msra.mxu0 0
        %2272 = vmatprep.subr.bf16.mxu0 0
        %2273 = vmatpush1.bf16.msra.mxu0 0
        %2274 = vmatprep.subr.bf16.mxu0 0
        %2275 = vmatpush1.bf16.msra.mxu0 0
        %2276 = vmatprep.subr.bf16.mxu0 0
        %2277 = vmatpush1.bf16.msra.mxu0 0
        %2278 = vmatprep.subr.bf16.mxu0 0
        %2279 = vmatpush1.bf16.msra.mxu0 0
        %2280 = vmatprep.subr.bf16.mxu0 0
        %2281 = vmatpush1.bf16.msra.mxu0 0
        %2282 = vmatprep.subr.bf16.mxu0 0
        %2283 = vmatpush1.bf16.msra.mxu0 0
        %2284 = vmatprep.subr.bf16.mxu0 0
        %2285 = vmatpush1.bf16.msra.mxu0 0
        %2286 = vmatprep.subr.bf16.mxu0 0
        %2287 = vmatpush1.bf16.msra.mxu0 0
        %2288 = vmatprep.subr.bf16.mxu0 0
        %2289 = vmatpush1.bf16.msra.mxu0 0
        %2290 = vmatprep.subr.bf16.mxu0 0
        %2291 = vmatpush1.bf16.msra.mxu0 0
        %2292 = vmatprep.subr.bf16.mxu0 0
        %2293 = vmatpush1.bf16.msra.mxu0 0
        %2294 = vmatprep.mubr.bf16.mxu0 0
        %2295 = vmatmul.mubr.bf16.gmra.mrb[0].mxu0 %v2260
        %v2296 = vpop.f32.mrb[0].mxu0
        %v2297 = vadd.f32 0.0, %v2296
        %v2298 = vpop.f32.mrb[0].mxu0
        %v2299 = vpop.f32.mrb[0].mxu0
        %v2300 = vadd.f32 0.0, %v2299
        %v2301 = vpop.f32.mrb[0].mxu0
        %2302 = vdwg.mxu0
        %v2303 = vsel %vm1626, %v2297, 0.0
        %2304 = vadd.xlane.f32.xlu0 %v2303
        %v2305 = vpop.xlane.xlu0 %2304
        %v2306 = vsel %vm1639, %v2300, 0.0
        %2307 = vadd.xlane.f32.xlu0 %v2306
        %v2308 = vpop.xlane.xlu0 %2307
        %v2309 = vmul.f32 %v2305, %v1643
        %v2310 = vmul.f32 %v2308, %v1643
        %v2311 = vsub.f32 %v2297, %v2309
        %v2312 = vsub.f32 %v2300, %v2310
        %v2313 = vmul.f32 %v2311, %v2311
        %v2314 = vmul.f32 %v2312, %v2312
        %v2315 = vsel %vm1626, %v2313, 0.0
        %2316 = vadd.xlane.f32.xlu0 %v2315
        %v2317 = vpop.xlane.xlu0 %2316
        %v2318 = vsel %vm1639, %v2314, 0.0
        %2319 = vadd.xlane.f32.xlu0 %v2318
        %v2320 = vpop.xlane.xlu0 %2319
        %v2321 = vmul.f32 %v2317, %v1643
        %v2322 = vmul.f32 %v2320, %v1643
        %v2323 = vadd.f32 %v2321, 1e-05
        %v2324 = vadd.f32 %v2322, 1e-05
        %v2325 = vrsqrt.pop %v2323
        %v2326 = vrsqrt.pop %v2324
        %v2327 = vmul.f32 %v2311, %v2325
        %v2328 = vmul.f32 %v2312, %v2326
        %v2330 = vlaneseq
        %v2331 = vshrl.u32 %v2330, 7
        %v2332 = vsub.s32 0, %v2331
        %v2333 = vrot.slane %v1552, %v2332
        %v2335 = vmul.f32 %v2327, %v2333
        %v2336 = vmul.f32 %v2328, %v2333
        %v2338 = vlaneseq
        %v2339 = vshrl.u32 %v2338, 7
        %v2340 = vsub.s32 0, %v2339
        %v2341 = vrot.slane %v1553, %v2340
        %v2343 = vadd.f32 %v2335, %v2341
        %v2344 = vadd.f32 %v2336, %v2341
        %2347 = vrot.lane.b32.xlu0 %v2297, 96
        %v2348 = vpop.permute.xlu0 %2347
        %2349 = vrot.lane.b32.xlu0 %v2300, 96
        %v2350 = vpop.permute.xlu0 %2349
        %v2353 = vsel %vm1626, %v2348, 0.0
        %2354 = vadd.xlane.f32.xlu0 %v2353
        %v2355 = vpop.xlane.xlu0 %2354
        %v2356 = vsel %vm1639, %v2350, 0.0
        %2357 = vadd.xlane.f32.xlu0 %v2356
        %v2358 = vpop.xlane.xlu0 %2357
        %v2359 = vmul.f32 %v2355, %v1643
        %v2360 = vmul.f32 %v2358, %v1643
        %v2361 = vsub.f32 %v2297, %v2359
        %v2362 = vsub.f32 %v2300, %v2360
        %v2363 = vmul.f32 %v2361, %v2361
        %v2364 = vmul.f32 %v2362, %v2362
        %2367 = vrot.lane.b32.xlu0 %v2363, 96
        %v2368 = vpop.permute.xlu0 %2367
        %2369 = vrot.lane.b32.xlu0 %v2364, 96
        %v2370 = vpop.permute.xlu0 %2369
        %v2373 = vsel %vm1626, %v2368, 0.0
        %2374 = vadd.xlane.f32.xlu0 %v2373
        %v2375 = vpop.xlane.xlu0 %2374
        %v2376 = vsel %vm1639, %v2370, 0.0
        %2377 = vadd.xlane.f32.xlu0 %v2376
        %v2378 = vpop.xlane.xlu0 %2377
        %v2379 = vmul.f32 %v2375, %v1643
        %v2380 = vmul.f32 %v2378, %v1643
        %v2381 = vadd.f32 %v2379, 1e-05
        %v2382 = vadd.f32 %v2380, 1e-05
        %v2383 = vrsqrt.pop %v2381
        %v2384 = vrsqrt.pop %v2382
        %v2385 = vmul.f32 %v2361, %v2383
        %v2386 = vmul.f32 %v2362, %v2384
        %v2388 = vlaneseq
        %v2389 = vshrl.u32 %v2388, 7
        %v2390 = vsub.s32 0, %v2389
        %v2391 = vrot.slane %v1554, %v2390
        %2392 = vrot.lane.b32.xlu0 %v2391, 32
        %v2393 = vpop.permute.xlu0 %2392
        %v2395 = vmul.f32 %v2385, %v2393
        %v2396 = vmul.f32 %v2386, %v2393
        %v2398 = vlaneseq
        %v2399 = vshrl.u32 %v2398, 7
        %v2400 = vsub.s32 0, %v2399
        %v2401 = vrot.slane %v1555, %v2400
        %2402 = vrot.lane.b32.xlu0 %v2401, 32
        %v2403 = vpop.permute.xlu0 %2402
        %v2405 = vadd.f32 %v2395, %v2403
        %v2406 = vadd.f32 %v2396, %v2403
        %v2407 = vpack.c.bf16 %v2252, %v2251
        %v2408 = vpack.c.bf16 %v2254, %v2253
        %v2409 = vpack.c.bf16 %v2255, %v2255
        %v2410 = vpack.c.bf16 %v2344, %v2343
        %vm2411 = vcmask 64512
        %v2413 = vsel %vm2411, %v2407, 0
        %v2416 = vsel %vm2411, %v2408, 0
        %v2419 = vsel %vm2411, %v2409, 0
        %v2422 = vsel %vm2411, %v2410, 0
        %2424 = vmatprep.subr.bf16.mxu0 0
        %2425 = vmatpush1.bf16.xpose.msra.mxu0 %v2422
        %2426 = vmatprep.subr.bf16.mxu0 0
        %2427 = vmatpush1.bf16.xpose.msra.mxu0 0
        %2428 = vmatprep.subr.bf16.mxu0 0
        %2429 = vmatpush1.bf16.xpose.msra.mxu0 0
        %2430 = vmatprep.subr.bf16.mxu0 0
        %2431 = vmatpush1.bf16.xpose.msra.mxu0 0
        %2432 = vmatprep.subr.bf16.mxu0 0
        %2433 = vmatpush1.bf16.xpose.msra.mxu0 0
        %2434 = vmatprep.subr.bf16.mxu0 0
        %2435 = vmatpush1.bf16.xpose.msra.mxu0 0
        %2436 = vmatprep.subr.bf16.mxu0 0
        %2437 = vmatpush1.bf16.xpose.msra.mxu0 0
        %2438 = vmatprep.subr.bf16.mxu0 0
        %2439 = vmatpush1.bf16.xpose.msra.mxu0 0
        %2440 = vmatprep.subr.bf16.mxu0 0
        %2441 = vmatpush1.bf16.xpose.msra.mxu0 0
        %2442 = vmatprep.subr.bf16.mxu0 0
        %2443 = vmatpush1.bf16.xpose.msra.mxu0 0
        %2444 = vmatprep.subr.bf16.mxu0 0
        %2445 = vmatpush1.bf16.xpose.msra.mxu0 0
        %2446 = vmatprep.subr.bf16.mxu0 0
        %2447 = vmatpush1.bf16.xpose.msra.mxu0 0
        %2448 = vmatprep.subr.bf16.mxu0 0
        %2449 = vmatpush1.bf16.xpose.msra.mxu0 0
        %2450 = vmatprep.subr.bf16.mxu0 0
        %2451 = vmatpush1.bf16.xpose.msra.mxu0 0
        %2452 = vmatprep.subr.bf16.mxu0 0
        %2453 = vmatpush1.bf16.xpose.msra.mxu0 0
        %2454 = vmatprep.subr.bf16.mxu0 0
        %2455 = vmatpush1.bf16.xpose.msra.mxu0 0
        %2456 = vmatprep.mubr.bf16.mxu0 0
        %2457 = vmatmul.mubr.bf16.gmra.mrb[0].mxu0 %v2413
        %v2458 = vpop.f32.mrb[0].mxu0
        %v2459 = vadd.f32 0.0, %v2458
        %v2460 = vpop.f32.mrb[0].mxu0
        %v2461 = vpop.f32.mrb[0].mxu0
        %v2462 = vadd.f32 0.0, %v2461
        %v2463 = vpop.f32.mrb[0].mxu0
        %2464 = vmatprep.mubr.bf16.mxu0 0
        %2465 = vmatmul.mubr.bf16.gmra.mrb[0].mxu0 %v2416
        %v2466 = vpop.f32.mrb[0].mxu0
        %v2467 = vadd.f32 0.0, %v2466
        %v2468 = vpop.f32.mrb[0].mxu0
        %v2469 = vpop.f32.mrb[0].mxu0
        %v2470 = vadd.f32 0.0, %v2469
        %v2471 = vpop.f32.mrb[0].mxu0
        %2472 = vmatprep.mubr.bf16.mxu0 0
        %2473 = vmatmul.mubr.bf16.gmra.mrb[0].mxu0 %v2419
        %v2474 = vpop.f32.mrb[0].mxu0
        %v2475 = vadd.f32 0.0, %v2474
        %v2476 = vpop.f32.mrb[0].mxu0
        %v2477 = vpop.f32.mrb[0].mxu0
        %v2478 = vpop.f32.mrb[0].mxu0
        %2479 = vdwg.mxu0
        %v2480 = vmul.f32 %v2459, 0.35355338
        %v2481 = vmul.f32 %v2462, 0.35355338
        %v2482 = vmul.f32 %v2467, 0.35355338
        %v2483 = vmul.f32 %v2470, 0.35355338
        %v2484 = vmul.f32 %v2475, 0.35355338
        %vm2485 = vcmask 72704
        %v2486 = vsel %vm2485, %v2480, -inf
        %2487 = vmax.xlane.f32.xlu0 %v2486
        %v2488 = vpop.xlane.xlu0 %2487
        %v2489 = vsel %vm2485, %v2481, -inf
        %2490 = vmax.xlane.f32.xlu0 %v2489
        %v2491 = vpop.xlane.xlu0 %2490
        %v2492 = vsel %vm2485, %v2482, -inf
        %2493 = vmax.xlane.f32.xlu0 %v2492
        %v2494 = vpop.xlane.xlu0 %2493
        %v2495 = vsel %vm2485, %v2483, -inf
        %2496 = vmax.xlane.f32.xlu0 %v2495
        %v2497 = vpop.xlane.xlu0 %2496
        %vm2498 = vcmask 65536
        %v2499 = vsel %vm2498, %v2484, -inf
        %2500 = vmax.xlane.f32.xlu0 %v2499
        %v2501 = vpop.xlane.xlu0 %2500
        %v2502 = vsub.f32 %v2480, %v2488
        %v2503 = vsub.f32 %v2481, %v2491
        %v2504 = vsub.f32 %v2482, %v2494
        %v2505 = vsub.f32 %v2483, %v2497
        %v2506 = vsub.f32 %v2484, %v2501
        %v2507 = vmul.f32 %v2502, 1.442695
        %v2508 = vpow.pop %v2507
        %v2509 = vmul.f32 %v2503, 1.442695
        %v2510 = vpow.pop %v2509
        %v2511 = vmul.f32 %v2504, 1.442695
        %v2512 = vpow.pop %v2511
        %v2513 = vmul.f32 %v2505, 1.442695
        %v2514 = vpow.pop %v2513
        %v2515 = vmul.f32 %v2506, 1.442695
        %v2516 = vpow.pop %v2515
        %v2517 = vsel %vm2485, %v2508, 0.0
        %2518 = vadd.xlane.f32.xlu0 %v2517
        %v2519 = vpop.xlane.xlu0 %2518
        %v2520 = vsel %vm2485, %v2510, 0.0
        %2521 = vadd.xlane.f32.xlu0 %v2520
        %v2522 = vpop.xlane.xlu0 %2521
        %v2523 = vsel %vm2485, %v2512, 0.0
        %2524 = vadd.xlane.f32.xlu0 %v2523
        %v2525 = vpop.xlane.xlu0 %2524
        %v2526 = vsel %vm2485, %v2514, 0.0
        %2527 = vadd.xlane.f32.xlu0 %v2526
        %v2528 = vpop.xlane.xlu0 %2527
        %v2529 = vsel %vm2498, %v2516, 0.0
        %2530 = vadd.xlane.f32.xlu0 %v2529
        %v2531 = vpop.xlane.xlu0 %2530
        %v2532 = vrcp.pop %v2519
        %v2533 = vmul.f32 %v2508, %v2532
        %v2534 = vrcp.pop %v2522
        %v2535 = vmul.f32 %v2510, %v2534
        %v2536 = vrcp.pop %v2525
        %v2537 = vmul.f32 %v2512, %v2536
        %v2538 = vrcp.pop %v2528
        %v2539 = vmul.f32 %v2514, %v2538
        %v2540 = vrcp.pop %v2531
        %v2541 = vmul.f32 %v2516, %v2540
        %v2542 = vpack.c.bf16 %v2535, %v2533
        %v2543 = vpack.c.bf16 %v2539, %v2537
        %v2544 = vpack.c.bf16 %v2541, %v2541
        %v2545 = vpack.c.bf16 %v2406, %v2405
        %2547 = vrot.lane.b32.xlu0 %v2545, 96
        %v2548 = vpop.permute.xlu0 %2547
        %v2550 = vsel %vm2485, %v2542, 0
        %v2553 = vsel %vm2485, %v2543, 0
        %v2556 = vsel %vm2485, %v2544, 0
        %v2558 = vsel %vm1857, 4294967295, 65535
        %v2559 = vsel %vm1825, %v2558, 0
        %v2561 = vand.u32 %v2548, %v2559
        %2563 = vmatprep.subr.bf16.mxu0 0
        %2564 = vmatpush1.bf16.msra.mxu0 %v2561
        %2565 = vmatprep.subr.bf16.mxu0 0
        %2566 = vmatpush1.bf16.msra.mxu0 0
        %2567 = vmatprep.subr.bf16.mxu0 0
        %2568 = vmatpush1.bf16.msra.mxu0 0
        %2569 = vmatprep.subr.bf16.mxu0 0
        %2570 = vmatpush1.bf16.msra.mxu0 0
        %2571 = vmatprep.subr.bf16.mxu0 0
        %2572 = vmatpush1.bf16.msra.mxu0 0
        %2573 = vmatprep.subr.bf16.mxu0 0
        %2574 = vmatpush1.bf16.msra.mxu0 0
        %2575 = vmatprep.subr.bf16.mxu0 0
        %2576 = vmatpush1.bf16.msra.mxu0 0
        %2577 = vmatprep.subr.bf16.mxu0 0
        %2578 = vmatpush1.bf16.msra.mxu0 0
        %2579 = vmatprep.subr.bf16.mxu0 0
        %2580 = vmatpush1.bf16.msra.mxu0 0
        %2581 = vmatprep.subr.bf16.mxu0 0
        %2582 = vmatpush1.bf16.msra.mxu0 0
        %2583 = vmatprep.subr.bf16.mxu0 0
        %2584 = vmatpush1.bf16.msra.mxu0 0
        %2585 = vmatprep.subr.bf16.mxu0 0
        %2586 = vmatpush1.bf16.msra.mxu0 0
        %2587 = vmatprep.subr.bf16.mxu0 0
        %2588 = vmatpush1.bf16.msra.mxu0 0
        %2589 = vmatprep.subr.bf16.mxu0 0
        %2590 = vmatpush1.bf16.msra.mxu0 0
        %2591 = vmatprep.subr.bf16.mxu0 0
        %2592 = vmatpush1.bf16.msra.mxu0 0
        %2593 = vmatprep.subr.bf16.mxu0 0
        %2594 = vmatpush1.bf16.msra.mxu0 0
        %2595 = vmatprep.mubr.bf16.mxu0 0
        %2596 = vmatmul.mubr.bf16.gmra.mrb[0].mxu0 %v2550
        %v2597 = vpop.f32.mrb[0].mxu0
        %v2598 = vadd.f32 0.0, %v2597
        %v2599 = vpop.f32.mrb[0].mxu0
        %v2600 = vpop.f32.mrb[0].mxu0
        %v2601 = vadd.f32 0.0, %v2600
        %v2602 = vpop.f32.mrb[0].mxu0
        %2603 = vmatprep.mubr.bf16.mxu0 0
        %2604 = vmatmul.mubr.bf16.gmra.mrb[0].mxu0 %v2553
        %v2605 = vpop.f32.mrb[0].mxu0
        %v2606 = vadd.f32 0.0, %v2605
        %v2607 = vpop.f32.mrb[0].mxu0
        %v2608 = vpop.f32.mrb[0].mxu0
        %v2609 = vadd.f32 0.0, %v2608
        %v2610 = vpop.f32.mrb[0].mxu0
        %2611 = vmatprep.mubr.bf16.mxu0 0
        %2612 = vmatmul.mubr.bf16.gmra.mrb[0].mxu0 %v2556
        %v2613 = vpop.f32.mrb[0].mxu0
        %v2614 = vadd.f32 0.0, %v2613
        %v2615 = vpop.f32.mrb[0].mxu0
        %v2616 = vpop.f32.mrb[0].mxu0
        %v2617 = vpop.f32.mrb[0].mxu0
        %2618 = vdwg.mxu0
        %2622 = vrot.lane.b32.xlu0 %v2407, 120
        %v2623 = vpop.permute.xlu0 %2622
        %2624 = vrot.lane.b32.xlu0 %v2408, 120
        %v2625 = vpop.permute.xlu0 %2624
        %2626 = vrot.lane.b32.xlu0 %v2409, 120
        %v2627 = vpop.permute.xlu0 %2626
        %2629 = vrot.lane.b32.xlu0 %v2410, 120
        %v2630 = vpop.permute.xlu0 %2629
        %v2632 = vsel %vm2411, %v2623, 0
        %v2635 = vsel %vm2411, %v2625, 0
        %v2638 = vsel %vm2411, %v2627, 0
        %v2641 = vsel %vm2411, %v2630, 0
        %2643 = vmatprep.subr.bf16.mxu0 0
        %2644 = vmatpush1.bf16.xpose.msra.mxu0 %v2641
        %2645 = vmatprep.subr.bf16.mxu0 0
        %2646 = vmatpush1.bf16.xpose.msra.mxu0 0
        %2647 = vmatprep.subr.bf16.mxu0 0
        %2648 = vmatpush1.bf16.xpose.msra.mxu0 0
        %2649 = vmatprep.subr.bf16.mxu0 0
        %2650 = vmatpush1.bf16.xpose.msra.mxu0 0
        %2651 = vmatprep.subr.bf16.mxu0 0
        %2652 = vmatpush1.bf16.xpose.msra.mxu0 0
        %2653 = vmatprep.subr.bf16.mxu0 0
        %2654 = vmatpush1.bf16.xpose.msra.mxu0 0
        %2655 = vmatprep.subr.bf16.mxu0 0
        %2656 = vmatpush1.bf16.xpose.msra.mxu0 0
        %2657 = vmatprep.subr.bf16.mxu0 0
        %2658 = vmatpush1.bf16.xpose.msra.mxu0 0
        %2659 = vmatprep.subr.bf16.mxu0 0
        %2660 = vmatpush1.bf16.xpose.msra.mxu0 0
        %2661 = vmatprep.subr.bf16.mxu0 0
        %2662 = vmatpush1.bf16.xpose.msra.mxu0 0
        %2663 = vmatprep.subr.bf16.mxu0 0
        %2664 = vmatpush1.bf16.xpose.msra.mxu0 0
        %2665 = vmatprep.subr.bf16.mxu0 0
        %2666 = vmatpush1.bf16.xpose.msra.mxu0 0
        %2667 = vmatprep.subr.bf16.mxu0 0
        %2668 = vmatpush1.bf16.xpose.msra.mxu0 0
        %2669 = vmatprep.subr.bf16.mxu0 0
        %2670 = vmatpush1.bf16.xpose.msra.mxu0 0
        %2671 = vmatprep.subr.bf16.mxu0 0
        %2672 = vmatpush1.bf16.xpose.msra.mxu0 0
        %2673 = vmatprep.subr.bf16.mxu0 0
        %2674 = vmatpush1.bf16.xpose.msra.mxu0 0
        %2675 = vmatprep.mubr.bf16.mxu0 0
        %2676 = vmatmul.mubr.bf16.gmra.mrb[0].mxu0 %v2632
        %v2677 = vpop.f32.mrb[0].mxu0
        %v2678 = vadd.f32 0.0, %v2677
        %v2679 = vpop.f32.mrb[0].mxu0
        %v2680 = vpop.f32.mrb[0].mxu0
        %v2681 = vadd.f32 0.0, %v2680
        %v2682 = vpop.f32.mrb[0].mxu0
        %2683 = vmatprep.mubr.bf16.mxu0 0
        %2684 = vmatmul.mubr.bf16.gmra.mrb[0].mxu0 %v2635
        %v2685 = vpop.f32.mrb[0].mxu0
        %v2686 = vadd.f32 0.0, %v2685
        %v2687 = vpop.f32.mrb[0].mxu0
        %v2688 = vpop.f32.mrb[0].mxu0
        %v2689 = vadd.f32 0.0, %v2688
        %v2690 = vpop.f32.mrb[0].mxu0
        %2691 = vmatprep.mubr.bf16.mxu0 0
        %2692 = vmatmul.mubr.bf16.gmra.mrb[0].mxu0 %v2638
        %v2693 = vpop.f32.mrb[0].mxu0
        %v2694 = vadd.f32 0.0, %v2693
        %v2695 = vpop.f32.mrb[0].mxu0
        %v2696 = vpop.f32.mrb[0].mxu0
        %v2697 = vpop.f32.mrb[0].mxu0
        %2698 = vdwg.mxu0
        %v2699 = vmul.f32 %v2678, 0.35355338
        %v2700 = vmul.f32 %v2681, 0.35355338
        %v2701 = vmul.f32 %v2686, 0.35355338
        %v2702 = vmul.f32 %v2689, 0.35355338
        %v2703 = vmul.f32 %v2694, 0.35355338
        %v2704 = vsel %vm2485, %v2699, -inf
        %2705 = vmax.xlane.f32.xlu0 %v2704
        %v2706 = vpop.xlane.xlu0 %2705
        %v2707 = vsel %vm2485, %v2700, -inf
        %2708 = vmax.xlane.f32.xlu0 %v2707
        %v2709 = vpop.xlane.xlu0 %2708
        %v2710 = vsel %vm2485, %v2701, -inf
        %2711 = vmax.xlane.f32.xlu0 %v2710
        %v2712 = vpop.xlane.xlu0 %2711
        %v2713 = vsel %vm2485, %v2702, -inf
        %2714 = vmax.xlane.f32.xlu0 %v2713
        %v2715 = vpop.xlane.xlu0 %2714
        %v2716 = vsel %vm2498, %v2703, -inf
        %2717 = vmax.xlane.f32.xlu0 %v2716
        %v2718 = vpop.xlane.xlu0 %2717
        %v2719 = vsub.f32 %v2699, %v2706
        %v2720 = vsub.f32 %v2700, %v2709
        %v2721 = vsub.f32 %v2701, %v2712
        %v2722 = vsub.f32 %v2702, %v2715
        %v2723 = vsub.f32 %v2703, %v2718
        %v2724 = vmul.f32 %v2719, 1.442695
        %v2725 = vpow.pop %v2724
        %v2726 = vmul.f32 %v2720, 1.442695
        %v2727 = vpow.pop %v2726
        %v2728 = vmul.f32 %v2721, 1.442695
        %v2729 = vpow.pop %v2728
        %v2730 = vmul.f32 %v2722, 1.442695
        %v2731 = vpow.pop %v2730
        %v2732 = vmul.f32 %v2723, 1.442695
        %v2733 = vpow.pop %v2732
        %v2734 = vsel %vm2485, %v2725, 0.0
        %2735 = vadd.xlane.f32.xlu0 %v2734
        %v2736 = vpop.xlane.xlu0 %2735
        %v2737 = vsel %vm2485, %v2727, 0.0
        %2738 = vadd.xlane.f32.xlu0 %v2737
        %v2739 = vpop.xlane.xlu0 %2738
        %v2740 = vsel %vm2485, %v2729, 0.0
        %2741 = vadd.xlane.f32.xlu0 %v2740
        %v2742 = vpop.xlane.xlu0 %2741
        %v2743 = vsel %vm2485, %v2731, 0.0
        %2744 = vadd.xlane.f32.xlu0 %v2743
        %v2745 = vpop.xlane.xlu0 %2744
        %v2746 = vsel %vm2498, %v2733, 0.0
        %2747 = vadd.xlane.f32.xlu0 %v2746
        %v2748 = vpop.xlane.xlu0 %2747
        %v2749 = vrcp.pop %v2736
        %v2750 = vmul.f32 %v2725, %v2749
        %v2751 = vrcp.pop %v2739
        %v2752 = vmul.f32 %v2727, %v2751
        %v2753 = vrcp.pop %v2742
        %v2754 = vmul.f32 %v2729, %v2753
        %v2755 = vrcp.pop %v2745
        %v2756 = vmul.f32 %v2731, %v2755
        %v2757 = vrcp.pop %v2748
        %v2758 = vmul.f32 %v2733, %v2757
        %v2759 = vpack.c.bf16 %v2752, %v2750
        %v2760 = vpack.c.bf16 %v2756, %v2754
        %v2761 = vpack.c.bf16 %v2758, %v2758
        %2762 = vrot.lane.b32.xlu0 %v2545, 88
        %v2763 = vpop.permute.xlu0 %2762
        %v2765 = vsel %vm2485, %v2759, 0
        %v2768 = vsel %vm2485, %v2760, 0
        %v2771 = vsel %vm2485, %v2761, 0
        %v2774 = vand.u32 %v2763, %v2559
        %2776 = vmatprep.subr.bf16.mxu0 0
        %2777 = vmatpush1.bf16.msra.mxu0 %v2774
        %2778 = vmatprep.subr.bf16.mxu0 0
        %2779 = vmatpush1.bf16.msra.mxu0 0
        %2780 = vmatprep.subr.bf16.mxu0 0
        %2781 = vmatpush1.bf16.msra.mxu0 0
        %2782 = vmatprep.subr.bf16.mxu0 0
        %2783 = vmatpush1.bf16.msra.mxu0 0
        %2784 = vmatprep.subr.bf16.mxu0 0
        %2785 = vmatpush1.bf16.msra.mxu0 0
        %2786 = vmatprep.subr.bf16.mxu0 0
        %2787 = vmatpush1.bf16.msra.mxu0 0
        %2788 = vmatprep.subr.bf16.mxu0 0
        %2789 = vmatpush1.bf16.msra.mxu0 0
        %2790 = vmatprep.subr.bf16.mxu0 0
        %2791 = vmatpush1.bf16.msra.mxu0 0
        %2792 = vmatprep.subr.bf16.mxu0 0
        %2793 = vmatpush1.bf16.msra.mxu0 0
        %2794 = vmatprep.subr.bf16.mxu0 0
        %2795 = vmatpush1.bf16.msra.mxu0 0
        %2796 = vmatprep.subr.bf16.mxu0 0
        %2797 = vmatpush1.bf16.msra.mxu0 0
        %2798 = vmatprep.subr.bf16.mxu0 0
        %2799 = vmatpush1.bf16.msra.mxu0 0
        %2800 = vmatprep.subr.bf16.mxu0 0
        %2801 = vmatpush1.bf16.msra.mxu0 0
        %2802 = vmatprep.subr.bf16.mxu0 0
        %2803 = vmatpush1.bf16.msra.mxu0 0
        %2804 = vmatprep.subr.bf16.mxu0 0
        %2805 = vmatpush1.bf16.msra.mxu0 0
        %2806 = vmatprep.subr.bf16.mxu0 0
        %2807 = vmatpush1.bf16.msra.mxu0 0
        %2808 = vmatprep.mubr.bf16.mxu0 0
        %2809 = vmatmul.mubr.bf16.gmra.mrb[0].mxu0 %v2765
        %v2810 = vpop.f32.mrb[0].mxu0
        %v2811 = vadd.f32 0.0, %v2810
        %v2812 = vpop.f32.mrb[0].mxu0
        %v2813 = vpop.f32.mrb[0].mxu0
        %v2814 = vadd.f32 0.0, %v2813
        %v2815 = vpop.f32.mrb[0].mxu0
        %2816 = vmatprep.mubr.bf16.mxu0 0
        %2817 = vmatmul.mubr.bf16.gmra.mrb[0].mxu0 %v2768
        %v2818 = vpop.f32.mrb[0].mxu0
        %v2819 = vadd.f32 0.0, %v2818
        %v2820 = vpop.f32.mrb[0].mxu0
        %v2821 = vpop.f32.mrb[0].mxu0
        %v2822 = vadd.f32 0.0, %v2821
        %v2823 = vpop.f32.mrb[0].mxu0
        %2824 = vmatprep.mubr.bf16.mxu0 0
        %2825 = vmatmul.mubr.bf16.gmra.mrb[0].mxu0 %v2771
        %v2826 = vpop.f32.mrb[0].mxu0
        %v2827 = vadd.f32 0.0, %v2826
        %v2828 = vpop.f32.mrb[0].mxu0
        %v2829 = vpop.f32.mrb[0].mxu0
        %v2830 = vpop.f32.mrb[0].mxu0
        %2831 = vdwg.mxu0
        %2832 = vrot.lane.b32.xlu0 %v2407, 112
        %v2833 = vpop.permute.xlu0 %2832
        %2834 = vrot.lane.b32.xlu0 %v2408, 112
        %v2835 = vpop.permute.xlu0 %2834
        %2836 = vrot.lane.b32.xlu0 %v2409, 112
        %v2837 = vpop.permute.xlu0 %2836
        %2838 = vrot.lane.b32.xlu0 %v2410, 112
        %v2839 = vpop.permute.xlu0 %2838
        %v2841 = vsel %vm2411, %v2833, 0
        %v2844 = vsel %vm2411, %v2835, 0
        %v2847 = vsel %vm2411, %v2837, 0
        %v2850 = vsel %vm2411, %v2839, 0
        %2852 = vmatprep.subr.bf16.mxu0 0
        %2853 = vmatpush1.bf16.xpose.msra.mxu0 %v2850
        %2854 = vmatprep.subr.bf16.mxu0 0
        %2855 = vmatpush1.bf16.xpose.msra.mxu0 0
        %2856 = vmatprep.subr.bf16.mxu0 0
        %2857 = vmatpush1.bf16.xpose.msra.mxu0 0
        %2858 = vmatprep.subr.bf16.mxu0 0
        %2859 = vmatpush1.bf16.xpose.msra.mxu0 0
        %2860 = vmatprep.subr.bf16.mxu0 0
        %2861 = vmatpush1.bf16.xpose.msra.mxu0 0
        %2862 = vmatprep.subr.bf16.mxu0 0
        %2863 = vmatpush1.bf16.xpose.msra.mxu0 0
        %2864 = vmatprep.subr.bf16.mxu0 0
        %2865 = vmatpush1.bf16.xpose.msra.mxu0 0
        %2866 = vmatprep.subr.bf16.mxu0 0
        %2867 = vmatpush1.bf16.xpose.msra.mxu0 0
        %2868 = vmatprep.subr.bf16.mxu0 0
        %2869 = vmatpush1.bf16.xpose.msra.mxu0 0
        %2870 = vmatprep.subr.bf16.mxu0 0
        %2871 = vmatpush1.bf16.xpose.msra.mxu0 0
        %2872 = vmatprep.subr.bf16.mxu0 0
        %2873 = vmatpush1.bf16.xpose.msra.mxu0 0
        %2874 = vmatprep.subr.bf16.mxu0 0
        %2875 = vmatpush1.bf16.xpose.msra.mxu0 0
        %2876 = vmatprep.subr.bf16.mxu0 0
        %2877 = vmatpush1.bf16.xpose.msra.mxu0 0
        %2878 = vmatprep.subr.bf16.mxu0 0
        %2879 = vmatpush1.bf16.xpose.msra.mxu0 0
        %2880 = vmatprep.subr.bf16.mxu0 0
        %2881 = vmatpush1.bf16.xpose.msra.mxu0 0
        %2882 = vmatprep.subr.bf16.mxu0 0
        %2883 = vmatpush1.bf16.xpose.msra.mxu0 0
        %2884 = vmatprep.mubr.bf16.mxu0 0
        %2885 = vmatmul.mubr.bf16.gmra.mrb[0].mxu0 %v2841
        %v2886 = vpop.f32.mrb[0].mxu0
        %v2887 = vadd.f32 0.0, %v2886
        %v2888 = vpop.f32.mrb[0].mxu0
        %v2889 = vpop.f32.mrb[0].mxu0
        %v2890 = vadd.f32 0.0, %v2889
        %v2891 = vpop.f32.mrb[0].mxu0
        %2892 = vmatprep.mubr.bf16.mxu0 0
        %2893 = vmatmul.mubr.bf16.gmra.mrb[0].mxu0 %v2844
        %v2894 = vpop.f32.mrb[0].mxu0
        %v2895 = vadd.f32 0.0, %v2894
        %v2896 = vpop.f32.mrb[0].mxu0
        %v2897 = vpop.f32.mrb[0].mxu0
        %v2898 = vadd.f32 0.0, %v2897
        %v2899 = vpop.f32.mrb[0].mxu0
        %2900 = vmatprep.mubr.bf16.mxu0 0
        %2901 = vmatmul.mubr.bf16.gmra.mrb[0].mxu0 %v2847
        %v2902 = vpop.f32.mrb[0].mxu0
        %v2903 = vadd.f32 0.0, %v2902
        %v2904 = vpop.f32.mrb[0].mxu0
        %v2905 = vpop.f32.mrb[0].mxu0
        %v2906 = vpop.f32.mrb[0].mxu0
        %2907 = vdwg.mxu0
        %v2908 = vmul.f32 %v2887, 0.35355338
        %v2909 = vmul.f32 %v2890, 0.35355338
        %v2910 = vmul.f32 %v2895, 0.35355338
        %v2911 = vmul.f32 %v2898, 0.35355338
        %v2912 = vmul.f32 %v2903, 0.35355338
        %v2913 = vsel %vm2485, %v2908, -inf
        %2914 = vmax.xlane.f32.xlu0 %v2913
        %v2915 = vpop.xlane.xlu0 %2914
        %v2916 = vsel %vm2485, %v2909, -inf
        %2917 = vmax.xlane.f32.xlu0 %v2916
        %v2918 = vpop.xlane.xlu0 %2917
        %v2919 = vsel %vm2485, %v2910, -inf
        %2920 = vmax.xlane.f32.xlu0 %v2919
        %v2921 = vpop.xlane.xlu0 %2920
        %v2922 = vsel %vm2485, %v2911, -inf
        %2923 = vmax.xlane.f32.xlu0 %v2922
        %v2924 = vpop.xlane.xlu0 %2923
        %v2925 = vsel %vm2498, %v2912, -inf
        %2926 = vmax.xlane.f32.xlu0 %v2925
        %v2927 = vpop.xlane.xlu0 %2926
        %v2928 = vsub.f32 %v2908, %v2915
        %v2929 = vsub.f32 %v2909, %v2918
        %v2930 = vsub.f32 %v2910, %v2921
        %v2931 = vsub.f32 %v2911, %v2924
        %v2932 = vsub.f32 %v2912, %v2927
        %v2933 = vmul.f32 %v2928, 1.442695
        %v2934 = vpow.pop %v2933
        %v2935 = vmul.f32 %v2929, 1.442695
        %v2936 = vpow.pop %v2935
        %v2937 = vmul.f32 %v2930, 1.442695
        %v2938 = vpow.pop %v2937
        %v2939 = vmul.f32 %v2931, 1.442695
        %v2940 = vpow.pop %v2939
        %v2941 = vmul.f32 %v2932, 1.442695
        %v2942 = vpow.pop %v2941
        %v2943 = vsel %vm2485, %v2934, 0.0
        %2944 = vadd.xlane.f32.xlu0 %v2943
        %v2945 = vpop.xlane.xlu0 %2944
        %v2946 = vsel %vm2485, %v2936, 0.0
        %2947 = vadd.xlane.f32.xlu0 %v2946
        %v2948 = vpop.xlane.xlu0 %2947
        %v2949 = vsel %vm2485, %v2938, 0.0
        %2950 = vadd.xlane.f32.xlu0 %v2949
        %v2951 = vpop.xlane.xlu0 %2950
        %v2952 = vsel %vm2485, %v2940, 0.0
        %2953 = vadd.xlane.f32.xlu0 %v2952
        %v2954 = vpop.xlane.xlu0 %2953
        %v2955 = vsel %vm2498, %v2942, 0.0
        %2956 = vadd.xlane.f32.xlu0 %v2955
        %v2957 = vpop.xlane.xlu0 %2956
        %v2958 = vrcp.pop %v2945
        %v2959 = vmul.f32 %v2934, %v2958
        %v2960 = vrcp.pop %v2948
        %v2961 = vmul.f32 %v2936, %v2960
        %v2962 = vrcp.pop %v2951
        %v2963 = vmul.f32 %v2938, %v2962
        %v2964 = vrcp.pop %v2954
        %v2965 = vmul.f32 %v2940, %v2964
        %v2966 = vrcp.pop %v2957
        %v2967 = vmul.f32 %v2942, %v2966
        %v2968 = vpack.c.bf16 %v2961, %v2959
        %v2969 = vpack.c.bf16 %v2965, %v2963
        %v2970 = vpack.c.bf16 %v2967, %v2967
        %2971 = vrot.lane.b32.xlu0 %v2545, 80
        %v2972 = vpop.permute.xlu0 %2971
        %v2974 = vsel %vm2485, %v2968, 0
        %v2977 = vsel %vm2485, %v2969, 0
        %v2980 = vsel %vm2485, %v2970, 0
        %v2983 = vand.u32 %v2972, %v2559
        %2985 = vmatprep.subr.bf16.mxu0 0
        %2986 = vmatpush1.bf16.msra.mxu0 %v2983
        %2987 = vmatprep.subr.bf16.mxu0 0
        %2988 = vmatpush1.bf16.msra.mxu0 0
        %2989 = vmatprep.subr.bf16.mxu0 0
        %2990 = vmatpush1.bf16.msra.mxu0 0
        %2991 = vmatprep.subr.bf16.mxu0 0
        %2992 = vmatpush1.bf16.msra.mxu0 0
        %2993 = vmatprep.subr.bf16.mxu0 0
        %2994 = vmatpush1.bf16.msra.mxu0 0
        %2995 = vmatprep.subr.bf16.mxu0 0
        %2996 = vmatpush1.bf16.msra.mxu0 0
        %2997 = vmatprep.subr.bf16.mxu0 0
        %2998 = vmatpush1.bf16.msra.mxu0 0
        %2999 = vmatprep.subr.bf16.mxu0 0
        %3000 = vmatpush1.bf16.msra.mxu0 0
        %3001 = vmatprep.subr.bf16.mxu0 0
        %3002 = vmatpush1.bf16.msra.mxu0 0
        %3003 = vmatprep.subr.bf16.mxu0 0
        %3004 = vmatpush1.bf16.msra.mxu0 0
        %3005 = vmatprep.subr.bf16.mxu0 0
        %3006 = vmatpush1.bf16.msra.mxu0 0
        %3007 = vmatprep.subr.bf16.mxu0 0
        %3008 = vmatpush1.bf16.msra.mxu0 0
        %3009 = vmatprep.subr.bf16.mxu0 0
        %3010 = vmatpush1.bf16.msra.mxu0 0
        %3011 = vmatprep.subr.bf16.mxu0 0
        %3012 = vmatpush1.bf16.msra.mxu0 0
        %3013 = vmatprep.subr.bf16.mxu0 0
        %3014 = vmatpush1.bf16.msra.mxu0 0
        %3015 = vmatprep.subr.bf16.mxu0 0
        %3016 = vmatpush1.bf16.msra.mxu0 0
        %3017 = vmatprep.mubr.bf16.mxu0 0
        %3018 = vmatmul.mubr.bf16.gmra.mrb[0].mxu0 %v2974
        %v3019 = vpop.f32.mrb[0].mxu0
        %v3020 = vadd.f32 0.0, %v3019
        %v3021 = vpop.f32.mrb[0].mxu0
        %v3022 = vpop.f32.mrb[0].mxu0
        %v3023 = vadd.f32 0.0, %v3022
        %v3024 = vpop.f32.mrb[0].mxu0
        %3025 = vmatprep.mubr.bf16.mxu0 0
        %3026 = vmatmul.mubr.bf16.gmra.mrb[0].mxu0 %v2977
        %v3027 = vpop.f32.mrb[0].mxu0
        %v3028 = vadd.f32 0.0, %v3027
        %v3029 = vpop.f32.mrb[0].mxu0
        %v3030 = vpop.f32.mrb[0].mxu0
        %v3031 = vadd.f32 0.0, %v3030
        %v3032 = vpop.f32.mrb[0].mxu0
        %3033 = vmatprep.mubr.bf16.mxu0 0
        %3034 = vmatmul.mubr.bf16.gmra.mrb[0].mxu0 %v2980
        %v3035 = vpop.f32.mrb[0].mxu0
        %v3036 = vadd.f32 0.0, %v3035
        %v3037 = vpop.f32.mrb[0].mxu0
        %v3038 = vpop.f32.mrb[0].mxu0
        %v3039 = vpop.f32.mrb[0].mxu0
        %3040 = vdwg.mxu0
        %3041 = vrot.lane.b32.xlu0 %v2407, 104
        %v3042 = vpop.permute.xlu0 %3041
        %3043 = vrot.lane.b32.xlu0 %v2408, 104
        %v3044 = vpop.permute.xlu0 %3043
        %3045 = vrot.lane.b32.xlu0 %v2409, 104
        %v3046 = vpop.permute.xlu0 %3045
        %3047 = vrot.lane.b32.xlu0 %v2410, 104
        %v3048 = vpop.permute.xlu0 %3047
        %v3050 = vsel %vm2411, %v3042, 0
        %v3053 = vsel %vm2411, %v3044, 0
        %v3056 = vsel %vm2411, %v3046, 0
        %v3059 = vsel %vm2411, %v3048, 0
        %3061 = vmatprep.subr.bf16.mxu0 0
        %3062 = vmatpush1.bf16.xpose.msra.mxu0 %v3059
        %3063 = vmatprep.subr.bf16.mxu0 0
        %3064 = vmatpush1.bf16.xpose.msra.mxu0 0
        %3065 = vmatprep.subr.bf16.mxu0 0
        %3066 = vmatpush1.bf16.xpose.msra.mxu0 0
        %3067 = vmatprep.subr.bf16.mxu0 0
        %3068 = vmatpush1.bf16.xpose.msra.mxu0 0
        %3069 = vmatprep.subr.bf16.mxu0 0
        %3070 = vmatpush1.bf16.xpose.msra.mxu0 0
        %3071 = vmatprep.subr.bf16.mxu0 0
        %3072 = vmatpush1.bf16.xpose.msra.mxu0 0
        %3073 = vmatprep.subr.bf16.mxu0 0
        %3074 = vmatpush1.bf16.xpose.msra.mxu0 0
        %3075 = vmatprep.subr.bf16.mxu0 0
        %3076 = vmatpush1.bf16.xpose.msra.mxu0 0
        %3077 = vmatprep.subr.bf16.mxu0 0
        %3078 = vmatpush1.bf16.xpose.msra.mxu0 0
        %3079 = vmatprep.subr.bf16.mxu0 0
        %3080 = vmatpush1.bf16.xpose.msra.mxu0 0
        %3081 = vmatprep.subr.bf16.mxu0 0
        %3082 = vmatpush1.bf16.xpose.msra.mxu0 0
        %3083 = vmatprep.subr.bf16.mxu0 0
        %3084 = vmatpush1.bf16.xpose.msra.mxu0 0
        %3085 = vmatprep.subr.bf16.mxu0 0
        %3086 = vmatpush1.bf16.xpose.msra.mxu0 0
        %3087 = vmatprep.subr.bf16.mxu0 0
        %3088 = vmatpush1.bf16.xpose.msra.mxu0 0
        %3089 = vmatprep.subr.bf16.mxu0 0
        %3090 = vmatpush1.bf16.xpose.msra.mxu0 0
        %3091 = vmatprep.subr.bf16.mxu0 0
        %3092 = vmatpush1.bf16.xpose.msra.mxu0 0
        %3093 = vmatprep.mubr.bf16.mxu0 0
        %3094 = vmatmul.mubr.bf16.gmra.mrb[0].mxu0 %v3050
        %v3095 = vpop.f32.mrb[0].mxu0
        %v3096 = vadd.f32 0.0, %v3095
        %v3097 = vpop.f32.mrb[0].mxu0
        %v3098 = vpop.f32.mrb[0].mxu0
        %v3099 = vadd.f32 0.0, %v3098
        %v3100 = vpop.f32.mrb[0].mxu0
        %3101 = vmatprep.mubr.bf16.mxu0 0
        %3102 = vmatmul.mubr.bf16.gmra.mrb[0].mxu0 %v3053
        %v3103 = vpop.f32.mrb[0].mxu0
        %v3104 = vadd.f32 0.0, %v3103
        %v3105 = vpop.f32.mrb[0].mxu0
        %v3106 = vpop.f32.mrb[0].mxu0
        %v3107 = vadd.f32 0.0, %v3106
        %v3108 = vpop.f32.mrb[0].mxu0
        %3109 = vmatprep.mubr.bf16.mxu0 0
        %3110 = vmatmul.mubr.bf16.gmra.mrb[0].mxu0 %v3056
        %v3111 = vpop.f32.mrb[0].mxu0
        %v3112 = vadd.f32 0.0, %v3111
        %v3113 = vpop.f32.mrb[0].mxu0
        %v3114 = vpop.f32.mrb[0].mxu0
        %v3115 = vpop.f32.mrb[0].mxu0
        %3116 = vdwg.mxu0
        %v3117 = vmul.f32 %v3096, 0.35355338
        %v3118 = vmul.f32 %v3099, 0.35355338
        %v3119 = vmul.f32 %v3104, 0.35355338
        %v3120 = vmul.f32 %v3107, 0.35355338
        %v3121 = vmul.f32 %v3112, 0.35355338
        %v3122 = vsel %vm2485, %v3117, -inf
        %3123 = vmax.xlane.f32.xlu0 %v3122
        %v3124 = vpop.xlane.xlu0 %3123
        %v3125 = vsel %vm2485, %v3118, -inf
        %3126 = vmax.xlane.f32.xlu0 %v3125
        %v3127 = vpop.xlane.xlu0 %3126
        %v3128 = vsel %vm2485, %v3119, -inf
        %3129 = vmax.xlane.f32.xlu0 %v3128
        %v3130 = vpop.xlane.xlu0 %3129
        %v3131 = vsel %vm2485, %v3120, -inf
        %3132 = vmax.xlane.f32.xlu0 %v3131
        %v3133 = vpop.xlane.xlu0 %3132
        %v3134 = vsel %vm2498, %v3121, -inf
        %3135 = vmax.xlane.f32.xlu0 %v3134
        %v3136 = vpop.xlane.xlu0 %3135
        %v3137 = vsub.f32 %v3117, %v3124
        %v3138 = vsub.f32 %v3118, %v3127
        %v3139 = vsub.f32 %v3119, %v3130
        %v3140 = vsub.f32 %v3120, %v3133
        %v3141 = vsub.f32 %v3121, %v3136
        %v3142 = vmul.f32 %v3137, 1.442695
        %v3143 = vpow.pop %v3142
        %v3144 = vmul.f32 %v3138, 1.442695
        %v3145 = vpow.pop %v3144
        %v3146 = vmul.f32 %v3139, 1.442695
        %v3147 = vpow.pop %v3146
        %v3148 = vmul.f32 %v3140, 1.442695
        %v3149 = vpow.pop %v3148
        %v3150 = vmul.f32 %v3141, 1.442695
        %v3151 = vpow.pop %v3150
        %v3152 = vsel %vm2485, %v3143, 0.0
        %3153 = vadd.xlane.f32.xlu0 %v3152
        %v3154 = vpop.xlane.xlu0 %3153
        %v3155 = vsel %vm2485, %v3145, 0.0
        %3156 = vadd.xlane.f32.xlu0 %v3155
        %v3157 = vpop.xlane.xlu0 %3156
        %v3158 = vsel %vm2485, %v3147, 0.0
        %3159 = vadd.xlane.f32.xlu0 %v3158
        %v3160 = vpop.xlane.xlu0 %3159
        %v3161 = vsel %vm2485, %v3149, 0.0
        %3162 = vadd.xlane.f32.xlu0 %v3161
        %v3163 = vpop.xlane.xlu0 %3162
        %v3164 = vsel %vm2498, %v3151, 0.0
        %3165 = vadd.xlane.f32.xlu0 %v3164
        %v3166 = vpop.xlane.xlu0 %3165
        %v3167 = vrcp.pop %v3154
        %v3168 = vmul.f32 %v3143, %v3167
        %v3169 = vrcp.pop %v3157
        %v3170 = vmul.f32 %v3145, %v3169
        %v3171 = vrcp.pop %v3160
        %v3172 = vmul.f32 %v3147, %v3171
        %v3173 = vrcp.pop %v3163
        %v3174 = vmul.f32 %v3149, %v3173
        %v3175 = vrcp.pop %v3166
        %v3176 = vmul.f32 %v3151, %v3175
        %v3177 = vpack.c.bf16 %v3170, %v3168
        %v3178 = vpack.c.bf16 %v3174, %v3172
        %v3179 = vpack.c.bf16 %v3176, %v3176
        %3180 = vrot.lane.b32.xlu0 %v2545, 72
        %v3181 = vpop.permute.xlu0 %3180
        %v3183 = vsel %vm2485, %v3177, 0
        %v3186 = vsel %vm2485, %v3178, 0
        %v3189 = vsel %vm2485, %v3179, 0
        %v3192 = vand.u32 %v3181, %v2559
        %3194 = vmatprep.subr.bf16.mxu0 0
        %3195 = vmatpush1.bf16.msra.mxu0 %v3192
        %3196 = vmatprep.subr.bf16.mxu0 0
        %3197 = vmatpush1.bf16.msra.mxu0 0
        %3198 = vmatprep.subr.bf16.mxu0 0
        %3199 = vmatpush1.bf16.msra.mxu0 0
        %3200 = vmatprep.subr.bf16.mxu0 0
        %3201 = vmatpush1.bf16.msra.mxu0 0
        %3202 = vmatprep.subr.bf16.mxu0 0
        %3203 = vmatpush1.bf16.msra.mxu0 0
        %3204 = vmatprep.subr.bf16.mxu0 0
        %3205 = vmatpush1.bf16.msra.mxu0 0
        %3206 = vmatprep.subr.bf16.mxu0 0
        %3207 = vmatpush1.bf16.msra.mxu0 0
        %3208 = vmatprep.subr.bf16.mxu0 0
        %3209 = vmatpush1.bf16.msra.mxu0 0
        %3210 = vmatprep.subr.bf16.mxu0 0
        %3211 = vmatpush1.bf16.msra.mxu0 0
        %3212 = vmatprep.subr.bf16.mxu0 0
        %3213 = vmatpush1.bf16.msra.mxu0 0
        %3214 = vmatprep.subr.bf16.mxu0 0
        %3215 = vmatpush1.bf16.msra.mxu0 0
        %3216 = vmatprep.subr.bf16.mxu0 0
        %3217 = vmatpush1.bf16.msra.mxu0 0
        %3218 = vmatprep.subr.bf16.mxu0 0
        %3219 = vmatpush1.bf16.msra.mxu0 0
        %3220 = vmatprep.subr.bf16.mxu0 0
        %3221 = vmatpush1.bf16.msra.mxu0 0
        %3222 = vmatprep.subr.bf16.mxu0 0
        %3223 = vmatpush1.bf16.msra.mxu0 0
        %3224 = vmatprep.subr.bf16.mxu0 0
        %3225 = vmatpush1.bf16.msra.mxu0 0
        %3226 = vmatprep.mubr.bf16.mxu0 0
        %3227 = vmatmul.mubr.bf16.gmra.mrb[0].mxu0 %v3183
        %v3228 = vpop.f32.mrb[0].mxu0
        %v3229 = vadd.f32 0.0, %v3228
        %v3230 = vpop.f32.mrb[0].mxu0
        %v3231 = vpop.f32.mrb[0].mxu0
        %v3232 = vadd.f32 0.0, %v3231
        %v3233 = vpop.f32.mrb[0].mxu0
        %3234 = vmatprep.mubr.bf16.mxu0 0
        %3235 = vmatmul.mubr.bf16.gmra.mrb[0].mxu0 %v3186
        %v3236 = vpop.f32.mrb[0].mxu0
        %v3237 = vadd.f32 0.0, %v3236
        %v3238 = vpop.f32.mrb[0].mxu0
        %v3239 = vpop.f32.mrb[0].mxu0
        %v3240 = vadd.f32 0.0, %v3239
        %v3241 = vpop.f32.mrb[0].mxu0
        %3242 = vmatprep.mubr.bf16.mxu0 0
        %3243 = vmatmul.mubr.bf16.gmra.mrb[0].mxu0 %v3189
        %v3244 = vpop.f32.mrb[0].mxu0
        %v3245 = vadd.f32 0.0, %v3244
        %v3246 = vpop.f32.mrb[0].mxu0
        %v3247 = vpop.f32.mrb[0].mxu0
        %v3248 = vpop.f32.mrb[0].mxu0
        %3249 = vdwg.mxu0
        %3255 = vrot.lane.b32.xlu0 %v2811, 8
        %v3256 = vpop.permute.xlu0 %3255
        %3257 = vrot.lane.b32.xlu0 %v2814, 8
        %v3258 = vpop.permute.xlu0 %3257
        %3259 = vrot.lane.b32.xlu0 %v2819, 8
        %v3260 = vpop.permute.xlu0 %3259
        %3261 = vrot.lane.b32.xlu0 %v2822, 8
        %v3262 = vpop.permute.xlu0 %3261
        %3263 = vrot.lane.b32.xlu0 %v2827, 8
        %v3264 = vpop.permute.xlu0 %3263
        %3275 = vrot.lane.b32.xlu0 %v3020, 16
        %v3276 = vpop.permute.xlu0 %3275
        %3277 = vrot.lane.b32.xlu0 %v3023, 16
        %v3278 = vpop.permute.xlu0 %3277
        %3279 = vrot.lane.b32.xlu0 %v3028, 16
        %v3280 = vpop.permute.xlu0 %3279
        %3281 = vrot.lane.b32.xlu0 %v3031, 16
        %v3282 = vpop.permute.xlu0 %3281
        %3283 = vrot.lane.b32.xlu0 %v3036, 16
        %v3284 = vpop.permute.xlu0 %3283
        %3295 = vrot.lane.b32.xlu0 %v3229, 24
        %v3296 = vpop.permute.xlu0 %3295
        %3297 = vrot.lane.b32.xlu0 %v3232, 24
        %v3298 = vpop.permute.xlu0 %3297
        %3299 = vrot.lane.b32.xlu0 %v3237, 24
        %v3300 = vpop.permute.xlu0 %3299
        %3301 = vrot.lane.b32.xlu0 %v3240, 24
        %v3302 = vpop.permute.xlu0 %3301
        %3303 = vrot.lane.b32.xlu0 %v3245, 24
        %v3304 = vpop.permute.xlu0 %3303
        %v3310 = vsel %vm2411, %v2598, %v3256
        %v3311 = vsel %vm2411, %v2601, %v3258
        %v3312 = vsel %vm2411, %v2606, %v3260
        %v3313 = vsel %vm2411, %v2609, %v3262
        %v3314 = vsel %vm2411, %v2614, %v3264
        %vm3315 = vcmask 130048
        %v3316 = vsel %vm3315, %v3310, %v3276
        %v3317 = vsel %vm3315, %v3311, %v3278
        %v3318 = vsel %vm3315, %v3312, %v3280
        %v3319 = vsel %vm3315, %v3313, %v3282
        %v3320 = vsel %vm3315, %v3314, %v3284
        %vm3321 = vcmask 195584
        %v3322 = vsel %vm3321, %v3316, %v3296
        %v3323 = vsel %vm3321, %v3317, %v3298
        %v3324 = vsel %vm3321, %v3318, %v3300
        %v3325 = vsel %vm3321, %v3319, %v3302
        %v3326 = vsel %vm3321, %v3320, %v3304
        %v3327 = vpack.c.bf16 %v3323, %v3322
        %v3328 = vpack.c.bf16 %v3325, %v3324
        %v3329 = vpack.c.bf16 %v3326, %v3326
        %v3330 = vpack.c.bf16 %v1565, %v1564
        %v3331 = vpack.c.bf16 %v1567, %v1566
        %v3333 = vsel %vm1626, %v3327, 0
        %v3336 = vsel %vm1626, %v3328, 0
        %v3339 = vsel %vm1626, %v3329, 0
        %3341 = vmatprep.subr.bf16.mxu0 0
        %3342 = vmatpush1.bf16.msra.mxu0 %v3330
        %3343 = vmatprep.subr.bf16.mxu0 0
        %3344 = vmatpush1.bf16.msra.mxu0 %v3331
        %3345 = vmatprep.subr.bf16.mxu0 0
        %3346 = vmatpush1.bf16.msra.mxu0 0
        %3347 = vmatprep.subr.bf16.mxu0 0
        %3348 = vmatpush1.bf16.msra.mxu0 0
        %3349 = vmatprep.subr.bf16.mxu0 0
        %3350 = vmatpush1.bf16.msra.mxu0 0
        %3351 = vmatprep.subr.bf16.mxu0 0
        %3352 = vmatpush1.bf16.msra.mxu0 0
        %3353 = vmatprep.subr.bf16.mxu0 0
        %3354 = vmatpush1.bf16.msra.mxu0 0
        %3355 = vmatprep.subr.bf16.mxu0 0
        %3356 = vmatpush1.bf16.msra.mxu0 0
        %3357 = vmatprep.subr.bf16.mxu0 0
        %3358 = vmatpush1.bf16.msra.mxu0 0
        %3359 = vmatprep.subr.bf16.mxu0 0
        %3360 = vmatpush1.bf16.msra.mxu0 0
        %3361 = vmatprep.subr.bf16.mxu0 0
        %3362 = vmatpush1.bf16.msra.mxu0 0
        %3363 = vmatprep.subr.bf16.mxu0 0
        %3364 = vmatpush1.bf16.msra.mxu0 0
        %3365 = vmatprep.subr.bf16.mxu0 0
        %3366 = vmatpush1.bf16.msra.mxu0 0
        %3367 = vmatprep.subr.bf16.mxu0 0
        %3368 = vmatpush1.bf16.msra.mxu0 0
        %3369 = vmatprep.subr.bf16.mxu0 0
        %3370 = vmatpush1.bf16.msra.mxu0 0
        %3371 = vmatprep.subr.bf16.mxu0 0
        %3372 = vmatpush1.bf16.msra.mxu0 0
        %3373 = vmatprep.mubr.bf16.mxu0 0
        %3374 = vmatmul.mubr.bf16.gmra.mrb[0].mxu0 %v3333
        %v3375 = vpop.f32.mrb[0].mxu0
        %v3376 = vadd.f32 %v1528, %v3375
        %v3377 = vpop.f32.mrb[0].mxu0
        %v3378 = vpop.f32.mrb[0].mxu0
        %v3379 = vadd.f32 %v1529, %v3378
        %v3380 = vpop.f32.mrb[0].mxu0
        %3381 = vmatprep.mubr.bf16.mxu0 0
        %3382 = vmatmul.mubr.bf16.gmra.mrb[0].mxu0 %v3336
        %v3383 = vpop.f32.mrb[0].mxu0
        %v3384 = vadd.f32 %v1530, %v3383
        %v3385 = vpop.f32.mrb[0].mxu0
        %v3386 = vpop.f32.mrb[0].mxu0
        %v3387 = vadd.f32 %v1531, %v3386
        %v3388 = vpop.f32.mrb[0].mxu0
        %3389 = vmatprep.mubr.bf16.mxu0 0
        %3390 = vmatmul.mubr.bf16.gmra.mrb[0].mxu0 %v3339
        %v3391 = vpop.f32.mrb[0].mxu0
        %v3392 = vadd.f32 %v1532, %v3391
        %v3393 = vpop.f32.mrb[0].mxu0
        %v3394 = vpop.f32.mrb[0].mxu0
        %v3395 = vpop.f32.mrb[0].mxu0
        %3396 = vdwg.mxu0
        %v3397 = vsel %vm1626, %v3376, 0.0
        %3398 = vadd.xlane.f32.xlu0 %v3397
        %v3399 = vpop.xlane.xlu0 %3398
        %v3400 = vsel %vm1626, %v3379, 0.0
        %3401 = vadd.xlane.f32.xlu0 %v3400
        %v3402 = vpop.xlane.xlu0 %3401
        %v3403 = vsel %vm1626, %v3384, 0.0
        %3404 = vadd.xlane.f32.xlu0 %v3403
        %v3405 = vpop.xlane.xlu0 %3404
        %v3406 = vsel %vm1626, %v3387, 0.0
        %3407 = vadd.xlane.f32.xlu0 %v3406
        %v3408 = vpop.xlane.xlu0 %3407
        %v3409 = vsel %vm1639, %v3392, 0.0
        %3410 = vadd.xlane.f32.xlu0 %v3409
        %v3411 = vpop.xlane.xlu0 %3410
        %v3412 = vmul.f32 %v3399, %v1643
        %v3413 = vmul.f32 %v3402, %v1643
        %v3414 = vmul.f32 %v3405, %v1643
        %v3415 = vmul.f32 %v3408, %v1643
        %v3416 = vmul.f32 %v3411, %v1643
        %v3417 = vsub.f32 %v3376, %v3412
        %v3418 = vsub.f32 %v3379, %v3413
        %v3419 = vsub.f32 %v3384, %v3414
        %v3420 = vsub.f32 %v3387, %v3415
        %v3421 = vsub.f32 %v3392, %v3416
        %v3422 = vmul.f32 %v3417, %v3417
        %v3423 = vmul.f32 %v3418, %v3418
        %v3424 = vmul.f32 %v3419, %v3419
        %v3425 = vmul.f32 %v3420, %v3420
        %v3426 = vmul.f32 %v3421, %v3421
        %v3427 = vsel %vm1626, %v3422, 0.0
        %3428 = vadd.xlane.f32.xlu0 %v3427
        %v3429 = vpop.xlane.xlu0 %3428
        %v3430 = vsel %vm1626, %v3423, 0.0
        %3431 = vadd.xlane.f32.xlu0 %v3430
        %v3432 = vpop.xlane.xlu0 %3431
        %v3433 = vsel %vm1626, %v3424, 0.0
        %3434 = vadd.xlane.f32.xlu0 %v3433
        %v3435 = vpop.xlane.xlu0 %3434
        %v3436 = vsel %vm1626, %v3425, 0.0
        %3437 = vadd.xlane.f32.xlu0 %v3436
        %v3438 = vpop.xlane.xlu0 %3437
        %v3439 = vsel %vm1639, %v3426, 0.0
        %3440 = vadd.xlane.f32.xlu0 %v3439
        %v3441 = vpop.xlane.xlu0 %3440
        %v3442 = vmul.f32 %v3429, %v1643
        %v3443 = vmul.f32 %v3432, %v1643
        %v3444 = vmul.f32 %v3435, %v1643
        %v3445 = vmul.f32 %v3438, %v1643
        %v3446 = vmul.f32 %v3441, %v1643
        %v3447 = vadd.f32 %v3442, 1e-05
        %v3448 = vadd.f32 %v3443, 1e-05
        %v3449 = vadd.f32 %v3444, 1e-05
        %v3450 = vadd.f32 %v3445, 1e-05
        %v3451 = vadd.f32 %v3446, 1e-05
        %v3452 = vrsqrt.pop %v3447
        %v3453 = vrsqrt.pop %v3448
        %v3454 = vrsqrt.pop %v3449
        %v3455 = vrsqrt.pop %v3450
        %v3456 = vrsqrt.pop %v3451
        %v3457 = vmul.f32 %v3417, %v3452
        %v3458 = vmul.f32 %v3418, %v3453
        %v3459 = vmul.f32 %v3419, %v3454
        %v3460 = vmul.f32 %v3420, %v3455
        %v3461 = vmul.f32 %v3421, %v3456
        %v3463 = vlaneseq
        %v3464 = vshrl.u32 %v3463, 7
        %v3465 = vsub.s32 0, %v3464
        %v3466 = vrot.slane %v1535, %v3465
        %v3468 = vmul.f32 %v3457, %v3466
        %v3469 = vmul.f32 %v3458, %v3466
        %v3470 = vmul.f32 %v3459, %v3466
        %v3471 = vmul.f32 %v3460, %v3466
        %v3472 = vmul.f32 %v3461, %v3466
        %v3474 = vlaneseq
        %v3475 = vshrl.u32 %v3474, 7
        %v3476 = vsub.s32 0, %v3475
        %v3477 = vrot.slane %v1536, %v3476
        %v3479 = vadd.f32 %v3468, %v3477
        %v3480 = vadd.f32 %v3469, %v3477
        %v3481 = vadd.f32 %v3470, %v3477
        %v3482 = vadd.f32 %v3471, %v3477
        %v3483 = vadd.f32 %v3472, %v3477
        %v3484 = vpack.c.bf16 %v3480, %v3479
        %v3485 = vpack.c.bf16 %v3482, %v3481
        %v3486 = vpack.c.bf16 %v3483, %v3483
        %v3487 = vpack.c.bf16 %v1569, %v1568
        %v3488 = vpack.c.bf16 %v1571, %v1570
        %v3490 = vlaneseq
        %v3491 = vshrl.u32 %v3490, 7
        %v3492 = vsub.s32 0, %v3491
        %v3493 = vrot.slane %v1572, %v3492
        %vm3495 = vsmask.f32 7424
        %v3497 = vshrl.u32 %v3484, 16
        %v3499 = vshll.u32 %v3484, 16
        %v3501 = vrot.slane %v3499, 1
        %v3502 = vor.u32 %v3497, %v3501
        %v3504 = vshll.u32 %v3485, 16
        %v3506 = vrot.slane %v3504, 1
        %v3507 = vsel %vm3495, %v3502, %v3506
        %v3508 = vshrl.u32 %v3485, 16
        %v3510 = vor.u32 %v3508, %v3506
        %v3512 = vshll.u32 %v3486, 16
        %v3514 = vrot.slane %v3512, 1
        %v3515 = vsel %vm3495, %v3510, %v3514
        %v3517 = vsel %vm1626, %v3507, 0
        %v3520 = vsel %vm1626, %v3515, 0
        %3522 = vmatprep.subr.bf16.mxu0 0
        %3523 = vmatpush1.bf16.msra.mxu0 %v3487
        %3524 = vmatprep.subr.bf16.mxu0 0
        %3525 = vmatpush1.bf16.msra.mxu0 %v3488
        %3526 = vmatprep.subr.bf16.mxu0 0
        %3527 = vmatpush1.bf16.msra.mxu0 0
        %3528 = vmatprep.subr.bf16.mxu0 0
        %3529 = vmatpush1.bf16.msra.mxu0 0
        %3530 = vmatprep.subr.bf16.mxu0 0
        %3531 = vmatpush1.bf16.msra.mxu0 0
        %3532 = vmatprep.subr.bf16.mxu0 0
        %3533 = vmatpush1.bf16.msra.mxu0 0
        %3534 = vmatprep.subr.bf16.mxu0 0
        %3535 = vmatpush1.bf16.msra.mxu0 0
        %3536 = vmatprep.subr.bf16.mxu0 0
        %3537 = vmatpush1.bf16.msra.mxu0 0
        %3538 = vmatprep.subr.bf16.mxu0 0
        %3539 = vmatpush1.bf16.msra.mxu0 0
        %3540 = vmatprep.subr.bf16.mxu0 0
        %3541 = vmatpush1.bf16.msra.mxu0 0
        %3542 = vmatprep.subr.bf16.mxu0 0
        %3543 = vmatpush1.bf16.msra.mxu0 0
        %3544 = vmatprep.subr.bf16.mxu0 0
        %3545 = vmatpush1.bf16.msra.mxu0 0
        %3546 = vmatprep.subr.bf16.mxu0 0
        %3547 = vmatpush1.bf16.msra.mxu0 0
        %3548 = vmatprep.subr.bf16.mxu0 0
        %3549 = vmatpush1.bf16.msra.mxu0 0
        %3550 = vmatprep.subr.bf16.mxu0 0
        %3551 = vmatpush1.bf16.msra.mxu0 0
        %3552 = vmatprep.subr.bf16.mxu0 0
        %3553 = vmatpush1.bf16.msra.mxu0 0
        %3554 = vmatprep.mubr.bf16.mxu0 0
        %3555 = vmatmul.mubr.bf16.gmra.mrb[0].mxu0 %v3517
        %v3556 = vpop.f32.mrb[0].mxu0
        %v3557 = vadd.f32 %v3493, %v3556
        %v3558 = vpop.f32.mrb[0].mxu0
        %v3559 = vpop.f32.mrb[0].mxu0
        %v3560 = vadd.f32 %v3493, %v3559
        %v3561 = vpop.f32.mrb[0].mxu0
        %3562 = vmatprep.mubr.bf16.mxu0 0
        %3563 = vmatmul.mubr.bf16.gmra.mrb[0].mxu0 %v3520
        %v3564 = vpop.f32.mrb[0].mxu0
        %v3565 = vadd.f32 %v3493, %v3564
        %v3566 = vpop.f32.mrb[0].mxu0
        %v3567 = vpop.f32.mrb[0].mxu0
        %v3568 = vadd.f32 %v3493, %v3567
        %v3569 = vpop.f32.mrb[0].mxu0
        %3570 = vdwg.mxu0
        %v3575 = vrot.slane %v3557, 7
        %v3576 = vrot.slane %v3560, 7
        %v3577 = vsel %vm1452, %v3575, %v3576
        %v3578 = vrot.slane %v3565, 7
        %v3579 = vsel %vm1452, %v3576, %v3578
        %v3580 = vrot.slane %v3568, 7
        %v3581 = vsel %vm1452, %v3578, %v3580
        %v3587 = vsel %vm1452, 0.0, %v3575
        %v3588 = vsel %vm1452, %v3580, 0.0
        %v3589 = vlaneseq
        %v3590 = vshrl.u32 %v3589, 7
        %v3591 = vsub.s32 0, %v3590
        %v3592 = vrot.slane %v1573, %v3591
        %v3593 = vmul.f32 %v3587, %v3592
        %v3594 = vmul.f32 %v3577, %v3592
        %v3595 = vmul.f32 %v3579, %v3592
        %v3596 = vmul.f32 %v3581, %v3592
        %v3597 = vlaneseq
        %v3598 = vshrl.u32 %v3597, 7
        %v3599 = vsub.s32 1, %v3598
        %v3600 = vrot.slane %v1573, %v3599
        %v3601 = vmul.f32 %v3587, %v3600
        %v3602 = vmul.f32 %v3577, %v3600
        %v3603 = vmul.f32 %v3579, %v3600
        %v3604 = vmul.f32 %v3581, %v3600
        %v3605 = vmul.f32 %v3588, %v3600
        %v3611 = vrot.slane %v3601, 1
        %v3612 = vrot.slane %v3602, 1
        %v3613 = vsel %vm1761, %v3611, %v3612
        %v3614 = vrot.slane %v3603, 1
        %v3615 = vsel %vm1761, %v3612, %v3614
        %v3616 = vrot.slane %v3604, 1
        %v3617 = vsel %vm1761, %v3614, %v3616
        %v3618 = vrot.slane %v3605, 1
        %v3619 = vsel %vm1761, %v3616, %v3618
        %v3624 = vadd.f32 %v3593, %v3613
        %v3625 = vadd.f32 %v3594, %v3615
        %v3626 = vadd.f32 %v3595, %v3617
        %v3627 = vadd.f32 %v3596, %v3619
        %v3628 = vlaneseq
        %v3629 = vshrl.u32 %v3628, 7
        %v3630 = vsub.s32 2, %v3629
        %v3631 = vrot.slane %v1573, %v3630
        %v3632 = vmul.f32 %v3587, %v3631
        %v3633 = vmul.f32 %v3577, %v3631
        %v3634 = vmul.f32 %v3579, %v3631
        %v3635 = vmul.f32 %v3581, %v3631
        %v3636 = vmul.f32 %v3588, %v3631
        %v3642 = vrot.slane %v3632, 2
        %v3643 = vrot.slane %v3633, 2
        %v3644 = vsel %vm1793, %v3642, %v3643
        %v3645 = vrot.slane %v3634, 2
        %v3646 = vsel %vm1793, %v3643, %v3645
        %v3647 = vrot.slane %v3635, 2
        %v3648 = vsel %vm1793, %v3645, %v3647
        %v3649 = vrot.slane %v3636, 2
        %v3650 = vsel %vm1793, %v3647, %v3649
        %v3655 = vadd.f32 %v3624, %v3644
        %v3656 = vadd.f32 %v3625, %v3646
        %v3657 = vadd.f32 %v3626, %v3648
        %v3658 = vadd.f32 %v3627, %v3650
        %v3660 = vlaneseq
        %v3661 = vshrl.u32 %v3660, 7
        %v3662 = vsub.s32 0, %v3661
        %v3663 = vrot.slane %v1574, %v3662
        %v3665 = vadd.f32 %v3655, %v3663
        %v3666 = vadd.f32 %v3656, %v3663
        %v3667 = vadd.f32 %v3657, %v3663
        %v3668 = vadd.f32 %v3658, %v3663
        %v3669 = vmul.f32 %v3665, 0.5
        %v3670 = vmul.f32 %v3666, 0.5
        %v3671 = vmul.f32 %v3667, 0.5
        %v3672 = vmul.f32 %v3668, 0.5
        %v3673 = vmul.f32 %v3665, 0.70710677
        %v3674 = vmul.f32 %v3666, 0.70710677
        %v3675 = vmul.f32 %v3667, 0.70710677
        %v3676 = vmul.f32 %v3668, 0.70710677
        %v3677 = vand.u32 2147483647, %v3673
        %v3678 = vand.u32 2147483647, %v3674
        %v3679 = vand.u32 2147483647, %v3675
        %v3680 = vand.u32 2147483647, %v3676
        %v3681 = vmul.f32 %v3677, 0.3275911
        %v3682 = vmul.f32 %v3678, 0.3275911
        %v3683 = vmul.f32 %v3679, 0.3275911
        %v3684 = vmul.f32 %v3680, 0.3275911
        %v3685 = vadd.f32 %v3681, 1.0
        %v3686 = vadd.f32 %v3682, 1.0
        %v3687 = vadd.f32 %v3683, 1.0
        %v3688 = vadd.f32 %v3684, 1.0
        %v3689 = vrcp.pop %v3685
        %v3690 = vmul.f32 1.0, %v3689
        %v3691 = vrcp.pop %v3686
        %v3692 = vmul.f32 1.0, %v3691
        %v3693 = vrcp.pop %v3687
        %v3694 = vmul.f32 1.0, %v3693
        %v3695 = vrcp.pop %v3688
        %v3696 = vmul.f32 1.0, %v3695
        %v3697 = vmul.f32 %v3690, 1.0614054
        %v3698 = vmul.f32 %v3692, 1.0614054
        %v3699 = vmul.f32 %v3694, 1.0614054
        %v3700 = vmul.f32 %v3696, 1.0614054
        %v3701 = vsub.f32 %v3697, 1.4531521
        %v3702 = vsub.f32 %v3698, 1.4531521
        %v3703 = vsub.f32 %v3699, 1.4531521
        %v3704 = vsub.f32 %v3700, 1.4531521
        %v3705 = vmul.f32 %v3701, %v3690
        %v3706 = vmul.f32 %v3702, %v3692
        %v3707 = vmul.f32 %v3703, %v3694
        %v3708 = vmul.f32 %v3704, %v3696
        %v3709 = vadd.f32 %v3705, 1.4214138
        %v3710 = vadd.f32 %v3706, 1.4214138
        %v3711 = vadd.f32 %v3707, 1.4214138
        %v3712 = vadd.f32 %v3708, 1.4214138
        %v3713 = vmul.f32 %v3709, %v3690
        %v3714 = vmul.f32 %v3710, %v3692
        %v3715 = vmul.f32 %v3711, %v3694
        %v3716 = vmul.f32 %v3712, %v3696
        %v3717 = vsub.f32 %v3713, 0.28449672
        %v3718 = vsub.f32 %v3714, 0.28449672
        %v3719 = vsub.f32 %v3715, 0.28449672
        %v3720 = vsub.f32 %v3716, 0.28449672
        %v3721 = vmul.f32 %v3717, %v3690
        %v3722 = vmul.f32 %v3718, %v3692
        %v3723 = vmul.f32 %v3719, %v3694
        %v3724 = vmul.f32 %v3720, %v3696
        %v3725 = vadd.f32 %v3721, 0.2548296
        %v3726 = vadd.f32 %v3722, 0.2548296
        %v3727 = vadd.f32 %v3723, 0.2548296
        %v3728 = vadd.f32 %v3724, 0.2548296
        %v3729 = vmul.f32 %v3725, %v3690
        %v3730 = vmul.f32 %v3726, %v3692
        %v3731 = vmul.f32 %v3727, %v3694
        %v3732 = vmul.f32 %v3728, %v3696
        %v3733 = vmul.f32 %v3677, %v3677
        %v3734 = vmul.f32 %v3678, %v3678
        %v3735 = vmul.f32 %v3679, %v3679
        %v3736 = vmul.f32 %v3680, %v3680
        %v3737 = vsub.f32 0.0, %v3733
        %v3738 = vsub.f32 0.0, %v3734
        %v3739 = vsub.f32 0.0, %v3735
        %v3740 = vsub.f32 0.0, %v3736
        %v3741 = vmul.f32 %v3737, 1.442695
        %v3742 = vpow.pop %v3741
        %v3743 = vmul.f32 %v3738, 1.442695
        %v3744 = vpow.pop %v3743
        %v3745 = vmul.f32 %v3739, 1.442695
        %v3746 = vpow.pop %v3745
        %v3747 = vmul.f32 %v3740, 1.442695
        %v3748 = vpow.pop %v3747
        %v3749 = vmul.f32 %v3729, %v3742
        %v3750 = vmul.f32 %v3730, %v3744
        %v3751 = vmul.f32 %v3731, %v3746
        %v3752 = vmul.f32 %v3732, %v3748
        %v3753 = vsub.f32 1.0, %v3749
        %v3754 = vsub.f32 1.0, %v3750
        %v3755 = vsub.f32 1.0, %v3751
        %v3756 = vsub.f32 1.0, %v3752
        %vm3757 = vcmp.ge.f32.partialorder %v3673, 0.0
        %vm3758 = vcmp.ge.f32.partialorder %v3674, 0.0
        %vm3759 = vcmp.ge.f32.partialorder %v3675, 0.0
        %vm3760 = vcmp.ge.f32.partialorder %v3676, 0.0
        %v3761 = vsub.f32 0.0, %v3753
        %v3762 = vsub.f32 0.0, %v3754
        %v3763 = vsub.f32 0.0, %v3755
        %v3764 = vsub.f32 0.0, %v3756
        %v3765 = vsel %vm3757, %v3753, %v3761
        %v3766 = vsel %vm3758, %v3754, %v3762
        %v3767 = vsel %vm3759, %v3755, %v3763
        %v3768 = vsel %vm3760, %v3756, %v3764
        %v3769 = vadd.f32 %v3765, 1.0
        %v3770 = vadd.f32 %v3766, 1.0
        %v3771 = vadd.f32 %v3767, 1.0
        %v3772 = vadd.f32 %v3768, 1.0
        %v3773 = vmul.f32 %v3669, %v3769
        %v3774 = vmul.f32 %v3670, %v3770
        %v3775 = vmul.f32 %v3671, %v3771
        %v3776 = vmul.f32 %v3672, %v3772
        %v3777 = vpack.c.bf16 %v3774, %v3773
        %v3778 = vpack.c.bf16 %v3776, %v3775
        %v3779 = vpack.c.bf16 %v1576, %v1575
        %v3780 = vpack.c.bf16 %v1578, %v1577
        %v3781 = vpack.c.bf16 %v1580, %v1579
        %v3782 = vpack.c.bf16 %v1582, %v1581
        %v3783 = vpack.c.bf16 %v1584, %v1583
        %v3784 = vpack.c.bf16 %v1586, %v1585
        %v3785 = vpack.c.bf16 %v1588, %v1587
        %v3786 = vpack.c.bf16 %v1590, %v1589
        %v3788 = vlaneseq
        %v3789 = vshrl.u32 %v3788, 7
        %v3790 = vsub.s32 0, %v3789
        %v3791 = vrot.slane %v1591, %v3790
        %3793 = vmatprep.subr.bf16.mxu0 0
        %3794 = vmatpush1.bf16.msra.mxu0 %v3779
        %3795 = vmatprep.subr.bf16.mxu0 0
        %3796 = vmatpush1.bf16.msra.mxu0 %v3780
        %3797 = vmatprep.subr.bf16.mxu0 0
        %3798 = vmatpush1.bf16.msra.mxu0 %v3781
        %3799 = vmatprep.subr.bf16.mxu0 0
        %3800 = vmatpush1.bf16.msra.mxu0 %v3782
        %3801 = vmatprep.subr.bf16.mxu0 0
        %3802 = vmatpush1.bf16.msra.mxu0 %v3783
        %3803 = vmatprep.subr.bf16.mxu0 0
        %3804 = vmatpush1.bf16.msra.mxu0 %v3784
        %3805 = vmatprep.subr.bf16.mxu0 0
        %3806 = vmatpush1.bf16.msra.mxu0 %v3785
        %3807 = vmatprep.subr.bf16.mxu0 0
        %3808 = vmatpush1.bf16.msra.mxu0 %v3786
        %3809 = vmatprep.subr.bf16.mxu0 0
        %3810 = vmatpush1.bf16.msra.mxu0 0
        %3811 = vmatprep.subr.bf16.mxu0 0
        %3812 = vmatpush1.bf16.msra.mxu0 0
        %3813 = vmatprep.subr.bf16.mxu0 0
        %3814 = vmatpush1.bf16.msra.mxu0 0
        %3815 = vmatprep.subr.bf16.mxu0 0
        %3816 = vmatpush1.bf16.msra.mxu0 0
        %3817 = vmatprep.subr.bf16.mxu0 0
        %3818 = vmatpush1.bf16.msra.mxu0 0
        %3819 = vmatprep.subr.bf16.mxu0 0
        %3820 = vmatpush1.bf16.msra.mxu0 0
        %3821 = vmatprep.subr.bf16.mxu0 0
        %3822 = vmatpush1.bf16.msra.mxu0 0
        %3823 = vmatprep.subr.bf16.mxu0 0
        %3824 = vmatpush1.bf16.msra.mxu0 0
        %3825 = vmatprep.mubr.bf16.mxu0 0
        %3826 = vmatmul.mubr.bf16.gmra.mrb[0].mxu0 %v3777
        %v3827 = vpop.f32.mrb[0].mxu0
        %v3828 = vadd.f32 %v3791, %v3827
        %v3829 = vpop.f32.mrb[0].mxu0
        %v3830 = vpop.f32.mrb[0].mxu0
        %v3831 = vadd.f32 %v3791, %v3830
        %v3832 = vpop.f32.mrb[0].mxu0
        %3833 = vmatprep.mubr.bf16.mxu0 0
        %3834 = vmatmul.mubr.bf16.gmra.mrb[0].mxu0 %v3778
        %v3835 = vpop.f32.mrb[0].mxu0
        %v3836 = vadd.f32 %v3791, %v3835
        %v3837 = vpop.f32.mrb[0].mxu0
        %v3838 = vpop.f32.mrb[0].mxu0
        %v3839 = vadd.f32 %v3791, %v3838
        %v3840 = vpop.f32.mrb[0].mxu0
        %3841 = vdwg.mxu0
        %v3846 = vrot.slane %v3828, 7
        %v3847 = vrot.slane %v3831, 7
        %v3848 = vsel %vm1452, %v3846, %v3847
        %v3849 = vrot.slane %v3836, 7
        %v3850 = vsel %vm1452, %v3847, %v3849
        %v3851 = vrot.slane %v3839, 7
        %v3852 = vsel %vm1452, %v3849, %v3851
        %v3858 = vsel %vm1452, %v3479, %v3846
        %v3859 = vadd.f32 %v3858, %v3376
        %v3860 = vadd.f32 %v3848, %v3379
        %v3861 = vadd.f32 %v3850, %v3384
        %v3862 = vadd.f32 %v3852, %v3387
        %v3863 = vadd.f32 %v3851, %v3392
        %v3864 = vsel %vm1626, %v3859, 0.0
        %3865 = vadd.xlane.f32.xlu0 %v3864
        %v3866 = vpop.xlane.xlu0 %3865
        %v3867 = vsel %vm1626, %v3860, 0.0
        %3868 = vadd.xlane.f32.xlu0 %v3867
        %v3869 = vpop.xlane.xlu0 %3868
        %v3870 = vsel %vm1626, %v3861, 0.0
        %3871 = vadd.xlane.f32.xlu0 %v3870
        %v3872 = vpop.xlane.xlu0 %3871
        %v3873 = vsel %vm1626, %v3862, 0.0
        %3874 = vadd.xlane.f32.xlu0 %v3873
        %v3875 = vpop.xlane.xlu0 %3874
        %v3876 = vsel %vm1639, %v3863, 0.0
        %3877 = vadd.xlane.f32.xlu0 %v3876
        %v3878 = vpop.xlane.xlu0 %3877
        %v3879 = vmul.f32 %v3866, %v1643
        %v3880 = vmul.f32 %v3869, %v1643
        %v3881 = vmul.f32 %v3872, %v1643
        %v3882 = vmul.f32 %v3875, %v1643
        %v3883 = vmul.f32 %v3878, %v1643
        %v3884 = vsub.f32 %v3859, %v3879
        %v3885 = vsub.f32 %v3860, %v3880
        %v3886 = vsub.f32 %v3861, %v3881
        %v3887 = vsub.f32 %v3862, %v3882
        %v3888 = vsub.f32 %v3863, %v3883
        %v3889 = vmul.f32 %v3884, %v3884
        %v3890 = vmul.f32 %v3885, %v3885
        %v3891 = vmul.f32 %v3886, %v3886
        %v3892 = vmul.f32 %v3887, %v3887
        %v3893 = vmul.f32 %v3888, %v3888
        %v3894 = vsel %vm1626, %v3889, 0.0
        %3895 = vadd.xlane.f32.xlu0 %v3894
        %v3896 = vpop.xlane.xlu0 %3895
        %v3897 = vsel %vm1626, %v3890, 0.0
        %3898 = vadd.xlane.f32.xlu0 %v3897
        %v3899 = vpop.xlane.xlu0 %3898
        %v3900 = vsel %vm1626, %v3891, 0.0
        %3901 = vadd.xlane.f32.xlu0 %v3900
        %v3902 = vpop.xlane.xlu0 %3901
        %v3903 = vsel %vm1626, %v3892, 0.0
        %3904 = vadd.xlane.f32.xlu0 %v3903
        %v3905 = vpop.xlane.xlu0 %3904
        %v3906 = vsel %vm1639, %v3893, 0.0
        %3907 = vadd.xlane.f32.xlu0 %v3906
        %v3908 = vpop.xlane.xlu0 %3907
        %v3909 = vmul.f32 %v3896, %v1643
        %v3910 = vmul.f32 %v3899, %v1643
        %v3911 = vmul.f32 %v3902, %v1643
        %v3912 = vmul.f32 %v3905, %v1643
        %v3913 = vmul.f32 %v3908, %v1643
        %v3914 = vadd.f32 %v3909, 1e-05
        %v3915 = vadd.f32 %v3910, 1e-05
        %v3916 = vadd.f32 %v3911, 1e-05
        %v3917 = vadd.f32 %v3912, 1e-05
        %v3918 = vadd.f32 %v3913, 1e-05
        %v3919 = vrsqrt.pop %v3914
        %v3920 = vrsqrt.pop %v3915
        %v3921 = vrsqrt.pop %v3916
        %v3922 = vrsqrt.pop %v3917
        %v3923 = vrsqrt.pop %v3918
        %v3924 = vmul.f32 %v3884, %v3919
        %v3925 = vmul.f32 %v3885, %v3920
        %v3926 = vmul.f32 %v3886, %v3921
        %v3927 = vmul.f32 %v3887, %v3922
        %v3928 = vmul.f32 %v3888, %v3923
        %v3930 = vlaneseq
        %v3931 = vshrl.u32 %v3930, 7
        %v3932 = vsub.s32 0, %v3931
        %v3933 = vrot.slane %v1537, %v3932
        %v3935 = vmul.f32 %v3924, %v3933
        %v3936 = vmul.f32 %v3925, %v3933
        %v3937 = vmul.f32 %v3926, %v3933
        %v3938 = vmul.f32 %v3927, %v3933
        %v3939 = vmul.f32 %v3928, %v3933
        %v3941 = vlaneseq
        %v3942 = vshrl.u32 %v3941, 7
        %v3943 = vsub.s32 0, %v3942
        %v3944 = vrot.slane %v1538, %v3943
        %v3946 = vadd.f32 %v3935, %v3944
        %v3947 = vadd.f32 %v3936, %v3944
        %v3948 = vadd.f32 %v3937, %v3944
        %v3949 = vadd.f32 %v3938, %v3944
        %v3950 = vadd.f32 %v3939, %v3944
        %v3951 = vpack.c.bf16 %v3947, %v3946
        %v3952 = vpack.c.bf16 %v3949, %v3948
        %v3953 = vpack.c.bf16 %v3950, %v3950
        %v3954 = vpack.c.bf16 %v1593, %v1592
        %v3955 = vpack.c.bf16 %v1595, %v1594
        %v3957 = vlaneseq
        %v3958 = vshrl.u32 %v3957, 7
        %v3959 = vsub.s32 0, %v3958
        %v3960 = vrot.slane %v1596, %v3959
        %v3963 = vshrl.u32 %v3951, 16
        %v3965 = vshll.u32 %v3951, 16
        %v3967 = vrot.slane %v3965, 1
        %v3968 = vor.u32 %v3963, %v3967
        %v3970 = vshll.u32 %v3952, 16
        %v3972 = vrot.slane %v3970, 1
        %v3973 = vsel %vm3495, %v3968, %v3972
        %v3974 = vshrl.u32 %v3952, 16
        %v3976 = vor.u32 %v3974, %v3972
        %v3978 = vshll.u32 %v3953, 16
        %v3980 = vrot.slane %v3978, 1
        %v3981 = vsel %vm3495, %v3976, %v3980
        %v3983 = vsel %vm1626, %v3973, 0
        %v3986 = vsel %vm1626, %v3981, 0
        %3988 = vmatprep.subr.bf16.mxu0 0
        %3989 = vmatpush1.bf16.msra.mxu0 %v3954
        %3990 = vmatprep.subr.bf16.mxu0 0
        %3991 = vmatpush1.bf16.msra.mxu0 %v3955
        %3992 = vmatprep.subr.bf16.mxu0 0
        %3993 = vmatpush1.bf16.msra.mxu0 0
        %3994 = vmatprep.subr.bf16.mxu0 0
        %3995 = vmatpush1.bf16.msra.mxu0 0
        %3996 = vmatprep.subr.bf16.mxu0 0
        %3997 = vmatpush1.bf16.msra.mxu0 0
        %3998 = vmatprep.subr.bf16.mxu0 0
        %3999 = vmatpush1.bf16.msra.mxu0 0
        %4000 = vmatprep.subr.bf16.mxu0 0
        %4001 = vmatpush1.bf16.msra.mxu0 0
        %4002 = vmatprep.subr.bf16.mxu0 0
        %4003 = vmatpush1.bf16.msra.mxu0 0
        %4004 = vmatprep.subr.bf16.mxu0 0
        %4005 = vmatpush1.bf16.msra.mxu0 0
        %4006 = vmatprep.subr.bf16.mxu0 0
        %4007 = vmatpush1.bf16.msra.mxu0 0
        %4008 = vmatprep.subr.bf16.mxu0 0
        %4009 = vmatpush1.bf16.msra.mxu0 0
        %4010 = vmatprep.subr.bf16.mxu0 0
        %4011 = vmatpush1.bf16.msra.mxu0 0
        %4012 = vmatprep.subr.bf16.mxu0 0
        %4013 = vmatpush1.bf16.msra.mxu0 0
        %4014 = vmatprep.subr.bf16.mxu0 0
        %4015 = vmatpush1.bf16.msra.mxu0 0
        %4016 = vmatprep.subr.bf16.mxu0 0
        %4017 = vmatpush1.bf16.msra.mxu0 0
        %4018 = vmatprep.subr.bf16.mxu0 0
        %4019 = vmatpush1.bf16.msra.mxu0 0
        %4020 = vmatprep.mubr.bf16.mxu0 0
        %4021 = vmatmul.mubr.bf16.gmra.mrb[0].mxu0 %v3983
        %v4022 = vpop.f32.mrb[0].mxu0
        %v4023 = vadd.f32 %v3960, %v4022
        %v4024 = vpop.f32.mrb[0].mxu0
        %v4025 = vpop.f32.mrb[0].mxu0
        %v4026 = vadd.f32 %v3960, %v4025
        %v4027 = vpop.f32.mrb[0].mxu0
        %4028 = vmatprep.mubr.bf16.mxu0 0
        %4029 = vmatmul.mubr.bf16.gmra.mrb[0].mxu0 %v3986
        %v4030 = vpop.f32.mrb[0].mxu0
        %v4031 = vadd.f32 %v3960, %v4030
        %v4032 = vpop.f32.mrb[0].mxu0
        %v4033 = vpop.f32.mrb[0].mxu0
        %v4034 = vadd.f32 %v3960, %v4033
        %v4035 = vpop.f32.mrb[0].mxu0
        %4036 = vdwg.mxu0
        %v4041 = vrot.slane %v4023, 7
        %v4042 = vrot.slane %v4026, 7
        %v4043 = vsel %vm1452, %v4041, %v4042
        %v4044 = vrot.slane %v4031, 7
        %v4045 = vsel %vm1452, %v4042, %v4044
        %v4046 = vrot.slane %v4034, 7
        %v4047 = vsel %vm1452, %v4044, %v4046
        %v4053 = vsel %vm1452, 0.0, %v4041
        %v4054 = vsel %vm1452, %v4046, 0.0
        %v4055 = vlaneseq
        %v4056 = vshrl.u32 %v4055, 7
        %v4057 = vsub.s32 0, %v4056
        %v4058 = vrot.slane %v1597, %v4057
        %v4059 = vmul.f32 %v4053, %v4058
        %v4060 = vmul.f32 %v4043, %v4058
        %v4061 = vmul.f32 %v4045, %v4058
        %v4062 = vmul.f32 %v4047, %v4058
        %v4063 = vlaneseq
        %v4064 = vshrl.u32 %v4063, 7
        %v4065 = vsub.s32 1, %v4064
        %v4066 = vrot.slane %v1597, %v4065
        %v4067 = vmul.f32 %v4053, %v4066
        %v4068 = vmul.f32 %v4043, %v4066
        %v4069 = vmul.f32 %v4045, %v4066
        %v4070 = vmul.f32 %v4047, %v4066
        %v4071 = vmul.f32 %v4054, %v4066
        %v4077 = vrot.slane %v4067, 1
        %v4078 = vrot.slane %v4068, 1
        %v4079 = vsel %vm1761, %v4077, %v4078
        %v4080 = vrot.slane %v4069, 1
        %v4081 = vsel %vm1761, %v4078, %v4080
        %v4082 = vrot.slane %v4070, 1
        %v4083 = vsel %vm1761, %v4080, %v4082
        %v4084 = vrot.slane %v4071, 1
        %v4085 = vsel %vm1761, %v4082, %v4084
        %v4090 = vadd.f32 %v4059, %v4079
        %v4091 = vadd.f32 %v4060, %v4081
        %v4092 = vadd.f32 %v4061, %v4083
        %v4093 = vadd.f32 %v4062, %v4085
        %v4094 = vlaneseq
        %v4095 = vshrl.u32 %v4094, 7
        %v4096 = vsub.s32 2, %v4095
        %v4097 = vrot.slane %v1597, %v4096
        %v4098 = vmul.f32 %v4053, %v4097
        %v4099 = vmul.f32 %v4043, %v4097
        %v4100 = vmul.f32 %v4045, %v4097
        %v4101 = vmul.f32 %v4047, %v4097
        %v4102 = vmul.f32 %v4054, %v4097
        %v4108 = vrot.slane %v4098, 2
        %v4109 = vrot.slane %v4099, 2
        %v4110 = vsel %vm1793, %v4108, %v4109
        %v4111 = vrot.slane %v4100, 2
        %v4112 = vsel %vm1793, %v4109, %v4111
        %v4113 = vrot.slane %v4101, 2
        %v4114 = vsel %vm1793, %v4111, %v4113
        %v4115 = vrot.slane %v4102, 2
        %v4116 = vsel %vm1793, %v4113, %v4115
        %v4121 = vadd.f32 %v4090, %v4110
        %v4122 = vadd.f32 %v4091, %v4112
        %v4123 = vadd.f32 %v4092, %v4114
        %v4124 = vadd.f32 %v4093, %v4116
        %v4126 = vlaneseq
        %v4127 = vshrl.u32 %v4126, 7
        %v4128 = vsub.s32 0, %v4127
        %v4129 = vrot.slane %v1598, %v4128
        %v4131 = vadd.f32 %v4121, %v4129
        %v4132 = vadd.f32 %v4122, %v4129
        %v4133 = vadd.f32 %v4123, %v4129
        %v4134 = vadd.f32 %v4124, %v4129
        %v4135 = vmul.f32 %v4131, 0.5
        %v4136 = vmul.f32 %v4132, 0.5
        %v4137 = vmul.f32 %v4133, 0.5
        %v4138 = vmul.f32 %v4134, 0.5
        %v4139 = vmul.f32 %v4131, 0.70710677
        %v4140 = vmul.f32 %v4132, 0.70710677
        %v4141 = vmul.f32 %v4133, 0.70710677
        %v4142 = vmul.f32 %v4134, 0.70710677
        %v4143 = vand.u32 2147483647, %v4139
        %v4144 = vand.u32 2147483647, %v4140
        %v4145 = vand.u32 2147483647, %v4141
        %v4146 = vand.u32 2147483647, %v4142
        %v4147 = vmul.f32 %v4143, 0.3275911
        %v4148 = vmul.f32 %v4144, 0.3275911
        %v4149 = vmul.f32 %v4145, 0.3275911
        %v4150 = vmul.f32 %v4146, 0.3275911
        %v4151 = vadd.f32 %v4147, 1.0
        %v4152 = vadd.f32 %v4148, 1.0
        %v4153 = vadd.f32 %v4149, 1.0
        %v4154 = vadd.f32 %v4150, 1.0
        %v4155 = vrcp.pop %v4151
        %v4156 = vmul.f32 1.0, %v4155
        %v4157 = vrcp.pop %v4152
        %v4158 = vmul.f32 1.0, %v4157
        %v4159 = vrcp.pop %v4153
        %v4160 = vmul.f32 1.0, %v4159
        %v4161 = vrcp.pop %v4154
        %v4162 = vmul.f32 1.0, %v4161
        %v4163 = vmul.f32 %v4156, 1.0614054
        %v4164 = vmul.f32 %v4158, 1.0614054
        %v4165 = vmul.f32 %v4160, 1.0614054
        %v4166 = vmul.f32 %v4162, 1.0614054
        %v4167 = vsub.f32 %v4163, 1.4531521
        %v4168 = vsub.f32 %v4164, 1.4531521
        %v4169 = vsub.f32 %v4165, 1.4531521
        %v4170 = vsub.f32 %v4166, 1.4531521
        %v4171 = vmul.f32 %v4167, %v4156
        %v4172 = vmul.f32 %v4168, %v4158
        %v4173 = vmul.f32 %v4169, %v4160
        %v4174 = vmul.f32 %v4170, %v4162
        %v4175 = vadd.f32 %v4171, 1.4214138
        %v4176 = vadd.f32 %v4172, 1.4214138
        %v4177 = vadd.f32 %v4173, 1.4214138
        %v4178 = vadd.f32 %v4174, 1.4214138
        %v4179 = vmul.f32 %v4175, %v4156
        %v4180 = vmul.f32 %v4176, %v4158
        %v4181 = vmul.f32 %v4177, %v4160
        %v4182 = vmul.f32 %v4178, %v4162
        %v4183 = vsub.f32 %v4179, 0.28449672
        %v4184 = vsub.f32 %v4180, 0.28449672
        %v4185 = vsub.f32 %v4181, 0.28449672
        %v4186 = vsub.f32 %v4182, 0.28449672
        %v4187 = vmul.f32 %v4183, %v4156
        %v4188 = vmul.f32 %v4184, %v4158
        %v4189 = vmul.f32 %v4185, %v4160
        %v4190 = vmul.f32 %v4186, %v4162
        %v4191 = vadd.f32 %v4187, 0.2548296
        %v4192 = vadd.f32 %v4188, 0.2548296
        %v4193 = vadd.f32 %v4189, 0.2548296
        %v4194 = vadd.f32 %v4190, 0.2548296
        %v4195 = vmul.f32 %v4191, %v4156
        %v4196 = vmul.f32 %v4192, %v4158
        %v4197 = vmul.f32 %v4193, %v4160
        %v4198 = vmul.f32 %v4194, %v4162
        %v4199 = vmul.f32 %v4143, %v4143
        %v4200 = vmul.f32 %v4144, %v4144
        %v4201 = vmul.f32 %v4145, %v4145
        %v4202 = vmul.f32 %v4146, %v4146
        %v4203 = vsub.f32 0.0, %v4199
        %v4204 = vsub.f32 0.0, %v4200
        %v4205 = vsub.f32 0.0, %v4201
        %v4206 = vsub.f32 0.0, %v4202
        %v4207 = vmul.f32 %v4203, 1.442695
        %v4208 = vpow.pop %v4207
        %v4209 = vmul.f32 %v4204, 1.442695
        %v4210 = vpow.pop %v4209
        %v4211 = vmul.f32 %v4205, 1.442695
        %v4212 = vpow.pop %v4211
        %v4213 = vmul.f32 %v4206, 1.442695
        %v4214 = vpow.pop %v4213
        %v4215 = vmul.f32 %v4195, %v4208
        %v4216 = vmul.f32 %v4196, %v4210
        %v4217 = vmul.f32 %v4197, %v4212
        %v4218 = vmul.f32 %v4198, %v4214
        %v4219 = vsub.f32 1.0, %v4215
        %v4220 = vsub.f32 1.0, %v4216
        %v4221 = vsub.f32 1.0, %v4217
        %v4222 = vsub.f32 1.0, %v4218
        %vm4223 = vcmp.ge.f32.partialorder %v4139, 0.0
        %vm4224 = vcmp.ge.f32.partialorder %v4140, 0.0
        %vm4225 = vcmp.ge.f32.partialorder %v4141, 0.0
        %vm4226 = vcmp.ge.f32.partialorder %v4142, 0.0
        %v4227 = vsub.f32 0.0, %v4219
        %v4228 = vsub.f32 0.0, %v4220
        %v4229 = vsub.f32 0.0, %v4221
        %v4230 = vsub.f32 0.0, %v4222
        %v4231 = vsel %vm4223, %v4219, %v4227
        %v4232 = vsel %vm4224, %v4220, %v4228
        %v4233 = vsel %vm4225, %v4221, %v4229
        %v4234 = vsel %vm4226, %v4222, %v4230
        %v4235 = vadd.f32 %v4231, 1.0
        %v4236 = vadd.f32 %v4232, 1.0
        %v4237 = vadd.f32 %v4233, 1.0
        %v4238 = vadd.f32 %v4234, 1.0
        %v4239 = vmul.f32 %v4135, %v4235
        %v4240 = vmul.f32 %v4136, %v4236
        %v4241 = vmul.f32 %v4137, %v4237
        %v4242 = vmul.f32 %v4138, %v4238
        %v4243 = vpack.c.bf16 %v4240, %v4239
        %v4244 = vpack.c.bf16 %v4242, %v4241
        %v4245 = vpack.c.bf16 %v1600, %v1599
        %v4246 = vpack.c.bf16 %v1602, %v1601
        %v4247 = vpack.c.bf16 %v1604, %v1603
        %v4248 = vpack.c.bf16 %v1606, %v1605
        %v4249 = vpack.c.bf16 %v1608, %v1607
        %v4250 = vpack.c.bf16 %v1610, %v1609
        %v4251 = vpack.c.bf16 %v1612, %v1611
        %v4252 = vpack.c.bf16 %v1614, %v1613
        %v4254 = vlaneseq
        %v4255 = vshrl.u32 %v4254, 7
        %v4256 = vsub.s32 0, %v4255
        %v4257 = vrot.slane %v1615, %v4256
        %4259 = vmatprep.subr.bf16.mxu0 0
        %4260 = vmatpush1.bf16.msra.mxu0 %v4245
        %4261 = vmatprep.subr.bf16.mxu0 0
        %4262 = vmatpush1.bf16.msra.mxu0 %v4246
        %4263 = vmatprep.subr.bf16.mxu0 0
        %4264 = vmatpush1.bf16.msra.mxu0 %v4247
        %4265 = vmatprep.subr.bf16.mxu0 0
        %4266 = vmatpush1.bf16.msra.mxu0 %v4248
        %4267 = vmatprep.subr.bf16.mxu0 0
        %4268 = vmatpush1.bf16.msra.mxu0 %v4249
        %4269 = vmatprep.subr.bf16.mxu0 0
        %4270 = vmatpush1.bf16.msra.mxu0 %v4250
        %4271 = vmatprep.subr.bf16.mxu0 0
        %4272 = vmatpush1.bf16.msra.mxu0 %v4251
        %4273 = vmatprep.subr.bf16.mxu0 0
        %4274 = vmatpush1.bf16.msra.mxu0 %v4252
        %4275 = vmatprep.subr.bf16.mxu0 0
        %4276 = vmatpush1.bf16.msra.mxu0 0
        %4277 = vmatprep.subr.bf16.mxu0 0
        %4278 = vmatpush1.bf16.msra.mxu0 0
        %4279 = vmatprep.subr.bf16.mxu0 0
        %4280 = vmatpush1.bf16.msra.mxu0 0
        %4281 = vmatprep.subr.bf16.mxu0 0
        %4282 = vmatpush1.bf16.msra.mxu0 0
        %4283 = vmatprep.subr.bf16.mxu0 0
        %4284 = vmatpush1.bf16.msra.mxu0 0
        %4285 = vmatprep.subr.bf16.mxu0 0
        %4286 = vmatpush1.bf16.msra.mxu0 0
        %4287 = vmatprep.subr.bf16.mxu0 0
        %4288 = vmatpush1.bf16.msra.mxu0 0
        %4289 = vmatprep.subr.bf16.mxu0 0
        %4290 = vmatpush1.bf16.msra.mxu0 0
        %4291 = vmatprep.mubr.bf16.mxu0 0
        %4292 = vmatmul.mubr.bf16.gmra.mrb[0].mxu0 %v4243
        %v4293 = vpop.f32.mrb[0].mxu0
        %v4294 = vadd.f32 %v4257, %v4293
        %v4295 = vpop.f32.mrb[0].mxu0
        %v4296 = vpop.f32.mrb[0].mxu0
        %v4297 = vadd.f32 %v4257, %v4296
        %v4298 = vpop.f32.mrb[0].mxu0
        %4299 = vmatprep.mubr.bf16.mxu0 0
        %4300 = vmatmul.mubr.bf16.gmra.mrb[0].mxu0 %v4244
        %v4301 = vpop.f32.mrb[0].mxu0
        %v4302 = vadd.f32 %v4257, %v4301
        %v4303 = vpop.f32.mrb[0].mxu0
        %v4304 = vpop.f32.mrb[0].mxu0
        %v4305 = vadd.f32 %v4257, %v4304
        %v4306 = vpop.f32.mrb[0].mxu0
        %4307 = vdwg.mxu0
        %v4312 = vrot.slane %v4294, 7
        %v4313 = vrot.slane %v4297, 7
        %v4314 = vsel %vm1452, %v4312, %v4313
        %v4315 = vrot.slane %v4302, 7
        %v4316 = vsel %vm1452, %v4313, %v4315
        %v4317 = vrot.slane %v4305, 7
        %v4318 = vsel %vm1452, %v4315, %v4317
        %v4324 = vsel %vm1452, %v3946, %v4312
        %v4325 = vadd.f32 %v4324, %v3859
        %v4326 = vadd.f32 %v4314, %v3860
        %v4327 = vadd.f32 %v4316, %v3861
        %v4328 = vadd.f32 %v4318, %v3862
        %v4329 = vadd.f32 %v4317, %v3863
        %v4331 = vlaneseq
        %v4332 = vshrl.u32 %v4331, 7
        %v4333 = vsub.s32 0, %v4332
        %v4334 = vrot.slane %v1539, %v4333
        %v4336 = vmul.f32 %v3924, %v4334
        %v4337 = vmul.f32 %v3925, %v4334
        %v4338 = vmul.f32 %v3926, %v4334
        %v4339 = vmul.f32 %v3927, %v4334
        %v4340 = vmul.f32 %v3928, %v4334
        %v4342 = vlaneseq
        %v4343 = vshrl.u32 %v4342, 7
        %v4344 = vsub.s32 0, %v4343
        %v4345 = vrot.slane %v1540, %v4344
        %v4347 = vadd.f32 %v4336, %v4345
        %v4348 = vadd.f32 %v4337, %v4345
        %v4349 = vadd.f32 %v4338, %v4345
        %v4350 = vadd.f32 %v4339, %v4345
        %v4351 = vadd.f32 %v4340, %v4345
        %v4352 = vpack.c.bf16 %v4348, %v4347
        %v4353 = vpack.c.bf16 %v4350, %v4349
        %v4354 = vpack.c.bf16 %v4351, %v4351
        %v4355 = vpack.c.bf16 %v1617, %v1616
        %v4356 = vpack.c.bf16 %v1619, %v1618
        %v4358 = vlaneseq
        %v4359 = vshrl.u32 %v4358, 7
        %v4360 = vsub.s32 0, %v4359
        %v4361 = vrot.slane %v1620, %v4360
        %v4364 = vsel %vm1626, %v4352, 0
        %v4367 = vsel %vm1626, %v4353, 0
        %v4370 = vsel %vm1626, %v4354, 0
        %4372 = vmatprep.subr.bf16.mxu0 0
        %4373 = vmatpush1.bf16.msra.mxu0 %v4355
        %4374 = vmatprep.subr.bf16.mxu0 0
        %4375 = vmatpush1.bf16.msra.mxu0 %v4356
        %4376 = vmatprep.subr.bf16.mxu0 0
        %4377 = vmatpush1.bf16.msra.mxu0 0
        %4378 = vmatprep.subr.bf16.mxu0 0
        %4379 = vmatpush1.bf16.msra.mxu0 0
        %4380 = vmatprep.subr.bf16.mxu0 0
        %4381 = vmatpush1.bf16.msra.mxu0 0
        %4382 = vmatprep.subr.bf16.mxu0 0
        %4383 = vmatpush1.bf16.msra.mxu0 0
        %4384 = vmatprep.subr.bf16.mxu0 0
        %4385 = vmatpush1.bf16.msra.mxu0 0
        %4386 = vmatprep.subr.bf16.mxu0 0
        %4387 = vmatpush1.bf16.msra.mxu0 0
        %4388 = vmatprep.subr.bf16.mxu0 0
        %4389 = vmatpush1.bf16.msra.mxu0 0
        %4390 = vmatprep.subr.bf16.mxu0 0
        %4391 = vmatpush1.bf16.msra.mxu0 0
        %4392 = vmatprep.subr.bf16.mxu0 0
        %4393 = vmatpush1.bf16.msra.mxu0 0
        %4394 = vmatprep.subr.bf16.mxu0 0
        %4395 = vmatpush1.bf16.msra.mxu0 0
        %4396 = vmatprep.subr.bf16.mxu0 0
        %4397 = vmatpush1.bf16.msra.mxu0 0
        %4398 = vmatprep.subr.bf16.mxu0 0
        %4399 = vmatpush1.bf16.msra.mxu0 0
        %4400 = vmatprep.subr.bf16.mxu0 0
        %4401 = vmatpush1.bf16.msra.mxu0 0
        %4402 = vmatprep.subr.bf16.mxu0 0
        %4403 = vmatpush1.bf16.msra.mxu0 0
        %4404 = vmatprep.mubr.bf16.mxu0 0
        %4405 = vmatmul.mubr.bf16.gmra.mrb[0].mxu0 %v4364
        %v4406 = vpop.f32.mrb[0].mxu0
        %v4407 = vadd.f32 %v4361, %v4406
        %v4408 = vpop.f32.mrb[0].mxu0
        %v4409 = vpop.f32.mrb[0].mxu0
        %v4410 = vadd.f32 %v4361, %v4409
        %v4411 = vpop.f32.mrb[0].mxu0
        %4412 = vmatprep.mubr.bf16.mxu0 0
        %4413 = vmatmul.mubr.bf16.gmra.mrb[0].mxu0 %v4367
        %v4414 = vpop.f32.mrb[0].mxu0
        %v4415 = vadd.f32 %v4361, %v4414
        %v4416 = vpop.f32.mrb[0].mxu0
        %v4417 = vpop.f32.mrb[0].mxu0
        %v4418 = vadd.f32 %v4361, %v4417
        %v4419 = vpop.f32.mrb[0].mxu0
        %4420 = vmatprep.mubr.bf16.mxu0 0
        %4421 = vmatmul.mubr.bf16.gmra.mrb[0].mxu0 %v4370
        %v4422 = vpop.f32.mrb[0].mxu0
        %v4423 = vadd.f32 %v4361, %v4422
        %v4424 = vpop.f32.mrb[0].mxu0
        %v4425 = vpop.f32.mrb[0].mxu0
        %v4426 = vpop.f32.mrb[0].mxu0
        %4427 = vdwg.mxu0
        %v4428 = vmul.f32 %v4407, 0.5
        %v4429 = vmul.f32 %v4410, 0.5
        %v4430 = vmul.f32 %v4415, 0.5
        %v4431 = vmul.f32 %v4418, 0.5
        %v4432 = vmul.f32 %v4423, 0.5
        %v4433 = vmul.f32 %v4407, 0.70710677
        %v4434 = vmul.f32 %v4410, 0.70710677
        %v4435 = vmul.f32 %v4415, 0.70710677
        %v4436 = vmul.f32 %v4418, 0.70710677
        %v4437 = vmul.f32 %v4423, 0.70710677
        %v4438 = vand.u32 2147483647, %v4433
        %v4439 = vand.u32 2147483647, %v4434
        %v4440 = vand.u32 2147483647, %v4435
        %v4441 = vand.u32 2147483647, %v4436
        %v4442 = vand.u32 2147483647, %v4437
        %v4443 = vmul.f32 %v4438, 0.3275911
        %v4444 = vmul.f32 %v4439, 0.3275911
        %v4445 = vmul.f32 %v4440, 0.3275911
        %v4446 = vmul.f32 %v4441, 0.3275911
        %v4447 = vmul.f32 %v4442, 0.3275911
        %v4448 = vadd.f32 %v4443, 1.0
        %v4449 = vadd.f32 %v4444, 1.0
        %v4450 = vadd.f32 %v4445, 1.0
        %v4451 = vadd.f32 %v4446, 1.0
        %v4452 = vadd.f32 %v4447, 1.0
        %v4453 = vrcp.pop %v4448
        %v4454 = vmul.f32 1.0, %v4453
        %v4455 = vrcp.pop %v4449
        %v4456 = vmul.f32 1.0, %v4455
        %v4457 = vrcp.pop %v4450
        %v4458 = vmul.f32 1.0, %v4457
        %v4459 = vrcp.pop %v4451
        %v4460 = vmul.f32 1.0, %v4459
        %v4461 = vrcp.pop %v4452
        %v4462 = vmul.f32 1.0, %v4461
        %v4463 = vmul.f32 %v4454, 1.0614054
        %v4464 = vmul.f32 %v4456, 1.0614054
        %v4465 = vmul.f32 %v4458, 1.0614054
        %v4466 = vmul.f32 %v4460, 1.0614054
        %v4467 = vmul.f32 %v4462, 1.0614054
        %v4468 = vsub.f32 %v4463, 1.4531521
        %v4469 = vsub.f32 %v4464, 1.4531521
        %v4470 = vsub.f32 %v4465, 1.4531521
        %v4471 = vsub.f32 %v4466, 1.4531521
        %v4472 = vsub.f32 %v4467, 1.4531521
        %v4473 = vmul.f32 %v4468, %v4454
        %v4474 = vmul.f32 %v4469, %v4456
        %v4475 = vmul.f32 %v4470, %v4458
        %v4476 = vmul.f32 %v4471, %v4460
        %v4477 = vmul.f32 %v4472, %v4462
        %v4478 = vadd.f32 %v4473, 1.4214138
        %v4479 = vadd.f32 %v4474, 1.4214138
        %v4480 = vadd.f32 %v4475, 1.4214138
        %v4481 = vadd.f32 %v4476, 1.4214138
        %v4482 = vadd.f32 %v4477, 1.4214138
        %v4483 = vmul.f32 %v4478, %v4454
        %v4484 = vmul.f32 %v4479, %v4456
        %v4485 = vmul.f32 %v4480, %v4458
        %v4486 = vmul.f32 %v4481, %v4460
        %v4487 = vmul.f32 %v4482, %v4462
        %v4488 = vsub.f32 %v4483, 0.28449672
        %v4489 = vsub.f32 %v4484, 0.28449672
        %v4490 = vsub.f32 %v4485, 0.28449672
        %v4491 = vsub.f32 %v4486, 0.28449672
        %v4492 = vsub.f32 %v4487, 0.28449672
        %v4493 = vmul.f32 %v4488, %v4454
        %v4494 = vmul.f32 %v4489, %v4456
        %v4495 = vmul.f32 %v4490, %v4458
        %v4496 = vmul.f32 %v4491, %v4460
        %v4497 = vmul.f32 %v4492, %v4462
        %v4498 = vadd.f32 %v4493, 0.2548296
        %v4499 = vadd.f32 %v4494, 0.2548296
        %v4500 = vadd.f32 %v4495, 0.2548296
        %v4501 = vadd.f32 %v4496, 0.2548296
        %v4502 = vadd.f32 %v4497, 0.2548296
        %v4503 = vmul.f32 %v4498, %v4454
        %v4504 = vmul.f32 %v4499, %v4456
        %v4505 = vmul.f32 %v4500, %v4458
        %v4506 = vmul.f32 %v4501, %v4460
        %v4507 = vmul.f32 %v4502, %v4462
        %v4508 = vmul.f32 %v4438, %v4438
        %v4509 = vmul.f32 %v4439, %v4439
        %v4510 = vmul.f32 %v4440, %v4440
        %v4511 = vmul.f32 %v4441, %v4441
        %v4512 = vmul.f32 %v4442, %v4442
        %v4513 = vsub.f32 0.0, %v4508
        %v4514 = vsub.f32 0.0, %v4509
        %v4515 = vsub.f32 0.0, %v4510
        %v4516 = vsub.f32 0.0, %v4511
        %v4517 = vsub.f32 0.0, %v4512
        %v4518 = vmul.f32 %v4513, 1.442695
        %v4519 = vpow.pop %v4518
        %v4520 = vmul.f32 %v4514, 1.442695
        %v4521 = vpow.pop %v4520
        %v4522 = vmul.f32 %v4515, 1.442695
        %v4523 = vpow.pop %v4522
        %v4524 = vmul.f32 %v4516, 1.442695
        %v4525 = vpow.pop %v4524
        %v4526 = vmul.f32 %v4517, 1.442695
        %v4527 = vpow.pop %v4526
        %v4528 = vmul.f32 %v4503, %v4519
        %v4529 = vmul.f32 %v4504, %v4521
        %v4530 = vmul.f32 %v4505, %v4523
        %v4531 = vmul.f32 %v4506, %v4525
        %v4532 = vmul.f32 %v4507, %v4527
        %v4533 = vsub.f32 1.0, %v4528
        %v4534 = vsub.f32 1.0, %v4529
        %v4535 = vsub.f32 1.0, %v4530
        %v4536 = vsub.f32 1.0, %v4531
        %v4537 = vsub.f32 1.0, %v4532
        %vm4538 = vcmp.ge.f32.partialorder %v4433, 0.0
        %vm4539 = vcmp.ge.f32.partialorder %v4434, 0.0
        %vm4540 = vcmp.ge.f32.partialorder %v4435, 0.0
        %vm4541 = vcmp.ge.f32.partialorder %v4436, 0.0
        %vm4542 = vcmp.ge.f32.partialorder %v4437, 0.0
        %v4543 = vsub.f32 0.0, %v4533
        %v4544 = vsub.f32 0.0, %v4534
        %v4545 = vsub.f32 0.0, %v4535
        %v4546 = vsub.f32 0.0, %v4536
        %v4547 = vsub.f32 0.0, %v4537
        %v4548 = vsel %vm4538, %v4533, %v4543
        %v4549 = vsel %vm4539, %v4534, %v4544
        %v4550 = vsel %vm4540, %v4535, %v4545
        %v4551 = vsel %vm4541, %v4536, %v4546
        %v4552 = vsel %vm4542, %v4537, %v4547
        %v4553 = vadd.f32 %v4548, 1.0
        %v4554 = vadd.f32 %v4549, 1.0
        %v4555 = vadd.f32 %v4550, 1.0
        %v4556 = vadd.f32 %v4551, 1.0
        %v4557 = vadd.f32 %v4552, 1.0
        %v4558 = vmul.f32 %v4428, %v4553
        %v4559 = vmul.f32 %v4429, %v4554
        %v4560 = vmul.f32 %v4430, %v4555
        %v4561 = vmul.f32 %v4431, %v4556
        %v4562 = vmul.f32 %v4432, %v4557
        %v4563 = vpack.c.bf16 %v4559, %v4558
        %v4564 = vpack.c.bf16 %v4561, %v4560
        %v4565 = vpack.c.bf16 %v4562, %v4562
        %v4566 = vpack.c.bf16 %v1622, %v1621
        %v4567 = vpack.c.bf16 %v1624, %v1623
        %v4569 = vlaneseq
        %v4570 = vshrl.u32 %v4569, 7
        %v4571 = vsub.s32 0, %v4570
        %v4572 = vrot.slane %v1625, %v4571
        %v4575 = vsel %vm1626, %v4563, 0
        %v4578 = vsel %vm1626, %v4564, 0
        %v4581 = vsel %vm1626, %v4565, 0
        %4583 = vmatprep.subr.bf16.mxu0 0
        %4584 = vmatpush1.bf16.msra.mxu0 %v4566
        %4585 = vmatprep.subr.bf16.mxu0 0
        %4586 = vmatpush1.bf16.msra.mxu0 %v4567
        %4587 = vmatprep.subr.bf16.mxu0 0
        %4588 = vmatpush1.bf16.msra.mxu0 0
        %4589 = vmatprep.subr.bf16.mxu0 0
        %4590 = vmatpush1.bf16.msra.mxu0 0
        %4591 = vmatprep.subr.bf16.mxu0 0
        %4592 = vmatpush1.bf16.msra.mxu0 0
        %4593 = vmatprep.subr.bf16.mxu0 0
        %4594 = vmatpush1.bf16.msra.mxu0 0
        %4595 = vmatprep.subr.bf16.mxu0 0
        %4596 = vmatpush1.bf16.msra.mxu0 0
        %4597 = vmatprep.subr.bf16.mxu0 0
        %4598 = vmatpush1.bf16.msra.mxu0 0
        %4599 = vmatprep.subr.bf16.mxu0 0
        %4600 = vmatpush1.bf16.msra.mxu0 0
        %4601 = vmatprep.subr.bf16.mxu0 0
        %4602 = vmatpush1.bf16.msra.mxu0 0
        %4603 = vmatprep.subr.bf16.mxu0 0
        %4604 = vmatpush1.bf16.msra.mxu0 0
        %4605 = vmatprep.subr.bf16.mxu0 0
        %4606 = vmatpush1.bf16.msra.mxu0 0
        %4607 = vmatprep.subr.bf16.mxu0 0
        %4608 = vmatpush1.bf16.msra.mxu0 0
        %4609 = vmatprep.subr.bf16.mxu0 0
        %4610 = vmatpush1.bf16.msra.mxu0 0
        %4611 = vmatprep.subr.bf16.mxu0 0
        %4612 = vmatpush1.bf16.msra.mxu0 0
        %4613 = vmatprep.subr.bf16.mxu0 0
        %4614 = vmatpush1.bf16.msra.mxu0 0
        %4615 = vmatprep.mubr.bf16.mxu0 0
        %4616 = vmatmul.mubr.bf16.gmra.mrb[0].mxu0 %v4575
        %v4617 = vpop.f32.mrb[0].mxu0
        %v4618 = vadd.f32 %v4572, %v4617
        %v4619 = vpop.f32.mrb[0].mxu0
        %v4620 = vpop.f32.mrb[0].mxu0
        %v4621 = vadd.f32 %v4572, %v4620
        %v4622 = vpop.f32.mrb[0].mxu0
        %4623 = vmatprep.mubr.bf16.mxu0 0
        %4624 = vmatmul.mubr.bf16.gmra.mrb[0].mxu0 %v4578
        %v4625 = vpop.f32.mrb[0].mxu0
        %v4626 = vadd.f32 %v4572, %v4625
        %v4627 = vpop.f32.mrb[0].mxu0
        %v4628 = vpop.f32.mrb[0].mxu0
        %v4629 = vadd.f32 %v4572, %v4628
        %v4630 = vpop.f32.mrb[0].mxu0
        %4631 = vmatprep.mubr.bf16.mxu0 0
        %4632 = vmatmul.mubr.bf16.gmra.mrb[0].mxu0 %v4581
        %v4633 = vpop.f32.mrb[0].mxu0
        %v4634 = vadd.f32 %v4572, %v4633
        %v4635 = vpop.f32.mrb[0].mxu0
        %v4636 = vpop.f32.mrb[0].mxu0
        %v4637 = vpop.f32.mrb[0].mxu0
        %4638 = vdwg.mxu0
        %v4639 = vadd.f32 %v4618, %v4325
        %v4640 = vadd.f32 %v4621, %v4326
        %v4641 = vadd.f32 %v4626, %v4327
        %v4642 = vadd.f32 %v4629, %v4328
        %v4643 = vadd.f32 %v4634, %v4329
        %s4644 = scalar_lea.vmem %s19, 1
        %v4645 = vld [vmem:[%s4644] sm:$0x1]
        %s4646 = scalar_lea.vmem %s21, 1
        %v4647 = vld [vmem:[%s4646] sm:$0x1]
        %s4648 = scalar_lea.vmem %s23, 1
        %v4649 = vld [vmem:[%s4648] sm:$0x1]
        %s4650 = scalar_lea.vmem %s25, 1
        %v4651 = vld [vmem:[%s4650] sm:$0x1]
        %s4652 = scalar_lea.vmem %s27, 1
        %v4653 = vld [vmem:[%s4652] sm:$0x1]
        %s4654 = scalar_lea.vmem %s29, 1
        %v4655 = vld [vmem:[%s4654] sm:$0x1]
        %s4656 = scalar_lea.vmem %s31, 1
        %v4657 = vld [vmem:[%s4656] sm:$0x1]
        %s4658 = scalar_lea.vmem %s33, 1
        %v4659 = vld [vmem:[%s4658] sm:$0x1]
        %s4660 = scalar_lea.vmem %s35, 8
        %v4661 = vld [vmem:[%s4660] sm:$0x7f]
        %s4662 = scalar_lea.vmem %s37, 1
        %v4663 = vld [vmem:[%s4662] sm:$0x1]
        %s4664 = scalar_lea.vmem %s39, 32
        %v4665 = vld [vmem:[%s4664] sm:$0xff]
        %v4666 = vld [vmem:[%s4664 + $0x8] sm:$0xff]
        %v4667 = vld [vmem:[%s4664 + $0x10] sm:$0xff]
        %v4668 = vld [vmem:[%s4664 + $0x18] sm:$0xff]
        %s4669 = scalar_lea.vmem %s41, 1
        %v4670 = vld [vmem:[%s4669] sm:$0x1]
        %s4671 = scalar_lea.vmem %s43, 1
        %v4672 = vld [vmem:[%s4671] sm:$0x1]
        %s4673 = scalar_lea.vmem %s45, 1
        %v4674 = vld [vmem:[%s4673] sm:$0x1]
        %s4675 = scalar_lea.vmem %s47, 1
        %v4676 = vld [vmem:[%s4675] sm:$0x1]
        %s4677 = scalar_lea.vmem %s49, 1
        %v4678 = vld [vmem:[%s4677] sm:$0x1]
        %s4679 = scalar_lea.vmem %s51, 1
        %v4680 = vld [vmem:[%s4679] sm:$0x1]
        %s4681 = scalar_lea.vmem %s53, 1
        %v4682 = vld [vmem:[%s4681] sm:$0x1]
        %s4683 = scalar_lea.vmem %s55, 1
        %v4684 = vld [vmem:[%s4683] sm:$0x1]
        %s4685 = scalar_lea.vmem %s57, 1
        %v4686 = vld [vmem:[%s4685] sm:$0x1]
        %s4687 = scalar_lea.vmem %s59, 32
        %v4688 = vld [vmem:[%s4687] sm:$0xff]
        %v4689 = vld [vmem:[%s4687 + $0x8] sm:$0xff]
        %v4690 = vld [vmem:[%s4687 + $0x10] sm:$0xff]
        %v4691 = vld [vmem:[%s4687 + $0x18] sm:$0xff]
        %s4692 = scalar_lea.vmem %s61, 32
        %v4693 = vld [vmem:[%s4692] sm:$0xff]
        %v4694 = vld [vmem:[%s4692 + $0x8] sm:$0xff]
        %v4695 = vld [vmem:[%s4692 + $0x10] sm:$0xff]
        %v4696 = vld [vmem:[%s4692 + $0x18] sm:$0xff]
        %s4697 = scalar_lea.vmem %s63, 32
        %v4698 = vld [vmem:[%s4697] sm:$0xff]
        %v4699 = vld [vmem:[%s4697 + $0x8] sm:$0xff]
        %v4700 = vld [vmem:[%s4697 + $0x10] sm:$0xff]
        %v4701 = vld [vmem:[%s4697 + $0x18] sm:$0xff]
        %s4702 = scalar_lea.vmem %s65, 32
        %v4703 = vld [vmem:[%s4702] sm:$0xff]
        %v4704 = vld [vmem:[%s4702 + $0x8] sm:$0xff]
        %v4705 = vld [vmem:[%s4702 + $0x10] sm:$0xff]
        %v4706 = vld [vmem:[%s4702 + $0x18] sm:$0xff]
        %s4707 = scalar_lea.vmem %s67, 1
        %v4708 = vld [vmem:[%s4707] sm:$0x1]
        %s4709 = scalar_lea.vmem %s69, 4
        %v4710 = vld [vmem:[%s4709] sm:$0x7]
        %s4711 = scalar_lea.vmem %s71, 1
        %v4712 = vld [vmem:[%s4711] sm:$0x1]
        %s4713 = scalar_lea.vmem %s73, 128
        %v4714 = vld [vmem:[%s4713] sm:$0xff]
        %v4715 = vld [vmem:[%s4713 + $0x8] sm:$0xff]
        %v4716 = vld [vmem:[%s4713 + $0x10] sm:$0xff]
        %v4717 = vld [vmem:[%s4713 + $0x18] sm:$0xff]
        %v4718 = vld [vmem:[%s4713 + $0x20] sm:$0xff]
        %v4719 = vld [vmem:[%s4713 + $0x28] sm:$0xff]
        %v4720 = vld [vmem:[%s4713 + $0x30] sm:$0xff]
        %v4721 = vld [vmem:[%s4713 + $0x38] sm:$0xff]
        %v4722 = vld [vmem:[%s4713 + $0x40] sm:$0xff]
        %v4723 = vld [vmem:[%s4713 + $0x48] sm:$0xff]
        %v4724 = vld [vmem:[%s4713 + $0x50] sm:$0xff]
        %v4725 = vld [vmem:[%s4713 + $0x58] sm:$0xff]
        %v4726 = vld [vmem:[%s4713 + $0x60] sm:$0xff]
        %v4727 = vld [vmem:[%s4713 + $0x68] sm:$0xff]
        %v4728 = vld [vmem:[%s4713 + $0x70] sm:$0xff]
        %v4729 = vld [vmem:[%s4713 + $0x78] sm:$0xff]
        %s4730 = scalar_lea.vmem %s75, 1
        %v4731 = vld [vmem:[%s4730] sm:$0x1]
        %s4732 = scalar_lea.vmem %s77, 32
        %v4733 = vld [vmem:[%s4732] sm:$0xff]
        %v4734 = vld [vmem:[%s4732 + $0x8] sm:$0xff]
        %v4735 = vld [vmem:[%s4732 + $0x10] sm:$0xff]
        %v4736 = vld [vmem:[%s4732 + $0x18] sm:$0xff]
        %s4737 = scalar_lea.vmem %s79, 1
        %v4738 = vld [vmem:[%s4737] sm:$0x1]
        %s4739 = scalar_lea.vmem %s81, 4
        %v4740 = vld [vmem:[%s4739] sm:$0x7]
        %s4741 = scalar_lea.vmem %s83, 1
        %v4742 = vld [vmem:[%s4741] sm:$0x1]
        %s4743 = scalar_lea.vmem %s85, 128
        %v4744 = vld [vmem:[%s4743] sm:$0xff]
        %v4745 = vld [vmem:[%s4743 + $0x8] sm:$0xff]
        %v4746 = vld [vmem:[%s4743 + $0x10] sm:$0xff]
        %v4747 = vld [vmem:[%s4743 + $0x18] sm:$0xff]
        %v4748 = vld [vmem:[%s4743 + $0x20] sm:$0xff]
        %v4749 = vld [vmem:[%s4743 + $0x28] sm:$0xff]
        %v4750 = vld [vmem:[%s4743 + $0x30] sm:$0xff]
        %v4751 = vld [vmem:[%s4743 + $0x38] sm:$0xff]
        %v4752 = vld [vmem:[%s4743 + $0x40] sm:$0xff]
        %v4753 = vld [vmem:[%s4743 + $0x48] sm:$0xff]
        %v4754 = vld [vmem:[%s4743 + $0x50] sm:$0xff]
        %v4755 = vld [vmem:[%s4743 + $0x58] sm:$0xff]
        %v4756 = vld [vmem:[%s4743 + $0x60] sm:$0xff]
        %v4757 = vld [vmem:[%s4743 + $0x68] sm:$0xff]
        %v4758 = vld [vmem:[%s4743 + $0x70] sm:$0xff]
        %v4759 = vld [vmem:[%s4743 + $0x78] sm:$0xff]
        %s4760 = scalar_lea.vmem %s87, 1
        %v4761 = vld [vmem:[%s4760] sm:$0x1]
        %s4762 = scalar_lea.vmem %s89, 32
        %v4763 = vld [vmem:[%s4762] sm:$0xff]
        %v4764 = vld [vmem:[%s4762 + $0x8] sm:$0xff]
        %v4765 = vld [vmem:[%s4762 + $0x10] sm:$0xff]
        %v4766 = vld [vmem:[%s4762 + $0x18] sm:$0xff]
        %s4767 = scalar_lea.vmem %s91, 1
        %v4768 = vld [vmem:[%s4767] sm:$0x1]
        %s4769 = scalar_lea.vmem %s93, 32
        %v4770 = vld [vmem:[%s4769] sm:$0xff]
        %v4771 = vld [vmem:[%s4769 + $0x8] sm:$0xff]
        %v4772 = vld [vmem:[%s4769 + $0x10] sm:$0xff]
        %v4773 = vld [vmem:[%s4769 + $0x18] sm:$0xff]
        %s4774 = scalar_lea.vmem %s95, 1
        %v4775 = vld [vmem:[%s4774] sm:$0x1]
        %v4776 = vsel %vm1626, %v4639, 0.0
        %4777 = vadd.xlane.f32.xlu0 %v4776
        %v4778 = vpop.xlane.xlu0 %4777
        %v4779 = vsel %vm1626, %v4640, 0.0
        %4780 = vadd.xlane.f32.xlu0 %v4779
        %v4781 = vpop.xlane.xlu0 %4780
        %v4782 = vsel %vm1626, %v4641, 0.0
        %4783 = vadd.xlane.f32.xlu0 %v4782
        %v4784 = vpop.xlane.xlu0 %4783
        %v4785 = vsel %vm1626, %v4642, 0.0
        %4786 = vadd.xlane.f32.xlu0 %v4785
        %v4787 = vpop.xlane.xlu0 %4786
        %v4788 = vsel %vm1639, %v4643, 0.0
        %4789 = vadd.xlane.f32.xlu0 %v4788
        %v4790 = vpop.xlane.xlu0 %4789
        %v4791 = vmul.f32 %v4778, %v1643
        %v4792 = vmul.f32 %v4781, %v1643
        %v4793 = vmul.f32 %v4784, %v1643
        %v4794 = vmul.f32 %v4787, %v1643
        %v4795 = vmul.f32 %v4790, %v1643
        %v4796 = vsub.f32 %v4639, %v4791
        %v4797 = vsub.f32 %v4640, %v4792
        %v4798 = vsub.f32 %v4641, %v4793
        %v4799 = vsub.f32 %v4642, %v4794
        %v4800 = vsub.f32 %v4643, %v4795
        %v4801 = vmul.f32 %v4796, %v4796
        %v4802 = vmul.f32 %v4797, %v4797
        %v4803 = vmul.f32 %v4798, %v4798
        %v4804 = vmul.f32 %v4799, %v4799
        %v4805 = vmul.f32 %v4800, %v4800
        %v4806 = vsel %vm1626, %v4801, 0.0
        %4807 = vadd.xlane.f32.xlu0 %v4806
        %v4808 = vpop.xlane.xlu0 %4807
        %v4809 = vsel %vm1626, %v4802, 0.0
        %4810 = vadd.xlane.f32.xlu0 %v4809
        %v4811 = vpop.xlane.xlu0 %4810
        %v4812 = vsel %vm1626, %v4803, 0.0
        %4813 = vadd.xlane.f32.xlu0 %v4812
        %v4814 = vpop.xlane.xlu0 %4813
        %v4815 = vsel %vm1626, %v4804, 0.0
        %4816 = vadd.xlane.f32.xlu0 %v4815
        %v4817 = vpop.xlane.xlu0 %4816
        %v4818 = vsel %vm1639, %v4805, 0.0
        %4819 = vadd.xlane.f32.xlu0 %v4818
        %v4820 = vpop.xlane.xlu0 %4819
        %v4821 = vmul.f32 %v4808, %v1643
        %v4822 = vmul.f32 %v4811, %v1643
        %v4823 = vmul.f32 %v4814, %v1643
        %v4824 = vmul.f32 %v4817, %v1643
        %v4825 = vmul.f32 %v4820, %v1643
        %v4826 = vadd.f32 %v4821, 1e-05
        %v4827 = vadd.f32 %v4822, 1e-05
        %v4828 = vadd.f32 %v4823, 1e-05
        %v4829 = vadd.f32 %v4824, 1e-05
        %v4830 = vadd.f32 %v4825, 1e-05
        %v4831 = vrsqrt.pop %v4826
        %v4832 = vrsqrt.pop %v4827
        %v4833 = vrsqrt.pop %v4828
        %v4834 = vrsqrt.pop %v4829
        %v4835 = vrsqrt.pop %v4830
        %v4836 = vmul.f32 %v4796, %v4831
        %v4837 = vmul.f32 %v4797, %v4832
        %v4838 = vmul.f32 %v4798, %v4833
        %v4839 = vmul.f32 %v4799, %v4834
        %v4840 = vmul.f32 %v4800, %v4835
        %v4842 = vlaneseq
        %v4843 = vshrl.u32 %v4842, 7
        %v4844 = vsub.s32 0, %v4843
        %v4845 = vrot.slane %v4645, %v4844
        %v4847 = vmul.f32 %v4836, %v4845
        %v4848 = vmul.f32 %v4837, %v4845
        %v4849 = vmul.f32 %v4838, %v4845
        %v4850 = vmul.f32 %v4839, %v4845
        %v4851 = vmul.f32 %v4840, %v4845
        %v4853 = vlaneseq
        %v4854 = vshrl.u32 %v4853, 7
        %v4855 = vsub.s32 0, %v4854
        %v4856 = vrot.slane %v4647, %v4855
        %v4858 = vadd.f32 %v4847, %v4856
        %v4859 = vadd.f32 %v4848, %v4856
        %v4860 = vadd.f32 %v4849, %v4856
        %v4861 = vadd.f32 %v4850, %v4856
        %v4862 = vadd.f32 %v4851, %v4856
        %v4868 = vrot.slane %v4858, 6
        %v4869 = vrot.slane %v4859, 6
        %v4870 = vsel %vm1721, %v4868, %v4869
        %v4871 = vrot.slane %v4860, 6
        %v4872 = vsel %vm1721, %v4869, %v4871
        %v4873 = vrot.slane %v4861, 6
        %v4874 = vsel %vm1721, %v4871, %v4873
        %v4875 = vrot.slane %v4862, 6
        %v4876 = vsel %vm1721, %v4873, %v4875
        %v4882 = vsel %vm1736, 0.0, %v4868
        %v4883 = vsel %vm1736, %v4876, 0.0
        %v4884 = vlaneseq
        %v4885 = vshrl.u32 %v4884, 7
        %v4886 = vsub.s32 0, %v4885
        %v4887 = vrot.slane %v4661, %v4886
        %v4888 = vmul.f32 %v4882, %v4887
        %v4889 = vmul.f32 %v4870, %v4887
        %v4890 = vmul.f32 %v4872, %v4887
        %v4891 = vmul.f32 %v4874, %v4887
        %v4892 = vlaneseq
        %v4893 = vshrl.u32 %v4892, 7
        %v4894 = vsub.s32 1, %v4893
        %v4895 = vrot.slane %v4661, %v4894
        %v4896 = vmul.f32 %v4882, %v4895
        %v4897 = vmul.f32 %v4870, %v4895
        %v4898 = vmul.f32 %v4872, %v4895
        %v4899 = vmul.f32 %v4874, %v4895
        %v4900 = vmul.f32 %v4883, %v4895
        %v4906 = vrot.slane %v4896, 1
        %v4907 = vrot.slane %v4897, 1
        %v4908 = vsel %vm1761, %v4906, %v4907
        %v4909 = vrot.slane %v4898, 1
        %v4910 = vsel %vm1761, %v4907, %v4909
        %v4911 = vrot.slane %v4899, 1
        %v4912 = vsel %vm1761, %v4909, %v4911
        %v4913 = vrot.slane %v4900, 1
        %v4914 = vsel %vm1761, %v4911, %v4913
        %v4919 = vadd.f32 %v4888, %v4908
        %v4920 = vadd.f32 %v4889, %v4910
        %v4921 = vadd.f32 %v4890, %v4912
        %v4922 = vadd.f32 %v4891, %v4914
        %v4923 = vlaneseq
        %v4924 = vshrl.u32 %v4923, 7
        %v4925 = vsub.s32 2, %v4924
        %v4926 = vrot.slane %v4661, %v4925
        %v4927 = vmul.f32 %v4882, %v4926
        %v4928 = vmul.f32 %v4870, %v4926
        %v4929 = vmul.f32 %v4872, %v4926
        %v4930 = vmul.f32 %v4874, %v4926
        %v4931 = vmul.f32 %v4883, %v4926
        %v4937 = vrot.slane %v4927, 2
        %v4938 = vrot.slane %v4928, 2
        %v4939 = vsel %vm1793, %v4937, %v4938
        %v4940 = vrot.slane %v4929, 2
        %v4941 = vsel %vm1793, %v4938, %v4940
        %v4942 = vrot.slane %v4930, 2
        %v4943 = vsel %vm1793, %v4940, %v4942
        %v4944 = vrot.slane %v4931, 2
        %v4945 = vsel %vm1793, %v4942, %v4944
        %v4950 = vadd.f32 %v4919, %v4939
        %v4951 = vadd.f32 %v4920, %v4941
        %v4952 = vadd.f32 %v4921, %v4943
        %v4953 = vadd.f32 %v4922, %v4945
        %v4954 = vlaneseq
        %v4955 = vshrl.u32 %v4954, 7
        %v4956 = vsub.s32 3, %v4955
        %v4957 = vrot.slane %v4661, %v4956
        %v4958 = vmul.f32 %v4882, %v4957
        %v4959 = vmul.f32 %v4870, %v4957
        %v4960 = vmul.f32 %v4872, %v4957
        %v4961 = vmul.f32 %v4874, %v4957
        %v4962 = vmul.f32 %v4883, %v4957
        %v4968 = vrot.slane %v4958, 3
        %v4969 = vrot.slane %v4959, 3
        %v4970 = vsel %vm1825, %v4968, %v4969
        %v4971 = vrot.slane %v4960, 3
        %v4972 = vsel %vm1825, %v4969, %v4971
        %v4973 = vrot.slane %v4961, 3
        %v4974 = vsel %vm1825, %v4971, %v4973
        %v4975 = vrot.slane %v4962, 3
        %v4976 = vsel %vm1825, %v4973, %v4975
        %v4981 = vadd.f32 %v4950, %v4970
        %v4982 = vadd.f32 %v4951, %v4972
        %v4983 = vadd.f32 %v4952, %v4974
        %v4984 = vadd.f32 %v4953, %v4976
        %v4985 = vlaneseq
        %v4986 = vshrl.u32 %v4985, 7
        %v4987 = vsub.s32 4, %v4986
        %v4988 = vrot.slane %v4661, %v4987
        %v4989 = vmul.f32 %v4882, %v4988
        %v4990 = vmul.f32 %v4870, %v4988
        %v4991 = vmul.f32 %v4872, %v4988
        %v4992 = vmul.f32 %v4874, %v4988
        %v4993 = vmul.f32 %v4883, %v4988
        %v4999 = vrot.slane %v4989, 4
        %v5000 = vrot.slane %v4990, 4
        %v5001 = vsel %vm1857, %v4999, %v5000
        %v5002 = vrot.slane %v4991, 4
        %v5003 = vsel %vm1857, %v5000, %v5002
        %v5004 = vrot.slane %v4992, 4
        %v5005 = vsel %vm1857, %v5002, %v5004
        %v5006 = vrot.slane %v4993, 4
        %v5007 = vsel %vm1857, %v5004, %v5006
        %v5012 = vadd.f32 %v4981, %v5001
        %v5013 = vadd.f32 %v4982, %v5003
        %v5014 = vadd.f32 %v4983, %v5005
        %v5015 = vadd.f32 %v4984, %v5007
        %v5016 = vlaneseq
        %v5017 = vshrl.u32 %v5016, 7
        %v5018 = vsub.s32 5, %v5017
        %v5019 = vrot.slane %v4661, %v5018
        %v5020 = vmul.f32 %v4882, %v5019
        %v5021 = vmul.f32 %v4870, %v5019
        %v5022 = vmul.f32 %v4872, %v5019
        %v5023 = vmul.f32 %v4874, %v5019
        %v5024 = vmul.f32 %v4883, %v5019
        %v5030 = vrot.slane %v5020, 5
        %v5031 = vrot.slane %v5021, 5
        %v5032 = vsel %vm1736, %v5030, %v5031
        %v5033 = vrot.slane %v5022, 5
        %v5034 = vsel %vm1736, %v5031, %v5033
        %v5035 = vrot.slane %v5023, 5
        %v5036 = vsel %vm1736, %v5033, %v5035
        %v5037 = vrot.slane %v5024, 5
        %v5038 = vsel %vm1736, %v5035, %v5037
        %v5043 = vadd.f32 %v5012, %v5032
        %v5044 = vadd.f32 %v5013, %v5034
        %v5045 = vadd.f32 %v5014, %v5036
        %v5046 = vadd.f32 %v5015, %v5038
        %v5047 = vlaneseq
        %v5048 = vshrl.u32 %v5047, 7
        %v5049 = vsub.s32 6, %v5048
        %v5050 = vrot.slane %v4661, %v5049
        %v5051 = vmul.f32 %v4882, %v5050
        %v5052 = vmul.f32 %v4870, %v5050
        %v5053 = vmul.f32 %v4872, %v5050
        %v5054 = vmul.f32 %v4874, %v5050
        %v5055 = vmul.f32 %v4883, %v5050
        %v5061 = vrot.slane %v5051, 6
        %v5062 = vrot.slane %v5052, 6
        %v5063 = vsel %vm1721, %v5061, %v5062
        %v5064 = vrot.slane %v5053, 6
        %v5065 = vsel %vm1721, %v5062, %v5064
        %v5066 = vrot.slane %v5054, 6
        %v5067 = vsel %vm1721, %v5064, %v5066
        %v5068 = vrot.slane %v5055, 6
        %v5069 = vsel %vm1721, %v5066, %v5068
        %v5074 = vadd.f32 %v5043, %v5063
        %v5075 = vadd.f32 %v5044, %v5065
        %v5076 = vadd.f32 %v5045, %v5067
        %v5077 = vadd.f32 %v5046, %v5069
        %v5079 = vlaneseq
        %v5080 = vshrl.u32 %v5079, 7
        %v5081 = vsub.s32 0, %v5080
        %v5082 = vrot.slane %v4663, %v5081
        %5084 = vmatprep.subr.mxu0 0.0
        %5085 = vmatpush1.msra.mxu0 %v5074
        %5086 = vmatprep.subr.mxu0 0.0
        %5087 = vmatpush1.msra.mxu0 %v5075
        %5088 = vmatprep.subr.mxu0 0.0
        %5089 = vmatpush1.msra.mxu0 %v5076
        %5090 = vmatprep.subr.mxu0 0.0
        %5091 = vmatpush1.msra.mxu0 %v5077
        %5092 = vmatprep.subr.mxu0 0.0
        %5093 = vmatpush1.msra.mxu0 0.0
        %5094 = vmatprep.subr.mxu0 0.0
        %5095 = vmatpush1.msra.mxu0 0.0
        %5096 = vmatprep.subr.mxu0 0.0
        %5097 = vmatpush1.msra.mxu0 0.0
        %5098 = vmatprep.subr.mxu0 0.0
        %5099 = vmatpush1.msra.mxu0 0.0
        %5100 = vmatprep.subr.mxu0 0.0
        %5101 = vmatpush1.msra.mxu0 0.0
        %5102 = vmatprep.subr.mxu0 0.0
        %5103 = vmatpush1.msra.mxu0 0.0
        %5104 = vmatprep.subr.mxu0 0.0
        %5105 = vmatpush1.msra.mxu0 0.0
        %5106 = vmatprep.subr.mxu0 0.0
        %5107 = vmatpush1.msra.mxu0 0.0
        %5108 = vmatprep.subr.mxu0 0.0
        %5109 = vmatpush1.msra.mxu0 0.0
        %5110 = vmatprep.subr.mxu0 0.0
        %5111 = vmatpush1.msra.mxu0 0.0
        %5112 = vmatprep.subr.mxu0 0.0
        %5113 = vmatpush1.msra.mxu0 0.0
        %5114 = vmatprep.subr.mxu0 0.0
        %5115 = vmatpush1.msra.mxu0 0.0
        %5116 = vmatprep.subr.mxu0 0.0
        %5117 = vmatpush1.msra.mxu0 0.0
        %5118 = vmatprep.subr.mxu0 0.0
        %5119 = vmatpush1.msra.mxu0 0.0
        %5120 = vmatprep.subr.mxu0 0.0
        %5121 = vmatpush1.msra.mxu0 0.0
        %5122 = vmatprep.subr.mxu0 0.0
        %5123 = vmatpush1.msra.mxu0 0.0
        %5124 = vmatprep.subr.mxu0 0.0
        %5125 = vmatpush1.msra.mxu0 0.0
        %5126 = vmatprep.subr.mxu0 0.0
        %5127 = vmatpush1.msra.mxu0 0.0
        %5128 = vmatprep.subr.mxu0 0.0
        %5129 = vmatpush1.msra.mxu0 0.0
        %5130 = vmatprep.subr.mxu0 0.0
        %5131 = vmatpush1.msra.mxu0 0.0
        %5132 = vmatprep.subr.mxu0 0.0
        %5133 = vmatpush1.msra.mxu0 0.0
        %5134 = vmatprep.subr.mxu0 0.0
        %5135 = vmatpush1.msra.mxu0 0.0
        %5136 = vmatprep.subr.mxu0 0.0
        %5137 = vmatpush1.msra.mxu0 0.0
        %5138 = vmatprep.subr.mxu0 0.0
        %5139 = vmatpush1.msra.mxu0 0.0
        %5140 = vmatprep.subr.mxu0 0.0
        %5141 = vmatpush1.msra.mxu0 0.0
        %5142 = vmatprep.subr.mxu0 0.0
        %5143 = vmatpush1.msra.mxu0 0.0
        %5144 = vmatprep.subr.mxu0 0.0
        %5145 = vmatpush1.msra.mxu0 0.0
        %5146 = vmatprep.subr.mxu0 0.0
        %5147 = vmatpush1.msra.mxu0 0.0
        %5148 = vmatprep.mubr.f32.mxu0 0.0
        %5149 = vmatmul.mubr.f32.gmra.mrb[0].mxu0 %v1944
        %v5150 = vpop.f32.mrb[0].mxu0
        %v5151 = vadd.f32 %v5082, %v5150
        %v5152 = vpop.f32.mrb[0].mxu0
        %5153 = vdwg.mxu0
        %v5154 = vpack.c.bf16 %v5151, %v5151
        %v5155 = vpack.c.bf16 %v4666, %v4665
        %v5156 = vpack.c.bf16 %v4668, %v4667
        %v5158 = vlaneseq
        %v5159 = vshrl.u32 %v5158, 7
        %v5160 = vsub.s32 0, %v5159
        %v5161 = vrot.slane %v4670, %v5160
        %v5164 = vsel %vm1626, %v5154, 0
        %5166 = vmatprep.subr.bf16.mxu0 0
        %5167 = vmatpush1.bf16.msra.mxu0 %v5155
        %5168 = vmatprep.subr.bf16.mxu0 0
        %5169 = vmatpush1.bf16.msra.mxu0 %v5156
        %5170 = vmatprep.subr.bf16.mxu0 0
        %5171 = vmatpush1.bf16.msra.mxu0 0
        %5172 = vmatprep.subr.bf16.mxu0 0
        %5173 = vmatpush1.bf16.msra.mxu0 0
        %5174 = vmatprep.subr.bf16.mxu0 0
        %5175 = vmatpush1.bf16.msra.mxu0 0
        %5176 = vmatprep.subr.bf16.mxu0 0
        %5177 = vmatpush1.bf16.msra.mxu0 0
        %5178 = vmatprep.subr.bf16.mxu0 0
        %5179 = vmatpush1.bf16.msra.mxu0 0
        %5180 = vmatprep.subr.bf16.mxu0 0
        %5181 = vmatpush1.bf16.msra.mxu0 0
        %5182 = vmatprep.subr.bf16.mxu0 0
        %5183 = vmatpush1.bf16.msra.mxu0 0
        %5184 = vmatprep.subr.bf16.mxu0 0
        %5185 = vmatpush1.bf16.msra.mxu0 0
        %5186 = vmatprep.subr.bf16.mxu0 0
        %5187 = vmatpush1.bf16.msra.mxu0 0
        %5188 = vmatprep.subr.bf16.mxu0 0
        %5189 = vmatpush1.bf16.msra.mxu0 0
        %5190 = vmatprep.subr.bf16.mxu0 0
        %5191 = vmatpush1.bf16.msra.mxu0 0
        %5192 = vmatprep.subr.bf16.mxu0 0
        %5193 = vmatpush1.bf16.msra.mxu0 0
        %5194 = vmatprep.subr.bf16.mxu0 0
        %5195 = vmatpush1.bf16.msra.mxu0 0
        %5196 = vmatprep.subr.bf16.mxu0 0
        %5197 = vmatpush1.bf16.msra.mxu0 0
        %5198 = vmatprep.mubr.bf16.mxu0 0
        %5199 = vmatmul.mubr.bf16.gmra.mrb[0].mxu0 %v5164
        %v5200 = vpop.f32.mrb[0].mxu0
        %v5201 = vadd.f32 %v5161, %v5200
        %v5202 = vpop.f32.mrb[0].mxu0
        %v5203 = vpop.f32.mrb[0].mxu0
        %v5204 = vpop.f32.mrb[0].mxu0
        %5205 = vdwg.mxu0
        %v5206 = vsel %vm1626, %v5201, 0.0
        %5207 = vadd.xlane.f32.xlu0 %v5206
        %v5208 = vpop.xlane.xlu0 %5207
        %v5209 = vmul.f32 %v5208, %v1643
        %v5210 = vsub.f32 %v5201, %v5209
        %v5211 = vmul.f32 %v5210, %v5210
        %v5212 = vsel %vm1626, %v5211, 0.0
        %5213 = vadd.xlane.f32.xlu0 %v5212
        %v5214 = vpop.xlane.xlu0 %5213
        %v5215 = vmul.f32 %v5214, %v1643
        %v5216 = vadd.f32 %v5215, 1e-05
        %v5217 = vrsqrt.pop %v5216
        %v5218 = vmul.f32 %v5210, %v5217
        %v5220 = vlaneseq
        %v5221 = vshrl.u32 %v5220, 7
        %v5222 = vsub.s32 0, %v5221
        %v5223 = vrot.slane %v4672, %v5222
        %v5225 = vmul.f32 %v5218, %v5223
        %v5227 = vlaneseq
        %v5228 = vshrl.u32 %v5227, 7
        %v5229 = vsub.s32 0, %v5228
        %v5230 = vrot.slane %v4674, %v5229
        %v5232 = vadd.f32 %v5225, %v5230
        %v5234 = vrot.slane %v5232, 7
        %v5236 = vsel %vm1452, %v4858, %v5234
        %v5237 = vpack.c.bf16 %v4859, %v4858
        %v5238 = vpack.c.bf16 %v4861, %v4860
        %v5239 = vpack.c.bf16 %v4862, %v4862
        %v5240 = vpack.c.bf16 %v4689, %v4688
        %v5241 = vpack.c.bf16 %v4691, %v4690
        %v5243 = vsel %vm1626, %v5237, 0
        %v5246 = vsel %vm1626, %v5238, 0
        %v5249 = vsel %vm1626, %v5239, 0
        %5251 = vmatprep.subr.bf16.mxu0 0
        %5252 = vmatpush1.bf16.msra.mxu0 %v5240
        %5253 = vmatprep.subr.bf16.mxu0 0
        %5254 = vmatpush1.bf16.msra.mxu0 %v5241
        %5255 = vmatprep.subr.bf16.mxu0 0
        %5256 = vmatpush1.bf16.msra.mxu0 0
        %5257 = vmatprep.subr.bf16.mxu0 0
        %5258 = vmatpush1.bf16.msra.mxu0 0
        %5259 = vmatprep.subr.bf16.mxu0 0
        %5260 = vmatpush1.bf16.msra.mxu0 0
        %5261 = vmatprep.subr.bf16.mxu0 0
        %5262 = vmatpush1.bf16.msra.mxu0 0
        %5263 = vmatprep.subr.bf16.mxu0 0
        %5264 = vmatpush1.bf16.msra.mxu0 0
        %5265 = vmatprep.subr.bf16.mxu0 0
        %5266 = vmatpush1.bf16.msra.mxu0 0
        %5267 = vmatprep.subr.bf16.mxu0 0
        %5268 = vmatpush1.bf16.msra.mxu0 0
        %5269 = vmatprep.subr.bf16.mxu0 0
        %5270 = vmatpush1.bf16.msra.mxu0 0
        %5271 = vmatprep.subr.bf16.mxu0 0
        %5272 = vmatpush1.bf16.msra.mxu0 0
        %5273 = vmatprep.subr.bf16.mxu0 0
        %5274 = vmatpush1.bf16.msra.mxu0 0
        %5275 = vmatprep.subr.bf16.mxu0 0
        %5276 = vmatpush1.bf16.msra.mxu0 0
        %5277 = vmatprep.subr.bf16.mxu0 0
        %5278 = vmatpush1.bf16.msra.mxu0 0
        %5279 = vmatprep.subr.bf16.mxu0 0
        %5280 = vmatpush1.bf16.msra.mxu0 0
        %5281 = vmatprep.subr.bf16.mxu0 0
        %5282 = vmatpush1.bf16.msra.mxu0 0
        %5283 = vmatprep.mubr.bf16.mxu0 0
        %5284 = vmatmul.mubr.bf16.gmra.mrb[0].mxu0 %v5243
        %v5285 = vpop.f32.mrb[0].mxu0
        %v5286 = vadd.f32 0.0, %v5285
        %v5287 = vpop.f32.mrb[0].mxu0
        %v5288 = vpop.f32.mrb[0].mxu0
        %v5289 = vadd.f32 0.0, %v5288
        %v5290 = vpop.f32.mrb[0].mxu0
        %5291 = vmatprep.mubr.bf16.mxu0 0
        %5292 = vmatmul.mubr.bf16.gmra.mrb[0].mxu0 %v5246
        %v5293 = vpop.f32.mrb[0].mxu0
        %v5294 = vadd.f32 0.0, %v5293
        %v5295 = vpop.f32.mrb[0].mxu0
        %v5296 = vpop.f32.mrb[0].mxu0
        %v5297 = vadd.f32 0.0, %v5296
        %v5298 = vpop.f32.mrb[0].mxu0
        %5299 = vmatprep.mubr.bf16.mxu0 0
        %5300 = vmatmul.mubr.bf16.gmra.mrb[0].mxu0 %v5249
        %v5301 = vpop.f32.mrb[0].mxu0
        %v5302 = vadd.f32 0.0, %v5301
        %v5303 = vpop.f32.mrb[0].mxu0
        %v5304 = vpop.f32.mrb[0].mxu0
        %v5305 = vpop.f32.mrb[0].mxu0
        %5306 = vdwg.mxu0
        %v5307 = vsel %vm1626, %v5286, 0.0
        %5308 = vadd.xlane.f32.xlu0 %v5307
        %v5309 = vpop.xlane.xlu0 %5308
        %v5310 = vsel %vm1626, %v5289, 0.0
        %5311 = vadd.xlane.f32.xlu0 %v5310
        %v5312 = vpop.xlane.xlu0 %5311
        %v5313 = vsel %vm1626, %v5294, 0.0
        %5314 = vadd.xlane.f32.xlu0 %v5313
        %v5315 = vpop.xlane.xlu0 %5314
        %v5316 = vsel %vm1626, %v5297, 0.0
        %5317 = vadd.xlane.f32.xlu0 %v5316
        %v5318 = vpop.xlane.xlu0 %5317
        %v5319 = vsel %vm1639, %v5302, 0.0
        %5320 = vadd.xlane.f32.xlu0 %v5319
        %v5321 = vpop.xlane.xlu0 %5320
        %v5322 = vmul.f32 %v5309, %v1643
        %v5323 = vmul.f32 %v5312, %v1643
        %v5324 = vmul.f32 %v5315, %v1643
        %v5325 = vmul.f32 %v5318, %v1643
        %v5326 = vmul.f32 %v5321, %v1643
        %v5327 = vsub.f32 %v5286, %v5322
        %v5328 = vsub.f32 %v5289, %v5323
        %v5329 = vsub.f32 %v5294, %v5324
        %v5330 = vsub.f32 %v5297, %v5325
        %v5331 = vsub.f32 %v5302, %v5326
        %v5332 = vmul.f32 %v5327, %v5327
        %v5333 = vmul.f32 %v5328, %v5328
        %v5334 = vmul.f32 %v5329, %v5329
        %v5335 = vmul.f32 %v5330, %v5330
        %v5336 = vmul.f32 %v5331, %v5331
        %v5337 = vsel %vm1626, %v5332, 0.0
        %5338 = vadd.xlane.f32.xlu0 %v5337
        %v5339 = vpop.xlane.xlu0 %5338
        %v5340 = vsel %vm1626, %v5333, 0.0
        %5341 = vadd.xlane.f32.xlu0 %v5340
        %v5342 = vpop.xlane.xlu0 %5341
        %v5343 = vsel %vm1626, %v5334, 0.0
        %5344 = vadd.xlane.f32.xlu0 %v5343
        %v5345 = vpop.xlane.xlu0 %5344
        %v5346 = vsel %vm1626, %v5335, 0.0
        %5347 = vadd.xlane.f32.xlu0 %v5346
        %v5348 = vpop.xlane.xlu0 %5347
        %v5349 = vsel %vm1639, %v5336, 0.0
        %5350 = vadd.xlane.f32.xlu0 %v5349
        %v5351 = vpop.xlane.xlu0 %5350
        %v5352 = vmul.f32 %v5339, %v1643
        %v5353 = vmul.f32 %v5342, %v1643
        %v5354 = vmul.f32 %v5345, %v1643
        %v5355 = vmul.f32 %v5348, %v1643
        %v5356 = vmul.f32 %v5351, %v1643
        %v5357 = vadd.f32 %v5352, 1e-05
        %v5358 = vadd.f32 %v5353, 1e-05
        %v5359 = vadd.f32 %v5354, 1e-05
        %v5360 = vadd.f32 %v5355, 1e-05
        %v5361 = vadd.f32 %v5356, 1e-05
        %v5362 = vrsqrt.pop %v5357
        %v5363 = vrsqrt.pop %v5358
        %v5364 = vrsqrt.pop %v5359
        %v5365 = vrsqrt.pop %v5360
        %v5366 = vrsqrt.pop %v5361
        %v5367 = vmul.f32 %v5327, %v5362
        %v5368 = vmul.f32 %v5328, %v5363
        %v5369 = vmul.f32 %v5329, %v5364
        %v5370 = vmul.f32 %v5330, %v5365
        %v5371 = vmul.f32 %v5331, %v5366
        %v5373 = vlaneseq
        %v5374 = vshrl.u32 %v5373, 7
        %v5375 = vsub.s32 0, %v5374
        %v5376 = vrot.slane %v4676, %v5375
        %v5378 = vmul.f32 %v5367, %v5376
        %v5379 = vmul.f32 %v5368, %v5376
        %v5380 = vmul.f32 %v5369, %v5376
        %v5381 = vmul.f32 %v5370, %v5376
        %v5382 = vmul.f32 %v5371, %v5376
        %v5384 = vlaneseq
        %v5385 = vshrl.u32 %v5384, 7
        %v5386 = vsub.s32 0, %v5385
        %v5387 = vrot.slane %v4678, %v5386
        %v5389 = vadd.f32 %v5378, %v5387
        %v5390 = vadd.f32 %v5379, %v5387
        %v5391 = vadd.f32 %v5380, %v5387
        %v5392 = vadd.f32 %v5381, %v5387
        %v5393 = vadd.f32 %v5382, %v5387
        %v5394 = vpack.c.bf16 %v5234, %v5236
        %v5395 = vpack.c.bf16 %v4694, %v4693
        %v5396 = vpack.c.bf16 %v4696, %v4695
        %v5398 = vsel %vm1626, %v5394, 0
        %5400 = vmatprep.subr.bf16.mxu0 0
        %5401 = vmatpush1.bf16.msra.mxu0 %v5395
        %5402 = vmatprep.subr.bf16.mxu0 0
        %5403 = vmatpush1.bf16.msra.mxu0 %v5396
        %5404 = vmatprep.subr.bf16.mxu0 0
        %5405 = vmatpush1.bf16.msra.mxu0 0
        %5406 = vmatprep.subr.bf16.mxu0 0
        %5407 = vmatpush1.bf16.msra.mxu0 0
        %5408 = vmatprep.subr.bf16.mxu0 0
        %5409 = vmatpush1.bf16.msra.mxu0 0
        %5410 = vmatprep.subr.bf16.mxu0 0
        %5411 = vmatpush1.bf16.msra.mxu0 0
        %5412 = vmatprep.subr.bf16.mxu0 0
        %5413 = vmatpush1.bf16.msra.mxu0 0
        %5414 = vmatprep.subr.bf16.mxu0 0
        %5415 = vmatpush1.bf16.msra.mxu0 0
        %5416 = vmatprep.subr.bf16.mxu0 0
        %5417 = vmatpush1.bf16.msra.mxu0 0
        %5418 = vmatprep.subr.bf16.mxu0 0
        %5419 = vmatpush1.bf16.msra.mxu0 0
        %5420 = vmatprep.subr.bf16.mxu0 0
        %5421 = vmatpush1.bf16.msra.mxu0 0
        %5422 = vmatprep.subr.bf16.mxu0 0
        %5423 = vmatpush1.bf16.msra.mxu0 0
        %5424 = vmatprep.subr.bf16.mxu0 0
        %5425 = vmatpush1.bf16.msra.mxu0 0
        %5426 = vmatprep.subr.bf16.mxu0 0
        %5427 = vmatpush1.bf16.msra.mxu0 0
        %5428 = vmatprep.subr.bf16.mxu0 0
        %5429 = vmatpush1.bf16.msra.mxu0 0
        %5430 = vmatprep.subr.bf16.mxu0 0
        %5431 = vmatpush1.bf16.msra.mxu0 0
        %5432 = vmatprep.mubr.bf16.mxu0 0
        %5433 = vmatmul.mubr.bf16.gmra.mrb[0].mxu0 %v5398
        %v5434 = vpop.f32.mrb[0].mxu0
        %v5435 = vadd.f32 0.0, %v5434
        %v5436 = vpop.f32.mrb[0].mxu0
        %v5437 = vpop.f32.mrb[0].mxu0
        %v5438 = vadd.f32 0.0, %v5437
        %v5439 = vpop.f32.mrb[0].mxu0
        %5440 = vdwg.mxu0
        %v5441 = vsel %vm1626, %v5435, 0.0
        %5442 = vadd.xlane.f32.xlu0 %v5441
        %v5443 = vpop.xlane.xlu0 %5442
        %v5444 = vsel %vm1639, %v5438, 0.0
        %5445 = vadd.xlane.f32.xlu0 %v5444
        %v5446 = vpop.xlane.xlu0 %5445
        %v5447 = vmul.f32 %v5443, %v1643
        %v5448 = vmul.f32 %v5446, %v1643
        %v5449 = vsub.f32 %v5435, %v5447
        %v5450 = vsub.f32 %v5438, %v5448
        %v5451 = vmul.f32 %v5449, %v5449
        %v5452 = vmul.f32 %v5450, %v5450
        %v5453 = vsel %vm1626, %v5451, 0.0
        %5454 = vadd.xlane.f32.xlu0 %v5453
        %v5455 = vpop.xlane.xlu0 %5454
        %v5456 = vsel %vm1639, %v5452, 0.0
        %5457 = vadd.xlane.f32.xlu0 %v5456
        %v5458 = vpop.xlane.xlu0 %5457
        %v5459 = vmul.f32 %v5455, %v1643
        %v5460 = vmul.f32 %v5458, %v1643
        %v5461 = vadd.f32 %v5459, 1e-05
        %v5462 = vadd.f32 %v5460, 1e-05
        %v5463 = vrsqrt.pop %v5461
        %v5464 = vrsqrt.pop %v5462
        %v5465 = vmul.f32 %v5449, %v5463
        %v5466 = vmul.f32 %v5450, %v5464
        %v5468 = vlaneseq
        %v5469 = vshrl.u32 %v5468, 7
        %v5470 = vsub.s32 0, %v5469
        %v5471 = vrot.slane %v4680, %v5470
        %v5473 = vmul.f32 %v5465, %v5471
        %v5474 = vmul.f32 %v5466, %v5471
        %v5476 = vlaneseq
        %v5477 = vshrl.u32 %v5476, 7
        %v5478 = vsub.s32 0, %v5477
        %v5479 = vrot.slane %v4682, %v5478
        %v5481 = vadd.f32 %v5473, %v5479
        %v5482 = vadd.f32 %v5474, %v5479
        %5485 = vrot.lane.b32.xlu0 %v5435, 96
        %v5486 = vpop.permute.xlu0 %5485
        %5487 = vrot.lane.b32.xlu0 %v5438, 96
        %v5488 = vpop.permute.xlu0 %5487
        %v5491 = vsel %vm1626, %v5486, 0.0
        %5492 = vadd.xlane.f32.xlu0 %v5491
        %v5493 = vpop.xlane.xlu0 %5492
        %v5494 = vsel %vm1639, %v5488, 0.0
        %5495 = vadd.xlane.f32.xlu0 %v5494
        %v5496 = vpop.xlane.xlu0 %5495
        %v5497 = vmul.f32 %v5493, %v1643
        %v5498 = vmul.f32 %v5496, %v1643
        %v5499 = vsub.f32 %v5435, %v5497
        %v5500 = vsub.f32 %v5438, %v5498
        %v5501 = vmul.f32 %v5499, %v5499
        %v5502 = vmul.f32 %v5500, %v5500
        %5505 = vrot.lane.b32.xlu0 %v5501, 96
        %v5506 = vpop.permute.xlu0 %5505
        %5507 = vrot.lane.b32.xlu0 %v5502, 96
        %v5508 = vpop.permute.xlu0 %5507
        %v5511 = vsel %vm1626, %v5506, 0.0
        %5512 = vadd.xlane.f32.xlu0 %v5511
        %v5513 = vpop.xlane.xlu0 %5512
        %v5514 = vsel %vm1639, %v5508, 0.0
        %5515 = vadd.xlane.f32.xlu0 %v5514
        %v5516 = vpop.xlane.xlu0 %5515
        %v5517 = vmul.f32 %v5513, %v1643
        %v5518 = vmul.f32 %v5516, %v1643
        %v5519 = vadd.f32 %v5517, 1e-05
        %v5520 = vadd.f32 %v5518, 1e-05
        %v5521 = vrsqrt.pop %v5519
        %v5522 = vrsqrt.pop %v5520
        %v5523 = vmul.f32 %v5499, %v5521
        %v5524 = vmul.f32 %v5500, %v5522
        %v5526 = vlaneseq
        %v5527 = vshrl.u32 %v5526, 7
        %v5528 = vsub.s32 0, %v5527
        %v5529 = vrot.slane %v4684, %v5528
        %5530 = vrot.lane.b32.xlu0 %v5529, 32
        %v5531 = vpop.permute.xlu0 %5530
        %v5533 = vmul.f32 %v5523, %v5531
        %v5534 = vmul.f32 %v5524, %v5531
        %v5536 = vlaneseq
        %v5537 = vshrl.u32 %v5536, 7
        %v5538 = vsub.s32 0, %v5537
        %v5539 = vrot.slane %v4686, %v5538
        %5540 = vrot.lane.b32.xlu0 %v5539, 32
        %v5541 = vpop.permute.xlu0 %5540
        %v5543 = vadd.f32 %v5533, %v5541
        %v5544 = vadd.f32 %v5534, %v5541
        %v5545 = vpack.c.bf16 %v5390, %v5389
        %v5546 = vpack.c.bf16 %v5392, %v5391
        %v5547 = vpack.c.bf16 %v5393, %v5393
        %v5548 = vpack.c.bf16 %v5482, %v5481
        %v5550 = vsel %vm2411, %v5545, 0
        %v5553 = vsel %vm2411, %v5546, 0
        %v5556 = vsel %vm2411, %v5547, 0
        %v5559 = vsel %vm2411, %v5548, 0
        %5561 = vmatprep.subr.bf16.mxu0 0
        %5562 = vmatpush1.bf16.xpose.msra.mxu0 %v5559
        %5563 = vmatprep.subr.bf16.mxu0 0
        %5564 = vmatpush1.bf16.xpose.msra.mxu0 0
        %5565 = vmatprep.subr.bf16.mxu0 0
        %5566 = vmatpush1.bf16.xpose.msra.mxu0 0
        %5567 = vmatprep.subr.bf16.mxu0 0
        %5568 = vmatpush1.bf16.xpose.msra.mxu0 0
        %5569 = vmatprep.subr.bf16.mxu0 0
        %5570 = vmatpush1.bf16.xpose.msra.mxu0 0
        %5571 = vmatprep.subr.bf16.mxu0 0
        %5572 = vmatpush1.bf16.xpose.msra.mxu0 0
        %5573 = vmatprep.subr.bf16.mxu0 0
        %5574 = vmatpush1.bf16.xpose.msra.mxu0 0
        %5575 = vmatprep.subr.bf16.mxu0 0
        %5576 = vmatpush1.bf16.xpose.msra.mxu0 0
        %5577 = vmatprep.subr.bf16.mxu0 0
        %5578 = vmatpush1.bf16.xpose.msra.mxu0 0
        %5579 = vmatprep.subr.bf16.mxu0 0
        %5580 = vmatpush1.bf16.xpose.msra.mxu0 0
        %5581 = vmatprep.subr.bf16.mxu0 0
        %5582 = vmatpush1.bf16.xpose.msra.mxu0 0
        %5583 = vmatprep.subr.bf16.mxu0 0
        %5584 = vmatpush1.bf16.xpose.msra.mxu0 0
        %5585 = vmatprep.subr.bf16.mxu0 0
        %5586 = vmatpush1.bf16.xpose.msra.mxu0 0
        %5587 = vmatprep.subr.bf16.mxu0 0
        %5588 = vmatpush1.bf16.xpose.msra.mxu0 0
        %5589 = vmatprep.subr.bf16.mxu0 0
        %5590 = vmatpush1.bf16.xpose.msra.mxu0 0
        %5591 = vmatprep.subr.bf16.mxu0 0
        %5592 = vmatpush1.bf16.xpose.msra.mxu0 0
        %5593 = vmatprep.mubr.bf16.mxu0 0
        %5594 = vmatmul.mubr.bf16.gmra.mrb[0].mxu0 %v5550
        %v5595 = vpop.f32.mrb[0].mxu0
        %v5596 = vadd.f32 0.0, %v5595
        %v5597 = vpop.f32.mrb[0].mxu0
        %v5598 = vpop.f32.mrb[0].mxu0
        %v5599 = vadd.f32 0.0, %v5598
        %v5600 = vpop.f32.mrb[0].mxu0
        %5601 = vmatprep.mubr.bf16.mxu0 0
        %5602 = vmatmul.mubr.bf16.gmra.mrb[0].mxu0 %v5553
        %v5603 = vpop.f32.mrb[0].mxu0
        %v5604 = vadd.f32 0.0, %v5603
        %v5605 = vpop.f32.mrb[0].mxu0
        %v5606 = vpop.f32.mrb[0].mxu0
        %v5607 = vadd.f32 0.0, %v5606
        %v5608 = vpop.f32.mrb[0].mxu0
        %5609 = vmatprep.mubr.bf16.mxu0 0
        %5610 = vmatmul.mubr.bf16.gmra.mrb[0].mxu0 %v5556
        %v5611 = vpop.f32.mrb[0].mxu0
        %v5612 = vadd.f32 0.0, %v5611
        %v5613 = vpop.f32.mrb[0].mxu0
        %v5614 = vpop.f32.mrb[0].mxu0
        %v5615 = vpop.f32.mrb[0].mxu0
        %5616 = vdwg.mxu0
        %v5617 = vmul.f32 %v5596, 0.35355338
        %v5618 = vmul.f32 %v5599, 0.35355338
        %v5619 = vmul.f32 %v5604, 0.35355338
        %v5620 = vmul.f32 %v5607, 0.35355338
        %v5621 = vmul.f32 %v5612, 0.35355338
        %v5622 = vsel %vm2485, %v5617, -inf
        %5623 = vmax.xlane.f32.xlu0 %v5622
        %v5624 = vpop.xlane.xlu0 %5623
        %v5625 = vsel %vm2485, %v5618, -inf
        %5626 = vmax.xlane.f32.xlu0 %v5625
        %v5627 = vpop.xlane.xlu0 %5626
        %v5628 = vsel %vm2485, %v5619, -inf
        %5629 = vmax.xlane.f32.xlu0 %v5628
        %v5630 = vpop.xlane.xlu0 %5629
        %v5631 = vsel %vm2485, %v5620, -inf
        %5632 = vmax.xlane.f32.xlu0 %v5631
        %v5633 = vpop.xlane.xlu0 %5632
        %v5634 = vsel %vm2498, %v5621, -inf
        %5635 = vmax.xlane.f32.xlu0 %v5634
        %v5636 = vpop.xlane.xlu0 %5635
        %v5637 = vsub.f32 %v5617, %v5624
        %v5638 = vsub.f32 %v5618, %v5627
        %v5639 = vsub.f32 %v5619, %v5630
        %v5640 = vsub.f32 %v5620, %v5633
        %v5641 = vsub.f32 %v5621, %v5636
        %v5642 = vmul.f32 %v5637, 1.442695
        %v5643 = vpow.pop %v5642
        %v5644 = vmul.f32 %v5638, 1.442695
        %v5645 = vpow.pop %v5644
        %v5646 = vmul.f32 %v5639, 1.442695
        %v5647 = vpow.pop %v5646
        %v5648 = vmul.f32 %v5640, 1.442695
        %v5649 = vpow.pop %v5648
        %v5650 = vmul.f32 %v5641, 1.442695
        %v5651 = vpow.pop %v5650
        %v5652 = vsel %vm2485, %v5643, 0.0
        %5653 = vadd.xlane.f32.xlu0 %v5652
        %v5654 = vpop.xlane.xlu0 %5653
        %v5655 = vsel %vm2485, %v5645, 0.0
        %5656 = vadd.xlane.f32.xlu0 %v5655
        %v5657 = vpop.xlane.xlu0 %5656
        %v5658 = vsel %vm2485, %v5647, 0.0
        %5659 = vadd.xlane.f32.xlu0 %v5658
        %v5660 = vpop.xlane.xlu0 %5659
        %v5661 = vsel %vm2485, %v5649, 0.0
        %5662 = vadd.xlane.f32.xlu0 %v5661
        %v5663 = vpop.xlane.xlu0 %5662
        %v5664 = vsel %vm2498, %v5651, 0.0
        %5665 = vadd.xlane.f32.xlu0 %v5664
        %v5666 = vpop.xlane.xlu0 %5665
        %v5667 = vrcp.pop %v5654
        %v5668 = vmul.f32 %v5643, %v5667
        %v5669 = vrcp.pop %v5657
        %v5670 = vmul.f32 %v5645, %v5669
        %v5671 = vrcp.pop %v5660
        %v5672 = vmul.f32 %v5647, %v5671
        %v5673 = vrcp.pop %v5663
        %v5674 = vmul.f32 %v5649, %v5673
        %v5675 = vrcp.pop %v5666
        %v5676 = vmul.f32 %v5651, %v5675
        %v5677 = vpack.c.bf16 %v5670, %v5668
        %v5678 = vpack.c.bf16 %v5674, %v5672
        %v5679 = vpack.c.bf16 %v5676, %v5676
        %v5680 = vpack.c.bf16 %v5544, %v5543
        %5682 = vrot.lane.b32.xlu0 %v5680, 96
        %v5683 = vpop.permute.xlu0 %5682
        %v5685 = vsel %vm2485, %v5677, 0
        %v5688 = vsel %vm2485, %v5678, 0
        %v5691 = vsel %vm2485, %v5679, 0
        %v5694 = vand.u32 %v5683, %v2559
        %5696 = vmatprep.subr.bf16.mxu0 0
        %5697 = vmatpush1.bf16.msra.mxu0 %v5694
        %5698 = vmatprep.subr.bf16.mxu0 0
        %5699 = vmatpush1.bf16.msra.mxu0 0
        %5700 = vmatprep.subr.bf16.mxu0 0
        %5701 = vmatpush1.bf16.msra.mxu0 0
        %5702 = vmatprep.subr.bf16.mxu0 0
        %5703 = vmatpush1.bf16.msra.mxu0 0
        %5704 = vmatprep.subr.bf16.mxu0 0
        %5705 = vmatpush1.bf16.msra.mxu0 0
        %5706 = vmatprep.subr.bf16.mxu0 0
        %5707 = vmatpush1.bf16.msra.mxu0 0
        %5708 = vmatprep.subr.bf16.mxu0 0
        %5709 = vmatpush1.bf16.msra.mxu0 0
        %5710 = vmatprep.subr.bf16.mxu0 0
        %5711 = vmatpush1.bf16.msra.mxu0 0
        %5712 = vmatprep.subr.bf16.mxu0 0
        %5713 = vmatpush1.bf16.msra.mxu0 0
        %5714 = vmatprep.subr.bf16.mxu0 0
        %5715 = vmatpush1.bf16.msra.mxu0 0
        %5716 = vmatprep.subr.bf16.mxu0 0
        %5717 = vmatpush1.bf16.msra.mxu0 0
        %5718 = vmatprep.subr.bf16.mxu0 0
        %5719 = vmatpush1.bf16.msra.mxu0 0
        %5720 = vmatprep.subr.bf16.mxu0 0
        %5721 = vmatpush1.bf16.msra.mxu0 0
        %5722 = vmatprep.subr.bf16.mxu0 0
        %5723 = vmatpush1.bf16.msra.mxu0 0
        %5724 = vmatprep.subr.bf16.mxu0 0
        %5725 = vmatpush1.bf16.msra.mxu0 0
        %5726 = vmatprep.subr.bf16.mxu0 0
        %5727 = vmatpush1.bf16.msra.mxu0 0
        %5728 = vmatprep.mubr.bf16.mxu0 0
        %5729 = vmatmul.mubr.bf16.gmra.mrb[0].mxu0 %v5685
        %v5730 = vpop.f32.mrb[0].mxu0
        %v5731 = vadd.f32 0.0, %v5730
        %v5732 = vpop.f32.mrb[0].mxu0
        %v5733 = vpop.f32.mrb[0].mxu0
        %v5734 = vadd.f32 0.0, %v5733
        %v5735 = vpop.f32.mrb[0].mxu0
        %5736 = vmatprep.mubr.bf16.mxu0 0
        %5737 = vmatmul.mubr.bf16.gmra.mrb[0].mxu0 %v5688
        %v5738 = vpop.f32.mrb[0].mxu0
        %v5739 = vadd.f32 0.0, %v5738
        %v5740 = vpop.f32.mrb[0].mxu0
        %v5741 = vpop.f32.mrb[0].mxu0
        %v5742 = vadd.f32 0.0, %v5741
        %v5743 = vpop.f32.mrb[0].mxu0
        %5744 = vmatprep.mubr.bf16.mxu0 0
        %5745 = vmatmul.mubr.bf16.gmra.mrb[0].mxu0 %v5691
        %v5746 = vpop.f32.mrb[0].mxu0
        %v5747 = vadd.f32 0.0, %v5746
        %v5748 = vpop.f32.mrb[0].mxu0
        %v5749 = vpop.f32.mrb[0].mxu0
        %v5750 = vpop.f32.mrb[0].mxu0
        %5751 = vdwg.mxu0
        %5755 = vrot.lane.b32.xlu0 %v5545, 120
        %v5756 = vpop.permute.xlu0 %5755
        %5757 = vrot.lane.b32.xlu0 %v5546, 120
        %v5758 = vpop.permute.xlu0 %5757
        %5759 = vrot.lane.b32.xlu0 %v5547, 120
        %v5760 = vpop.permute.xlu0 %5759
        %5762 = vrot.lane.b32.xlu0 %v5548, 120
        %v5763 = vpop.permute.xlu0 %5762
        %v5765 = vsel %vm2411, %v5756, 0
        %v5768 = vsel %vm2411, %v5758, 0
        %v5771 = vsel %vm2411, %v5760, 0
        %v5774 = vsel %vm2411, %v5763, 0
        %5776 = vmatprep.subr.bf16.mxu0 0
        %5777 = vmatpush1.bf16.xpose.msra.mxu0 %v5774
        %5778 = vmatprep.subr.bf16.mxu0 0
        %5779 = vmatpush1.bf16.xpose.msra.mxu0 0
        %5780 = vmatprep.subr.bf16.mxu0 0
        %5781 = vmatpush1.bf16.xpose.msra.mxu0 0
        %5782 = vmatprep.subr.bf16.mxu0 0
        %5783 = vmatpush1.bf16.xpose.msra.mxu0 0
        %5784 = vmatprep.subr.bf16.mxu0 0
        %5785 = vmatpush1.bf16.xpose.msra.mxu0 0
        %5786 = vmatprep.subr.bf16.mxu0 0
        %5787 = vmatpush1.bf16.xpose.msra.mxu0 0
        %5788 = vmatprep.subr.bf16.mxu0 0
        %5789 = vmatpush1.bf16.xpose.msra.mxu0 0
        %5790 = vmatprep.subr.bf16.mxu0 0
        %5791 = vmatpush1.bf16.xpose.msra.mxu0 0
        %5792 = vmatprep.subr.bf16.mxu0 0
        %5793 = vmatpush1.bf16.xpose.msra.mxu0 0
        %5794 = vmatprep.subr.bf16.mxu0 0
        %5795 = vmatpush1.bf16.xpose.msra.mxu0 0
        %5796 = vmatprep.subr.bf16.mxu0 0
        %5797 = vmatpush1.bf16.xpose.msra.mxu0 0
        %5798 = vmatprep.subr.bf16.mxu0 0
        %5799 = vmatpush1.bf16.xpose.msra.mxu0 0
        %5800 = vmatprep.subr.bf16.mxu0 0
        %5801 = vmatpush1.bf16.xpose.msra.mxu0 0
        %5802 = vmatprep.subr.bf16.mxu0 0
        %5803 = vmatpush1.bf16.xpose.msra.mxu0 0
        %5804 = vmatprep.subr.bf16.mxu0 0
        %5805 = vmatpush1.bf16.xpose.msra.mxu0 0
        %5806 = vmatprep.subr.bf16.mxu0 0
        %5807 = vmatpush1.bf16.xpose.msra.mxu0 0
        %5808 = vmatprep.mubr.bf16.mxu0 0
        %5809 = vmatmul.mubr.bf16.gmra.mrb[0].mxu0 %v5765
        %v5810 = vpop.f32.mrb[0].mxu0
        %v5811 = vadd.f32 0.0, %v5810
        %v5812 = vpop.f32.mrb[0].mxu0
        %v5813 = vpop.f32.mrb[0].mxu0
        %v5814 = vadd.f32 0.0, %v5813
        %v5815 = vpop.f32.mrb[0].mxu0
        %5816 = vmatprep.mubr.bf16.mxu0 0
        %5817 = vmatmul.mubr.bf16.gmra.mrb[0].mxu0 %v5768
        %v5818 = vpop.f32.mrb[0].mxu0
        %v5819 = vadd.f32 0.0, %v5818
        %v5820 = vpop.f32.mrb[0].mxu0
        %v5821 = vpop.f32.mrb[0].mxu0
        %v5822 = vadd.f32 0.0, %v5821
        %v5823 = vpop.f32.mrb[0].mxu0
        %5824 = vmatprep.mubr.bf16.mxu0 0
        %5825 = vmatmul.mubr.bf16.gmra.mrb[0].mxu0 %v5771
        %v5826 = vpop.f32.mrb[0].mxu0
        %v5827 = vadd.f32 0.0, %v5826
        %v5828 = vpop.f32.mrb[0].mxu0
        %v5829 = vpop.f32.mrb[0].mxu0
        %v5830 = vpop.f32.mrb[0].mxu0
        %5831 = vdwg.mxu0
        %v5832 = vmul.f32 %v5811, 0.35355338
        %v5833 = vmul.f32 %v5814, 0.35355338
        %v5834 = vmul.f32 %v5819, 0.35355338
        %v5835 = vmul.f32 %v5822, 0.35355338
        %v5836 = vmul.f32 %v5827, 0.35355338
        %v5837 = vsel %vm2485, %v5832, -inf
        %5838 = vmax.xlane.f32.xlu0 %v5837
        %v5839 = vpop.xlane.xlu0 %5838
        %v5840 = vsel %vm2485, %v5833, -inf
        %5841 = vmax.xlane.f32.xlu0 %v5840
        %v5842 = vpop.xlane.xlu0 %5841
        %v5843 = vsel %vm2485, %v5834, -inf
        %5844 = vmax.xlane.f32.xlu0 %v5843
        %v5845 = vpop.xlane.xlu0 %5844
        %v5846 = vsel %vm2485, %v5835, -inf
        %5847 = vmax.xlane.f32.xlu0 %v5846
        %v5848 = vpop.xlane.xlu0 %5847
        %v5849 = vsel %vm2498, %v5836, -inf
        %5850 = vmax.xlane.f32.xlu0 %v5849
        %v5851 = vpop.xlane.xlu0 %5850
        %v5852 = vsub.f32 %v5832, %v5839
        %v5853 = vsub.f32 %v5833, %v5842
        %v5854 = vsub.f32 %v5834, %v5845
        %v5855 = vsub.f32 %v5835, %v5848
        %v5856 = vsub.f32 %v5836, %v5851
        %v5857 = vmul.f32 %v5852, 1.442695
        %v5858 = vpow.pop %v5857
        %v5859 = vmul.f32 %v5853, 1.442695
        %v5860 = vpow.pop %v5859
        %v5861 = vmul.f32 %v5854, 1.442695
        %v5862 = vpow.pop %v5861
        %v5863 = vmul.f32 %v5855, 1.442695
        %v5864 = vpow.pop %v5863
        %v5865 = vmul.f32 %v5856, 1.442695
        %v5866 = vpow.pop %v5865
        %v5867 = vsel %vm2485, %v5858, 0.0
        %5868 = vadd.xlane.f32.xlu0 %v5867
        %v5869 = vpop.xlane.xlu0 %5868
        %v5870 = vsel %vm2485, %v5860, 0.0
        %5871 = vadd.xlane.f32.xlu0 %v5870
        %v5872 = vpop.xlane.xlu0 %5871
        %v5873 = vsel %vm2485, %v5862, 0.0
        %5874 = vadd.xlane.f32.xlu0 %v5873
        %v5875 = vpop.xlane.xlu0 %5874
        %v5876 = vsel %vm2485, %v5864, 0.0
        %5877 = vadd.xlane.f32.xlu0 %v5876
        %v5878 = vpop.xlane.xlu0 %5877
        %v5879 = vsel %vm2498, %v5866, 0.0
        %5880 = vadd.xlane.f32.xlu0 %v5879
        %v5881 = vpop.xlane.xlu0 %5880
        %v5882 = vrcp.pop %v5869
        %v5883 = vmul.f32 %v5858, %v5882
        %v5884 = vrcp.pop %v5872
        %v5885 = vmul.f32 %v5860, %v5884
        %v5886 = vrcp.pop %v5875
        %v5887 = vmul.f32 %v5862, %v5886
        %v5888 = vrcp.pop %v5878
        %v5889 = vmul.f32 %v5864, %v5888
        %v5890 = vrcp.pop %v5881
        %v5891 = vmul.f32 %v5866, %v5890
        %v5892 = vpack.c.bf16 %v5885, %v5883
        %v5893 = vpack.c.bf16 %v5889, %v5887
        %v5894 = vpack.c.bf16 %v5891, %v5891
        %5895 = vrot.lane.b32.xlu0 %v5680, 88
        %v5896 = vpop.permute.xlu0 %5895
        %v5898 = vsel %vm2485, %v5892, 0
        %v5901 = vsel %vm2485, %v5893, 0
        %v5904 = vsel %vm2485, %v5894, 0
        %v5907 = vand.u32 %v5896, %v2559
        %5909 = vmatprep.subr.bf16.mxu0 0
        %5910 = vmatpush1.bf16.msra.mxu0 %v5907
        %5911 = vmatprep.subr.bf16.mxu0 0
        %5912 = vmatpush1.bf16.msra.mxu0 0
        %5913 = vmatprep.subr.bf16.mxu0 0
        %5914 = vmatpush1.bf16.msra.mxu0 0
        %5915 = vmatprep.subr.bf16.mxu0 0
        %5916 = vmatpush1.bf16.msra.mxu0 0
        %5917 = vmatprep.subr.bf16.mxu0 0
        %5918 = vmatpush1.bf16.msra.mxu0 0
        %5919 = vmatprep.subr.bf16.mxu0 0
        %5920 = vmatpush1.bf16.msra.mxu0 0
        %5921 = vmatprep.subr.bf16.mxu0 0
        %5922 = vmatpush1.bf16.msra.mxu0 0
        %5923 = vmatprep.subr.bf16.mxu0 0
        %5924 = vmatpush1.bf16.msra.mxu0 0
        %5925 = vmatprep.subr.bf16.mxu0 0
        %5926 = vmatpush1.bf16.msra.mxu0 0
        %5927 = vmatprep.subr.bf16.mxu0 0
        %5928 = vmatpush1.bf16.msra.mxu0 0
        %5929 = vmatprep.subr.bf16.mxu0 0
        %5930 = vmatpush1.bf16.msra.mxu0 0
        %5931 = vmatprep.subr.bf16.mxu0 0
        %5932 = vmatpush1.bf16.msra.mxu0 0
        %5933 = vmatprep.subr.bf16.mxu0 0
        %5934 = vmatpush1.bf16.msra.mxu0 0
        %5935 = vmatprep.subr.bf16.mxu0 0
        %5936 = vmatpush1.bf16.msra.mxu0 0
        %5937 = vmatprep.subr.bf16.mxu0 0
        %5938 = vmatpush1.bf16.msra.mxu0 0
        %5939 = vmatprep.subr.bf16.mxu0 0
        %5940 = vmatpush1.bf16.msra.mxu0 0
        %5941 = vmatprep.mubr.bf16.mxu0 0
        %5942 = vmatmul.mubr.bf16.gmra.mrb[0].mxu0 %v5898
        %v5943 = vpop.f32.mrb[0].mxu0
        %v5944 = vadd.f32 0.0, %v5943
        %v5945 = vpop.f32.mrb[0].mxu0
        %v5946 = vpop.f32.mrb[0].mxu0
        %v5947 = vadd.f32 0.0, %v5946
        %v5948 = vpop.f32.mrb[0].mxu0
        %5949 = vmatprep.mubr.bf16.mxu0 0
        %5950 = vmatmul.mubr.bf16.gmra.mrb[0].mxu0 %v5901
        %v5951 = vpop.f32.mrb[0].mxu0
        %v5952 = vadd.f32 0.0, %v5951
        %v5953 = vpop.f32.mrb[0].mxu0
        %v5954 = vpop.f32.mrb[0].mxu0
        %v5955 = vadd.f32 0.0, %v5954
        %v5956 = vpop.f32.mrb[0].mxu0
        %5957 = vmatprep.mubr.bf16.mxu0 0
        %5958 = vmatmul.mubr.bf16.gmra.mrb[0].mxu0 %v5904
        %v5959 = vpop.f32.mrb[0].mxu0
        %v5960 = vadd.f32 0.0, %v5959
        %v5961 = vpop.f32.mrb[0].mxu0
        %v5962 = vpop.f32.mrb[0].mxu0
        %v5963 = vpop.f32.mrb[0].mxu0
        %5964 = vdwg.mxu0
        %5965 = vrot.lane.b32.xlu0 %v5545, 112
        %v5966 = vpop.permute.xlu0 %5965
        %5967 = vrot.lane.b32.xlu0 %v5546, 112
        %v5968 = vpop.permute.xlu0 %5967
        %5969 = vrot.lane.b32.xlu0 %v5547, 112
        %v5970 = vpop.permute.xlu0 %5969
        %5971 = vrot.lane.b32.xlu0 %v5548, 112
        %v5972 = vpop.permute.xlu0 %5971
        %v5974 = vsel %vm2411, %v5966, 0
        %v5977 = vsel %vm2411, %v5968, 0
        %v5980 = vsel %vm2411, %v5970, 0
        %v5983 = vsel %vm2411, %v5972, 0
        %5985 = vmatprep.subr.bf16.mxu0 0
        %5986 = vmatpush1.bf16.xpose.msra.mxu0 %v5983
        %5987 = vmatprep.subr.bf16.mxu0 0
        %5988 = vmatpush1.bf16.xpose.msra.mxu0 0
        %5989 = vmatprep.subr.bf16.mxu0 0
        %5990 = vmatpush1.bf16.xpose.msra.mxu0 0
        %5991 = vmatprep.subr.bf16.mxu0 0
        %5992 = vmatpush1.bf16.xpose.msra.mxu0 0
        %5993 = vmatprep.subr.bf16.mxu0 0
        %5994 = vmatpush1.bf16.xpose.msra.mxu0 0
        %5995 = vmatprep.subr.bf16.mxu0 0
        %5996 = vmatpush1.bf16.xpose.msra.mxu0 0
        %5997 = vmatprep.subr.bf16.mxu0 0
        %5998 = vmatpush1.bf16.xpose.msra.mxu0 0
        %5999 = vmatprep.subr.bf16.mxu0 0
        %6000 = vmatpush1.bf16.xpose.msra.mxu0 0
        %6001 = vmatprep.subr.bf16.mxu0 0
        %6002 = vmatpush1.bf16.xpose.msra.mxu0 0
        %6003 = vmatprep.subr.bf16.mxu0 0
        %6004 = vmatpush1.bf16.xpose.msra.mxu0 0
        %6005 = vmatprep.subr.bf16.mxu0 0
        %6006 = vmatpush1.bf16.xpose.msra.mxu0 0
        %6007 = vmatprep.subr.bf16.mxu0 0
        %6008 = vmatpush1.bf16.xpose.msra.mxu0 0
        %6009 = vmatprep.subr.bf16.mxu0 0
        %6010 = vmatpush1.bf16.xpose.msra.mxu0 0
        %6011 = vmatprep.subr.bf16.mxu0 0
        %6012 = vmatpush1.bf16.xpose.msra.mxu0 0
        %6013 = vmatprep.subr.bf16.mxu0 0
        %6014 = vmatpush1.bf16.xpose.msra.mxu0 0
        %6015 = vmatprep.subr.bf16.mxu0 0
        %6016 = vmatpush1.bf16.xpose.msra.mxu0 0
        %6017 = vmatprep.mubr.bf16.mxu0 0
        %6018 = vmatmul.mubr.bf16.gmra.mrb[0].mxu0 %v5974
        %v6019 = vpop.f32.mrb[0].mxu0
        %v6020 = vadd.f32 0.0, %v6019
        %v6021 = vpop.f32.mrb[0].mxu0
        %v6022 = vpop.f32.mrb[0].mxu0
        %v6023 = vadd.f32 0.0, %v6022
        %v6024 = vpop.f32.mrb[0].mxu0
        %6025 = vmatprep.mubr.bf16.mxu0 0
        %6026 = vmatmul.mubr.bf16.gmra.mrb[0].mxu0 %v5977
        %v6027 = vpop.f32.mrb[0].mxu0
        %v6028 = vadd.f32 0.0, %v6027
        %v6029 = vpop.f32.mrb[0].mxu0
        %v6030 = vpop.f32.mrb[0].mxu0
        %v6031 = vadd.f32 0.0, %v6030
        %v6032 = vpop.f32.mrb[0].mxu0
        %6033 = vmatprep.mubr.bf16.mxu0 0
        %6034 = vmatmul.mubr.bf16.gmra.mrb[0].mxu0 %v5980
        %v6035 = vpop.f32.mrb[0].mxu0
        %v6036 = vadd.f32 0.0, %v6035
        %v6037 = vpop.f32.mrb[0].mxu0
        %v6038 = vpop.f32.mrb[0].mxu0
        %v6039 = vpop.f32.mrb[0].mxu0
        %6040 = vdwg.mxu0
        %v6041 = vmul.f32 %v6020, 0.35355338
        %v6042 = vmul.f32 %v6023, 0.35355338
        %v6043 = vmul.f32 %v6028, 0.35355338
        %v6044 = vmul.f32 %v6031, 0.35355338
        %v6045 = vmul.f32 %v6036, 0.35355338
        %v6046 = vsel %vm2485, %v6041, -inf
        %6047 = vmax.xlane.f32.xlu0 %v6046
        %v6048 = vpop.xlane.xlu0 %6047
        %v6049 = vsel %vm2485, %v6042, -inf
        %6050 = vmax.xlane.f32.xlu0 %v6049
        %v6051 = vpop.xlane.xlu0 %6050
        %v6052 = vsel %vm2485, %v6043, -inf
        %6053 = vmax.xlane.f32.xlu0 %v6052
        %v6054 = vpop.xlane.xlu0 %6053
        %v6055 = vsel %vm2485, %v6044, -inf
        %6056 = vmax.xlane.f32.xlu0 %v6055
        %v6057 = vpop.xlane.xlu0 %6056
        %v6058 = vsel %vm2498, %v6045, -inf
        %6059 = vmax.xlane.f32.xlu0 %v6058
        %v6060 = vpop.xlane.xlu0 %6059
        %v6061 = vsub.f32 %v6041, %v6048
        %v6062 = vsub.f32 %v6042, %v6051
        %v6063 = vsub.f32 %v6043, %v6054
        %v6064 = vsub.f32 %v6044, %v6057
        %v6065 = vsub.f32 %v6045, %v6060
        %v6066 = vmul.f32 %v6061, 1.442695
        %v6067 = vpow.pop %v6066
        %v6068 = vmul.f32 %v6062, 1.442695
        %v6069 = vpow.pop %v6068
        %v6070 = vmul.f32 %v6063, 1.442695
        %v6071 = vpow.pop %v6070
        %v6072 = vmul.f32 %v6064, 1.442695
        %v6073 = vpow.pop %v6072
        %v6074 = vmul.f32 %v6065, 1.442695
        %v6075 = vpow.pop %v6074
        %v6076 = vsel %vm2485, %v6067, 0.0
        %6077 = vadd.xlane.f32.xlu0 %v6076
        %v6078 = vpop.xlane.xlu0 %6077
        %v6079 = vsel %vm2485, %v6069, 0.0
        %6080 = vadd.xlane.f32.xlu0 %v6079
        %v6081 = vpop.xlane.xlu0 %6080
        %v6082 = vsel %vm2485, %v6071, 0.0
        %6083 = vadd.xlane.f32.xlu0 %v6082
        %v6084 = vpop.xlane.xlu0 %6083
        %v6085 = vsel %vm2485, %v6073, 0.0
        %6086 = vadd.xlane.f32.xlu0 %v6085
        %v6087 = vpop.xlane.xlu0 %6086
        %v6088 = vsel %vm2498, %v6075, 0.0
        %6089 = vadd.xlane.f32.xlu0 %v6088
        %v6090 = vpop.xlane.xlu0 %6089
        %v6091 = vrcp.pop %v6078
        %v6092 = vmul.f32 %v6067, %v6091
        %v6093 = vrcp.pop %v6081
        %v6094 = vmul.f32 %v6069, %v6093
        %v6095 = vrcp.pop %v6084
        %v6096 = vmul.f32 %v6071, %v6095
        %v6097 = vrcp.pop %v6087
        %v6098 = vmul.f32 %v6073, %v6097
        %v6099 = vrcp.pop %v6090
        %v6100 = vmul.f32 %v6075, %v6099
        %v6101 = vpack.c.bf16 %v6094, %v6092
        %v6102 = vpack.c.bf16 %v6098, %v6096
        %v6103 = vpack.c.bf16 %v6100, %v6100
        %6104 = vrot.lane.b32.xlu0 %v5680, 80
        %v6105 = vpop.permute.xlu0 %6104
        %v6107 = vsel %vm2485, %v6101, 0
        %v6110 = vsel %vm2485, %v6102, 0
        %v6113 = vsel %vm2485, %v6103, 0
        %v6116 = vand.u32 %v6105, %v2559
        %6118 = vmatprep.subr.bf16.mxu0 0
        %6119 = vmatpush1.bf16.msra.mxu0 %v6116
        %6120 = vmatprep.subr.bf16.mxu0 0
        %6121 = vmatpush1.bf16.msra.mxu0 0
        %6122 = vmatprep.subr.bf16.mxu0 0
        %6123 = vmatpush1.bf16.msra.mxu0 0
        %6124 = vmatprep.subr.bf16.mxu0 0
        %6125 = vmatpush1.bf16.msra.mxu0 0
        %6126 = vmatprep.subr.bf16.mxu0 0
        %6127 = vmatpush1.bf16.msra.mxu0 0
        %6128 = vmatprep.subr.bf16.mxu0 0
        %6129 = vmatpush1.bf16.msra.mxu0 0
        %6130 = vmatprep.subr.bf16.mxu0 0
        %6131 = vmatpush1.bf16.msra.mxu0 0
        %6132 = vmatprep.subr.bf16.mxu0 0
        %6133 = vmatpush1.bf16.msra.mxu0 0
        %6134 = vmatprep.subr.bf16.mxu0 0
        %6135 = vmatpush1.bf16.msra.mxu0 0
        %6136 = vmatprep.subr.bf16.mxu0 0
        %6137 = vmatpush1.bf16.msra.mxu0 0
        %6138 = vmatprep.subr.bf16.mxu0 0
        %6139 = vmatpush1.bf16.msra.mxu0 0
        %6140 = vmatprep.subr.bf16.mxu0 0
        %6141 = vmatpush1.bf16.msra.mxu0 0
        %6142 = vmatprep.subr.bf16.mxu0 0
        %6143 = vmatpush1.bf16.msra.mxu0 0
        %6144 = vmatprep.subr.bf16.mxu0 0
        %6145 = vmatpush1.bf16.msra.mxu0 0
        %6146 = vmatprep.subr.bf16.mxu0 0
        %6147 = vmatpush1.bf16.msra.mxu0 0
        %6148 = vmatprep.subr.bf16.mxu0 0
        %6149 = vmatpush1.bf16.msra.mxu0 0
        %6150 = vmatprep.mubr.bf16.mxu0 0
        %6151 = vmatmul.mubr.bf16.gmra.mrb[0].mxu0 %v6107
        %v6152 = vpop.f32.mrb[0].mxu0
        %v6153 = vadd.f32 0.0, %v6152
        %v6154 = vpop.f32.mrb[0].mxu0
        %v6155 = vpop.f32.mrb[0].mxu0
        %v6156 = vadd.f32 0.0, %v6155
        %v6157 = vpop.f32.mrb[0].mxu0
        %6158 = vmatprep.mubr.bf16.mxu0 0
        %6159 = vmatmul.mubr.bf16.gmra.mrb[0].mxu0 %v6110
        %v6160 = vpop.f32.mrb[0].mxu0
        %v6161 = vadd.f32 0.0, %v6160
        %v6162 = vpop.f32.mrb[0].mxu0
        %v6163 = vpop.f32.mrb[0].mxu0
        %v6164 = vadd.f32 0.0, %v6163
        %v6165 = vpop.f32.mrb[0].mxu0
        %6166 = vmatprep.mubr.bf16.mxu0 0
        %6167 = vmatmul.mubr.bf16.gmra.mrb[0].mxu0 %v6113
        %v6168 = vpop.f32.mrb[0].mxu0
        %v6169 = vadd.f32 0.0, %v6168
        %v6170 = vpop.f32.mrb[0].mxu0
        %v6171 = vpop.f32.mrb[0].mxu0
        %v6172 = vpop.f32.mrb[0].mxu0
        %6173 = vdwg.mxu0
        %6174 = vrot.lane.b32.xlu0 %v5545, 104
        %v6175 = vpop.permute.xlu0 %6174
        %6176 = vrot.lane.b32.xlu0 %v5546, 104
        %v6177 = vpop.permute.xlu0 %6176
        %6178 = vrot.lane.b32.xlu0 %v5547, 104
        %v6179 = vpop.permute.xlu0 %6178
        %6180 = vrot.lane.b32.xlu0 %v5548, 104
        %v6181 = vpop.permute.xlu0 %6180
        %v6183 = vsel %vm2411, %v6175, 0
        %v6186 = vsel %vm2411, %v6177, 0
        %v6189 = vsel %vm2411, %v6179, 0
        %v6192 = vsel %vm2411, %v6181, 0
        %6194 = vmatprep.subr.bf16.mxu0 0
        %6195 = vmatpush1.bf16.xpose.msra.mxu0 %v6192
        %6196 = vmatprep.subr.bf16.mxu0 0
        %6197 = vmatpush1.bf16.xpose.msra.mxu0 0
        %6198 = vmatprep.subr.bf16.mxu0 0
        %6199 = vmatpush1.bf16.xpose.msra.mxu0 0
        %6200 = vmatprep.subr.bf16.mxu0 0
        %6201 = vmatpush1.bf16.xpose.msra.mxu0 0
        %6202 = vmatprep.subr.bf16.mxu0 0
        %6203 = vmatpush1.bf16.xpose.msra.mxu0 0
        %6204 = vmatprep.subr.bf16.mxu0 0
        %6205 = vmatpush1.bf16.xpose.msra.mxu0 0
        %6206 = vmatprep.subr.bf16.mxu0 0
        %6207 = vmatpush1.bf16.xpose.msra.mxu0 0
        %6208 = vmatprep.subr.bf16.mxu0 0
        %6209 = vmatpush1.bf16.xpose.msra.mxu0 0
        %6210 = vmatprep.subr.bf16.mxu0 0
        %6211 = vmatpush1.bf16.xpose.msra.mxu0 0
        %6212 = vmatprep.subr.bf16.mxu0 0
        %6213 = vmatpush1.bf16.xpose.msra.mxu0 0
        %6214 = vmatprep.subr.bf16.mxu0 0
        %6215 = vmatpush1.bf16.xpose.msra.mxu0 0
        %6216 = vmatprep.subr.bf16.mxu0 0
        %6217 = vmatpush1.bf16.xpose.msra.mxu0 0
        %6218 = vmatprep.subr.bf16.mxu0 0
        %6219 = vmatpush1.bf16.xpose.msra.mxu0 0
        %6220 = vmatprep.subr.bf16.mxu0 0
        %6221 = vmatpush1.bf16.xpose.msra.mxu0 0
        %6222 = vmatprep.subr.bf16.mxu0 0
        %6223 = vmatpush1.bf16.xpose.msra.mxu0 0
        %6224 = vmatprep.subr.bf16.mxu0 0
        %6225 = vmatpush1.bf16.xpose.msra.mxu0 0
        %6226 = vmatprep.mubr.bf16.mxu0 0
        %6227 = vmatmul.mubr.bf16.gmra.mrb[0].mxu0 %v6183
        %v6228 = vpop.f32.mrb[0].mxu0
        %v6229 = vadd.f32 0.0, %v6228
        %v6230 = vpop.f32.mrb[0].mxu0
        %v6231 = vpop.f32.mrb[0].mxu0
        %v6232 = vadd.f32 0.0, %v6231
        %v6233 = vpop.f32.mrb[0].mxu0
        %6234 = vmatprep.mubr.bf16.mxu0 0
        %6235 = vmatmul.mubr.bf16.gmra.mrb[0].mxu0 %v6186
        %v6236 = vpop.f32.mrb[0].mxu0
        %v6237 = vadd.f32 0.0, %v6236
        %v6238 = vpop.f32.mrb[0].mxu0
        %v6239 = vpop.f32.mrb[0].mxu0
        %v6240 = vadd.f32 0.0, %v6239
        %v6241 = vpop.f32.mrb[0].mxu0
        %6242 = vmatprep.mubr.bf16.mxu0 0
        %6243 = vmatmul.mubr.bf16.gmra.mrb[0].mxu0 %v6189
        %v6244 = vpop.f32.mrb[0].mxu0
        %v6245 = vadd.f32 0.0, %v6244
        %v6246 = vpop.f32.mrb[0].mxu0
        %v6247 = vpop.f32.mrb[0].mxu0
        %v6248 = vpop.f32.mrb[0].mxu0
        %6249 = vdwg.mxu0
        %v6250 = vmul.f32 %v6229, 0.35355338
        %v6251 = vmul.f32 %v6232, 0.35355338
        %v6252 = vmul.f32 %v6237, 0.35355338
        %v6253 = vmul.f32 %v6240, 0.35355338
        %v6254 = vmul.f32 %v6245, 0.35355338
        %v6255 = vsel %vm2485, %v6250, -inf
        %6256 = vmax.xlane.f32.xlu0 %v6255
        %v6257 = vpop.xlane.xlu0 %6256
        %v6258 = vsel %vm2485, %v6251, -inf
        %6259 = vmax.xlane.f32.xlu0 %v6258
        %v6260 = vpop.xlane.xlu0 %6259
        %v6261 = vsel %vm2485, %v6252, -inf
        %6262 = vmax.xlane.f32.xlu0 %v6261
        %v6263 = vpop.xlane.xlu0 %6262
        %v6264 = vsel %vm2485, %v6253, -inf
        %6265 = vmax.xlane.f32.xlu0 %v6264
        %v6266 = vpop.xlane.xlu0 %6265
        %v6267 = vsel %vm2498, %v6254, -inf
        %6268 = vmax.xlane.f32.xlu0 %v6267
        %v6269 = vpop.xlane.xlu0 %6268
        %v6270 = vsub.f32 %v6250, %v6257
        %v6271 = vsub.f32 %v6251, %v6260
        %v6272 = vsub.f32 %v6252, %v6263
        %v6273 = vsub.f32 %v6253, %v6266
        %v6274 = vsub.f32 %v6254, %v6269
        %v6275 = vmul.f32 %v6270, 1.442695
        %v6276 = vpow.pop %v6275
        %v6277 = vmul.f32 %v6271, 1.442695
        %v6278 = vpow.pop %v6277
        %v6279 = vmul.f32 %v6272, 1.442695
        %v6280 = vpow.pop %v6279
        %v6281 = vmul.f32 %v6273, 1.442695
        %v6282 = vpow.pop %v6281
        %v6283 = vmul.f32 %v6274, 1.442695
        %v6284 = vpow.pop %v6283
        %v6285 = vsel %vm2485, %v6276, 0.0
        %6286 = vadd.xlane.f32.xlu0 %v6285
        %v6287 = vpop.xlane.xlu0 %6286
        %v6288 = vsel %vm2485, %v6278, 0.0
        %6289 = vadd.xlane.f32.xlu0 %v6288
        %v6290 = vpop.xlane.xlu0 %6289
        %v6291 = vsel %vm2485, %v6280, 0.0
        %6292 = vadd.xlane.f32.xlu0 %v6291
        %v6293 = vpop.xlane.xlu0 %6292
        %v6294 = vsel %vm2485, %v6282, 0.0
        %6295 = vadd.xlane.f32.xlu0 %v6294
        %v6296 = vpop.xlane.xlu0 %6295
        %v6297 = vsel %vm2498, %v6284, 0.0
        %6298 = vadd.xlane.f32.xlu0 %v6297
        %v6299 = vpop.xlane.xlu0 %6298
        %v6300 = vrcp.pop %v6287
        %v6301 = vmul.f32 %v6276, %v6300
        %v6302 = vrcp.pop %v6290
        %v6303 = vmul.f32 %v6278, %v6302
        %v6304 = vrcp.pop %v6293
        %v6305 = vmul.f32 %v6280, %v6304
        %v6306 = vrcp.pop %v6296
        %v6307 = vmul.f32 %v6282, %v6306
        %v6308 = vrcp.pop %v6299
        %v6309 = vmul.f32 %v6284, %v6308
        %v6310 = vpack.c.bf16 %v6303, %v6301
        %v6311 = vpack.c.bf16 %v6307, %v6305
        %v6312 = vpack.c.bf16 %v6309, %v6309
        %6313 = vrot.lane.b32.xlu0 %v5680, 72
        %v6314 = vpop.permute.xlu0 %6313
        %v6316 = vsel %vm2485, %v6310, 0
        %v6319 = vsel %vm2485, %v6311, 0
        %v6322 = vsel %vm2485, %v6312, 0
        %v6325 = vand.u32 %v6314, %v2559
        %6327 = vmatprep.subr.bf16.mxu0 0
        %6328 = vmatpush1.bf16.msra.mxu0 %v6325
        %6329 = vmatprep.subr.bf16.mxu0 0
        %6330 = vmatpush1.bf16.msra.mxu0 0
        %6331 = vmatprep.subr.bf16.mxu0 0
        %6332 = vmatpush1.bf16.msra.mxu0 0
        %6333 = vmatprep.subr.bf16.mxu0 0
        %6334 = vmatpush1.bf16.msra.mxu0 0
        %6335 = vmatprep.subr.bf16.mxu0 0
        %6336 = vmatpush1.bf16.msra.mxu0 0
        %6337 = vmatprep.subr.bf16.mxu0 0
        %6338 = vmatpush1.bf16.msra.mxu0 0
        %6339 = vmatprep.subr.bf16.mxu0 0
        %6340 = vmatpush1.bf16.msra.mxu0 0
        %6341 = vmatprep.subr.bf16.mxu0 0
        %6342 = vmatpush1.bf16.msra.mxu0 0
        %6343 = vmatprep.subr.bf16.mxu0 0
        %6344 = vmatpush1.bf16.msra.mxu0 0
        %6345 = vmatprep.subr.bf16.mxu0 0
        %6346 = vmatpush1.bf16.msra.mxu0 0
        %6347 = vmatprep.subr.bf16.mxu0 0
        %6348 = vmatpush1.bf16.msra.mxu0 0
        %6349 = vmatprep.subr.bf16.mxu0 0
        %6350 = vmatpush1.bf16.msra.mxu0 0
        %6351 = vmatprep.subr.bf16.mxu0 0
        %6352 = vmatpush1.bf16.msra.mxu0 0
        %6353 = vmatprep.subr.bf16.mxu0 0
        %6354 = vmatpush1.bf16.msra.mxu0 0
        %6355 = vmatprep.subr.bf16.mxu0 0
        %6356 = vmatpush1.bf16.msra.mxu0 0
        %6357 = vmatprep.subr.bf16.mxu0 0
        %6358 = vmatpush1.bf16.msra.mxu0 0
        %6359 = vmatprep.mubr.bf16.mxu0 0
        %6360 = vmatmul.mubr.bf16.gmra.mrb[0].mxu0 %v6316
        %v6361 = vpop.f32.mrb[0].mxu0
        %v6362 = vadd.f32 0.0, %v6361
        %v6363 = vpop.f32.mrb[0].mxu0
        %v6364 = vpop.f32.mrb[0].mxu0
        %v6365 = vadd.f32 0.0, %v6364
        %v6366 = vpop.f32.mrb[0].mxu0
        %6367 = vmatprep.mubr.bf16.mxu0 0
        %6368 = vmatmul.mubr.bf16.gmra.mrb[0].mxu0 %v6319
        %v6369 = vpop.f32.mrb[0].mxu0
        %v6370 = vadd.f32 0.0, %v6369
        %v6371 = vpop.f32.mrb[0].mxu0
        %v6372 = vpop.f32.mrb[0].mxu0
        %v6373 = vadd.f32 0.0, %v6372
        %v6374 = vpop.f32.mrb[0].mxu0
        %6375 = vmatprep.mubr.bf16.mxu0 0
        %6376 = vmatmul.mubr.bf16.gmra.mrb[0].mxu0 %v6322
        %v6377 = vpop.f32.mrb[0].mxu0
        %v6378 = vadd.f32 0.0, %v6377
        %v6379 = vpop.f32.mrb[0].mxu0
        %v6380 = vpop.f32.mrb[0].mxu0
        %v6381 = vpop.f32.mrb[0].mxu0
        %6382 = vdwg.mxu0
        %6388 = vrot.lane.b32.xlu0 %v5944, 8
        %v6389 = vpop.permute.xlu0 %6388
        %6390 = vrot.lane.b32.xlu0 %v5947, 8
        %v6391 = vpop.permute.xlu0 %6390
        %6392 = vrot.lane.b32.xlu0 %v5952, 8
        %v6393 = vpop.permute.xlu0 %6392
        %6394 = vrot.lane.b32.xlu0 %v5955, 8
        %v6395 = vpop.permute.xlu0 %6394
        %6396 = vrot.lane.b32.xlu0 %v5960, 8
        %v6397 = vpop.permute.xlu0 %6396
        %6408 = vrot.lane.b32.xlu0 %v6153, 16
        %v6409 = vpop.permute.xlu0 %6408
        %6410 = vrot.lane.b32.xlu0 %v6156, 16
        %v6411 = vpop.permute.xlu0 %6410
        %6412 = vrot.lane.b32.xlu0 %v6161, 16
        %v6413 = vpop.permute.xlu0 %6412
        %6414 = vrot.lane.b32.xlu0 %v6164, 16
        %v6415 = vpop.permute.xlu0 %6414
        %6416 = vrot.lane.b32.xlu0 %v6169, 16
        %v6417 = vpop.permute.xlu0 %6416
        %6428 = vrot.lane.b32.xlu0 %v6362, 24
        %v6429 = vpop.permute.xlu0 %6428
        %6430 = vrot.lane.b32.xlu0 %v6365, 24
        %v6431 = vpop.permute.xlu0 %6430
        %6432 = vrot.lane.b32.xlu0 %v6370, 24
        %v6433 = vpop.permute.xlu0 %6432
        %6434 = vrot.lane.b32.xlu0 %v6373, 24
        %v6435 = vpop.permute.xlu0 %6434
        %6436 = vrot.lane.b32.xlu0 %v6378, 24
        %v6437 = vpop.permute.xlu0 %6436
        %v6443 = vsel %vm2411, %v5731, %v6389
        %v6444 = vsel %vm2411, %v5734, %v6391
        %v6445 = vsel %vm2411, %v5739, %v6393
        %v6446 = vsel %vm2411, %v5742, %v6395
        %v6447 = vsel %vm2411, %v5747, %v6397
        %v6448 = vsel %vm3315, %v6443, %v6409
        %v6449 = vsel %vm3315, %v6444, %v6411
        %v6450 = vsel %vm3315, %v6445, %v6413
        %v6451 = vsel %vm3315, %v6446, %v6415
        %v6452 = vsel %vm3315, %v6447, %v6417
        %v6453 = vsel %vm3321, %v6448, %v6429
        %v6454 = vsel %vm3321, %v6449, %v6431
        %v6455 = vsel %vm3321, %v6450, %v6433
        %v6456 = vsel %vm3321, %v6451, %v6435
        %v6457 = vsel %vm3321, %v6452, %v6437
        %v6458 = vpack.c.bf16 %v6454, %v6453
        %v6459 = vpack.c.bf16 %v6456, %v6455
        %v6460 = vpack.c.bf16 %v6457, %v6457
        %v6461 = vpack.c.bf16 %v4699, %v4698
        %v6462 = vpack.c.bf16 %v4701, %v4700
        %v6464 = vsel %vm1626, %v6458, 0
        %v6467 = vsel %vm1626, %v6459, 0
        %v6470 = vsel %vm1626, %v6460, 0
        %6472 = vmatprep.subr.bf16.mxu0 0
        %6473 = vmatpush1.bf16.msra.mxu0 %v6461
        %6474 = vmatprep.subr.bf16.mxu0 0
        %6475 = vmatpush1.bf16.msra.mxu0 %v6462
        %6476 = vmatprep.subr.bf16.mxu0 0
        %6477 = vmatpush1.bf16.msra.mxu0 0
        %6478 = vmatprep.subr.bf16.mxu0 0
        %6479 = vmatpush1.bf16.msra.mxu0 0
        %6480 = vmatprep.subr.bf16.mxu0 0
        %6481 = vmatpush1.bf16.msra.mxu0 0
        %6482 = vmatprep.subr.bf16.mxu0 0
        %6483 = vmatpush1.bf16.msra.mxu0 0
        %6484 = vmatprep.subr.bf16.mxu0 0
        %6485 = vmatpush1.bf16.msra.mxu0 0
        %6486 = vmatprep.subr.bf16.mxu0 0
        %6487 = vmatpush1.bf16.msra.mxu0 0
        %6488 = vmatprep.subr.bf16.mxu0 0
        %6489 = vmatpush1.bf16.msra.mxu0 0
        %6490 = vmatprep.subr.bf16.mxu0 0
        %6491 = vmatpush1.bf16.msra.mxu0 0
        %6492 = vmatprep.subr.bf16.mxu0 0
        %6493 = vmatpush1.bf16.msra.mxu0 0
        %6494 = vmatprep.subr.bf16.mxu0 0
        %6495 = vmatpush1.bf16.msra.mxu0 0
        %6496 = vmatprep.subr.bf16.mxu0 0
        %6497 = vmatpush1.bf16.msra.mxu0 0
        %6498 = vmatprep.subr.bf16.mxu0 0
        %6499 = vmatpush1.bf16.msra.mxu0 0
        %6500 = vmatprep.subr.bf16.mxu0 0
        %6501 = vmatpush1.bf16.msra.mxu0 0
        %6502 = vmatprep.subr.bf16.mxu0 0
        %6503 = vmatpush1.bf16.msra.mxu0 0
        %6504 = vmatprep.mubr.bf16.mxu0 0
        %6505 = vmatmul.mubr.bf16.gmra.mrb[0].mxu0 %v6464
        %v6506 = vpop.f32.mrb[0].mxu0
        %v6507 = vadd.f32 %v4639, %v6506
        %v6508 = vpop.f32.mrb[0].mxu0
        %v6509 = vpop.f32.mrb[0].mxu0
        %v6510 = vadd.f32 %v4640, %v6509
        %v6511 = vpop.f32.mrb[0].mxu0
        %6512 = vmatprep.mubr.bf16.mxu0 0
        %6513 = vmatmul.mubr.bf16.gmra.mrb[0].mxu0 %v6467
        %v6514 = vpop.f32.mrb[0].mxu0
        %v6515 = vadd.f32 %v4641, %v6514
        %v6516 = vpop.f32.mrb[0].mxu0
        %v6517 = vpop.f32.mrb[0].mxu0
        %v6518 = vadd.f32 %v4642, %v6517
        %v6519 = vpop.f32.mrb[0].mxu0
        %6520 = vmatprep.mubr.bf16.mxu0 0
        %6521 = vmatmul.mubr.bf16.gmra.mrb[0].mxu0 %v6470
        %v6522 = vpop.f32.mrb[0].mxu0
        %v6523 = vadd.f32 %v4643, %v6522
        %v6524 = vpop.f32.mrb[0].mxu0
        %v6525 = vpop.f32.mrb[0].mxu0
        %v6526 = vpop.f32.mrb[0].mxu0
        %6527 = vdwg.mxu0
        %v6528 = vsel %vm1626, %v6507, 0.0
        %6529 = vadd.xlane.f32.xlu0 %v6528
        %v6530 = vpop.xlane.xlu0 %6529
        %v6531 = vsel %vm1626, %v6510, 0.0
        %6532 = vadd.xlane.f32.xlu0 %v6531
        %v6533 = vpop.xlane.xlu0 %6532
        %v6534 = vsel %vm1626, %v6515, 0.0
        %6535 = vadd.xlane.f32.xlu0 %v6534
        %v6536 = vpop.xlane.xlu0 %6535
        %v6537 = vsel %vm1626, %v6518, 0.0
        %6538 = vadd.xlane.f32.xlu0 %v6537
        %v6539 = vpop.xlane.xlu0 %6538
        %v6540 = vsel %vm1639, %v6523, 0.0
        %6541 = vadd.xlane.f32.xlu0 %v6540
        %v6542 = vpop.xlane.xlu0 %6541
        %v6543 = vmul.f32 %v6530, %v1643
        %v6544 = vmul.f32 %v6533, %v1643
        %v6545 = vmul.f32 %v6536, %v1643
        %v6546 = vmul.f32 %v6539, %v1643
        %v6547 = vmul.f32 %v6542, %v1643
        %v6548 = vsub.f32 %v6507, %v6543
        %v6549 = vsub.f32 %v6510, %v6544
        %v6550 = vsub.f32 %v6515, %v6545
        %v6551 = vsub.f32 %v6518, %v6546
        %v6552 = vsub.f32 %v6523, %v6547
        %v6553 = vmul.f32 %v6548, %v6548
        %v6554 = vmul.f32 %v6549, %v6549
        %v6555 = vmul.f32 %v6550, %v6550
        %v6556 = vmul.f32 %v6551, %v6551
        %v6557 = vmul.f32 %v6552, %v6552
        %v6558 = vsel %vm1626, %v6553, 0.0
        %6559 = vadd.xlane.f32.xlu0 %v6558
        %v6560 = vpop.xlane.xlu0 %6559
        %v6561 = vsel %vm1626, %v6554, 0.0
        %6562 = vadd.xlane.f32.xlu0 %v6561
        %v6563 = vpop.xlane.xlu0 %6562
        %v6564 = vsel %vm1626, %v6555, 0.0
        %6565 = vadd.xlane.f32.xlu0 %v6564
        %v6566 = vpop.xlane.xlu0 %6565
        %v6567 = vsel %vm1626, %v6556, 0.0
        %6568 = vadd.xlane.f32.xlu0 %v6567
        %v6569 = vpop.xlane.xlu0 %6568
        %v6570 = vsel %vm1639, %v6557, 0.0
        %6571 = vadd.xlane.f32.xlu0 %v6570
        %v6572 = vpop.xlane.xlu0 %6571
        %v6573 = vmul.f32 %v6560, %v1643
        %v6574 = vmul.f32 %v6563, %v1643
        %v6575 = vmul.f32 %v6566, %v1643
        %v6576 = vmul.f32 %v6569, %v1643
        %v6577 = vmul.f32 %v6572, %v1643
        %v6578 = vadd.f32 %v6573, 1e-05
        %v6579 = vadd.f32 %v6574, 1e-05
        %v6580 = vadd.f32 %v6575, 1e-05
        %v6581 = vadd.f32 %v6576, 1e-05
        %v6582 = vadd.f32 %v6577, 1e-05
        %v6583 = vrsqrt.pop %v6578
        %v6584 = vrsqrt.pop %v6579
        %v6585 = vrsqrt.pop %v6580
        %v6586 = vrsqrt.pop %v6581
        %v6587 = vrsqrt.pop %v6582
        %v6588 = vmul.f32 %v6548, %v6583
        %v6589 = vmul.f32 %v6549, %v6584
        %v6590 = vmul.f32 %v6550, %v6585
        %v6591 = vmul.f32 %v6551, %v6586
        %v6592 = vmul.f32 %v6552, %v6587
        %v6594 = vlaneseq
        %v6595 = vshrl.u32 %v6594, 7
        %v6596 = vsub.s32 0, %v6595
        %v6597 = vrot.slane %v4649, %v6596
        %v6599 = vmul.f32 %v6588, %v6597
        %v6600 = vmul.f32 %v6589, %v6597
        %v6601 = vmul.f32 %v6590, %v6597
        %v6602 = vmul.f32 %v6591, %v6597
        %v6603 = vmul.f32 %v6592, %v6597
        %v6605 = vlaneseq
        %v6606 = vshrl.u32 %v6605, 7
        %v6607 = vsub.s32 0, %v6606
        %v6608 = vrot.slane %v4651, %v6607
        %v6610 = vadd.f32 %v6599, %v6608
        %v6611 = vadd.f32 %v6600, %v6608
        %v6612 = vadd.f32 %v6601, %v6608
        %v6613 = vadd.f32 %v6602, %v6608
        %v6614 = vadd.f32 %v6603, %v6608
        %v6615 = vpack.c.bf16 %v6611, %v6610
        %v6616 = vpack.c.bf16 %v6613, %v6612
        %v6617 = vpack.c.bf16 %v6614, %v6614
        %v6618 = vpack.c.bf16 %v4704, %v4703
        %v6619 = vpack.c.bf16 %v4706, %v4705
        %v6621 = vlaneseq
        %v6622 = vshrl.u32 %v6621, 7
        %v6623 = vsub.s32 0, %v6622
        %v6624 = vrot.slane %v4708, %v6623
        %v6627 = vshrl.u32 %v6615, 16
        %v6629 = vshll.u32 %v6615, 16
        %v6631 = vrot.slane %v6629, 1
        %v6632 = vor.u32 %v6627, %v6631
        %v6634 = vshll.u32 %v6616, 16
        %v6636 = vrot.slane %v6634, 1
        %v6637 = vsel %vm3495, %v6632, %v6636
        %v6638 = vshrl.u32 %v6616, 16
        %v6640 = vor.u32 %v6638, %v6636
        %v6642 = vshll.u32 %v6617, 16
        %v6644 = vrot.slane %v6642, 1
        %v6645 = vsel %vm3495, %v6640, %v6644
        %v6647 = vsel %vm1626, %v6637, 0
        %v6650 = vsel %vm1626, %v6645, 0
        %6652 = vmatprep.subr.bf16.mxu0 0
        %6653 = vmatpush1.bf16.msra.mxu0 %v6618
        %6654 = vmatprep.subr.bf16.mxu0 0
        %6655 = vmatpush1.bf16.msra.mxu0 %v6619
        %6656 = vmatprep.subr.bf16.mxu0 0
        %6657 = vmatpush1.bf16.msra.mxu0 0
        %6658 = vmatprep.subr.bf16.mxu0 0
        %6659 = vmatpush1.bf16.msra.mxu0 0
        %6660 = vmatprep.subr.bf16.mxu0 0
        %6661 = vmatpush1.bf16.msra.mxu0 0
        %6662 = vmatprep.subr.bf16.mxu0 0
        %6663 = vmatpush1.bf16.msra.mxu0 0
        %6664 = vmatprep.subr.bf16.mxu0 0
        %6665 = vmatpush1.bf16.msra.mxu0 0
        %6666 = vmatprep.subr.bf16.mxu0 0
        %6667 = vmatpush1.bf16.msra.mxu0 0
        %6668 = vmatprep.subr.bf16.mxu0 0
        %6669 = vmatpush1.bf16.msra.mxu0 0
        %6670 = vmatprep.subr.bf16.mxu0 0
        %6671 = vmatpush1.bf16.msra.mxu0 0
        %6672 = vmatprep.subr.bf16.mxu0 0
        %6673 = vmatpush1.bf16.msra.mxu0 0
        %6674 = vmatprep.subr.bf16.mxu0 0
        %6675 = vmatpush1.bf16.msra.mxu0 0
        %6676 = vmatprep.subr.bf16.mxu0 0
        %6677 = vmatpush1.bf16.msra.mxu0 0
        %6678 = vmatprep.subr.bf16.mxu0 0
        %6679 = vmatpush1.bf16.msra.mxu0 0
        %6680 = vmatprep.subr.bf16.mxu0 0
        %6681 = vmatpush1.bf16.msra.mxu0 0
        %6682 = vmatprep.subr.bf16.mxu0 0
        %6683 = vmatpush1.bf16.msra.mxu0 0
        %6684 = vmatprep.mubr.bf16.mxu0 0
        %6685 = vmatmul.mubr.bf16.gmra.mrb[0].mxu0 %v6647
        %v6686 = vpop.f32.mrb[0].mxu0
        %v6687 = vadd.f32 %v6624, %v6686
        %v6688 = vpop.f32.mrb[0].mxu0
        %v6689 = vpop.f32.mrb[0].mxu0
        %v6690 = vadd.f32 %v6624, %v6689
        %v6691 = vpop.f32.mrb[0].mxu0
        %6692 = vmatprep.mubr.bf16.mxu0 0
        %6693 = vmatmul.mubr.bf16.gmra.mrb[0].mxu0 %v6650
        %v6694 = vpop.f32.mrb[0].mxu0
        %v6695 = vadd.f32 %v6624, %v6694
        %v6696 = vpop.f32.mrb[0].mxu0
        %v6697 = vpop.f32.mrb[0].mxu0
        %v6698 = vadd.f32 %v6624, %v6697
        %v6699 = vpop.f32.mrb[0].mxu0
        %6700 = vdwg.mxu0
        %v6705 = vrot.slane %v6687, 7
        %v6706 = vrot.slane %v6690, 7
        %v6707 = vsel %vm1452, %v6705, %v6706
        %v6708 = vrot.slane %v6695, 7
        %v6709 = vsel %vm1452, %v6706, %v6708
        %v6710 = vrot.slane %v6698, 7
        %v6711 = vsel %vm1452, %v6708, %v6710
        %v6717 = vsel %vm1452, 0.0, %v6705
        %v6718 = vsel %vm1452, %v6710, 0.0
        %v6719 = vlaneseq
        %v6720 = vshrl.u32 %v6719, 7
        %v6721 = vsub.s32 0, %v6720
        %v6722 = vrot.slane %v4710, %v6721
        %v6723 = vmul.f32 %v6717, %v6722
        %v6724 = vmul.f32 %v6707, %v6722
        %v6725 = vmul.f32 %v6709, %v6722
        %v6726 = vmul.f32 %v6711, %v6722
        %v6727 = vlaneseq
        %v6728 = vshrl.u32 %v6727, 7
        %v6729 = vsub.s32 1, %v6728
        %v6730 = vrot.slane %v4710, %v6729
        %v6731 = vmul.f32 %v6717, %v6730
        %v6732 = vmul.f32 %v6707, %v6730
        %v6733 = vmul.f32 %v6709, %v6730
        %v6734 = vmul.f32 %v6711, %v6730
        %v6735 = vmul.f32 %v6718, %v6730
        %v6741 = vrot.slane %v6731, 1
        %v6742 = vrot.slane %v6732, 1
        %v6743 = vsel %vm1761, %v6741, %v6742
        %v6744 = vrot.slane %v6733, 1
        %v6745 = vsel %vm1761, %v6742, %v6744
        %v6746 = vrot.slane %v6734, 1
        %v6747 = vsel %vm1761, %v6744, %v6746
        %v6748 = vrot.slane %v6735, 1
        %v6749 = vsel %vm1761, %v6746, %v6748
        %v6754 = vadd.f32 %v6723, %v6743
        %v6755 = vadd.f32 %v6724, %v6745
        %v6756 = vadd.f32 %v6725, %v6747
        %v6757 = vadd.f32 %v6726, %v6749
        %v6758 = vlaneseq
        %v6759 = vshrl.u32 %v6758, 7
        %v6760 = vsub.s32 2, %v6759
        %v6761 = vrot.slane %v4710, %v6760
        %v6762 = vmul.f32 %v6717, %v6761
        %v6763 = vmul.f32 %v6707, %v6761
        %v6764 = vmul.f32 %v6709, %v6761
        %v6765 = vmul.f32 %v6711, %v6761
        %v6766 = vmul.f32 %v6718, %v6761
        %v6772 = vrot.slane %v6762, 2
        %v6773 = vrot.slane %v6763, 2
        %v6774 = vsel %vm1793, %v6772, %v6773
        %v6775 = vrot.slane %v6764, 2
        %v6776 = vsel %vm1793, %v6773, %v6775
        %v6777 = vrot.slane %v6765, 2
        %v6778 = vsel %vm1793, %v6775, %v6777
        %v6779 = vrot.slane %v6766, 2
        %v6780 = vsel %vm1793, %v6777, %v6779
        %v6785 = vadd.f32 %v6754, %v6774
        %v6786 = vadd.f32 %v6755, %v6776
        %v6787 = vadd.f32 %v6756, %v6778
        %v6788 = vadd.f32 %v6757, %v6780
        %v6790 = vlaneseq
        %v6791 = vshrl.u32 %v6790, 7
        %v6792 = vsub.s32 0, %v6791
        %v6793 = vrot.slane %v4712, %v6792
        %v6795 = vadd.f32 %v6785, %v6793
        %v6796 = vadd.f32 %v6786, %v6793
        %v6797 = vadd.f32 %v6787, %v6793
        %v6798 = vadd.f32 %v6788, %v6793
        %v6799 = vmul.f32 %v6795, 0.5
        %v6800 = vmul.f32 %v6796, 0.5
        %v6801 = vmul.f32 %v6797, 0.5
        %v6802 = vmul.f32 %v6798, 0.5
        %v6803 = vmul.f32 %v6795, 0.70710677
        %v6804 = vmul.f32 %v6796, 0.70710677
        %v6805 = vmul.f32 %v6797, 0.70710677
        %v6806 = vmul.f32 %v6798, 0.70710677
        %v6807 = vand.u32 2147483647, %v6803
        %v6808 = vand.u32 2147483647, %v6804
        %v6809 = vand.u32 2147483647, %v6805
        %v6810 = vand.u32 2147483647, %v6806
        %v6811 = vmul.f32 %v6807, 0.3275911
        %v6812 = vmul.f32 %v6808, 0.3275911
        %v6813 = vmul.f32 %v6809, 0.3275911
        %v6814 = vmul.f32 %v6810, 0.3275911
        %v6815 = vadd.f32 %v6811, 1.0
        %v6816 = vadd.f32 %v6812, 1.0
        %v6817 = vadd.f32 %v6813, 1.0
        %v6818 = vadd.f32 %v6814, 1.0
        %v6819 = vrcp.pop %v6815
        %v6820 = vmul.f32 1.0, %v6819
        %v6821 = vrcp.pop %v6816
        %v6822 = vmul.f32 1.0, %v6821
        %v6823 = vrcp.pop %v6817
        %v6824 = vmul.f32 1.0, %v6823
        %v6825 = vrcp.pop %v6818
        %v6826 = vmul.f32 1.0, %v6825
        %v6827 = vmul.f32 %v6820, 1.0614054
        %v6828 = vmul.f32 %v6822, 1.0614054
        %v6829 = vmul.f32 %v6824, 1.0614054
        %v6830 = vmul.f32 %v6826, 1.0614054
        %v6831 = vsub.f32 %v6827, 1.4531521
        %v6832 = vsub.f32 %v6828, 1.4531521
        %v6833 = vsub.f32 %v6829, 1.4531521
        %v6834 = vsub.f32 %v6830, 1.4531521
        %v6835 = vmul.f32 %v6831, %v6820
        %v6836 = vmul.f32 %v6832, %v6822
        %v6837 = vmul.f32 %v6833, %v6824
        %v6838 = vmul.f32 %v6834, %v6826
        %v6839 = vadd.f32 %v6835, 1.4214138
        %v6840 = vadd.f32 %v6836, 1.4214138
        %v6841 = vadd.f32 %v6837, 1.4214138
        %v6842 = vadd.f32 %v6838, 1.4214138
        %v6843 = vmul.f32 %v6839, %v6820
        %v6844 = vmul.f32 %v6840, %v6822
        %v6845 = vmul.f32 %v6841, %v6824
        %v6846 = vmul.f32 %v6842, %v6826
        %v6847 = vsub.f32 %v6843, 0.28449672
        %v6848 = vsub.f32 %v6844, 0.28449672
        %v6849 = vsub.f32 %v6845, 0.28449672
        %v6850 = vsub.f32 %v6846, 0.28449672
        %v6851 = vmul.f32 %v6847, %v6820
        %v6852 = vmul.f32 %v6848, %v6822
        %v6853 = vmul.f32 %v6849, %v6824
        %v6854 = vmul.f32 %v6850, %v6826
        %v6855 = vadd.f32 %v6851, 0.2548296
        %v6856 = vadd.f32 %v6852, 0.2548296
        %v6857 = vadd.f32 %v6853, 0.2548296
        %v6858 = vadd.f32 %v6854, 0.2548296
        %v6859 = vmul.f32 %v6855, %v6820
        %v6860 = vmul.f32 %v6856, %v6822
        %v6861 = vmul.f32 %v6857, %v6824
        %v6862 = vmul.f32 %v6858, %v6826
        %v6863 = vmul.f32 %v6807, %v6807
        %v6864 = vmul.f32 %v6808, %v6808
        %v6865 = vmul.f32 %v6809, %v6809
        %v6866 = vmul.f32 %v6810, %v6810
        %v6867 = vsub.f32 0.0, %v6863
        %v6868 = vsub.f32 0.0, %v6864
        %v6869 = vsub.f32 0.0, %v6865
        %v6870 = vsub.f32 0.0, %v6866
        %v6871 = vmul.f32 %v6867, 1.442695
        %v6872 = vpow.pop %v6871
        %v6873 = vmul.f32 %v6868, 1.442695
        %v6874 = vpow.pop %v6873
        %v6875 = vmul.f32 %v6869, 1.442695
        %v6876 = vpow.pop %v6875
        %v6877 = vmul.f32 %v6870, 1.442695
        %v6878 = vpow.pop %v6877
        %v6879 = vmul.f32 %v6859, %v6872
        %v6880 = vmul.f32 %v6860, %v6874
        %v6881 = vmul.f32 %v6861, %v6876
        %v6882 = vmul.f32 %v6862, %v6878
        %v6883 = vsub.f32 1.0, %v6879
        %v6884 = vsub.f32 1.0, %v6880
        %v6885 = vsub.f32 1.0, %v6881
        %v6886 = vsub.f32 1.0, %v6882
        %vm6887 = vcmp.ge.f32.partialorder %v6803, 0.0
        %vm6888 = vcmp.ge.f32.partialorder %v6804, 0.0
        %vm6889 = vcmp.ge.f32.partialorder %v6805, 0.0
        %vm6890 = vcmp.ge.f32.partialorder %v6806, 0.0
        %v6891 = vsub.f32 0.0, %v6883
        %v6892 = vsub.f32 0.0, %v6884
        %v6893 = vsub.f32 0.0, %v6885
        %v6894 = vsub.f32 0.0, %v6886
        %v6895 = vsel %vm6887, %v6883, %v6891
        %v6896 = vsel %vm6888, %v6884, %v6892
        %v6897 = vsel %vm6889, %v6885, %v6893
        %v6898 = vsel %vm6890, %v6886, %v6894
        %v6899 = vadd.f32 %v6895, 1.0
        %v6900 = vadd.f32 %v6896, 1.0
        %v6901 = vadd.f32 %v6897, 1.0
        %v6902 = vadd.f32 %v6898, 1.0
        %v6903 = vmul.f32 %v6799, %v6899
        %v6904 = vmul.f32 %v6800, %v6900
        %v6905 = vmul.f32 %v6801, %v6901
        %v6906 = vmul.f32 %v6802, %v6902
        %v6907 = vpack.c.bf16 %v6904, %v6903
        %v6908 = vpack.c.bf16 %v6906, %v6905
        %v6909 = vpack.c.bf16 %v4715, %v4714
        %v6910 = vpack.c.bf16 %v4717, %v4716
        %v6911 = vpack.c.bf16 %v4719, %v4718
        %v6912 = vpack.c.bf16 %v4721, %v4720
        %v6913 = vpack.c.bf16 %v4723, %v4722
        %v6914 = vpack.c.bf16 %v4725, %v4724
        %v6915 = vpack.c.bf16 %v4727, %v4726
        %v6916 = vpack.c.bf16 %v4729, %v4728
        %v6918 = vlaneseq
        %v6919 = vshrl.u32 %v6918, 7
        %v6920 = vsub.s32 0, %v6919
        %v6921 = vrot.slane %v4731, %v6920
        %6923 = vmatprep.subr.bf16.mxu0 0
        %6924 = vmatpush1.bf16.msra.mxu0 %v6909
        %6925 = vmatprep.subr.bf16.mxu0 0
        %6926 = vmatpush1.bf16.msra.mxu0 %v6910
        %6927 = vmatprep.subr.bf16.mxu0 0
        %6928 = vmatpush1.bf16.msra.mxu0 %v6911
        %6929 = vmatprep.subr.bf16.mxu0 0
        %6930 = vmatpush1.bf16.msra.mxu0 %v6912
        %6931 = vmatprep.subr.bf16.mxu0 0
        %6932 = vmatpush1.bf16.msra.mxu0 %v6913
        %6933 = vmatprep.subr.bf16.mxu0 0
        %6934 = vmatpush1.bf16.msra.mxu0 %v6914
        %6935 = vmatprep.subr.bf16.mxu0 0
        %6936 = vmatpush1.bf16.msra.mxu0 %v6915
        %6937 = vmatprep.subr.bf16.mxu0 0
        %6938 = vmatpush1.bf16.msra.mxu0 %v6916
        %6939 = vmatprep.subr.bf16.mxu0 0
        %6940 = vmatpush1.bf16.msra.mxu0 0
        %6941 = vmatprep.subr.bf16.mxu0 0
        %6942 = vmatpush1.bf16.msra.mxu0 0
        %6943 = vmatprep.subr.bf16.mxu0 0
        %6944 = vmatpush1.bf16.msra.mxu0 0
        %6945 = vmatprep.subr.bf16.mxu0 0
        %6946 = vmatpush1.bf16.msra.mxu0 0
        %6947 = vmatprep.subr.bf16.mxu0 0
        %6948 = vmatpush1.bf16.msra.mxu0 0
        %6949 = vmatprep.subr.bf16.mxu0 0
        %6950 = vmatpush1.bf16.msra.mxu0 0
        %6951 = vmatprep.subr.bf16.mxu0 0
        %6952 = vmatpush1.bf16.msra.mxu0 0
        %6953 = vmatprep.subr.bf16.mxu0 0
        %6954 = vmatpush1.bf16.msra.mxu0 0
        %6955 = vmatprep.mubr.bf16.mxu0 0
        %6956 = vmatmul.mubr.bf16.gmra.mrb[0].mxu0 %v6907
        %v6957 = vpop.f32.mrb[0].mxu0
        %v6958 = vadd.f32 %v6921, %v6957
        %v6959 = vpop.f32.mrb[0].mxu0
        %v6960 = vpop.f32.mrb[0].mxu0
        %v6961 = vadd.f32 %v6921, %v6960
        %v6962 = vpop.f32.mrb[0].mxu0
        %6963 = vmatprep.mubr.bf16.mxu0 0
        %6964 = vmatmul.mubr.bf16.gmra.mrb[0].mxu0 %v6908
        %v6965 = vpop.f32.mrb[0].mxu0
        %v6966 = vadd.f32 %v6921, %v6965
        %v6967 = vpop.f32.mrb[0].mxu0
        %v6968 = vpop.f32.mrb[0].mxu0
        %v6969 = vadd.f32 %v6921, %v6968
        %v6970 = vpop.f32.mrb[0].mxu0
        %6971 = vdwg.mxu0
        %v6976 = vrot.slane %v6958, 7
        %v6977 = vrot.slane %v6961, 7
        %v6978 = vsel %vm1452, %v6976, %v6977
        %v6979 = vrot.slane %v6966, 7
        %v6980 = vsel %vm1452, %v6977, %v6979
        %v6981 = vrot.slane %v6969, 7
        %v6982 = vsel %vm1452, %v6979, %v6981
        %v6988 = vsel %vm1452, %v6610, %v6976
        %v6989 = vadd.f32 %v6988, %v6507
        %v6990 = vadd.f32 %v6978, %v6510
        %v6991 = vadd.f32 %v6980, %v6515
        %v6992 = vadd.f32 %v6982, %v6518
        %v6993 = vadd.f32 %v6981, %v6523
        %v6994 = vsel %vm1626, %v6989, 0.0
        %6995 = vadd.xlane.f32.xlu0 %v6994
        %v6996 = vpop.xlane.xlu0 %6995
        %v6997 = vsel %vm1626, %v6990, 0.0
        %6998 = vadd.xlane.f32.xlu0 %v6997
        %v6999 = vpop.xlane.xlu0 %6998
        %v7000 = vsel %vm1626, %v6991, 0.0
        %7001 = vadd.xlane.f32.xlu0 %v7000
        %v7002 = vpop.xlane.xlu0 %7001
        %v7003 = vsel %vm1626, %v6992, 0.0
        %7004 = vadd.xlane.f32.xlu0 %v7003
        %v7005 = vpop.xlane.xlu0 %7004
        %v7006 = vsel %vm1639, %v6993, 0.0
        %7007 = vadd.xlane.f32.xlu0 %v7006
        %v7008 = vpop.xlane.xlu0 %7007
        %v7009 = vmul.f32 %v6996, %v1643
        %v7010 = vmul.f32 %v6999, %v1643
        %v7011 = vmul.f32 %v7002, %v1643
        %v7012 = vmul.f32 %v7005, %v1643
        %v7013 = vmul.f32 %v7008, %v1643
        %v7014 = vsub.f32 %v6989, %v7009
        %v7015 = vsub.f32 %v6990, %v7010
        %v7016 = vsub.f32 %v6991, %v7011
        %v7017 = vsub.f32 %v6992, %v7012
        %v7018 = vsub.f32 %v6993, %v7013
        %v7019 = vmul.f32 %v7014, %v7014
        %v7020 = vmul.f32 %v7015, %v7015
        %v7021 = vmul.f32 %v7016, %v7016
        %v7022 = vmul.f32 %v7017, %v7017
        %v7023 = vmul.f32 %v7018, %v7018
        %v7024 = vsel %vm1626, %v7019, 0.0
        %7025 = vadd.xlane.f32.xlu0 %v7024
        %v7026 = vpop.xlane.xlu0 %7025
        %v7027 = vsel %vm1626, %v7020, 0.0
        %7028 = vadd.xlane.f32.xlu0 %v7027
        %v7029 = vpop.xlane.xlu0 %7028
        %v7030 = vsel %vm1626, %v7021, 0.0
        %7031 = vadd.xlane.f32.xlu0 %v7030
        %v7032 = vpop.xlane.xlu0 %7031
        %v7033 = vsel %vm1626, %v7022, 0.0
        %7034 = vadd.xlane.f32.xlu0 %v7033
        %v7035 = vpop.xlane.xlu0 %7034
        %v7036 = vsel %vm1639, %v7023, 0.0
        %7037 = vadd.xlane.f32.xlu0 %v7036
        %v7038 = vpop.xlane.xlu0 %7037
        %v7039 = vmul.f32 %v7026, %v1643
        %v7040 = vmul.f32 %v7029, %v1643
        %v7041 = vmul.f32 %v7032, %v1643
        %v7042 = vmul.f32 %v7035, %v1643
        %v7043 = vmul.f32 %v7038, %v1643
        %v7044 = vadd.f32 %v7039, 1e-05
        %v7045 = vadd.f32 %v7040, 1e-05
        %v7046 = vadd.f32 %v7041, 1e-05
        %v7047 = vadd.f32 %v7042, 1e-05
        %v7048 = vadd.f32 %v7043, 1e-05
        %v7049 = vrsqrt.pop %v7044
        %v7050 = vrsqrt.pop %v7045
        %v7051 = vrsqrt.pop %v7046
        %v7052 = vrsqrt.pop %v7047
        %v7053 = vrsqrt.pop %v7048
        %v7054 = vmul.f32 %v7014, %v7049
        %v7055 = vmul.f32 %v7015, %v7050
        %v7056 = vmul.f32 %v7016, %v7051
        %v7057 = vmul.f32 %v7017, %v7052
        %v7058 = vmul.f32 %v7018, %v7053
        %v7060 = vlaneseq
        %v7061 = vshrl.u32 %v7060, 7
        %v7062 = vsub.s32 0, %v7061
        %v7063 = vrot.slane %v4653, %v7062
        %v7065 = vmul.f32 %v7054, %v7063
        %v7066 = vmul.f32 %v7055, %v7063
        %v7067 = vmul.f32 %v7056, %v7063
        %v7068 = vmul.f32 %v7057, %v7063
        %v7069 = vmul.f32 %v7058, %v7063
        %v7071 = vlaneseq
        %v7072 = vshrl.u32 %v7071, 7
        %v7073 = vsub.s32 0, %v7072
        %v7074 = vrot.slane %v4655, %v7073
        %v7076 = vadd.f32 %v7065, %v7074
        %v7077 = vadd.f32 %v7066, %v7074
        %v7078 = vadd.f32 %v7067, %v7074
        %v7079 = vadd.f32 %v7068, %v7074
        %v7080 = vadd.f32 %v7069, %v7074
        %v7081 = vpack.c.bf16 %v7077, %v7076
        %v7082 = vpack.c.bf16 %v7079, %v7078
        %v7083 = vpack.c.bf16 %v7080, %v7080
        %v7084 = vpack.c.bf16 %v4734, %v4733
        %v7085 = vpack.c.bf16 %v4736, %v4735
        %v7087 = vlaneseq
        %v7088 = vshrl.u32 %v7087, 7
        %v7089 = vsub.s32 0, %v7088
        %v7090 = vrot.slane %v4738, %v7089
        %v7093 = vshrl.u32 %v7081, 16
        %v7095 = vshll.u32 %v7081, 16
        %v7097 = vrot.slane %v7095, 1
        %v7098 = vor.u32 %v7093, %v7097
        %v7100 = vshll.u32 %v7082, 16
        %v7102 = vrot.slane %v7100, 1
        %v7103 = vsel %vm3495, %v7098, %v7102
        %v7104 = vshrl.u32 %v7082, 16
        %v7106 = vor.u32 %v7104, %v7102
        %v7108 = vshll.u32 %v7083, 16
        %v7110 = vrot.slane %v7108, 1
        %v7111 = vsel %vm3495, %v7106, %v7110
        %v7113 = vsel %vm1626, %v7103, 0
        %v7116 = vsel %vm1626, %v7111, 0
        %7118 = vmatprep.subr.bf16.mxu0 0
        %7119 = vmatpush1.bf16.msra.mxu0 %v7084
        %7120 = vmatprep.subr.bf16.mxu0 0
        %7121 = vmatpush1.bf16.msra.mxu0 %v7085
        %7122 = vmatprep.subr.bf16.mxu0 0
        %7123 = vmatpush1.bf16.msra.mxu0 0
        %7124 = vmatprep.subr.bf16.mxu0 0
        %7125 = vmatpush1.bf16.msra.mxu0 0
        %7126 = vmatprep.subr.bf16.mxu0 0
        %7127 = vmatpush1.bf16.msra.mxu0 0
        %7128 = vmatprep.subr.bf16.mxu0 0
        %7129 = vmatpush1.bf16.msra.mxu0 0
        %7130 = vmatprep.subr.bf16.mxu0 0
        %7131 = vmatpush1.bf16.msra.mxu0 0
        %7132 = vmatprep.subr.bf16.mxu0 0
        %7133 = vmatpush1.bf16.msra.mxu0 0
        %7134 = vmatprep.subr.bf16.mxu0 0
        %7135 = vmatpush1.bf16.msra.mxu0 0
        %7136 = vmatprep.subr.bf16.mxu0 0
        %7137 = vmatpush1.bf16.msra.mxu0 0
        %7138 = vmatprep.subr.bf16.mxu0 0
        %7139 = vmatpush1.bf16.msra.mxu0 0
        %7140 = vmatprep.subr.bf16.mxu0 0
        %7141 = vmatpush1.bf16.msra.mxu0 0
        %7142 = vmatprep.subr.bf16.mxu0 0
        %7143 = vmatpush1.bf16.msra.mxu0 0
        %7144 = vmatprep.subr.bf16.mxu0 0
        %7145 = vmatpush1.bf16.msra.mxu0 0
        %7146 = vmatprep.subr.bf16.mxu0 0
        %7147 = vmatpush1.bf16.msra.mxu0 0
        %7148 = vmatprep.subr.bf16.mxu0 0
        %7149 = vmatpush1.bf16.msra.mxu0 0
        %7150 = vmatprep.mubr.bf16.mxu0 0
        %7151 = vmatmul.mubr.bf16.gmra.mrb[0].mxu0 %v7113
        %v7152 = vpop.f32.mrb[0].mxu0
        %v7153 = vadd.f32 %v7090, %v7152
        %v7154 = vpop.f32.mrb[0].mxu0
        %v7155 = vpop.f32.mrb[0].mxu0
        %v7156 = vadd.f32 %v7090, %v7155
        %v7157 = vpop.f32.mrb[0].mxu0
        %7158 = vmatprep.mubr.bf16.mxu0 0
        %7159 = vmatmul.mubr.bf16.gmra.mrb[0].mxu0 %v7116
        %v7160 = vpop.f32.mrb[0].mxu0
        %v7161 = vadd.f32 %v7090, %v7160
        %v7162 = vpop.f32.mrb[0].mxu0
        %v7163 = vpop.f32.mrb[0].mxu0
        %v7164 = vadd.f32 %v7090, %v7163
        %v7165 = vpop.f32.mrb[0].mxu0
        %7166 = vdwg.mxu0
        %v7171 = vrot.slane %v7153, 7
        %v7172 = vrot.slane %v7156, 7
        %v7173 = vsel %vm1452, %v7171, %v7172
        %v7174 = vrot.slane %v7161, 7
        %v7175 = vsel %vm1452, %v7172, %v7174
        %v7176 = vrot.slane %v7164, 7
        %v7177 = vsel %vm1452, %v7174, %v7176
        %v7183 = vsel %vm1452, 0.0, %v7171
        %v7184 = vsel %vm1452, %v7176, 0.0
        %v7185 = vlaneseq
        %v7186 = vshrl.u32 %v7185, 7
        %v7187 = vsub.s32 0, %v7186
        %v7188 = vrot.slane %v4740, %v7187
        %v7189 = vmul.f32 %v7183, %v7188
        %v7190 = vmul.f32 %v7173, %v7188
        %v7191 = vmul.f32 %v7175, %v7188
        %v7192 = vmul.f32 %v7177, %v7188
        %v7193 = vlaneseq
        %v7194 = vshrl.u32 %v7193, 7
        %v7195 = vsub.s32 1, %v7194
        %v7196 = vrot.slane %v4740, %v7195
        %v7197 = vmul.f32 %v7183, %v7196
        %v7198 = vmul.f32 %v7173, %v7196
        %v7199 = vmul.f32 %v7175, %v7196
        %v7200 = vmul.f32 %v7177, %v7196
        %v7201 = vmul.f32 %v7184, %v7196
        %v7207 = vrot.slane %v7197, 1
        %v7208 = vrot.slane %v7198, 1
        %v7209 = vsel %vm1761, %v7207, %v7208
        %v7210 = vrot.slane %v7199, 1
        %v7211 = vsel %vm1761, %v7208, %v7210
        %v7212 = vrot.slane %v7200, 1
        %v7213 = vsel %vm1761, %v7210, %v7212
        %v7214 = vrot.slane %v7201, 1
        %v7215 = vsel %vm1761, %v7212, %v7214
        %v7220 = vadd.f32 %v7189, %v7209
        %v7221 = vadd.f32 %v7190, %v7211
        %v7222 = vadd.f32 %v7191, %v7213
        %v7223 = vadd.f32 %v7192, %v7215
        %v7224 = vlaneseq
        %v7225 = vshrl.u32 %v7224, 7
        %v7226 = vsub.s32 2, %v7225
        %v7227 = vrot.slane %v4740, %v7226
        %v7228 = vmul.f32 %v7183, %v7227
        %v7229 = vmul.f32 %v7173, %v7227
        %v7230 = vmul.f32 %v7175, %v7227
        %v7231 = vmul.f32 %v7177, %v7227
        %v7232 = vmul.f32 %v7184, %v7227
        %v7238 = vrot.slane %v7228, 2
        %v7239 = vrot.slane %v7229, 2
        %v7240 = vsel %vm1793, %v7238, %v7239
        %v7241 = vrot.slane %v7230, 2
        %v7242 = vsel %vm1793, %v7239, %v7241
        %v7243 = vrot.slane %v7231, 2
        %v7244 = vsel %vm1793, %v7241, %v7243
        %v7245 = vrot.slane %v7232, 2
        %v7246 = vsel %vm1793, %v7243, %v7245
        %v7251 = vadd.f32 %v7220, %v7240
        %v7252 = vadd.f32 %v7221, %v7242
        %v7253 = vadd.f32 %v7222, %v7244
        %v7254 = vadd.f32 %v7223, %v7246
        %v7256 = vlaneseq
        %v7257 = vshrl.u32 %v7256, 7
        %v7258 = vsub.s32 0, %v7257
        %v7259 = vrot.slane %v4742, %v7258
        %v7261 = vadd.f32 %v7251, %v7259
        %v7262 = vadd.f32 %v7252, %v7259
        %v7263 = vadd.f32 %v7253, %v7259
        %v7264 = vadd.f32 %v7254, %v7259
        %v7265 = vmul.f32 %v7261, 0.5
        %v7266 = vmul.f32 %v7262, 0.5
        %v7267 = vmul.f32 %v7263, 0.5
        %v7268 = vmul.f32 %v7264, 0.5
        %v7269 = vmul.f32 %v7261, 0.70710677
        %v7270 = vmul.f32 %v7262, 0.70710677
        %v7271 = vmul.f32 %v7263, 0.70710677
        %v7272 = vmul.f32 %v7264, 0.70710677
        %v7273 = vand.u32 2147483647, %v7269
        %v7274 = vand.u32 2147483647, %v7270
        %v7275 = vand.u32 2147483647, %v7271
        %v7276 = vand.u32 2147483647, %v7272
        %v7277 = vmul.f32 %v7273, 0.3275911
        %v7278 = vmul.f32 %v7274, 0.3275911
        %v7279 = vmul.f32 %v7275, 0.3275911
        %v7280 = vmul.f32 %v7276, 0.3275911
        %v7281 = vadd.f32 %v7277, 1.0
        %v7282 = vadd.f32 %v7278, 1.0
        %v7283 = vadd.f32 %v7279, 1.0
        %v7284 = vadd.f32 %v7280, 1.0
        %v7285 = vrcp.pop %v7281
        %v7286 = vmul.f32 1.0, %v7285
        %v7287 = vrcp.pop %v7282
        %v7288 = vmul.f32 1.0, %v7287
        %v7289 = vrcp.pop %v7283
        %v7290 = vmul.f32 1.0, %v7289
        %v7291 = vrcp.pop %v7284
        %v7292 = vmul.f32 1.0, %v7291
        %v7293 = vmul.f32 %v7286, 1.0614054
        %v7294 = vmul.f32 %v7288, 1.0614054
        %v7295 = vmul.f32 %v7290, 1.0614054
        %v7296 = vmul.f32 %v7292, 1.0614054
        %v7297 = vsub.f32 %v7293, 1.4531521
        %v7298 = vsub.f32 %v7294, 1.4531521
        %v7299 = vsub.f32 %v7295, 1.4531521
        %v7300 = vsub.f32 %v7296, 1.4531521
        %v7301 = vmul.f32 %v7297, %v7286
        %v7302 = vmul.f32 %v7298, %v7288
        %v7303 = vmul.f32 %v7299, %v7290
        %v7304 = vmul.f32 %v7300, %v7292
        %v7305 = vadd.f32 %v7301, 1.4214138
        %v7306 = vadd.f32 %v7302, 1.4214138
        %v7307 = vadd.f32 %v7303, 1.4214138
        %v7308 = vadd.f32 %v7304, 1.4214138
        %v7309 = vmul.f32 %v7305, %v7286
        %v7310 = vmul.f32 %v7306, %v7288
        %v7311 = vmul.f32 %v7307, %v7290
        %v7312 = vmul.f32 %v7308, %v7292
        %v7313 = vsub.f32 %v7309, 0.28449672
        %v7314 = vsub.f32 %v7310, 0.28449672
        %v7315 = vsub.f32 %v7311, 0.28449672
        %v7316 = vsub.f32 %v7312, 0.28449672
        %v7317 = vmul.f32 %v7313, %v7286
        %v7318 = vmul.f32 %v7314, %v7288
        %v7319 = vmul.f32 %v7315, %v7290
        %v7320 = vmul.f32 %v7316, %v7292
        %v7321 = vadd.f32 %v7317, 0.2548296
        %v7322 = vadd.f32 %v7318, 0.2548296
        %v7323 = vadd.f32 %v7319, 0.2548296
        %v7324 = vadd.f32 %v7320, 0.2548296
        %v7325 = vmul.f32 %v7321, %v7286
        %v7326 = vmul.f32 %v7322, %v7288
        %v7327 = vmul.f32 %v7323, %v7290
        %v7328 = vmul.f32 %v7324, %v7292
        %v7329 = vmul.f32 %v7273, %v7273
        %v7330 = vmul.f32 %v7274, %v7274
        %v7331 = vmul.f32 %v7275, %v7275
        %v7332 = vmul.f32 %v7276, %v7276
        %v7333 = vsub.f32 0.0, %v7329
        %v7334 = vsub.f32 0.0, %v7330
        %v7335 = vsub.f32 0.0, %v7331
        %v7336 = vsub.f32 0.0, %v7332
        %v7337 = vmul.f32 %v7333, 1.442695
        %v7338 = vpow.pop %v7337
        %v7339 = vmul.f32 %v7334, 1.442695
        %v7340 = vpow.pop %v7339
        %v7341 = vmul.f32 %v7335, 1.442695
        %v7342 = vpow.pop %v7341
        %v7343 = vmul.f32 %v7336, 1.442695
        %v7344 = vpow.pop %v7343
        %v7345 = vmul.f32 %v7325, %v7338
        %v7346 = vmul.f32 %v7326, %v7340
        %v7347 = vmul.f32 %v7327, %v7342
        %v7348 = vmul.f32 %v7328, %v7344
        %v7349 = vsub.f32 1.0, %v7345
        %v7350 = vsub.f32 1.0, %v7346
        %v7351 = vsub.f32 1.0, %v7347
        %v7352 = vsub.f32 1.0, %v7348
        %vm7353 = vcmp.ge.f32.partialorder %v7269, 0.0
        %vm7354 = vcmp.ge.f32.partialorder %v7270, 0.0
        %vm7355 = vcmp.ge.f32.partialorder %v7271, 0.0
        %vm7356 = vcmp.ge.f32.partialorder %v7272, 0.0
        %v7357 = vsub.f32 0.0, %v7349
        %v7358 = vsub.f32 0.0, %v7350
        %v7359 = vsub.f32 0.0, %v7351
        %v7360 = vsub.f32 0.0, %v7352
        %v7361 = vsel %vm7353, %v7349, %v7357
        %v7362 = vsel %vm7354, %v7350, %v7358
        %v7363 = vsel %vm7355, %v7351, %v7359
        %v7364 = vsel %vm7356, %v7352, %v7360
        %v7365 = vadd.f32 %v7361, 1.0
        %v7366 = vadd.f32 %v7362, 1.0
        %v7367 = vadd.f32 %v7363, 1.0
        %v7368 = vadd.f32 %v7364, 1.0
        %v7369 = vmul.f32 %v7265, %v7365
        %v7370 = vmul.f32 %v7266, %v7366
        %v7371 = vmul.f32 %v7267, %v7367
        %v7372 = vmul.f32 %v7268, %v7368
        %v7373 = vpack.c.bf16 %v7370, %v7369
        %v7374 = vpack.c.bf16 %v7372, %v7371
        %v7375 = vpack.c.bf16 %v4745, %v4744
        %v7376 = vpack.c.bf16 %v4747, %v4746
        %v7377 = vpack.c.bf16 %v4749, %v4748
        %v7378 = vpack.c.bf16 %v4751, %v4750
        %v7379 = vpack.c.bf16 %v4753, %v4752
        %v7380 = vpack.c.bf16 %v4755, %v4754
        %v7381 = vpack.c.bf16 %v4757, %v4756
        %v7382 = vpack.c.bf16 %v4759, %v4758
        %v7384 = vlaneseq
        %v7385 = vshrl.u32 %v7384, 7
        %v7386 = vsub.s32 0, %v7385
        %v7387 = vrot.slane %v4761, %v7386
        %7389 = vmatprep.subr.bf16.mxu0 0
        %7390 = vmatpush1.bf16.msra.mxu0 %v7375
        %7391 = vmatprep.subr.bf16.mxu0 0
        %7392 = vmatpush1.bf16.msra.mxu0 %v7376
        %7393 = vmatprep.subr.bf16.mxu0 0
        %7394 = vmatpush1.bf16.msra.mxu0 %v7377
        %7395 = vmatprep.subr.bf16.mxu0 0
        %7396 = vmatpush1.bf16.msra.mxu0 %v7378
        %7397 = vmatprep.subr.bf16.mxu0 0
        %7398 = vmatpush1.bf16.msra.mxu0 %v7379
        %7399 = vmatprep.subr.bf16.mxu0 0
        %7400 = vmatpush1.bf16.msra.mxu0 %v7380
        %7401 = vmatprep.subr.bf16.mxu0 0
        %7402 = vmatpush1.bf16.msra.mxu0 %v7381
        %7403 = vmatprep.subr.bf16.mxu0 0
        %7404 = vmatpush1.bf16.msra.mxu0 %v7382
        %7405 = vmatprep.subr.bf16.mxu0 0
        %7406 = vmatpush1.bf16.msra.mxu0 0
        %7407 = vmatprep.subr.bf16.mxu0 0
        %7408 = vmatpush1.bf16.msra.mxu0 0
        %7409 = vmatprep.subr.bf16.mxu0 0
        %7410 = vmatpush1.bf16.msra.mxu0 0
        %7411 = vmatprep.subr.bf16.mxu0 0
        %7412 = vmatpush1.bf16.msra.mxu0 0
        %7413 = vmatprep.subr.bf16.mxu0 0
        %7414 = vmatpush1.bf16.msra.mxu0 0
        %7415 = vmatprep.subr.bf16.mxu0 0
        %7416 = vmatpush1.bf16.msra.mxu0 0
        %7417 = vmatprep.subr.bf16.mxu0 0
        %7418 = vmatpush1.bf16.msra.mxu0 0
        %7419 = vmatprep.subr.bf16.mxu0 0
        %7420 = vmatpush1.bf16.msra.mxu0 0
        %7421 = vmatprep.mubr.bf16.mxu0 0
        %7422 = vmatmul.mubr.bf16.gmra.mrb[0].mxu0 %v7373
        %v7423 = vpop.f32.mrb[0].mxu0
        %v7424 = vadd.f32 %v7387, %v7423
        %v7425 = vpop.f32.mrb[0].mxu0
        %v7426 = vpop.f32.mrb[0].mxu0
        %v7427 = vpop.f32.mrb[0].mxu0
        %7428 = vmatprep.mubr.bf16.mxu0 0
        %7429 = vmatmul.mubr.bf16.gmra.mrb[0].mxu0 %v7374
        %v7430 = vpop.f32.mrb[0].mxu0
        %v7431 = vpop.f32.mrb[0].mxu0
        %v7432 = vpop.f32.mrb[0].mxu0
        %v7433 = vpop.f32.mrb[0].mxu0
        %7434 = vdwg.mxu0
        %v7436 = vrot.slane %v7424, 7
        %v7438 = vsel %vm1452, %v7076, %v7436
        %v7439 = vadd.f32 %v7438, %v6989
        %v7441 = vlaneseq
        %v7442 = vshrl.u32 %v7441, 7
        %v7443 = vsub.s32 0, %v7442
        %v7444 = vrot.slane %v4657, %v7443
        %v7446 = vmul.f32 %v7054, %v7444
        %v7447 = vmul.f32 %v7055, %v7444
        %v7448 = vmul.f32 %v7056, %v7444
        %v7449 = vmul.f32 %v7057, %v7444
        %v7450 = vmul.f32 %v7058, %v7444
        %v7452 = vlaneseq
        %v7453 = vshrl.u32 %v7452, 7
        %v7454 = vsub.s32 0, %v7453
        %v7455 = vrot.slane %v4659, %v7454
        %v7457 = vadd.f32 %v7446, %v7455
        %v7458 = vadd.f32 %v7447, %v7455
        %v7459 = vadd.f32 %v7448, %v7455
        %v7460 = vadd.f32 %v7449, %v7455
        %v7461 = vadd.f32 %v7450, %v7455
        %v7462 = vpack.c.bf16 %v7458, %v7457
        %v7463 = vpack.c.bf16 %v7460, %v7459
        %v7464 = vpack.c.bf16 %v7461, %v7461
        %v7465 = vpack.c.bf16 %v4764, %v4763
        %v7466 = vpack.c.bf16 %v4766, %v4765
        %v7468 = vlaneseq
        %v7469 = vshrl.u32 %v7468, 7
        %v7470 = vsub.s32 0, %v7469
        %v7471 = vrot.slane %v4768, %v7470
        %v7474 = vsel %vm1626, %v7462, 0
        %v7477 = vsel %vm1626, %v7463, 0
        %v7480 = vsel %vm1626, %v7464, 0
        %7482 = vmatprep.subr.bf16.mxu0 0
        %7483 = vmatpush1.bf16.msra.mxu0 %v7465
        %7484 = vmatprep.subr.bf16.mxu0 0
        %7485 = vmatpush1.bf16.msra.mxu0 %v7466
        %7486 = vmatprep.subr.bf16.mxu0 0
        %7487 = vmatpush1.bf16.msra.mxu0 0
        %7488 = vmatprep.subr.bf16.mxu0 0
        %7489 = vmatpush1.bf16.msra.mxu0 0
        %7490 = vmatprep.subr.bf16.mxu0 0
        %7491 = vmatpush1.bf16.msra.mxu0 0
        %7492 = vmatprep.subr.bf16.mxu0 0
        %7493 = vmatpush1.bf16.msra.mxu0 0
        %7494 = vmatprep.subr.bf16.mxu0 0
        %7495 = vmatpush1.bf16.msra.mxu0 0
        %7496 = vmatprep.subr.bf16.mxu0 0
        %7497 = vmatpush1.bf16.msra.mxu0 0
        %7498 = vmatprep.subr.bf16.mxu0 0
        %7499 = vmatpush1.bf16.msra.mxu0 0
        %7500 = vmatprep.subr.bf16.mxu0 0
        %7501 = vmatpush1.bf16.msra.mxu0 0
        %7502 = vmatprep.subr.bf16.mxu0 0
        %7503 = vmatpush1.bf16.msra.mxu0 0
        %7504 = vmatprep.subr.bf16.mxu0 0
        %7505 = vmatpush1.bf16.msra.mxu0 0
        %7506 = vmatprep.subr.bf16.mxu0 0
        %7507 = vmatpush1.bf16.msra.mxu0 0
        %7508 = vmatprep.subr.bf16.mxu0 0
        %7509 = vmatpush1.bf16.msra.mxu0 0
        %7510 = vmatprep.subr.bf16.mxu0 0
        %7511 = vmatpush1.bf16.msra.mxu0 0
        %7512 = vmatprep.subr.bf16.mxu0 0
        %7513 = vmatpush1.bf16.msra.mxu0 0
        %7514 = vmatprep.mubr.bf16.mxu0 0
        %7515 = vmatmul.mubr.bf16.gmra.mrb[0].mxu0 %v7474
        %v7516 = vpop.f32.mrb[0].mxu0
        %v7517 = vadd.f32 %v7471, %v7516
        %v7518 = vpop.f32.mrb[0].mxu0
        %v7519 = vpop.f32.mrb[0].mxu0
        %v7520 = vadd.f32 %v7471, %v7519
        %v7521 = vpop.f32.mrb[0].mxu0
        %7522 = vmatprep.mubr.bf16.mxu0 0
        %7523 = vmatmul.mubr.bf16.gmra.mrb[0].mxu0 %v7477
        %v7524 = vpop.f32.mrb[0].mxu0
        %v7525 = vadd.f32 %v7471, %v7524
        %v7526 = vpop.f32.mrb[0].mxu0
        %v7527 = vpop.f32.mrb[0].mxu0
        %v7528 = vadd.f32 %v7471, %v7527
        %v7529 = vpop.f32.mrb[0].mxu0
        %7530 = vmatprep.mubr.bf16.mxu0 0
        %7531 = vmatmul.mubr.bf16.gmra.mrb[0].mxu0 %v7480
        %v7532 = vpop.f32.mrb[0].mxu0
        %v7533 = vadd.f32 %v7471, %v7532
        %v7534 = vpop.f32.mrb[0].mxu0
        %v7535 = vpop.f32.mrb[0].mxu0
        %v7536 = vpop.f32.mrb[0].mxu0
        %7537 = vdwg.mxu0
        %v7538 = vmul.f32 %v7517, 0.5
        %v7539 = vmul.f32 %v7520, 0.5
        %v7540 = vmul.f32 %v7525, 0.5
        %v7541 = vmul.f32 %v7528, 0.5
        %v7542 = vmul.f32 %v7533, 0.5
        %v7543 = vmul.f32 %v7517, 0.70710677
        %v7544 = vmul.f32 %v7520, 0.70710677
        %v7545 = vmul.f32 %v7525, 0.70710677
        %v7546 = vmul.f32 %v7528, 0.70710677
        %v7547 = vmul.f32 %v7533, 0.70710677
        %v7548 = vand.u32 2147483647, %v7543
        %v7549 = vand.u32 2147483647, %v7544
        %v7550 = vand.u32 2147483647, %v7545
        %v7551 = vand.u32 2147483647, %v7546
        %v7552 = vand.u32 2147483647, %v7547
        %v7553 = vmul.f32 %v7548, 0.3275911
        %v7554 = vmul.f32 %v7549, 0.3275911
        %v7555 = vmul.f32 %v7550, 0.3275911
        %v7556 = vmul.f32 %v7551, 0.3275911
        %v7557 = vmul.f32 %v7552, 0.3275911
        %v7558 = vadd.f32 %v7553, 1.0
        %v7559 = vadd.f32 %v7554, 1.0
        %v7560 = vadd.f32 %v7555, 1.0
        %v7561 = vadd.f32 %v7556, 1.0
        %v7562 = vadd.f32 %v7557, 1.0
        %v7563 = vrcp.pop %v7558
        %v7564 = vmul.f32 1.0, %v7563
        %v7565 = vrcp.pop %v7559
        %v7566 = vmul.f32 1.0, %v7565
        %v7567 = vrcp.pop %v7560
        %v7568 = vmul.f32 1.0, %v7567
        %v7569 = vrcp.pop %v7561
        %v7570 = vmul.f32 1.0, %v7569
        %v7571 = vrcp.pop %v7562
        %v7572 = vmul.f32 1.0, %v7571
        %v7573 = vmul.f32 %v7564, 1.0614054
        %v7574 = vmul.f32 %v7566, 1.0614054
        %v7575 = vmul.f32 %v7568, 1.0614054
        %v7576 = vmul.f32 %v7570, 1.0614054
        %v7577 = vmul.f32 %v7572, 1.0614054
        %v7578 = vsub.f32 %v7573, 1.4531521
        %v7579 = vsub.f32 %v7574, 1.4531521
        %v7580 = vsub.f32 %v7575, 1.4531521
        %v7581 = vsub.f32 %v7576, 1.4531521
        %v7582 = vsub.f32 %v7577, 1.4531521
        %v7583 = vmul.f32 %v7578, %v7564
        %v7584 = vmul.f32 %v7579, %v7566
        %v7585 = vmul.f32 %v7580, %v7568
        %v7586 = vmul.f32 %v7581, %v7570
        %v7587 = vmul.f32 %v7582, %v7572
        %v7588 = vadd.f32 %v7583, 1.4214138
        %v7589 = vadd.f32 %v7584, 1.4214138
        %v7590 = vadd.f32 %v7585, 1.4214138
        %v7591 = vadd.f32 %v7586, 1.4214138
        %v7592 = vadd.f32 %v7587, 1.4214138
        %v7593 = vmul.f32 %v7588, %v7564
        %v7594 = vmul.f32 %v7589, %v7566
        %v7595 = vmul.f32 %v7590, %v7568
        %v7596 = vmul.f32 %v7591, %v7570
        %v7597 = vmul.f32 %v7592, %v7572
        %v7598 = vsub.f32 %v7593, 0.28449672
        %v7599 = vsub.f32 %v7594, 0.28449672
        %v7600 = vsub.f32 %v7595, 0.28449672
        %v7601 = vsub.f32 %v7596, 0.28449672
        %v7602 = vsub.f32 %v7597, 0.28449672
        %v7603 = vmul.f32 %v7598, %v7564
        %v7604 = vmul.f32 %v7599, %v7566
        %v7605 = vmul.f32 %v7600, %v7568
        %v7606 = vmul.f32 %v7601, %v7570
        %v7607 = vmul.f32 %v7602, %v7572
        %v7608 = vadd.f32 %v7603, 0.2548296
        %v7609 = vadd.f32 %v7604, 0.2548296
        %v7610 = vadd.f32 %v7605, 0.2548296
        %v7611 = vadd.f32 %v7606, 0.2548296
        %v7612 = vadd.f32 %v7607, 0.2548296
        %v7613 = vmul.f32 %v7608, %v7564
        %v7614 = vmul.f32 %v7609, %v7566
        %v7615 = vmul.f32 %v7610, %v7568
        %v7616 = vmul.f32 %v7611, %v7570
        %v7617 = vmul.f32 %v7612, %v7572
        %v7618 = vmul.f32 %v7548, %v7548
        %v7619 = vmul.f32 %v7549, %v7549
        %v7620 = vmul.f32 %v7550, %v7550
        %v7621 = vmul.f32 %v7551, %v7551
        %v7622 = vmul.f32 %v7552, %v7552
        %v7623 = vsub.f32 0.0, %v7618
        %v7624 = vsub.f32 0.0, %v7619
        %v7625 = vsub.f32 0.0, %v7620
        %v7626 = vsub.f32 0.0, %v7621
        %v7627 = vsub.f32 0.0, %v7622
        %v7628 = vmul.f32 %v7623, 1.442695
        %v7629 = vpow.pop %v7628
        %v7630 = vmul.f32 %v7624, 1.442695
        %v7631 = vpow.pop %v7630
        %v7632 = vmul.f32 %v7625, 1.442695
        %v7633 = vpow.pop %v7632
        %v7634 = vmul.f32 %v7626, 1.442695
        %v7635 = vpow.pop %v7634
        %v7636 = vmul.f32 %v7627, 1.442695
        %v7637 = vpow.pop %v7636
        %v7638 = vmul.f32 %v7613, %v7629
        %v7639 = vmul.f32 %v7614, %v7631
        %v7640 = vmul.f32 %v7615, %v7633
        %v7641 = vmul.f32 %v7616, %v7635
        %v7642 = vmul.f32 %v7617, %v7637
        %v7643 = vsub.f32 1.0, %v7638
        %v7644 = vsub.f32 1.0, %v7639
        %v7645 = vsub.f32 1.0, %v7640
        %v7646 = vsub.f32 1.0, %v7641
        %v7647 = vsub.f32 1.0, %v7642
        %vm7648 = vcmp.ge.f32.partialorder %v7543, 0.0
        %vm7649 = vcmp.ge.f32.partialorder %v7544, 0.0
        %vm7650 = vcmp.ge.f32.partialorder %v7545, 0.0
        %vm7651 = vcmp.ge.f32.partialorder %v7546, 0.0
        %vm7652 = vcmp.ge.f32.partialorder %v7547, 0.0
        %v7653 = vsub.f32 0.0, %v7643
        %v7654 = vsub.f32 0.0, %v7644
        %v7655 = vsub.f32 0.0, %v7645
        %v7656 = vsub.f32 0.0, %v7646
        %v7657 = vsub.f32 0.0, %v7647
        %v7658 = vsel %vm7648, %v7643, %v7653
        %v7659 = vsel %vm7649, %v7644, %v7654
        %v7660 = vsel %vm7650, %v7645, %v7655
        %v7661 = vsel %vm7651, %v7646, %v7656
        %v7662 = vsel %vm7652, %v7647, %v7657
        %v7663 = vadd.f32 %v7658, 1.0
        %v7664 = vadd.f32 %v7659, 1.0
        %v7665 = vadd.f32 %v7660, 1.0
        %v7666 = vadd.f32 %v7661, 1.0
        %v7667 = vadd.f32 %v7662, 1.0
        %v7668 = vmul.f32 %v7538, %v7663
        %v7669 = vmul.f32 %v7539, %v7664
        %v7670 = vmul.f32 %v7540, %v7665
        %v7671 = vmul.f32 %v7541, %v7666
        %v7672 = vmul.f32 %v7542, %v7667
        %v7673 = vpack.c.bf16 %v7669, %v7668
        %v7674 = vpack.c.bf16 %v7671, %v7670
        %v7675 = vpack.c.bf16 %v7672, %v7672
        %v7676 = vpack.c.bf16 %v4771, %v4770
        %v7677 = vpack.c.bf16 %v4773, %v4772
        %v7679 = vlaneseq
        %v7680 = vshrl.u32 %v7679, 7
        %v7681 = vsub.s32 0, %v7680
        %v7682 = vrot.slane %v4775, %v7681
        %v7685 = vsel %vm1626, %v7673, 0
        %v7688 = vsel %vm1626, %v7674, 0
        %v7691 = vsel %vm1626, %v7675, 0
        %7693 = vmatprep.subr.bf16.mxu0 0
        %7694 = vmatpush1.bf16.msra.mxu0 %v7676
        %7695 = vmatprep.subr.bf16.mxu0 0
        %7696 = vmatpush1.bf16.msra.mxu0 %v7677
        %7697 = vmatprep.subr.bf16.mxu0 0
        %7698 = vmatpush1.bf16.msra.mxu0 0
        %7699 = vmatprep.subr.bf16.mxu0 0
        %7700 = vmatpush1.bf16.msra.mxu0 0
        %7701 = vmatprep.subr.bf16.mxu0 0
        %7702 = vmatpush1.bf16.msra.mxu0 0
        %7703 = vmatprep.subr.bf16.mxu0 0
        %7704 = vmatpush1.bf16.msra.mxu0 0
        %7705 = vmatprep.subr.bf16.mxu0 0
        %7706 = vmatpush1.bf16.msra.mxu0 0
        %7707 = vmatprep.subr.bf16.mxu0 0
        %7708 = vmatpush1.bf16.msra.mxu0 0
        %7709 = vmatprep.subr.bf16.mxu0 0
        %7710 = vmatpush1.bf16.msra.mxu0 0
        %7711 = vmatprep.subr.bf16.mxu0 0
        %7712 = vmatpush1.bf16.msra.mxu0 0
        %7713 = vmatprep.subr.bf16.mxu0 0
        %7714 = vmatpush1.bf16.msra.mxu0 0
        %7715 = vmatprep.subr.bf16.mxu0 0
        %7716 = vmatpush1.bf16.msra.mxu0 0
        %7717 = vmatprep.subr.bf16.mxu0 0
        %7718 = vmatpush1.bf16.msra.mxu0 0
        %7719 = vmatprep.subr.bf16.mxu0 0
        %7720 = vmatpush1.bf16.msra.mxu0 0
        %7721 = vmatprep.subr.bf16.mxu0 0
        %7722 = vmatpush1.bf16.msra.mxu0 0
        %7723 = vmatprep.subr.bf16.mxu0 0
        %7724 = vmatpush1.bf16.msra.mxu0 0
        %7725 = vmatprep.mubr.bf16.mxu0 0
        %7726 = vmatmul.mubr.bf16.gmra.mrb[0].mxu0 %v7685
        %v7727 = vpop.f32.mrb[0].mxu0
        %v7728 = vadd.f32 %v7682, %v7727
        %v7729 = vpop.f32.mrb[0].mxu0
        %v7730 = vpop.f32.mrb[0].mxu0
        %v7731 = vpop.f32.mrb[0].mxu0
        %7732 = vmatprep.mubr.bf16.mxu0 0
        %7733 = vmatmul.mubr.bf16.gmra.mrb[0].mxu0 %v7688
        %v7734 = vpop.f32.mrb[0].mxu0
        %v7735 = vpop.f32.mrb[0].mxu0
        %v7736 = vpop.f32.mrb[0].mxu0
        %v7737 = vpop.f32.mrb[0].mxu0
        %7738 = vmatprep.mubr.bf16.mxu0 0
        %7739 = vmatmul.mubr.bf16.gmra.mrb[0].mxu0 %v7691
        %v7740 = vpop.f32.mrb[0].mxu0
        %v7741 = vpop.f32.mrb[0].mxu0
        %v7742 = vpop.f32.mrb[0].mxu0
        %v7743 = vpop.f32.mrb[0].mxu0
        %7744 = vdwg.mxu0
        %v7745 = vadd.f32 %v7728, %v7439
        %v7746 = vld [vmem:[%s11] sm:$0x1]
        %v7747 = vld [vmem:[%s13] sm:$0x1]
        %v7748 = vsel %vm1639, %v7745, 0.0
        %7749 = vadd.xlane.f32.xlu0 %v7748
        %v7750 = vpop.xlane.xlu0 %7749
        %v7751 = vmul.f32 %v7750, %v1643
        %v7752 = vsub.f32 %v7745, %v7751
        %v7753 = vmul.f32 %v7752, %v7752
        %v7754 = vsel %vm1639, %v7753, 0.0
        %7755 = vadd.xlane.f32.xlu0 %v7754
        %v7756 = vpop.xlane.xlu0 %7755
        %v7757 = vmul.f32 %v7756, %v1643
        %v7758 = vadd.f32 %v7757, 1e-05
        %v7759 = vrsqrt.pop %v7758
        %v7760 = vmul.f32 %v7752, %v7759
        %v7761 = vmul.f32 %v7760, %v7746
        %v7762 = vadd.f32 %v7761, %v7747
        %v7763 = vld [vmem:[%s15] sm:$0xff]
        %v7764 = vld [vmem:[%s15 + $0x8] sm:$0xff]
        %v7765 = vld [vmem:[%s15 + $0x10] sm:$0xff]
        %v7766 = vld [vmem:[%s15 + $0x18] sm:$0xff]
        %v7767 = vpack.c.bf16 %v7762, %v7762
        %v7768 = vpack.c.bf16 %v7764, %v7763
        %v7769 = vpack.c.bf16 %v7766, %v7765
        %v7770 = vld [vmem:[%s17] sm:$0x1]
        %v7772 = vsel %vm1626, %v7767, 0
        %7774 = vmatprep.subr.bf16.mxu0 0
        %7775 = vmatpush1.bf16.msra.mxu0 %v7768
        %7776 = vmatprep.subr.bf16.mxu0 0
        %7777 = vmatpush1.bf16.msra.mxu0 %v7769
        %7778 = vmatprep.subr.bf16.mxu0 0
        %7779 = vmatpush1.bf16.msra.mxu0 0
        %7780 = vmatprep.subr.bf16.mxu0 0
        %7781 = vmatpush1.bf16.msra.mxu0 0
        %7782 = vmatprep.subr.bf16.mxu0 0
        %7783 = vmatpush1.bf16.msra.mxu0 0
        %7784 = vmatprep.subr.bf16.mxu0 0
        %7785 = vmatpush1.bf16.msra.mxu0 0
        %7786 = vmatprep.subr.bf16.mxu0 0
        %7787 = vmatpush1.bf16.msra.mxu0 0
        %7788 = vmatprep.subr.bf16.mxu0 0
        %7789 = vmatpush1.bf16.msra.mxu0 0
        %7790 = vmatprep.subr.bf16.mxu0 0
        %7791 = vmatpush1.bf16.msra.mxu0 0
        %7792 = vmatprep.subr.bf16.mxu0 0
        %7793 = vmatpush1.bf16.msra.mxu0 0
        %7794 = vmatprep.subr.bf16.mxu0 0
        %7795 = vmatpush1.bf16.msra.mxu0 0
        %7796 = vmatprep.subr.bf16.mxu0 0
        %7797 = vmatpush1.bf16.msra.mxu0 0
        %7798 = vmatprep.subr.bf16.mxu0 0
        %7799 = vmatpush1.bf16.msra.mxu0 0
        %7800 = vmatprep.subr.bf16.mxu0 0
        %7801 = vmatpush1.bf16.msra.mxu0 0
        %7802 = vmatprep.subr.bf16.mxu0 0
        %7803 = vmatpush1.bf16.msra.mxu0 0
        %7804 = vmatprep.subr.bf16.mxu0 0
        %7805 = vmatpush1.bf16.msra.mxu0 0
        %7806 = vmatprep.mubr.bf16.mxu0 0
        %7807 = vmatmul.mubr.bf16.gmra.mrb[0].mxu0 %v7772
        %v7808 = vpop.f32.mrb[0].mxu0
        %v7809 = vadd.f32 %v7770, %v7808
        %v7810 = vpop.f32.mrb[0].mxu0
        %v7811 = vpop.f32.mrb[0].mxu0
        %v7812 = vpop.f32.mrb[0].mxu0
        %7813 = vdwg.mxu0
        %vm7814 = vcmask 16384
        %v7815 = vsel %vm7814, %v7809, -inf
        %7816 = vmax.xlane.f32.xlu0 %v7815
        %v7817 = vpop.xlane.xlu0 %7816
        %v7818 = vsub.f32 %v7809, %v7817
        %v7819 = vmul.f32 %v7818, 1.442695
        %v7820 = vpow.pop %v7819
        %v7821 = vsel %vm7814, %v7820, 0.0
        %7822 = vadd.xlane.f32.xlu0 %v7821
        %v7823 = vpop.xlane.xlu0 %7822
        %v7824 = vrcp.pop %v7823
        %v7825 = vmul.f32 %v7820, %v7824
        %7826 = vst.msk [vmem:[%s1426] sm:$0x1] %vm7814, %v7825
        %s7827 = sand.u32 %s1132, 1
        %s7828 = scalar_lea.sflag [#allocation3], %s7827
        %s7829 = sand.u32 %s1132, 1
        %s7830 = scalar_lea.vmem [#allocation2], %s7829
        // Predicated region
        $region213: #{model_forward.1} parent=211 // pred_check
          %p7831 = pneg %p1142
        $region214: #{model_forward.1} parent=211 // pred_check_branch
          %7833 = sbr.rel (%p7831) target = $region216
        $region215: #{model_forward.1} parent=211 // pred_region
          %s7835 = ssub.s32 16, 16
          %7836 = vsyncadd %s7828, %s7835
          %s7837 = smul.addr %s111, 16
          %s7838 = scalar_lea.hbm %s97, %s7837
          %s7840 = sshll.u32 %s7830, 4
          %s7841 = int_to_ptr.vmem [resolvable:$true] %s7840
          %7843 = dma.vmem_to_hbm [thread:$0]  %s7841, 16, %s7838, %s7828
        $region216: #{model_forward.1} parent=211 // pred_fallthru
          _
      $region212: #{model_forward.1} parent=5 // pred_fallthru
        _
      %p7844 = scmp.le.s32.totalorder 2, %s106
      // Predicated region
      $region217: #{model_forward.1} parent=5 // pred_check
        %p7845 = pneg %p7844
      $region218: #{model_forward.1} parent=5 // pred_check_branch
        %7847 = sbr.rel (%p7845) target = $region220
      $region219: #{model_forward.1} parent=5 // pred_region
        %s7848 = ssub.s32 %s106, 2
        // Predicated region
        $region221: #{model_forward.1} parent=219 // pred_check
          %p7849 = pneg %p1148
        $region222: #{model_forward.1} parent=219 // pred_check_branch
          %7851 = sbr.rel (%p7849) target = $region224
        $region223: #{model_forward.1} parent=219 // pred_region
          %s7852 = sand.u32 %s1133, 1
          %s7853 = scalar_lea.sflag [#allocation3], %s7852
          %s7854 = sand.u32 %s1133, 1
          %s7855 = scalar_lea.vmem [#allocation2], %s7854
          %7856 = dma.done %s7853, 16
        $region224: #{model_forward.1} parent=219 // pred_fallthru
          _
      $region220: #{model_forward.1} parent=5 // pred_fallthru
        _
    $region6: #{model_forward.1} parent=1 // loop_footer
      %s110 = sadd.s32 1, %s106
    $region7: #{model_forward.1} parent=1 // loop_footer_branch
      %105 = sbr.rel target = $region3
    $region8: #{model_forward.1} parent=1 // loop_exit
      _
    %7857 = vsyncpa [#allocation3], 1
    %s7858 = scalar_lea.sflag [#allocation3], 1
    %7859 = vsyncpa %s7858, 1

</llo_original>
